<compile_context>
chip_gen: v7x
topology: tpu7x:2x2x1
jax: 0.10.0
libtpu: 0.0.40
codegen_flags: <defaults>
</compile_context>

<pallas_src>
from functools import partial

import numpy as np
import jax
import jax.numpy as jnp
from jax.experimental import pallas as pl
from jax.experimental.pallas import tpu as pltpu  # noqa: F401  (kept for parity / future tiling)


# ----------------------------- config ---------------------------------------
MODES = 4          # modes1
WIDTH = 32         # width
INPUT_SIZE = 3     # input channels (fc0 sees INPUT_SIZE + 1 after grid concat)
OUTPUT_SIZE = 1
BATCH = 2
S = 16             # spatial size
N_LAYERS = 4
OUT_PAD = 128      # lane-dense padded output channels (sliced back outside)


def _gelu_exact(x):
    # matches torch.nn.functional.gelu (default, erf-based)
    return 0.5 * x * (1.0 + jax.lax.erf(x * 0.7071067811865476))


# ----------------------------- kernel ---------------------------------------
def fno1d_kernel(x_ref, fc0w_ref, fc0b_ref,
                 fwd_ref, fwdj_ref, inv_ref,
                 wr_ref, wi_ref, cw_ref, cb_ref,
                 fc1w_ref, fc1b_ref, fc2w_ref, fc2b_ref,
                 out_ref):
    """Whole forward pass, one grid-less invocation.

    Activation layout: (B*S, C) rows = (b, s) flattened.  Learned-weight matmul
    operands are bf16 (f32 accumulation); DFT operators and all element-wise
    math stay f32.
    """
    f32 = jnp.float32
    bf16 = jnp.bfloat16

    n_layers = wr_ref.shape[0]
    modes = wr_ref.shape[1]

    # fc0: (B*S, cin+1) -> (B*S, W)
    h = jnp.dot(x_ref[...].astype(bf16), fc0w_ref[...],
                preferred_element_type=f32) + fc0b_ref[...]

    # Fourier layers: x -> irDFT( per-mode complex mix( rDFT(x) ) ) + Conv1x1(x)
    for l in range(n_layers):                                  # static unroll
        hb = h.astype(bf16)
        # pointwise 1x1-conv branch + its bias
        acc = jnp.dot(hb, cw_ref[l], preferred_element_type=f32) + cb_ref[l]
        # spectral branch, factored; block-diagonal over the batch so every op
        # is a plain 2D matmul in the (B*S, C) layout (no reshapes).
        for k in range(modes):                                 # static unroll
            xk = jnp.dot(fwd_ref[k], h, preferred_element_type=f32)    # (2B, W) = [Xr; Xi]
            xkj = jnp.dot(fwdj_ref[k], h, preferred_element_type=f32)  # (2B, W) = [-Xi; Xr]
            yk = (jnp.dot(xk.astype(bf16), wr_ref[l, k],
                          preferred_element_type=f32)
                  + jnp.dot(xkj.astype(bf16), wi_ref[l, k],
                            preferred_element_type=f32))               # (2B, W) = [Yr; Yi]
            acc = acc + jnp.dot(inv_ref[k], yk, preferred_element_type=f32)
        h = acc
        if l < n_layers - 1:
            h = _gelu_exact(h)

    # head: fc1 -> gelu -> fc2 (fc2 lane-padded to 128 for an unmasked store)
    h = jnp.dot(h.astype(bf16), fc1w_ref[...],
                preferred_element_type=f32) + fc1b_ref[...]
    h = _gelu_exact(h)
    out_ref[...] = jnp.dot(h.astype(bf16), fc2w_ref[...],
                           preferred_element_type=f32) + fc2b_ref[...]


# ----------------------------- one-time precompute ---------------------------
def build_operators(params, batch, s, modes=MODES):
    """One-time (per model / per (batch, s)) precompute of every pallas_call
    operand.  Called once and cached by the caller; the per-call path is just
    the jitted `fno_forward` plus the kernel."""
    f32, bf16 = jnp.float32, jnp.bfloat16
    hidden = params["fc1_w"].shape[1]
    out_size = params["fc2_w"].shape[1]

    # --- exact truncated real-DFT operators, block-diagonal over the batch ---
    n = np.arange(s)
    k = np.arange(modes)
    theta = 2.0 * np.pi * np.outer(k, n) / s                   # (modes, s)
    cos_f, sin_f = np.cos(theta), np.sin(theta)
    # irfft coefficients: 1/S, doubled for non-DC / non-Nyquist kept modes
    coef = np.where((k > 0) & (2 * k < s), 2.0, 1.0)
    cos_i = (coef[:, None] * np.cos(theta)) / s                # (modes, s)
    sin_i = (-coef[:, None] * np.sin(theta)) / s               # (modes, s)

    two_b = 2 * batch
    fwd = np.zeros((modes, two_b, batch * s), np.float32)   # rows: [Xr_b ; Xi_b]
    fwdj = np.zeros((modes, two_b, batch * s), np.float32)  # rows: [-Xi_b ; Xr_b]
    inv = np.zeros((modes, batch * s, two_b), np.float32)   # cols: [Yr_b ; Yi_b]
    for kk in range(modes):
        for b in range(batch):
            cols = slice(b * s, (b + 1) * s)
            fwd[kk, b, cols] = cos_f[kk]            # Xr = sum_s x cos
            fwd[kk, batch + b, cols] = -sin_f[kk]   # Xi = -sum_s x sin
            fwdj[kk, b, cols] = sin_f[kk]           # -Xi
            fwdj[kk, batch + b, cols] = cos_f[kk]   # Xr
            inv[kk, cols, b] = cos_i[kk]            # += ci(t,k) * Yr
            inv[kk, cols, batch + b] = sin_i[kk]    # += si(t,k) * Yi

    # fc2 padded to 128 output lanes (unmasked lane-dense store)
    fc2w = np.zeros((hidden, OUT_PAD), np.float32)
    fc2w[:, :out_size] = np.asarray(params["fc2_w"], np.float32)
    fc2b = np.zeros((1, OUT_PAD), np.float32)
    fc2b[:, :out_size] = np.asarray(params["fc2_b"], np.float32)

    return dict(
        fc0_w=jnp.asarray(params["fc0_w"], bf16),      # (cin+1, W)
        fc0_b=jnp.asarray(params["fc0_b"], f32),       # (1, W)
        fwd=jnp.asarray(fwd, f32),                     # (modes, 2B, B*S)
        fwdj=jnp.asarray(fwdj, f32),                   # (modes, 2B, B*S)
        inv=jnp.asarray(inv, f32),                     # (modes, B*S, 2B)
        wr=jnp.asarray(params["sw_r"], bf16),          # (L, modes, W, W)
        wi=jnp.asarray(params["sw_i"], bf16),          # (L, modes, W, W)
        cw=jnp.asarray(params["cw"], bf16),            # (L, W, W)
        cb=jnp.asarray(params["cb"], f32),             # (L, 1, W)
        fc1_w=jnp.asarray(params["fc1_w"], bf16),      # (W, 128)
        fc1_b=jnp.asarray(params["fc1_b"], f32),       # (1, 128)
        fc2_w=jnp.asarray(fc2w, bf16),                 # (128, 128) padded
        fc2_b=jnp.asarray(fc2b, f32),                  # (1, 128) padded
    )


# ----------------------------- jitted forward --------------------------------
@partial(jax.jit, static_argnames=("out_size",))
def fno_forward(x, ops, *, out_size=OUTPUT_SIZE):
    """Per-call path: grid concat + one grid-less pallas_call + unpad."""
    B, s, _ = x.shape
    gridx = jnp.linspace(0.0, 1.0, s, dtype=jnp.float32).reshape(1, s, 1)
    gridx = jnp.broadcast_to(gridx, (B, s, 1))
    xg = jnp.concatenate([x.astype(jnp.float32), gridx], axis=-1)   # (B, S, cin+1)
    x2d = xg.reshape(B * s, -1)                                     # (B*S, cin+1)

    out = pl.pallas_call(
        fno1d_kernel,
        out_shape=jax.ShapeDtypeStruct((B * s, OUT_PAD), jnp.float32),
    )(x2d,
      ops["fc0_w"], ops["fc0_b"],
      ops["fwd"], ops["fwdj"], ops["inv"],
      ops["wr"], ops["wi"], ops["cw"], ops["cb"],
      ops["fc1_w"], ops["fc1_b"], ops["fc2_w"], ops["fc2_b"])

    # strip the lane padding outside the kernel
    return out.reshape(B, s, OUT_PAD)[..., :out_size]


# ----------------------------- params ----------------------------------------
def init_params(key, modes, width, input_size, output_size):
    ks = jax.random.split(key, 12)
    cin1 = input_size + 1
    u = lambda k, shape, lo, hi: jax.random.uniform(k, shape, jnp.float32, lo, hi)
    scale = 1.0 / (width * width)
    b0 = 1.0 / np.sqrt(cin1)
    bw = 1.0 / np.sqrt(width)
    b1 = 1.0 / np.sqrt(128)
    return dict(
        fc0_w=u(ks[0], (cin1, width), -b0, b0),               # stored (in, out)
        fc0_b=u(ks[1], (1, width), -b0, b0),
        # spectral weights, layer-stacked, layout (layer, mode, in, out)
        sw_r=u(ks[2], (N_LAYERS, modes, width, width), 0.0, scale),
        sw_i=u(ks[3], (N_LAYERS, modes, width, width), 0.0, scale),
        # 1x1 conv weights stored (layer, in, out) and biases (layer, 1, out)
        cw=u(ks[4], (N_LAYERS, width, width), -bw, bw),
        cb=u(ks[5], (N_LAYERS, 1, width), -bw, bw),
        fc1_w=u(ks[6], (width, 128), -bw, bw),
        fc1_b=u(ks[7], (1, 128), -bw, bw),
        fc2_w=u(ks[8], (128, output_size), -b1, b1),
        fc2_b=u(ks[9], (1, output_size), -b1, b1),
    )


# ----------------------------- pure-JAX reference ----------------------------
def fno_reference(x, params, modes=MODES):
    B, s, _ = x.shape
    width = params["fc0_w"].shape[1]
    gridx = jnp.linspace(0.0, 1.0, s, dtype=jnp.float32).reshape(1, s, 1)
    gridx = jnp.broadcast_to(gridx, (B, s, 1))
    xg = jnp.concatenate([x.astype(jnp.float32), gridx], axis=-1)
    h = xg @ params["fc0_w"] + params["fc0_b"][0]                    # (B, S, W)
    hc = jnp.transpose(h, (0, 2, 1))                                 # (B, W, S)
    for l in range(N_LAYERS):
        xft = jnp.fft.rfft(hc, axis=-1)[:, :, :modes]                # (B, W, modes)
        w = params["sw_r"][l] + 1j * params["sw_i"][l]               # (modes, in, out)
        oft = jnp.einsum('bik,kio->bok', xft, w)
        out_ft = jnp.zeros((B, width, s // 2 + 1), jnp.complex64).at[:, :, :modes].set(oft)
        x1 = jnp.fft.irfft(out_ft, n=s, axis=-1)
        x2 = jnp.einsum('bis,io->bos', hc, params["cw"][l]) + params["cb"][l][0][None, :, None]
        hc = x1 + x2
        if l < N_LAYERS - 1:
            hc = _gelu_exact(hc)
    h = jnp.transpose(hc, (0, 2, 1))
    h = _gelu_exact(h @ params["fc1_w"] + params["fc1_b"][0])
    return h @ params["fc2_w"] + params["fc2_b"][0]


# TODO(synk): Normalizer_1D and noise_std exist in __init__ but are never used
# in FNO_standard_1D.forward, so they are intentionally not implemented.

if __name__ == "__main__":
    key = jax.random.PRNGKey(0)
    kx, kp = jax.random.split(key)
    x = jax.random.normal(kx, (BATCH, S, INPUT_SIZE), dtype=jnp.float32)
    params = init_params(kp, MODES, WIDTH, INPUT_SIZE, OUTPUT_SIZE)

    # one-time operator precompute (cached per model); per-call path is jitted
    ops = build_operators(params, BATCH, S, MODES)

    out = jax.block_until_ready(fno_forward(x, ops, out_size=OUTPUT_SIZE))

    ref = fno_reference(x, params)
    # Learned-weight MXU operands are bf16 (DFT path stays f32), so compare at
    # a documented bf16-level tolerance against the f32 reference.
    np.testing.assert_allclose(np.asarray(out), np.asarray(ref), rtol=3e-2, atol=8e-3)

    print("KERNEL_OK")
</pallas_src>

<mosaic_0001>
module attributes {stable_mosaic.version = 11 : i64} {
  func.func @fno1d_kernel(%arg0: memref<32x4xf32, #tpu.memory_space<vmem>>, %arg1: memref<4x32xbf16, #tpu.memory_space<vmem>>, %arg2: memref<1x32xf32, #tpu.memory_space<vmem>>, %arg3: memref<4x4x32xf32, #tpu.memory_space<vmem>>, %arg4: memref<4x4x32xf32, #tpu.memory_space<vmem>>, %arg5: memref<4x32x4xf32, #tpu.memory_space<vmem>>, %arg6: memref<4x4x32x32xbf16, #tpu.memory_space<vmem>>, %arg7: memref<4x4x32x32xbf16, #tpu.memory_space<vmem>>, %arg8: memref<4x32x32xbf16, #tpu.memory_space<vmem>>, %arg9: memref<4x1x32xf32, #tpu.memory_space<vmem>>, %arg10: memref<32x128xbf16, #tpu.memory_space<vmem>>, %arg11: memref<1x128xf32, #tpu.memory_space<vmem>>, %arg12: memref<128x128xbf16, #tpu.memory_space<vmem>>, %arg13: memref<1x128xf32, #tpu.memory_space<vmem>>, %arg14: memref<32x128xf32, #tpu.memory_space<vmem>>) attributes {dimension_semantics = [], scalar_prefetch = 0 : i64, scratch_operands = 0 : i64, tpu.core_type = #tpu.core_type<tc>} {
    %c0 = arith.constant 0 : index
    %c0_0 = arith.constant 0 : index
    %0 = vector.load %arg0[%c0, %c0_0] : memref<32x4xf32, #tpu.memory_space<vmem>>, vector<32x4xf32>
    %1 = arith.truncf %0 : vector<32x4xf32> to vector<32x4xbf16>
    %c0_1 = arith.constant 0 : index
    %c0_2 = arith.constant 0 : index
    %2 = vector.load %arg1[%c0_1, %c0_2] : memref<4x32xbf16, #tpu.memory_space<vmem>>, vector<4x32xbf16>
    %cst = arith.constant dense<0.000000e+00> : vector<32x32xf32>
    %3 = tpu.matmul %1, %2, %cst {dimension_numbers = #tpu.dot_dimension_numbers<[1], [0], [0], [1], [0, 0, 1, 1], [], []>} : vector<32x4xbf16>, vector<4x32xbf16>, vector<32x32xf32> -> vector<32x32xf32>
    %c0_3 = arith.constant 0 : index
    %c0_4 = arith.constant 0 : index
    %4 = vector.load %arg2[%c0_3, %c0_4] : memref<1x32xf32, #tpu.memory_space<vmem>>, vector<1x32xf32>
    %5 = vector.broadcast %4 : vector<1x32xf32> to vector<32x32xf32>
    %6 = arith.addf %3, %5 : vector<32x32xf32>
    %7 = arith.truncf %6 : vector<32x32xf32> to vector<32x32xbf16>
    %c0_5 = arith.constant 0 : index
    %c0_6 = arith.constant 0 : index
    %c0_7 = arith.constant 0 : index
    %8 = vector.load %arg8[%c0_5, %c0_6, %c0_7] : memref<4x32x32xbf16, #tpu.memory_space<vmem>>, vector<1x32x32xbf16>
    %9 = vector.shape_cast %8 : vector<1x32x32xbf16> to vector<32x32xbf16>
    %cst_8 = arith.constant dense<0.000000e+00> : vector<32x32xf32>
    %10 = tpu.matmul %7, %9, %cst_8 {dimension_numbers = #tpu.dot_dimension_numbers<[1], [0], [0], [1], [0, 0, 1, 1], [], []>} : vector<32x32xbf16>, vector<32x32xbf16>, vector<32x32xf32> -> vector<32x32xf32>
    %c0_9 = arith.constant 0 : index
    %c0_10 = arith.constant 0 : index
    %c0_11 = arith.constant 0 : index
    %11 = vector.load %arg9[%c0_9, %c0_10, %c0_11] : memref<4x1x32xf32, #tpu.memory_space<vmem>>, vector<1x1x32xf32>
    %12 = vector.shape_cast %11 : vector<1x1x32xf32> to vector<1x32xf32>
    %13 = vector.broadcast %12 : vector<1x32xf32> to vector<32x32xf32>
    %14 = arith.addf %10, %13 : vector<32x32xf32>
    %c0_12 = arith.constant 0 : index
    %c0_13 = arith.constant 0 : index
    %c0_14 = arith.constant 0 : index
    %15 = vector.load %arg3[%c0_12, %c0_13, %c0_14] : memref<4x4x32xf32, #tpu.memory_space<vmem>>, vector<1x4x32xf32>
    %16 = vector.shape_cast %15 : vector<1x4x32xf32> to vector<4x32xf32>
    %cst_15 = arith.constant dense<0.000000e+00> : vector<4x32xf32>
    %17 = tpu.matmul %16, %6, %cst_15 {dimension_numbers = #tpu.dot_dimension_numbers<[1], [0], [0], [1], [0, 0, 1, 1], [], []>} : vector<4x32xf32>, vector<32x32xf32>, vector<4x32xf32> -> vector<4x32xf32>
    %c0_16 = arith.constant 0 : index
    %c0_17 = arith.constant 0 : index
    %c0_18 = arith.constant 0 : index
    %18 = vector.load %arg4[%c0_16, %c0_17, %c0_18] : memref<4x4x32xf32, #tpu.memory_space<vmem>>, vector<1x4x32xf32>
    %19 = vector.shape_cast %18 : vector<1x4x32xf32> to vector<4x32xf32>
    %cst_19 = arith.constant dense<0.000000e+00> : vector<4x32xf32>
    %20 = tpu.matmul %19, %6, %cst_19 {dimension_numbers = #tpu.dot_dimension_numbers<[1], [0], [0], [1], [0, 0, 1, 1], [], []>} : vector<4x32xf32>, vector<32x32xf32>, vector<4x32xf32> -> vector<4x32xf32>
    %21 = arith.truncf %17 : vector<4x32xf32> to vector<4x32xbf16>
    %c0_20 = arith.constant 0 : index
    %c0_21 = arith.constant 0 : index
    %c0_22 = arith.constant 0 : index
    %c0_23 = arith.constant 0 : index
    %22 = vector.load %arg6[%c0_20, %c0_21, %c0_22, %c0_23] : memref<4x4x32x32xbf16, #tpu.memory_space<vmem>>, vector<1x1x32x32xbf16>
    %23 = vector.shape_cast %22 : vector<1x1x32x32xbf16> to vector<32x32xbf16>
    %cst_24 = arith.constant dense<0.000000e+00> : vector<4x32xf32>
    %24 = tpu.matmul %21, %23, %cst_24 {dimension_numbers = #tpu.dot_dimension_numbers<[1], [0], [0], [1], [0, 0, 1, 1], [], []>} : vector<4x32xbf16>, vector<32x32xbf16>, vector<4x32xf32> -> vector<4x32xf32>
    %25 = arith.truncf %20 : vector<4x32xf32> to vector<4x32xbf16>
    %c0_25 = arith.constant 0 : index
    %c0_26 = arith.constant 0 : index
    %c0_27 = arith.constant 0 : index
    %c0_28 = arith.constant 0 : index
    %26 = vector.load %arg7[%c0_25, %c0_26, %c0_27, %c0_28] : memref<4x4x32x32xbf16, #tpu.memory_space<vmem>>, vector<1x1x32x32xbf16>
    %27 = vector.shape_cast %26 : vector<1x1x32x32xbf16> to vector<32x32xbf16>
    %cst_29 = arith.constant dense<0.000000e+00> : vector<4x32xf32>
    %28 = tpu.matmul %25, %27, %cst_29 {dimension_numbers = #tpu.dot_dimension_numbers<[1], [0], [0], [1], [0, 0, 1, 1], [], []>} : vector<4x32xbf16>, vector<32x32xbf16>, vector<4x32xf32> -> vector<4x32xf32>
    %29 = arith.addf %24, %28 : vector<4x32xf32>
    %c0_30 = arith.constant 0 : index
    %c0_31 = arith.constant 0 : index
    %c0_32 = arith.constant 0 : index
    %30 = vector.load %arg5[%c0_30, %c0_31, %c0_32] : memref<4x32x4xf32, #tpu.memory_space<vmem>>, vector<1x32x4xf32>
    %31 = vector.shape_cast %30 : vector<1x32x4xf32> to vector<32x4xf32>
    %cst_33 = arith.constant dense<0.000000e+00> : vector<32x32xf32>
    %32 = tpu.matmul %31, %29, %cst_33 {dimension_numbers = #tpu.dot_dimension_numbers<[1], [0], [0], [1], [0, 0, 1, 1], [], []>} : vector<32x4xf32>, vector<4x32xf32>, vector<32x32xf32> -> vector<32x32xf32>
    %33 = arith.addf %14, %32 : vector<32x32xf32>
    %c1 = arith.constant 1 : index
    %c0_34 = arith.constant 0 : index
    %c0_35 = arith.constant 0 : index
    %34 = vector.load %arg3[%c1, %c0_34, %c0_35] : memref<4x4x32xf32, #tpu.memory_space<vmem>>, vector<1x4x32xf32>
    %35 = vector.shape_cast %34 : vector<1x4x32xf32> to vector<4x32xf32>
    %cst_36 = arith.constant dense<0.000000e+00> : vector<4x32xf32>
    %36 = tpu.matmul %35, %6, %cst_36 {dimension_numbers = #tpu.dot_dimension_numbers<[1], [0], [0], [1], [0, 0, 1, 1], [], []>} : vector<4x32xf32>, vector<32x32xf32>, vector<4x32xf32> -> vector<4x32xf32>
    %c1_37 = arith.constant 1 : index
    %c0_38 = arith.constant 0 : index
    %c0_39 = arith.constant 0 : index
    %37 = vector.load %arg4[%c1_37, %c0_38, %c0_39] : memref<4x4x32xf32, #tpu.memory_space<vmem>>, vector<1x4x32xf32>
    %38 = vector.shape_cast %37 : vector<1x4x32xf32> to vector<4x32xf32>
    %cst_40 = arith.constant dense<0.000000e+00> : vector<4x32xf32>
    %39 = tpu.matmul %38, %6, %cst_40 {dimension_numbers = #tpu.dot_dimension_numbers<[1], [0], [0], [1], [0, 0, 1, 1], [], []>} : vector<4x32xf32>, vector<32x32xf32>, vector<4x32xf32> -> vector<4x32xf32>
    %40 = arith.truncf %36 : vector<4x32xf32> to vector<4x32xbf16>
    %c0_41 = arith.constant 0 : index
    %c1_42 = arith.constant 1 : index
    %c0_43 = arith.constant 0 : index
    %c0_44 = arith.constant 0 : index
    %41 = vector.load %arg6[%c0_41, %c1_42, %c0_43, %c0_44] : memref<4x4x32x32xbf16, #tpu.memory_space<vmem>>, vector<1x1x32x32xbf16>
    %42 = vector.shape_cast %41 : vector<1x1x32x32xbf16> to vector<32x32xbf16>
    %cst_45 = arith.constant dense<0.000000e+00> : vector<4x32xf32>
    %43 = tpu.matmul %40, %42, %cst_45 {dimension_numbers = #tpu.dot_dimension_numbers<[1], [0], [0], [1], [0, 0, 1, 1], [], []>} : vector<4x32xbf16>, vector<32x32xbf16>, vector<4x32xf32> -> vector<4x32xf32>
    %44 = arith.truncf %39 : vector<4x32xf32> to vector<4x32xbf16>
    %c0_46 = arith.constant 0 : index
    %c1_47 = arith.constant 1 : index
    %c0_48 = arith.constant 0 : index
    %c0_49 = arith.constant 0 : index
    %45 = vector.load %arg7[%c0_46, %c1_47, %c0_48, %c0_49] : memref<4x4x32x32xbf16, #tpu.memory_space<vmem>>, vector<1x1x32x32xbf16>
    %46 = vector.shape_cast %45 : vector<1x1x32x32xbf16> to vector<32x32xbf16>
    %cst_50 = arith.constant dense<0.000000e+00> : vector<4x32xf32>
    %47 = tpu.matmul %44, %46, %cst_50 {dimension_numbers = #tpu.dot_dimension_numbers<[1], [0], [0], [1], [0, 0, 1, 1], [], []>} : vector<4x32xbf16>, vector<32x32xbf16>, vector<4x32xf32> -> vector<4x32xf32>
    %48 = arith.addf %43, %47 : vector<4x32xf32>
    %c1_51 = arith.constant 1 : index
    %c0_52 = arith.constant 0 : index
    %c0_53 = arith.constant 0 : index
    %49 = vector.load %arg5[%c1_51, %c0_52, %c0_53] : memref<4x32x4xf32, #tpu.memory_space<vmem>>, vector<1x32x4xf32>
    %50 = vector.shape_cast %49 : vector<1x32x4xf32> to vector<32x4xf32>
    %cst_54 = arith.constant dense<0.000000e+00> : vector<32x32xf32>
    %51 = tpu.matmul %50, %48, %cst_54 {dimension_numbers = #tpu.dot_dimension_numbers<[1], [0], [0], [1], [0, 0, 1, 1], [], []>} : vector<32x4xf32>, vector<4x32xf32>, vector<32x32xf32> -> vector<32x32xf32>
    %52 = arith.addf %33, %51 : vector<32x32xf32>
    %c2 = arith.constant 2 : index
    %c0_55 = arith.constant 0 : index
    %c0_56 = arith.constant 0 : index
    %53 = vector.load %arg3[%c2, %c0_55, %c0_56] : memref<4x4x32xf32, #tpu.memory_space<vmem>>, vector<1x4x32xf32>
    %54 = vector.shape_cast %53 : vector<1x4x32xf32> to vector<4x32xf32>
    %cst_57 = arith.constant dense<0.000000e+00> : vector<4x32xf32>
    %55 = tpu.matmul %54, %6, %cst_57 {dimension_numbers = #tpu.dot_dimension_numbers<[1], [0], [0], [1], [0, 0, 1, 1], [], []>} : vector<4x32xf32>, vector<32x32xf32>, vector<4x32xf32> -> vector<4x32xf32>
    %c2_58 = arith.constant 2 : index
    %c0_59 = arith.constant 0 : index
    %c0_60 = arith.constant 0 : index
    %56 = vector.load %arg4[%c2_58, %c0_59, %c0_60] : memref<4x4x32xf32, #tpu.memory_space<vmem>>, vector<1x4x32xf32>
    %57 = vector.shape_cast %56 : vector<1x4x32xf32> to vector<4x32xf32>
    %cst_61 = arith.constant dense<0.000000e+00> : vector<4x32xf32>
    %58 = tpu.matmul %57, %6, %cst_61 {dimension_numbers = #tpu.dot_dimension_numbers<[1], [0], [0], [1], [0, 0, 1, 1], [], []>} : vector<4x32xf32>, vector<32x32xf32>, vector<4x32xf32> -> vector<4x32xf32>
    %59 = arith.truncf %55 : vector<4x32xf32> to vector<4x32xbf16>
    %c0_62 = arith.constant 0 : index
    %c2_63 = arith.constant 2 : index
    %c0_64 = arith.constant 0 : index
    %c0_65 = arith.constant 0 : index
    %60 = vector.load %arg6[%c0_62, %c2_63, %c0_64, %c0_65] : memref<4x4x32x32xbf16, #tpu.memory_space<vmem>>, vector<1x1x32x32xbf16>
    %61 = vector.shape_cast %60 : vector<1x1x32x32xbf16> to vector<32x32xbf16>
    %cst_66 = arith.constant dense<0.000000e+00> : vector<4x32xf32>
    %62 = tpu.matmul %59, %61, %cst_66 {dimension_numbers = #tpu.dot_dimension_numbers<[1], [0], [0], [1], [0, 0, 1, 1], [], []>} : vector<4x32xbf16>, vector<32x32xbf16>, vector<4x32xf32> -> vector<4x32xf32>
    %63 = arith.truncf %58 : vector<4x32xf32> to vector<4x32xbf16>
    %c0_67 = arith.constant 0 : index
    %c2_68 = arith.constant 2 : index
    %c0_69 = arith.constant 0 : index
    %c0_70 = arith.constant 0 : index
    %64 = vector.load %arg7[%c0_67, %c2_68, %c0_69, %c0_70] : memref<4x4x32x32xbf16, #tpu.memory_space<vmem>>, vector<1x1x32x32xbf16>
    %65 = vector.shape_cast %64 : vector<1x1x32x32xbf16> to vector<32x32xbf16>
    %cst_71 = arith.constant dense<0.000000e+00> : vector<4x32xf32>
    %66 = tpu.matmul %63, %65, %cst_71 {dimension_numbers = #tpu.dot_dimension_numbers<[1], [0], [0], [1], [0, 0, 1, 1], [], []>} : vector<4x32xbf16>, vector<32x32xbf16>, vector<4x32xf32> -> vector<4x32xf32>
    %67 = arith.addf %62, %66 : vector<4x32xf32>
    %c2_72 = arith.constant 2 : index
    %c0_73 = arith.constant 0 : index
    %c0_74 = arith.constant 0 : index
    %68 = vector.load %arg5[%c2_72, %c0_73, %c0_74] : memref<4x32x4xf32, #tpu.memory_space<vmem>>, vector<1x32x4xf32>
    %69 = vector.shape_cast %68 : vector<1x32x4xf32> to vector<32x4xf32>
    %cst_75 = arith.constant dense<0.000000e+00> : vector<32x32xf32>
    %70 = tpu.matmul %69, %67, %cst_75 {dimension_numbers = #tpu.dot_dimension_numbers<[1], [0], [0], [1], [0, 0, 1, 1], [], []>} : vector<32x4xf32>, vector<4x32xf32>, vector<32x32xf32> -> vector<32x32xf32>
    %71 = arith.addf %52, %70 : vector<32x32xf32>
    %c3 = arith.constant 3 : index
    %c0_76 = arith.constant 0 : index
    %c0_77 = arith.constant 0 : index
    %72 = vector.load %arg3[%c3, %c0_76, %c0_77] : memref<4x4x32xf32, #tpu.memory_space<vmem>>, vector<1x4x32xf32>
    %73 = vector.shape_cast %72 : vector<1x4x32xf32> to vector<4x32xf32>
    %cst_78 = arith.constant dense<0.000000e+00> : vector<4x32xf32>
    %74 = tpu.matmul %73, %6, %cst_78 {dimension_numbers = #tpu.dot_dimension_numbers<[1], [0], [0], [1], [0, 0, 1, 1], [], []>} : vector<4x32xf32>, vector<32x32xf32>, vector<4x32xf32> -> vector<4x32xf32>
    %c3_79 = arith.constant 3 : index
    %c0_80 = arith.constant 0 : index
    %c0_81 = arith.constant 0 : index
    %75 = vector.load %arg4[%c3_79, %c0_80, %c0_81] : memref<4x4x32xf32, #tpu.memory_space<vmem>>, vector<1x4x32xf32>
    %76 = vector.shape_cast %75 : vector<1x4x32xf32> to vector<4x32xf32>
    %cst_82 = arith.constant dense<0.000000e+00> : vector<4x32xf32>
    %77 = tpu.matmul %76, %6, %cst_82 {dimension_numbers = #tpu.dot_dimension_numbers<[1], [0], [0], [1], [0, 0, 1, 1], [], []>} : vector<4x32xf32>, vector<32x32xf32>, vector<4x32xf32> -> vector<4x32xf32>
    %78 = arith.truncf %74 : vector<4x32xf32> to vector<4x32xbf16>
    %c0_83 = arith.constant 0 : index
    %c3_84 = arith.constant 3 : index
    %c0_85 = arith.constant 0 : index
    %c0_86 = arith.constant 0 : index
    %79 = vector.load %arg6[%c0_83, %c3_84, %c0_85, %c0_86] : memref<4x4x32x32xbf16, #tpu.memory_space<vmem>>, vector<1x1x32x32xbf16>
    %80 = vector.shape_cast %79 : vector<1x1x32x32xbf16> to vector<32x32xbf16>
    %cst_87 = arith.constant dense<0.000000e+00> : vector<4x32xf32>
    %81 = tpu.matmul %78, %80, %cst_87 {dimension_numbers = #tpu.dot_dimension_numbers<[1], [0], [0], [1], [0, 0, 1, 1], [], []>} : vector<4x32xbf16>, vector<32x32xbf16>, vector<4x32xf32> -> vector<4x32xf32>
    %82 = arith.truncf %77 : vector<4x32xf32> to vector<4x32xbf16>
    %c0_88 = arith.constant 0 : index
    %c3_89 = arith.constant 3 : index
    %c0_90 = arith.constant 0 : index
    %c0_91 = arith.constant 0 : index
    %83 = vector.load %arg7[%c0_88, %c3_89, %c0_90, %c0_91] : memref<4x4x32x32xbf16, #tpu.memory_space<vmem>>, vector<1x1x32x32xbf16>
    %84 = vector.shape_cast %83 : vector<1x1x32x32xbf16> to vector<32x32xbf16>
    %cst_92 = arith.constant dense<0.000000e+00> : vector<4x32xf32>
    %85 = tpu.matmul %82, %84, %cst_92 {dimension_numbers = #tpu.dot_dimension_numbers<[1], [0], [0], [1], [0, 0, 1, 1], [], []>} : vector<4x32xbf16>, vector<32x32xbf16>, vector<4x32xf32> -> vector<4x32xf32>
    %86 = arith.addf %81, %85 : vector<4x32xf32>
    %c3_93 = arith.constant 3 : index
    %c0_94 = arith.constant 0 : index
    %c0_95 = arith.constant 0 : index
    %87 = vector.load %arg5[%c3_93, %c0_94, %c0_95] : memref<4x32x4xf32, #tpu.memory_space<vmem>>, vector<1x32x4xf32>
    %88 = vector.shape_cast %87 : vector<1x32x4xf32> to vector<32x4xf32>
    %cst_96 = arith.constant dense<0.000000e+00> : vector<32x32xf32>
    %89 = tpu.matmul %88, %86, %cst_96 {dimension_numbers = #tpu.dot_dimension_numbers<[1], [0], [0], [1], [0, 0, 1, 1], [], []>} : vector<32x4xf32>, vector<4x32xf32>, vector<32x32xf32> -> vector<32x32xf32>
    %90 = arith.addf %71, %89 : vector<32x32xf32>
    %cst_97 = arith.constant 5.000000e-01 : f32
    %91 = vector.broadcast %cst_97 : f32 to vector<32x32xf32>
    %92 = arith.mulf %91, %90 : vector<32x32xf32>
    %cst_98 = arith.constant 0.707106769 : f32
    %93 = vector.broadcast %cst_98 : f32 to vector<32x32xf32>
    %94 = arith.mulf %90, %93 : vector<32x32xf32>
    %95 = math.erf %94 : vector<32x32xf32>
    %cst_99 = arith.constant 1.000000e+00 : f32
    %96 = vector.broadcast %cst_99 : f32 to vector<32x32xf32>
    %97 = arith.addf %96, %95 : vector<32x32xf32>
    %98 = arith.mulf %92, %97 : vector<32x32xf32>
    %99 = arith.truncf %98 : vector<32x32xf32> to vector<32x32xbf16>
    %c1_100 = arith.constant 1 : index
    %c0_101 = arith.constant 0 : index
    %c0_102 = arith.constant 0 : index
    %100 = vector.load %arg8[%c1_100, %c0_101, %c0_102] : memref<4x32x32xbf16, #tpu.memory_space<vmem>>, vector<1x32x32xbf16>
    %101 = vector.shape_cast %100 : vector<1x32x32xbf16> to vector<32x32xbf16>
    %cst_103 = arith.constant dense<0.000000e+00> : vector<32x32xf32>
    %102 = tpu.matmul %99, %101, %cst_103 {dimension_numbers = #tpu.dot_dimension_numbers<[1], [0], [0], [1], [0, 0, 1, 1], [], []>} : vector<32x32xbf16>, vector<32x32xbf16>, vector<32x32xf32> -> vector<32x32xf32>
    %c1_104 = arith.constant 1 : index
    %c0_105 = arith.constant 0 : index
    %c0_106 = arith.constant 0 : index
    %103 = vector.load %arg9[%c1_104, %c0_105, %c0_106] : memref<4x1x32xf32, #tpu.memory_space<vmem>>, vector<1x1x32xf32>
    %104 = vector.shape_cast %103 : vector<1x1x32xf32> to vector<1x32xf32>
    %105 = vector.broadcast %104 : vector<1x32xf32> to vector<32x32xf32>
    %106 = arith.addf %102, %105 : vector<32x32xf32>
    %c0_107 = arith.constant 0 : index
    %c0_108 = arith.constant 0 : index
    %c0_109 = arith.constant 0 : index
    %107 = vector.load %arg3[%c0_107, %c0_108, %c0_109] : memref<4x4x32xf32, #tpu.memory_space<vmem>>, vector<1x4x32xf32>
    %108 = vector.shape_cast %107 : vector<1x4x32xf32> to vector<4x32xf32>
    %cst_110 = arith.constant dense<0.000000e+00> : vector<4x32xf32>
    %109 = tpu.matmul %108, %98, %cst_110 {dimension_numbers = #tpu.dot_dimension_numbers<[1], [0], [0], [1], [0, 0, 1, 1], [], []>} : vector<4x32xf32>, vector<32x32xf32>, vector<4x32xf32> -> vector<4x32xf32>
    %c0_111 = arith.constant 0 : index
    %c0_112 = arith.constant 0 : index
    %c0_113 = arith.constant 0 : index
    %110 = vector.load %arg4[%c0_111, %c0_112, %c0_113] : memref<4x4x32xf32, #tpu.memory_space<vmem>>, vector<1x4x32xf32>
    %111 = vector.shape_cast %110 : vector<1x4x32xf32> to vector<4x32xf32>
    %cst_114 = arith.constant dense<0.000000e+00> : vector<4x32xf32>
    %112 = tpu.matmul %111, %98, %cst_114 {dimension_numbers = #tpu.dot_dimension_numbers<[1], [0], [0], [1], [0, 0, 1, 1], [], []>} : vector<4x32xf32>, vector<32x32xf32>, vector<4x32xf32> -> vector<4x32xf32>
    %113 = arith.truncf %109 : vector<4x32xf32> to vector<4x32xbf16>
    %c1_115 = arith.constant 1 : index
    %c0_116 = arith.constant 0 : index
    %c0_117 = arith.constant 0 : index
    %c0_118 = arith.constant 0 : index
    %114 = vector.load %arg6[%c1_115, %c0_116, %c0_117, %c0_118] : memref<4x4x32x32xbf16, #tpu.memory_space<vmem>>, vector<1x1x32x32xbf16>
    %115 = vector.shape_cast %114 : vector<1x1x32x32xbf16> to vector<32x32xbf16>
    %cst_119 = arith.constant dense<0.000000e+00> : vector<4x32xf32>
    %116 = tpu.matmul %113, %115, %cst_119 {dimension_numbers = #tpu.dot_dimension_numbers<[1], [0], [0], [1], [0, 0, 1, 1], [], []>} : vector<4x32xbf16>, vector<32x32xbf16>, vector<4x32xf32> -> vector<4x32xf32>
    %117 = arith.truncf %112 : vector<4x32xf32> to vector<4x32xbf16>
    %c1_120 = arith.constant 1 : index
    %c0_121 = arith.constant 0 : index
    %c0_122 = arith.constant 0 : index
    %c0_123 = arith.constant 0 : index
    %118 = vector.load %arg7[%c1_120, %c0_121, %c0_122, %c0_123] : memref<4x4x32x32xbf16, #tpu.memory_space<vmem>>, vector<1x1x32x32xbf16>
    %119 = vector.shape_cast %118 : vector<1x1x32x32xbf16> to vector<32x32xbf16>
    %cst_124 = arith.constant dense<0.000000e+00> : vector<4x32xf32>
    %120 = tpu.matmul %117, %119, %cst_124 {dimension_numbers = #tpu.dot_dimension_numbers<[1], [0], [0], [1], [0, 0, 1, 1], [], []>} : vector<4x32xbf16>, vector<32x32xbf16>, vector<4x32xf32> -> vector<4x32xf32>
    %121 = arith.addf %116, %120 : vector<4x32xf32>
    %c0_125 = arith.constant 0 : index
    %c0_126 = arith.constant 0 : index
    %c0_127 = arith.constant 0 : index
    %122 = vector.load %arg5[%c0_125, %c0_126, %c0_127] : memref<4x32x4xf32, #tpu.memory_space<vmem>>, vector<1x32x4xf32>
    %123 = vector.shape_cast %122 : vector<1x32x4xf32> to vector<32x4xf32>
    %cst_128 = arith.constant dense<0.000000e+00> : vector<32x32xf32>
    %124 = tpu.matmul %123, %121, %cst_128 {dimension_numbers = #tpu.dot_dimension_numbers<[1], [0], [0], [1], [0, 0, 1, 1], [], []>} : vector<32x4xf32>, vector<4x32xf32>, vector<32x32xf32> -> vector<32x32xf32>
    %125 = arith.addf %106, %124 : vector<32x32xf32>
    %c1_129 = arith.constant 1 : index
    %c0_130 = arith.constant 0 : index
    %c0_131 = arith.constant 0 : index
    %126 = vector.load %arg3[%c1_129, %c0_130, %c0_131] : memref<4x4x32xf32, #tpu.memory_space<vmem>>, vector<1x4x32xf32>
    %127 = vector.shape_cast %126 : vector<1x4x32xf32> to vector<4x32xf32>
    %cst_132 = arith.constant dense<0.000000e+00> : vector<4x32xf32>
    %128 = tpu.matmul %127, %98, %cst_132 {dimension_numbers = #tpu.dot_dimension_numbers<[1], [0], [0], [1], [0, 0, 1, 1], [], []>} : vector<4x32xf32>, vector<32x32xf32>, vector<4x32xf32> -> vector<4x32xf32>
    %c1_133 = arith.constant 1 : index
    %c0_134 = arith.constant 0 : index
    %c0_135 = arith.constant 0 : index
    %129 = vector.load %arg4[%c1_133, %c0_134, %c0_135] : memref<4x4x32xf32, #tpu.memory_space<vmem>>, vector<1x4x32xf32>
    %130 = vector.shape_cast %129 : vector<1x4x32xf32> to vector<4x32xf32>
    %cst_136 = arith.constant dense<0.000000e+00> : vector<4x32xf32>
    %131 = tpu.matmul %130, %98, %cst_136 {dimension_numbers = #tpu.dot_dimension_numbers<[1], [0], [0], [1], [0, 0, 1, 1], [], []>} : vector<4x32xf32>, vector<32x32xf32>, vector<4x32xf32> -> vector<4x32xf32>
    %132 = arith.truncf %128 : vector<4x32xf32> to vector<4x32xbf16>
    %c1_137 = arith.constant 1 : index
    %c1_138 = arith.constant 1 : index
    %c0_139 = arith.constant 0 : index
    %c0_140 = arith.constant 0 : index
    %133 = vector.load %arg6[%c1_137, %c1_138, %c0_139, %c0_140] : memref<4x4x32x32xbf16, #tpu.memory_space<vmem>>, vector<1x1x32x32xbf16>
    %134 = vector.shape_cast %133 : vector<1x1x32x32xbf16> to vector<32x32xbf16>
    %cst_141 = arith.constant dense<0.000000e+00> : vector<4x32xf32>
    %135 = tpu.matmul %132, %134, %cst_141 {dimension_numbers = #tpu.dot_dimension_numbers<[1], [0], [0], [1], [0, 0, 1, 1], [], []>} : vector<4x32xbf16>, vector<32x32xbf16>, vector<4x32xf32> -> vector<4x32xf32>
    %136 = arith.truncf %131 : vector<4x32xf32> to vector<4x32xbf16>
    %c1_142 = arith.constant 1 : index
    %c1_143 = arith.constant 1 : index
    %c0_144 = arith.constant 0 : index
    %c0_145 = arith.constant 0 : index
    %137 = vector.load %arg7[%c1_142, %c1_143, %c0_144, %c0_145] : memref<4x4x32x32xbf16, #tpu.memory_space<vmem>>, vector<1x1x32x32xbf16>
    %138 = vector.shape_cast %137 : vector<1x1x32x32xbf16> to vector<32x32xbf16>
    %cst_146 = arith.constant dense<0.000000e+00> : vector<4x32xf32>
    %139 = tpu.matmul %136, %138, %cst_146 {dimension_numbers = #tpu.dot_dimension_numbers<[1], [0], [0], [1], [0, 0, 1, 1], [], []>} : vector<4x32xbf16>, vector<32x32xbf16>, vector<4x32xf32> -> vector<4x32xf32>
    %140 = arith.addf %135, %139 : vector<4x32xf32>
    %c1_147 = arith.constant 1 : index
    %c0_148 = arith.constant 0 : index
    %c0_149 = arith.constant 0 : index
    %141 = vector.load %arg5[%c1_147, %c0_148, %c0_149] : memref<4x32x4xf32, #tpu.memory_space<vmem>>, vector<1x32x4xf32>
    %142 = vector.shape_cast %141 : vector<1x32x4xf32> to vector<32x4xf32>
    %cst_150 = arith.constant dense<0.000000e+00> : vector<32x32xf32>
    %143 = tpu.matmul %142, %140, %cst_150 {dimension_numbers = #tpu.dot_dimension_numbers<[1], [0], [0], [1], [0, 0, 1, 1], [], []>} : vector<32x4xf32>, vector<4x32xf32>, vector<32x32xf32> -> vector<32x32xf32>
    %144 = arith.addf %125, %143 : vector<32x32xf32>
    %c2_151 = arith.constant 2 : index
    %c0_152 = arith.constant 0 : index
    %c0_153 = arith.constant 0 : index
    %145 = vector.load %arg3[%c2_151, %c0_152, %c0_153] : memref<4x4x32xf32, #tpu.memory_space<vmem>>, vector<1x4x32xf32>
    %146 = vector.shape_cast %145 : vector<1x4x32xf32> to vector<4x32xf32>
    %cst_154 = arith.constant dense<0.000000e+00> : vector<4x32xf32>
    %147 = tpu.matmul %146, %98, %cst_154 {dimension_numbers = #tpu.dot_dimension_numbers<[1], [0], [0], [1], [0, 0, 1, 1], [], []>} : vector<4x32xf32>, vector<32x32xf32>, vector<4x32xf32> -> vector<4x32xf32>
    %c2_155 = arith.constant 2 : index
    %c0_156 = arith.constant 0 : index
    %c0_157 = arith.constant 0 : index
    %148 = vector.load %arg4[%c2_155, %c0_156, %c0_157] : memref<4x4x32xf32, #tpu.memory_space<vmem>>, vector<1x4x32xf32>
    %149 = vector.shape_cast %148 : vector<1x4x32xf32> to vector<4x32xf32>
    %cst_158 = arith.constant dense<0.000000e+00> : vector<4x32xf32>
    %150 = tpu.matmul %149, %98, %cst_158 {dimension_numbers = #tpu.dot_dimension_numbers<[1], [0], [0], [1], [0, 0, 1, 1], [], []>} : vector<4x32xf32>, vector<32x32xf32>, vector<4x32xf32> -> vector<4x32xf32>
    %151 = arith.truncf %147 : vector<4x32xf32> to vector<4x32xbf16>
    %c1_159 = arith.constant 1 : index
    %c2_160 = arith.constant 2 : index
    %c0_161 = arith.constant 0 : index
    %c0_162 = arith.constant 0 : index
    %152 = vector.load %arg6[%c1_159, %c2_160, %c0_161, %c0_162] : memref<4x4x32x32xbf16, #tpu.memory_space<vmem>>, vector<1x1x32x32xbf16>
    %153 = vector.shape_cast %152 : vector<1x1x32x32xbf16> to vector<32x32xbf16>
    %cst_163 = arith.constant dense<0.000000e+00> : vector<4x32xf32>
    %154 = tpu.matmul %151, %153, %cst_163 {dimension_numbers = #tpu.dot_dimension_numbers<[1], [0], [0], [1], [0, 0, 1, 1], [], []>} : vector<4x32xbf16>, vector<32x32xbf16>, vector<4x32xf32> -> vector<4x32xf32>
    %155 = arith.truncf %150 : vector<4x32xf32> to vector<4x32xbf16>
    %c1_164 = arith.constant 1 : index
    %c2_165 = arith.constant 2 : index
    %c0_166 = arith.constant 0 : index
    %c0_167 = arith.constant 0 : index
    %156 = vector.load %arg7[%c1_164, %c2_165, %c0_166, %c0_167] : memref<4x4x32x32xbf16, #tpu.memory_space<vmem>>, vector<1x1x32x32xbf16>
    %157 = vector.shape_cast %156 : vector<1x1x32x32xbf16> to vector<32x32xbf16>
    %cst_168 = arith.constant dense<0.000000e+00> : vector<4x32xf32>
    %158 = tpu.matmul %155, %157, %cst_168 {dimension_numbers = #tpu.dot_dimension_numbers<[1], [0], [0], [1], [0, 0, 1, 1], [], []>} : vector<4x32xbf16>, vector<32x32xbf16>, vector<4x32xf32> -> vector<4x32xf32>
    %159 = arith.addf %154, %158 : vector<4x32xf32>
    %c2_169 = arith.constant 2 : index
    %c0_170 = arith.constant 0 : index
    %c0_171 = arith.constant 0 : index
    %160 = vector.load %arg5[%c2_169, %c0_170, %c0_171] : memref<4x32x4xf32, #tpu.memory_space<vmem>>, vector<1x32x4xf32>
    %161 = vector.shape_cast %160 : vector<1x32x4xf32> to vector<32x4xf32>
    %cst_172 = arith.constant dense<0.000000e+00> : vector<32x32xf32>
    %162 = tpu.matmul %161, %159, %cst_172 {dimension_numbers = #tpu.dot_dimension_numbers<[1], [0], [0], [1], [0, 0, 1, 1], [], []>} : vector<32x4xf32>, vector<4x32xf32>, vector<32x32xf32> -> vector<32x32xf32>
    %163 = arith.addf %144, %162 : vector<32x32xf32>
    %c3_173 = arith.constant 3 : index
    %c0_174 = arith.constant 0 : index
    %c0_175 = arith.constant 0 : index
    %164 = vector.load %arg3[%c3_173, %c0_174, %c0_175] : memref<4x4x32xf32, #tpu.memory_space<vmem>>, vector<1x4x32xf32>
    %165 = vector.shape_cast %164 : vector<1x4x32xf32> to vector<4x32xf32>
    %cst_176 = arith.constant dense<0.000000e+00> : vector<4x32xf32>
    %166 = tpu.matmul %165, %98, %cst_176 {dimension_numbers = #tpu.dot_dimension_numbers<[1], [0], [0], [1], [0, 0, 1, 1], [], []>} : vector<4x32xf32>, vector<32x32xf32>, vector<4x32xf32> -> vector<4x32xf32>
    %c3_177 = arith.constant 3 : index
    %c0_178 = arith.constant 0 : index
    %c0_179 = arith.constant 0 : index
    %167 = vector.load %arg4[%c3_177, %c0_178, %c0_179] : memref<4x4x32xf32, #tpu.memory_space<vmem>>, vector<1x4x32xf32>
    %168 = vector.shape_cast %167 : vector<1x4x32xf32> to vector<4x32xf32>
    %cst_180 = arith.constant dense<0.000000e+00> : vector<4x32xf32>
    %169 = tpu.matmul %168, %98, %cst_180 {dimension_numbers = #tpu.dot_dimension_numbers<[1], [0], [0], [1], [0, 0, 1, 1], [], []>} : vector<4x32xf32>, vector<32x32xf32>, vector<4x32xf32> -> vector<4x32xf32>
    %170 = arith.truncf %166 : vector<4x32xf32> to vector<4x32xbf16>
    %c1_181 = arith.constant 1 : index
    %c3_182 = arith.constant 3 : index
    %c0_183 = arith.constant 0 : index
    %c0_184 = arith.constant 0 : index
    %171 = vector.load %arg6[%c1_181, %c3_182, %c0_183, %c0_184] : memref<4x4x32x32xbf16, #tpu.memory_space<vmem>>, vector<1x1x32x32xbf16>
    %172 = vector.shape_cast %171 : vector<1x1x32x32xbf16> to vector<32x32xbf16>
    %cst_185 = arith.constant dense<0.000000e+00> : vector<4x32xf32>
    %173 = tpu.matmul %170, %172, %cst_185 {dimension_numbers = #tpu.dot_dimension_numbers<[1], [0], [0], [1], [0, 0, 1, 1], [], []>} : vector<4x32xbf16>, vector<32x32xbf16>, vector<4x32xf32> -> vector<4x32xf32>
    %174 = arith.truncf %169 : vector<4x32xf32> to vector<4x32xbf16>
    %c1_186 = arith.constant 1 : index
    %c3_187 = arith.constant 3 : index
    %c0_188 = arith.constant 0 : index
    %c0_189 = arith.constant 0 : index
    %175 = vector.load %arg7[%c1_186, %c3_187, %c0_188, %c0_189] : memref<4x4x32x32xbf16, #tpu.memory_space<vmem>>, vector<1x1x32x32xbf16>
    %176 = vector.shape_cast %175 : vector<1x1x32x32xbf16> to vector<32x32xbf16>
    %cst_190 = arith.constant dense<0.000000e+00> : vector<4x32xf32>
    %177 = tpu.matmul %174, %176, %cst_190 {dimension_numbers = #tpu.dot_dimension_numbers<[1], [0], [0], [1], [0, 0, 1, 1], [], []>} : vector<4x32xbf16>, vector<32x32xbf16>, vector<4x32xf32> -> vector<4x32xf32>
    %178 = arith.addf %173, %177 : vector<4x32xf32>
    %c3_191 = arith.constant 3 : index
    %c0_192 = arith.constant 0 : index
    %c0_193 = arith.constant 0 : index
    %179 = vector.load %arg5[%c3_191, %c0_192, %c0_193] : memref<4x32x4xf32, #tpu.memory_space<vmem>>, vector<1x32x4xf32>
    %180 = vector.shape_cast %179 : vector<1x32x4xf32> to vector<32x4xf32>
    %cst_194 = arith.constant dense<0.000000e+00> : vector<32x32xf32>
    %181 = tpu.matmul %180, %178, %cst_194 {dimension_numbers = #tpu.dot_dimension_numbers<[1], [0], [0], [1], [0, 0, 1, 1], [], []>} : vector<32x4xf32>, vector<4x32xf32>, vector<32x32xf32> -> vector<32x32xf32>
    %182 = arith.addf %163, %181 : vector<32x32xf32>
    %cst_195 = arith.constant 5.000000e-01 : f32
    %183 = vector.broadcast %cst_195 : f32 to vector<32x32xf32>
    %184 = arith.mulf %183, %182 : vector<32x32xf32>
    %cst_196 = arith.constant 0.707106769 : f32
    %185 = vector.broadcast %cst_196 : f32 to vector<32x32xf32>
    %186 = arith.mulf %182, %185 : vector<32x32xf32>
    %187 = math.erf %186 : vector<32x32xf32>
    %cst_197 = arith.constant 1.000000e+00 : f32
    %188 = vector.broadcast %cst_197 : f32 to vector<32x32xf32>
    %189 = arith.addf %188, %187 : vector<32x32xf32>
    %190 = arith.mulf %184, %189 : vector<32x32xf32>
    %191 = arith.truncf %190 : vector<32x32xf32> to vector<32x32xbf16>
    %c2_198 = arith.constant 2 : index
    %c0_199 = arith.constant 0 : index
    %c0_200 = arith.constant 0 : index
    %192 = vector.load %arg8[%c2_198, %c0_199, %c0_200] : memref<4x32x32xbf16, #tpu.memory_space<vmem>>, vector<1x32x32xbf16>
    %193 = vector.shape_cast %192 : vector<1x32x32xbf16> to vector<32x32xbf16>
    %cst_201 = arith.constant dense<0.000000e+00> : vector<32x32xf32>
    %194 = tpu.matmul %191, %193, %cst_201 {dimension_numbers = #tpu.dot_dimension_numbers<[1], [0], [0], [1], [0, 0, 1, 1], [], []>} : vector<32x32xbf16>, vector<32x32xbf16>, vector<32x32xf32> -> vector<32x32xf32>
    %c2_202 = arith.constant 2 : index
    %c0_203 = arith.constant 0 : index
    %c0_204 = arith.constant 0 : index
    %195 = vector.load %arg9[%c2_202, %c0_203, %c0_204] : memref<4x1x32xf32, #tpu.memory_space<vmem>>, vector<1x1x32xf32>
    %196 = vector.shape_cast %195 : vector<1x1x32xf32> to vector<1x32xf32>
    %197 = vector.broadcast %196 : vector<1x32xf32> to vector<32x32xf32>
    %198 = arith.addf %194, %197 : vector<32x32xf32>
    %c0_205 = arith.constant 0 : index
    %c0_206 = arith.constant 0 : index
    %c0_207 = arith.constant 0 : index
    %199 = vector.load %arg3[%c0_205, %c0_206, %c0_207] : memref<4x4x32xf32, #tpu.memory_space<vmem>>, vector<1x4x32xf32>
    %200 = vector.shape_cast %199 : vector<1x4x32xf32> to vector<4x32xf32>
    %cst_208 = arith.constant dense<0.000000e+00> : vector<4x32xf32>
    %201 = tpu.matmul %200, %190, %cst_208 {dimension_numbers = #tpu.dot_dimension_numbers<[1], [0], [0], [1], [0, 0, 1, 1], [], []>} : vector<4x32xf32>, vector<32x32xf32>, vector<4x32xf32> -> vector<4x32xf32>
    %c0_209 = arith.constant 0 : index
    %c0_210 = arith.constant 0 : index
    %c0_211 = arith.constant 0 : index
    %202 = vector.load %arg4[%c0_209, %c0_210, %c0_211] : memref<4x4x32xf32, #tpu.memory_space<vmem>>, vector<1x4x32xf32>
    %203 = vector.shape_cast %202 : vector<1x4x32xf32> to vector<4x32xf32>
    %cst_212 = arith.constant dense<0.000000e+00> : vector<4x32xf32>
    %204 = tpu.matmul %203, %190, %cst_212 {dimension_numbers = #tpu.dot_dimension_numbers<[1], [0], [0], [1], [0, 0, 1, 1], [], []>} : vector<4x32xf32>, vector<32x32xf32>, vector<4x32xf32> -> vector<4x32xf32>
    %205 = arith.truncf %201 : vector<4x32xf32> to vector<4x32xbf16>
    %c2_213 = arith.constant 2 : index
    %c0_214 = arith.constant 0 : index
    %c0_215 = arith.constant 0 : index
    %c0_216 = arith.constant 0 : index
    %206 = vector.load %arg6[%c2_213, %c0_214, %c0_215, %c0_216] : memref<4x4x32x32xbf16, #tpu.memory_space<vmem>>, vector<1x1x32x32xbf16>
    %207 = vector.shape_cast %206 : vector<1x1x32x32xbf16> to vector<32x32xbf16>
    %cst_217 = arith.constant dense<0.000000e+00> : vector<4x32xf32>
    %208 = tpu.matmul %205, %207, %cst_217 {dimension_numbers = #tpu.dot_dimension_numbers<[1], [0], [0], [1], [0, 0, 1, 1], [], []>} : vector<4x32xbf16>, vector<32x32xbf16>, vector<4x32xf32> -> vector<4x32xf32>
    %209 = arith.truncf %204 : vector<4x32xf32> to vector<4x32xbf16>
    %c2_218 = arith.constant 2 : index
    %c0_219 = arith.constant 0 : index
    %c0_220 = arith.constant 0 : index
    %c0_221 = arith.constant 0 : index
    %210 = vector.load %arg7[%c2_218, %c0_219, %c0_220, %c0_221] : memref<4x4x32x32xbf16, #tpu.memory_space<vmem>>, vector<1x1x32x32xbf16>
    %211 = vector.shape_cast %210 : vector<1x1x32x32xbf16> to vector<32x32xbf16>
    %cst_222 = arith.constant dense<0.000000e+00> : vector<4x32xf32>
    %212 = tpu.matmul %209, %211, %cst_222 {dimension_numbers = #tpu.dot_dimension_numbers<[1], [0], [0], [1], [0, 0, 1, 1], [], []>} : vector<4x32xbf16>, vector<32x32xbf16>, vector<4x32xf32> -> vector<4x32xf32>
    %213 = arith.addf %208, %212 : vector<4x32xf32>
    %c0_223 = arith.constant 0 : index
    %c0_224 = arith.constant 0 : index
    %c0_225 = arith.constant 0 : index
    %214 = vector.load %arg5[%c0_223, %c0_224, %c0_225] : memref<4x32x4xf32, #tpu.memory_space<vmem>>, vector<1x32x4xf32>
    %215 = vector.shape_cast %214 : vector<1x32x4xf32> to vector<32x4xf32>
    %cst_226 = arith.constant dense<0.000000e+00> : vector<32x32xf32>
    %216 = tpu.matmul %215, %213, %cst_226 {dimension_numbers = #tpu.dot_dimension_numbers<[1], [0], [0], [1], [0, 0, 1, 1], [], []>} : vector<32x4xf32>, vector<4x32xf32>, vector<32x32xf32> -> vector<32x32xf32>
    %217 = arith.addf %198, %216 : vector<32x32xf32>
    %c1_227 = arith.constant 1 : index
    %c0_228 = arith.constant 0 : index
    %c0_229 = arith.constant 0 : index
    %218 = vector.load %arg3[%c1_227, %c0_228, %c0_229] : memref<4x4x32xf32, #tpu.memory_space<vmem>>, vector<1x4x32xf32>
    %219 = vector.shape_cast %218 : vector<1x4x32xf32> to vector<4x32xf32>
    %cst_230 = arith.constant dense<0.000000e+00> : vector<4x32xf32>
    %220 = tpu.matmul %219, %190, %cst_230 {dimension_numbers = #tpu.dot_dimension_numbers<[1], [0], [0], [1], [0, 0, 1, 1], [], []>} : vector<4x32xf32>, vector<32x32xf32>, vector<4x32xf32> -> vector<4x32xf32>
    %c1_231 = arith.constant 1 : index
    %c0_232 = arith.constant 0 : index
    %c0_233 = arith.constant 0 : index
    %221 = vector.load %arg4[%c1_231, %c0_232, %c0_233] : memref<4x4x32xf32, #tpu.memory_space<vmem>>, vector<1x4x32xf32>
    %222 = vector.shape_cast %221 : vector<1x4x32xf32> to vector<4x32xf32>
    %cst_234 = arith.constant dense<0.000000e+00> : vector<4x32xf32>
    %223 = tpu.matmul %222, %190, %cst_234 {dimension_numbers = #tpu.dot_dimension_numbers<[1], [0], [0], [1], [0, 0, 1, 1], [], []>} : vector<4x32xf32>, vector<32x32xf32>, vector<4x32xf32> -> vector<4x32xf32>
    %224 = arith.truncf %220 : vector<4x32xf32> to vector<4x32xbf16>
    %c2_235 = arith.constant 2 : index
    %c1_236 = arith.constant 1 : index
    %c0_237 = arith.constant 0 : index
    %c0_238 = arith.constant 0 : index
    %225 = vector.load %arg6[%c2_235, %c1_236, %c0_237, %c0_238] : memref<4x4x32x32xbf16, #tpu.memory_space<vmem>>, vector<1x1x32x32xbf16>
    %226 = vector.shape_cast %225 : vector<1x1x32x32xbf16> to vector<32x32xbf16>
    %cst_239 = arith.constant dense<0.000000e+00> : vector<4x32xf32>
    %227 = tpu.matmul %224, %226, %cst_239 {dimension_numbers = #tpu.dot_dimension_numbers<[1], [0], [0], [1], [0, 0, 1, 1], [], []>} : vector<4x32xbf16>, vector<32x32xbf16>, vector<4x32xf32> -> vector<4x32xf32>
    %228 = arith.truncf %223 : vector<4x32xf32> to vector<4x32xbf16>
    %c2_240 = arith.constant 2 : index
    %c1_241 = arith.constant 1 : index
    %c0_242 = arith.constant 0 : index
    %c0_243 = arith.constant 0 : index
    %229 = vector.load %arg7[%c2_240, %c1_241, %c0_242, %c0_243] : memref<4x4x32x32xbf16, #tpu.memory_space<vmem>>, vector<1x1x32x32xbf16>
    %230 = vector.shape_cast %229 : vector<1x1x32x32xbf16> to vector<32x32xbf16>
    %cst_244 = arith.constant dense<0.000000e+00> : vector<4x32xf32>
    %231 = tpu.matmul %228, %230, %cst_244 {dimension_numbers = #tpu.dot_dimension_numbers<[1], [0], [0], [1], [0, 0, 1, 1], [], []>} : vector<4x32xbf16>, vector<32x32xbf16>, vector<4x32xf32> -> vector<4x32xf32>
    %232 = arith.addf %227, %231 : vector<4x32xf32>
    %c1_245 = arith.constant 1 : index
    %c0_246 = arith.constant 0 : index
    %c0_247 = arith.constant 0 : index
    %233 = vector.load %arg5[%c1_245, %c0_246, %c0_247] : memref<4x32x4xf32, #tpu.memory_space<vmem>>, vector<1x32x4xf32>
    %234 = vector.shape_cast %233 : vector<1x32x4xf32> to vector<32x4xf32>
    %cst_248 = arith.constant dense<0.000000e+00> : vector<32x32xf32>
    %235 = tpu.matmul %234, %232, %cst_248 {dimension_numbers = #tpu.dot_dimension_numbers<[1], [0], [0], [1], [0, 0, 1, 1], [], []>} : vector<32x4xf32>, vector<4x32xf32>, vector<32x32xf32> -> vector<32x32xf32>
    %236 = arith.addf %217, %235 : vector<32x32xf32>
    %c2_249 = arith.constant 2 : index
    %c0_250 = arith.constant 0 : index
    %c0_251 = arith.constant 0 : index
    %237 = vector.load %arg3[%c2_249, %c0_250, %c0_251] : memref<4x4x32xf32, #tpu.memory_space<vmem>>, vector<1x4x32xf32>
    %238 = vector.shape_cast %237 : vector<1x4x32xf32> to vector<4x32xf32>
    %cst_252 = arith.constant dense<0.000000e+00> : vector<4x32xf32>
    %239 = tpu.matmul %238, %190, %cst_252 {dimension_numbers = #tpu.dot_dimension_numbers<[1], [0], [0], [1], [0, 0, 1, 1], [], []>} : vector<4x32xf32>, vector<32x32xf32>, vector<4x32xf32> -> vector<4x32xf32>
    %c2_253 = arith.constant 2 : index
    %c0_254 = arith.constant 0 : index
    %c0_255 = arith.constant 0 : index
    %240 = vector.load %arg4[%c2_253, %c0_254, %c0_255] : memref<4x4x32xf32, #tpu.memory_space<vmem>>, vector<1x4x32xf32>
    %241 = vector.shape_cast %240 : vector<1x4x32xf32> to vector<4x32xf32>
    %cst_256 = arith.constant dense<0.000000e+00> : vector<4x32xf32>
    %242 = tpu.matmul %241, %190, %cst_256 {dimension_numbers = #tpu.dot_dimension_numbers<[1], [0], [0], [1], [0, 0, 1, 1], [], []>} : vector<4x32xf32>, vector<32x32xf32>, vector<4x32xf32> -> vector<4x32xf32>
    %243 = arith.truncf %239 : vector<4x32xf32> to vector<4x32xbf16>
    %c2_257 = arith.constant 2 : index
    %c2_258 = arith.constant 2 : index
    %c0_259 = arith.constant 0 : index
    %c0_260 = arith.constant 0 : index
    %244 = vector.load %arg6[%c2_257, %c2_258, %c0_259, %c0_260] : memref<4x4x32x32xbf16, #tpu.memory_space<vmem>>, vector<1x1x32x32xbf16>
    %245 = vector.shape_cast %244 : vector<1x1x32x32xbf16> to vector<32x32xbf16>
    %cst_261 = arith.constant dense<0.000000e+00> : vector<4x32xf32>
    %246 = tpu.matmul %243, %245, %cst_261 {dimension_numbers = #tpu.dot_dimension_numbers<[1], [0], [0], [1], [0, 0, 1, 1], [], []>} : vector<4x32xbf16>, vector<32x32xbf16>, vector<4x32xf32> -> vector<4x32xf32>
    %247 = arith.truncf %242 : vector<4x32xf32> to vector<4x32xbf16>
    %c2_262 = arith.constant 2 : index
    %c2_263 = arith.constant 2 : index
    %c0_264 = arith.constant 0 : index
    %c0_265 = arith.constant 0 : index
    %248 = vector.load %arg7[%c2_262, %c2_263, %c0_264, %c0_265] : memref<4x4x32x32xbf16, #tpu.memory_space<vmem>>, vector<1x1x32x32xbf16>
    %249 = vector.shape_cast %248 : vector<1x1x32x32xbf16> to vector<32x32xbf16>
    %cst_266 = arith.constant dense<0.000000e+00> : vector<4x32xf32>
    %250 = tpu.matmul %247, %249, %cst_266 {dimension_numbers = #tpu.dot_dimension_numbers<[1], [0], [0], [1], [0, 0, 1, 1], [], []>} : vector<4x32xbf16>, vector<32x32xbf16>, vector<4x32xf32> -> vector<4x32xf32>
    %251 = arith.addf %246, %250 : vector<4x32xf32>
    %c2_267 = arith.constant 2 : index
    %c0_268 = arith.constant 0 : index
    %c0_269 = arith.constant 0 : index
    %252 = vector.load %arg5[%c2_267, %c0_268, %c0_269] : memref<4x32x4xf32, #tpu.memory_space<vmem>>, vector<1x32x4xf32>
    %253 = vector.shape_cast %252 : vector<1x32x4xf32> to vector<32x4xf32>
    %cst_270 = arith.constant dense<0.000000e+00> : vector<32x32xf32>
    %254 = tpu.matmul %253, %251, %cst_270 {dimension_numbers = #tpu.dot_dimension_numbers<[1], [0], [0], [1], [0, 0, 1, 1], [], []>} : vector<32x4xf32>, vector<4x32xf32>, vector<32x32xf32> -> vector<32x32xf32>
    %255 = arith.addf %236, %254 : vector<32x32xf32>
    %c3_271 = arith.constant 3 : index
    %c0_272 = arith.constant 0 : index
    %c0_273 = arith.constant 0 : index
    %256 = vector.load %arg3[%c3_271, %c0_272, %c0_273] : memref<4x4x32xf32, #tpu.memory_space<vmem>>, vector<1x4x32xf32>
    %257 = vector.shape_cast %256 : vector<1x4x32xf32> to vector<4x32xf32>
    %cst_274 = arith.constant dense<0.000000e+00> : vector<4x32xf32>
    %258 = tpu.matmul %257, %190, %cst_274 {dimension_numbers = #tpu.dot_dimension_numbers<[1], [0], [0], [1], [0, 0, 1, 1], [], []>} : vector<4x32xf32>, vector<32x32xf32>, vector<4x32xf32> -> vector<4x32xf32>
    %c3_275 = arith.constant 3 : index
    %c0_276 = arith.constant 0 : index
    %c0_277 = arith.constant 0 : index
    %259 = vector.load %arg4[%c3_275, %c0_276, %c0_277] : memref<4x4x32xf32, #tpu.memory_space<vmem>>, vector<1x4x32xf32>
    %260 = vector.shape_cast %259 : vector<1x4x32xf32> to vector<4x32xf32>
    %cst_278 = arith.constant dense<0.000000e+00> : vector<4x32xf32>
    %261 = tpu.matmul %260, %190, %cst_278 {dimension_numbers = #tpu.dot_dimension_numbers<[1], [0], [0], [1], [0, 0, 1, 1], [], []>} : vector<4x32xf32>, vector<32x32xf32>, vector<4x32xf32> -> vector<4x32xf32>
    %262 = arith.truncf %258 : vector<4x32xf32> to vector<4x32xbf16>
    %c2_279 = arith.constant 2 : index
    %c3_280 = arith.constant 3 : index
    %c0_281 = arith.constant 0 : index
    %c0_282 = arith.constant 0 : index
    %263 = vector.load %arg6[%c2_279, %c3_280, %c0_281, %c0_282] : memref<4x4x32x32xbf16, #tpu.memory_space<vmem>>, vector<1x1x32x32xbf16>
    %264 = vector.shape_cast %263 : vector<1x1x32x32xbf16> to vector<32x32xbf16>
    %cst_283 = arith.constant dense<0.000000e+00> : vector<4x32xf32>
    %265 = tpu.matmul %262, %264, %cst_283 {dimension_numbers = #tpu.dot_dimension_numbers<[1], [0], [0], [1], [0, 0, 1, 1], [], []>} : vector<4x32xbf16>, vector<32x32xbf16>, vector<4x32xf32> -> vector<4x32xf32>
    %266 = arith.truncf %261 : vector<4x32xf32> to vector<4x32xbf16>
    %c2_284 = arith.constant 2 : index
    %c3_285 = arith.constant 3 : index
    %c0_286 = arith.constant 0 : index
    %c0_287 = arith.constant 0 : index
    %267 = vector.load %arg7[%c2_284, %c3_285, %c0_286, %c0_287] : memref<4x4x32x32xbf16, #tpu.memory_space<vmem>>, vector<1x1x32x32xbf16>
    %268 = vector.shape_cast %267 : vector<1x1x32x32xbf16> to vector<32x32xbf16>
    %cst_288 = arith.constant dense<0.000000e+00> : vector<4x32xf32>
    %269 = tpu.matmul %266, %268, %cst_288 {dimension_numbers = #tpu.dot_dimension_numbers<[1], [0], [0], [1], [0, 0, 1, 1], [], []>} : vector<4x32xbf16>, vector<32x32xbf16>, vector<4x32xf32> -> vector<4x32xf32>
    %270 = arith.addf %265, %269 : vector<4x32xf32>
    %c3_289 = arith.constant 3 : index
    %c0_290 = arith.constant 0 : index
    %c0_291 = arith.constant 0 : index
    %271 = vector.load %arg5[%c3_289, %c0_290, %c0_291] : memref<4x32x4xf32, #tpu.memory_space<vmem>>, vector<1x32x4xf32>
    %272 = vector.shape_cast %271 : vector<1x32x4xf32> to vector<32x4xf32>
    %cst_292 = arith.constant dense<0.000000e+00> : vector<32x32xf32>
    %273 = tpu.matmul %272, %270, %cst_292 {dimension_numbers = #tpu.dot_dimension_numbers<[1], [0], [0], [1], [0, 0, 1, 1], [], []>} : vector<32x4xf32>, vector<4x32xf32>, vector<32x32xf32> -> vector<32x32xf32>
    %274 = arith.addf %255, %273 : vector<32x32xf32>
    %cst_293 = arith.constant 5.000000e-01 : f32
    %275 = vector.broadcast %cst_293 : f32 to vector<32x32xf32>
    %276 = arith.mulf %275, %274 : vector<32x32xf32>
    %cst_294 = arith.constant 0.707106769 : f32
    %277 = vector.broadcast %cst_294 : f32 to vector<32x32xf32>
    %278 = arith.mulf %274, %277 : vector<32x32xf32>
    %279 = math.erf %278 : vector<32x32xf32>
    %cst_295 = arith.constant 1.000000e+00 : f32
    %280 = vector.broadcast %cst_295 : f32 to vector<32x32xf32>
    %281 = arith.addf %280, %279 : vector<32x32xf32>
    %282 = arith.mulf %276, %281 : vector<32x32xf32>
    %283 = arith.truncf %282 : vector<32x32xf32> to vector<32x32xbf16>
    %c3_296 = arith.constant 3 : index
    %c0_297 = arith.constant 0 : index
    %c0_298 = arith.constant 0 : index
    %284 = vector.load %arg8[%c3_296, %c0_297, %c0_298] : memref<4x32x32xbf16, #tpu.memory_space<vmem>>, vector<1x32x32xbf16>
    %285 = vector.shape_cast %284 : vector<1x32x32xbf16> to vector<32x32xbf16>
    %cst_299 = arith.constant dense<0.000000e+00> : vector<32x32xf32>
    %286 = tpu.matmul %283, %285, %cst_299 {dimension_numbers = #tpu.dot_dimension_numbers<[1], [0], [0], [1], [0, 0, 1, 1], [], []>} : vector<32x32xbf16>, vector<32x32xbf16>, vector<32x32xf32> -> vector<32x32xf32>
    %c3_300 = arith.constant 3 : index
    %c0_301 = arith.constant 0 : index
    %c0_302 = arith.constant 0 : index
    %287 = vector.load %arg9[%c3_300, %c0_301, %c0_302] : memref<4x1x32xf32, #tpu.memory_space<vmem>>, vector<1x1x32xf32>
    %288 = vector.shape_cast %287 : vector<1x1x32xf32> to vector<1x32xf32>
    %289 = vector.broadcast %288 : vector<1x32xf32> to vector<32x32xf32>
    %290 = arith.addf %286, %289 : vector<32x32xf32>
    %c0_303 = arith.constant 0 : index
    %c0_304 = arith.constant 0 : index
    %c0_305 = arith.constant 0 : index
    %291 = vector.load %arg3[%c0_303, %c0_304, %c0_305] : memref<4x4x32xf32, #tpu.memory_space<vmem>>, vector<1x4x32xf32>
    %292 = vector.shape_cast %291 : vector<1x4x32xf32> to vector<4x32xf32>
    %cst_306 = arith.constant dense<0.000000e+00> : vector<4x32xf32>
    %293 = tpu.matmul %292, %282, %cst_306 {dimension_numbers = #tpu.dot_dimension_numbers<[1], [0], [0], [1], [0, 0, 1, 1], [], []>} : vector<4x32xf32>, vector<32x32xf32>, vector<4x32xf32> -> vector<4x32xf32>
    %c0_307 = arith.constant 0 : index
    %c0_308 = arith.constant 0 : index
    %c0_309 = arith.constant 0 : index
    %294 = vector.load %arg4[%c0_307, %c0_308, %c0_309] : memref<4x4x32xf32, #tpu.memory_space<vmem>>, vector<1x4x32xf32>
    %295 = vector.shape_cast %294 : vector<1x4x32xf32> to vector<4x32xf32>
    %cst_310 = arith.constant dense<0.000000e+00> : vector<4x32xf32>
    %296 = tpu.matmul %295, %282, %cst_310 {dimension_numbers = #tpu.dot_dimension_numbers<[1], [0], [0], [1], [0, 0, 1, 1], [], []>} : vector<4x32xf32>, vector<32x32xf32>, vector<4x32xf32> -> vector<4x32xf32>
    %297 = arith.truncf %293 : vector<4x32xf32> to vector<4x32xbf16>
    %c3_311 = arith.constant 3 : index
    %c0_312 = arith.constant 0 : index
    %c0_313 = arith.constant 0 : index
    %c0_314 = arith.constant 0 : index
    %298 = vector.load %arg6[%c3_311, %c0_312, %c0_313, %c0_314] : memref<4x4x32x32xbf16, #tpu.memory_space<vmem>>, vector<1x1x32x32xbf16>
    %299 = vector.shape_cast %298 : vector<1x1x32x32xbf16> to vector<32x32xbf16>
    %cst_315 = arith.constant dense<0.000000e+00> : vector<4x32xf32>
    %300 = tpu.matmul %297, %299, %cst_315 {dimension_numbers = #tpu.dot_dimension_numbers<[1], [0], [0], [1], [0, 0, 1, 1], [], []>} : vector<4x32xbf16>, vector<32x32xbf16>, vector<4x32xf32> -> vector<4x32xf32>
    %301 = arith.truncf %296 : vector<4x32xf32> to vector<4x32xbf16>
    %c3_316 = arith.constant 3 : index
    %c0_317 = arith.constant 0 : index
    %c0_318 = arith.constant 0 : index
    %c0_319 = arith.constant 0 : index
    %302 = vector.load %arg7[%c3_316, %c0_317, %c0_318, %c0_319] : memref<4x4x32x32xbf16, #tpu.memory_space<vmem>>, vector<1x1x32x32xbf16>
    %303 = vector.shape_cast %302 : vector<1x1x32x32xbf16> to vector<32x32xbf16>
    %cst_320 = arith.constant dense<0.000000e+00> : vector<4x32xf32>
    %304 = tpu.matmul %301, %303, %cst_320 {dimension_numbers = #tpu.dot_dimension_numbers<[1], [0], [0], [1], [0, 0, 1, 1], [], []>} : vector<4x32xbf16>, vector<32x32xbf16>, vector<4x32xf32> -> vector<4x32xf32>
    %305 = arith.addf %300, %304 : vector<4x32xf32>
    %c0_321 = arith.constant 0 : index
    %c0_322 = arith.constant 0 : index
    %c0_323 = arith.constant 0 : index
    %306 = vector.load %arg5[%c0_321, %c0_322, %c0_323] : memref<4x32x4xf32, #tpu.memory_space<vmem>>, vector<1x32x4xf32>
    %307 = vector.shape_cast %306 : vector<1x32x4xf32> to vector<32x4xf32>
    %cst_324 = arith.constant dense<0.000000e+00> : vector<32x32xf32>
    %308 = tpu.matmul %307, %305, %cst_324 {dimension_numbers = #tpu.dot_dimension_numbers<[1], [0], [0], [1], [0, 0, 1, 1], [], []>} : vector<32x4xf32>, vector<4x32xf32>, vector<32x32xf32> -> vector<32x32xf32>
    %309 = arith.addf %290, %308 : vector<32x32xf32>
    %c1_325 = arith.constant 1 : index
    %c0_326 = arith.constant 0 : index
    %c0_327 = arith.constant 0 : index
    %310 = vector.load %arg3[%c1_325, %c0_326, %c0_327] : memref<4x4x32xf32, #tpu.memory_space<vmem>>, vector<1x4x32xf32>
    %311 = vector.shape_cast %310 : vector<1x4x32xf32> to vector<4x32xf32>
    %cst_328 = arith.constant dense<0.000000e+00> : vector<4x32xf32>
    %312 = tpu.matmul %311, %282, %cst_328 {dimension_numbers = #tpu.dot_dimension_numbers<[1], [0], [0], [1], [0, 0, 1, 1], [], []>} : vector<4x32xf32>, vector<32x32xf32>, vector<4x32xf32> -> vector<4x32xf32>
    %c1_329 = arith.constant 1 : index
    %c0_330 = arith.constant 0 : index
    %c0_331 = arith.constant 0 : index
    %313 = vector.load %arg4[%c1_329, %c0_330, %c0_331] : memref<4x4x32xf32, #tpu.memory_space<vmem>>, vector<1x4x32xf32>
    %314 = vector.shape_cast %313 : vector<1x4x32xf32> to vector<4x32xf32>
    %cst_332 = arith.constant dense<0.000000e+00> : vector<4x32xf32>
    %315 = tpu.matmul %314, %282, %cst_332 {dimension_numbers = #tpu.dot_dimension_numbers<[1], [0], [0], [1], [0, 0, 1, 1], [], []>} : vector<4x32xf32>, vector<32x32xf32>, vector<4x32xf32> -> vector<4x32xf32>
    %316 = arith.truncf %312 : vector<4x32xf32> to vector<4x32xbf16>
    %c3_333 = arith.constant 3 : index
    %c1_334 = arith.constant 1 : index
    %c0_335 = arith.constant 0 : index
    %c0_336 = arith.constant 0 : index
    %317 = vector.load %arg6[%c3_333, %c1_334, %c0_335, %c0_336] : memref<4x4x32x32xbf16, #tpu.memory_space<vmem>>, vector<1x1x32x32xbf16>
    %318 = vector.shape_cast %317 : vector<1x1x32x32xbf16> to vector<32x32xbf16>
    %cst_337 = arith.constant dense<0.000000e+00> : vector<4x32xf32>
    %319 = tpu.matmul %316, %318, %cst_337 {dimension_numbers = #tpu.dot_dimension_numbers<[1], [0], [0], [1], [0, 0, 1, 1], [], []>} : vector<4x32xbf16>, vector<32x32xbf16>, vector<4x32xf32> -> vector<4x32xf32>
    %320 = arith.truncf %315 : vector<4x32xf32> to vector<4x32xbf16>
    %c3_338 = arith.constant 3 : index
    %c1_339 = arith.constant 1 : index
    %c0_340 = arith.constant 0 : index
    %c0_341 = arith.constant 0 : index
    %321 = vector.load %arg7[%c3_338, %c1_339, %c0_340, %c0_341] : memref<4x4x32x32xbf16, #tpu.memory_space<vmem>>, vector<1x1x32x32xbf16>
    %322 = vector.shape_cast %321 : vector<1x1x32x32xbf16> to vector<32x32xbf16>
    %cst_342 = arith.constant dense<0.000000e+00> : vector<4x32xf32>
    %323 = tpu.matmul %320, %322, %cst_342 {dimension_numbers = #tpu.dot_dimension_numbers<[1], [0], [0], [1], [0, 0, 1, 1], [], []>} : vector<4x32xbf16>, vector<32x32xbf16>, vector<4x32xf32> -> vector<4x32xf32>
    %324 = arith.addf %319, %323 : vector<4x32xf32>
    %c1_343 = arith.constant 1 : index
    %c0_344 = arith.constant 0 : index
    %c0_345 = arith.constant 0 : index
    %325 = vector.load %arg5[%c1_343, %c0_344, %c0_345] : memref<4x32x4xf32, #tpu.memory_space<vmem>>, vector<1x32x4xf32>
    %326 = vector.shape_cast %325 : vector<1x32x4xf32> to vector<32x4xf32>
    %cst_346 = arith.constant dense<0.000000e+00> : vector<32x32xf32>
    %327 = tpu.matmul %326, %324, %cst_346 {dimension_numbers = #tpu.dot_dimension_numbers<[1], [0], [0], [1], [0, 0, 1, 1], [], []>} : vector<32x4xf32>, vector<4x32xf32>, vector<32x32xf32> -> vector<32x32xf32>
    %328 = arith.addf %309, %327 : vector<32x32xf32>
    %c2_347 = arith.constant 2 : index
    %c0_348 = arith.constant 0 : index
    %c0_349 = arith.constant 0 : index
    %329 = vector.load %arg3[%c2_347, %c0_348, %c0_349] : memref<4x4x32xf32, #tpu.memory_space<vmem>>, vector<1x4x32xf32>
    %330 = vector.shape_cast %329 : vector<1x4x32xf32> to vector<4x32xf32>
    %cst_350 = arith.constant dense<0.000000e+00> : vector<4x32xf32>
    %331 = tpu.matmul %330, %282, %cst_350 {dimension_numbers = #tpu.dot_dimension_numbers<[1], [0], [0], [1], [0, 0, 1, 1], [], []>} : vector<4x32xf32>, vector<32x32xf32>, vector<4x32xf32> -> vector<4x32xf32>
    %c2_351 = arith.constant 2 : index
    %c0_352 = arith.constant 0 : index
    %c0_353 = arith.constant 0 : index
    %332 = vector.load %arg4[%c2_351, %c0_352, %c0_353] : memref<4x4x32xf32, #tpu.memory_space<vmem>>, vector<1x4x32xf32>
    %333 = vector.shape_cast %332 : vector<1x4x32xf32> to vector<4x32xf32>
    %cst_354 = arith.constant dense<0.000000e+00> : vector<4x32xf32>
    %334 = tpu.matmul %333, %282, %cst_354 {dimension_numbers = #tpu.dot_dimension_numbers<[1], [0], [0], [1], [0, 0, 1, 1], [], []>} : vector<4x32xf32>, vector<32x32xf32>, vector<4x32xf32> -> vector<4x32xf32>
    %335 = arith.truncf %331 : vector<4x32xf32> to vector<4x32xbf16>
    %c3_355 = arith.constant 3 : index
    %c2_356 = arith.constant 2 : index
    %c0_357 = arith.constant 0 : index
    %c0_358 = arith.constant 0 : index
    %336 = vector.load %arg6[%c3_355, %c2_356, %c0_357, %c0_358] : memref<4x4x32x32xbf16, #tpu.memory_space<vmem>>, vector<1x1x32x32xbf16>
    %337 = vector.shape_cast %336 : vector<1x1x32x32xbf16> to vector<32x32xbf16>
    %cst_359 = arith.constant dense<0.000000e+00> : vector<4x32xf32>
    %338 = tpu.matmul %335, %337, %cst_359 {dimension_numbers = #tpu.dot_dimension_numbers<[1], [0], [0], [1], [0, 0, 1, 1], [], []>} : vector<4x32xbf16>, vector<32x32xbf16>, vector<4x32xf32> -> vector<4x32xf32>
    %339 = arith.truncf %334 : vector<4x32xf32> to vector<4x32xbf16>
    %c3_360 = arith.constant 3 : index
    %c2_361 = arith.constant 2 : index
    %c0_362 = arith.constant 0 : index
    %c0_363 = arith.constant 0 : index
    %340 = vector.load %arg7[%c3_360, %c2_361, %c0_362, %c0_363] : memref<4x4x32x32xbf16, #tpu.memory_space<vmem>>, vector<1x1x32x32xbf16>
    %341 = vector.shape_cast %340 : vector<1x1x32x32xbf16> to vector<32x32xbf16>
    %cst_364 = arith.constant dense<0.000000e+00> : vector<4x32xf32>
    %342 = tpu.matmul %339, %341, %cst_364 {dimension_numbers = #tpu.dot_dimension_numbers<[1], [0], [0], [1], [0, 0, 1, 1], [], []>} : vector<4x32xbf16>, vector<32x32xbf16>, vector<4x32xf32> -> vector<4x32xf32>
    %343 = arith.addf %338, %342 : vector<4x32xf32>
    %c2_365 = arith.constant 2 : index
    %c0_366 = arith.constant 0 : index
    %c0_367 = arith.constant 0 : index
    %344 = vector.load %arg5[%c2_365, %c0_366, %c0_367] : memref<4x32x4xf32, #tpu.memory_space<vmem>>, vector<1x32x4xf32>
    %345 = vector.shape_cast %344 : vector<1x32x4xf32> to vector<32x4xf32>
    %cst_368 = arith.constant dense<0.000000e+00> : vector<32x32xf32>
    %346 = tpu.matmul %345, %343, %cst_368 {dimension_numbers = #tpu.dot_dimension_numbers<[1], [0], [0], [1], [0, 0, 1, 1], [], []>} : vector<32x4xf32>, vector<4x32xf32>, vector<32x32xf32> -> vector<32x32xf32>
    %347 = arith.addf %328, %346 : vector<32x32xf32>
    %c3_369 = arith.constant 3 : index
    %c0_370 = arith.constant 0 : index
    %c0_371 = arith.constant 0 : index
    %348 = vector.load %arg3[%c3_369, %c0_370, %c0_371] : memref<4x4x32xf32, #tpu.memory_space<vmem>>, vector<1x4x32xf32>
    %349 = vector.shape_cast %348 : vector<1x4x32xf32> to vector<4x32xf32>
    %cst_372 = arith.constant dense<0.000000e+00> : vector<4x32xf32>
    %350 = tpu.matmul %349, %282, %cst_372 {dimension_numbers = #tpu.dot_dimension_numbers<[1], [0], [0], [1], [0, 0, 1, 1], [], []>} : vector<4x32xf32>, vector<32x32xf32>, vector<4x32xf32> -> vector<4x32xf32>
    %c3_373 = arith.constant 3 : index
    %c0_374 = arith.constant 0 : index
    %c0_375 = arith.constant 0 : index
    %351 = vector.load %arg4[%c3_373, %c0_374, %c0_375] : memref<4x4x32xf32, #tpu.memory_space<vmem>>, vector<1x4x32xf32>
    %352 = vector.shape_cast %351 : vector<1x4x32xf32> to vector<4x32xf32>
    %cst_376 = arith.constant dense<0.000000e+00> : vector<4x32xf32>
    %353 = tpu.matmul %352, %282, %cst_376 {dimension_numbers = #tpu.dot_dimension_numbers<[1], [0], [0], [1], [0, 0, 1, 1], [], []>} : vector<4x32xf32>, vector<32x32xf32>, vector<4x32xf32> -> vector<4x32xf32>
    %354 = arith.truncf %350 : vector<4x32xf32> to vector<4x32xbf16>
    %c3_377 = arith.constant 3 : index
    %c3_378 = arith.constant 3 : index
    %c0_379 = arith.constant 0 : index
    %c0_380 = arith.constant 0 : index
    %355 = vector.load %arg6[%c3_377, %c3_378, %c0_379, %c0_380] : memref<4x4x32x32xbf16, #tpu.memory_space<vmem>>, vector<1x1x32x32xbf16>
    %356 = vector.shape_cast %355 : vector<1x1x32x32xbf16> to vector<32x32xbf16>
    %cst_381 = arith.constant dense<0.000000e+00> : vector<4x32xf32>
    %357 = tpu.matmul %354, %356, %cst_381 {dimension_numbers = #tpu.dot_dimension_numbers<[1], [0], [0], [1], [0, 0, 1, 1], [], []>} : vector<4x32xbf16>, vector<32x32xbf16>, vector<4x32xf32> -> vector<4x32xf32>
    %358 = arith.truncf %353 : vector<4x32xf32> to vector<4x32xbf16>
    %c3_382 = arith.constant 3 : index
    %c3_383 = arith.constant 3 : index
    %c0_384 = arith.constant 0 : index
    %c0_385 = arith.constant 0 : index
    %359 = vector.load %arg7[%c3_382, %c3_383, %c0_384, %c0_385] : memref<4x4x32x32xbf16, #tpu.memory_space<vmem>>, vector<1x1x32x32xbf16>
    %360 = vector.shape_cast %359 : vector<1x1x32x32xbf16> to vector<32x32xbf16>
    %cst_386 = arith.constant dense<0.000000e+00> : vector<4x32xf32>
    %361 = tpu.matmul %358, %360, %cst_386 {dimension_numbers = #tpu.dot_dimension_numbers<[1], [0], [0], [1], [0, 0, 1, 1], [], []>} : vector<4x32xbf16>, vector<32x32xbf16>, vector<4x32xf32> -> vector<4x32xf32>
    %362 = arith.addf %357, %361 : vector<4x32xf32>
    %c3_387 = arith.constant 3 : index
    %c0_388 = arith.constant 0 : index
    %c0_389 = arith.constant 0 : index
    %363 = vector.load %arg5[%c3_387, %c0_388, %c0_389] : memref<4x32x4xf32, #tpu.memory_space<vmem>>, vector<1x32x4xf32>
    %364 = vector.shape_cast %363 : vector<1x32x4xf32> to vector<32x4xf32>
    %cst_390 = arith.constant dense<0.000000e+00> : vector<32x32xf32>
    %365 = tpu.matmul %364, %362, %cst_390 {dimension_numbers = #tpu.dot_dimension_numbers<[1], [0], [0], [1], [0, 0, 1, 1], [], []>} : vector<32x4xf32>, vector<4x32xf32>, vector<32x32xf32> -> vector<32x32xf32>
    %366 = arith.addf %347, %365 : vector<32x32xf32>
    %367 = arith.truncf %366 : vector<32x32xf32> to vector<32x32xbf16>
    %c0_391 = arith.constant 0 : index
    %c0_392 = arith.constant 0 : index
    %368 = vector.load %arg10[%c0_391, %c0_392] : memref<32x128xbf16, #tpu.memory_space<vmem>>, vector<32x128xbf16>
    %cst_393 = arith.constant dense<0.000000e+00> : vector<32x128xf32>
    %369 = tpu.matmul %367, %368, %cst_393 {dimension_numbers = #tpu.dot_dimension_numbers<[1], [0], [0], [1], [0, 0, 1, 1], [], []>} : vector<32x32xbf16>, vector<32x128xbf16>, vector<32x128xf32> -> vector<32x128xf32>
    %c0_394 = arith.constant 0 : index
    %c0_395 = arith.constant 0 : index
    %370 = vector.load %arg11[%c0_394, %c0_395] : memref<1x128xf32, #tpu.memory_space<vmem>>, vector<1x128xf32>
    %371 = vector.broadcast %370 : vector<1x128xf32> to vector<32x128xf32>
    %372 = arith.addf %369, %371 : vector<32x128xf32>
    %cst_396 = arith.constant 5.000000e-01 : f32
    %373 = vector.broadcast %cst_396 : f32 to vector<32x128xf32>
    %374 = arith.mulf %373, %372 : vector<32x128xf32>
    %cst_397 = arith.constant 0.707106769 : f32
    %375 = vector.broadcast %cst_397 : f32 to vector<32x128xf32>
    %376 = arith.mulf %372, %375 : vector<32x128xf32>
    %377 = math.erf %376 : vector<32x128xf32>
    %cst_398 = arith.constant 1.000000e+00 : f32
    %378 = vector.broadcast %cst_398 : f32 to vector<32x128xf32>
    %379 = arith.addf %378, %377 : vector<32x128xf32>
    %380 = arith.mulf %374, %379 : vector<32x128xf32>
    %381 = arith.truncf %380 : vector<32x128xf32> to vector<32x128xbf16>
    %c0_399 = arith.constant 0 : index
    %c0_400 = arith.constant 0 : index
    %382 = vector.load %arg12[%c0_399, %c0_400] : memref<128x128xbf16, #tpu.memory_space<vmem>>, vector<128x128xbf16>
    %cst_401 = arith.constant dense<0.000000e+00> : vector<32x128xf32>
    %383 = tpu.matmul %381, %382, %cst_401 {dimension_numbers = #tpu.dot_dimension_numbers<[1], [0], [0], [1], [0, 0, 1, 1], [], []>} : vector<32x128xbf16>, vector<128x128xbf16>, vector<32x128xf32> -> vector<32x128xf32>
    %c0_402 = arith.constant 0 : index
    %c0_403 = arith.constant 0 : index
    %384 = vector.load %arg13[%c0_402, %c0_403] : memref<1x128xf32, #tpu.memory_space<vmem>>, vector<1x128xf32>
    %385 = vector.broadcast %384 : vector<1x128xf32> to vector<32x128xf32>
    %386 = arith.addf %383, %385 : vector<32x128xf32>
    %c0_404 = arith.constant 0 : index
    %c0_405 = arith.constant 0 : index
    %387 = vector.load %arg14[%c0_404, %c0_405] : memref<32x128xf32, #tpu.memory_space<vmem>>, vector<32x128xf32>
    tpu.vector_store %arg14[%c0_404, %c0_405], %386 {strides = array<i32>} : memref<32x128xf32, #tpu.memory_space<vmem>>, vector<32x128xf32>,
    return
  }
}

</mosaic_0001>

<llo_original>
// kernel: fno_forward.1
$region0: #{fno_forward.1}
  #allocation0 [shape = 'u32[]', space=smem, size = 0x4, offset = 0x4, fixed_abs, tag = 'smem constant byte address 0x4 - core index']
  #allocation1 [shape = 'u32[144,128]{1,0:T(1,128)}', space=vmem, size = 0x12000, scoped, tag = 'internal scratch']
  %s0 = inlined_call_operand.vmem [shape: f32[32,4], index: 0, kind: input, shape index: {}]
  %s1 = inlined_call_operand.vmem [shape: bf16[4,32], index: 1, kind: input, shape index: {}]
  %s2 = inlined_call_operand.vmem [shape: f32[1,32], index: 2, kind: input, shape index: {}]
  %s3 = inlined_call_operand.hbm [shape: f32[4,4,32], index: 3, kind: input, shape index: {}]
  %s4 = inlined_call_operand.hbm [shape: f32[4,4,32], index: 4, kind: input, shape index: {}]
  %s5 = inlined_call_operand.vmem [shape: f32[4,32,4], index: 5, kind: input, shape index: {}]
  %s6 = inlined_call_operand.vmem [shape: bf16[4,4,32,32], index: 6, kind: input, shape index: {}]
  %s7 = inlined_call_operand.hbm [shape: bf16[4,4,32,32], index: 7, kind: input, shape index: {}]
  %s8 = inlined_call_operand.hbm [shape: bf16[4,32,32], index: 8, kind: input, shape index: {}]
  %s9 = inlined_call_operand.vmem [shape: f32[4,1,32], index: 9, kind: input, shape index: {}]
  %s10 = inlined_call_operand.hbm [shape: bf16[32,128], index: 10, kind: input, shape index: {}]
  %s11 = inlined_call_operand.vmem [shape: f32[1,128], index: 11, kind: input, shape index: {}]
  %s12 = inlined_call_operand.hbm [shape: bf16[128,128], index: 12, kind: input, shape index: {}]
  %s13 = inlined_call_operand.hbm [shape: f32[1,128], index: 13, kind: input, shape index: {}]
  %s14 = inlined_call_operand.vmem [shape: f32[32,128], index: 14, kind: output, shape index: {}]
  %s15 = sld [smem:[#allocation0]]
  $region94: #{fno_forward.1} parent=0
    _
  %s17 = ssub.s32 1, %s15
  %s18 = scalar_select 0, %s17, %s15
  $region1: #{fno_forward.1} parent=0
    #allocation2 [shape = 'u8[8192]{0}', space=vmem, size = 0x2000, scoped, tag = 'input window, operand 3, single buffered']
    #allocation3 [shape = 's32[1]{0}', space=sflag, size = 0x4, scoped, tag = 'scoped memory for fno_forward.1']
    #allocation4 [shape = 'u8[8192]{0}', space=vmem, size = 0x2000, scoped, tag = 'input window, operand 4, single buffered']
    #allocation5 [shape = 's32[1]{0}', space=sflag, size = 0x4, scoped, tag = 'scoped memory for fno_forward.1']
    #allocation6 [shape = 'u8[131072]{0}', space=vmem, size = 0x20000, scoped, tag = 'input window, operand 7, single buffered']
    #allocation7 [shape = 'u8[32768]{0}', space=vmem, size = 0x8000, scoped, tag = 'input window, operand 8, single buffered']
    #allocation8 [shape = 's32[1]{0}', space=sflag, size = 0x4, scoped, tag = 'scoped memory for fno_forward.1']
    #allocation9 [shape = 'u8[8192]{0}', space=vmem, size = 0x2000, scoped, tag = 'input window, operand 10, single buffered']
    #allocation10 [shape = 'u8[32768]{0}', space=vmem, size = 0x8000, scoped, tag = 'input window, operand 12, single buffered']
    #allocation11 [shape = 's32[1]{0}', space=sflag, size = 0x4, scoped, tag = 'scoped memory for fno_forward.1']
    #allocation12 [shape = 'u8[512]{0}', space=vmem, size = 0x400, scoped, tag = 'input window, operand 13, single buffered']
    %19 = vsyncpa [#allocation3], 0
    %20 = vsyncpa [#allocation5], 0
    %21 = vsyncpa [#allocation8], 0
    %22 = vsyncpa [#allocation11], 0
    // Predicated region
    $region2: #{fno_forward.1} parent=1 // pred_check
      _
    $region3: #{fno_forward.1} parent=1 // pred_check_branch
      %24 = sbr.rel (0) target = $region5
    $region4: #{fno_forward.1} parent=1 // pred_region
      _
    $region5: #{fno_forward.1} parent=1 // pred_fallthru
      _
    // Predicated region
    $region6: #{fno_forward.1} parent=1 // pred_check
      _
    $region7: #{fno_forward.1} parent=1 // pred_check_branch
      %26 = sbr.rel (0) target = $region9
    $region8: #{fno_forward.1} parent=1 // pred_region
      _
    $region9: #{fno_forward.1} parent=1 // pred_fallthru
      _
    // Predicated region
    $region10: #{fno_forward.1} parent=1 // pred_check
      _
    $region11: #{fno_forward.1} parent=1 // pred_check_branch
      %28 = sbr.rel (0) target = $region13
    $region12: #{fno_forward.1} parent=1 // pred_region
      _
    $region13: #{fno_forward.1} parent=1 // pred_fallthru
      _
    // Predicated region
    $region14: #{fno_forward.1} parent=1 // pred_check
      _
    $region15: #{fno_forward.1} parent=1 // pred_check_branch
      %30 = sbr.rel (0) target = $region17
    $region16: #{fno_forward.1} parent=1 // pred_region
      %s32 = ssub.s32 256, 256
      %33 = vsyncadd [#allocation3], %s32
      %s34 = sshll.u32 [#allocation2], 4
      %s35 = int_to_ptr.vmem [resolvable:$true] %s34
      %40 = dma.hbm_to_vmem [thread:$0]  %s3, 256, %s35, [#allocation3], 64, 64, 4
    $region17: #{fno_forward.1} parent=1 // pred_fallthru
      _
    // Predicated region
    $region18: #{fno_forward.1} parent=1 // pred_check
      _
    $region19: #{fno_forward.1} parent=1 // pred_check_branch
      %42 = sbr.rel (0) target = $region21
    $region20: #{fno_forward.1} parent=1 // pred_region
      %s44 = ssub.s32 256, 256
      %45 = vsyncadd [#allocation5], %s44
      %s46 = sshll.u32 [#allocation4], 4
      %s47 = int_to_ptr.vmem [resolvable:$true] %s46
      %52 = dma.hbm_to_vmem [thread:$0]  %s4, 256, %s47, [#allocation5], 64, 64, 4
    $region21: #{fno_forward.1} parent=1 // pred_fallthru
      _
    // Predicated region
    $region22: #{fno_forward.1} parent=1 // pred_check
      _
    $region23: #{fno_forward.1} parent=1 // pred_check_branch
      %54 = sbr.rel (0) target = $region25
    $region24: #{fno_forward.1} parent=1 // pred_region
      _
    $region25: #{fno_forward.1} parent=1 // pred_fallthru
      _
    // Predicated region
    $region26: #{fno_forward.1} parent=1 // pred_check
      _
    $region27: #{fno_forward.1} parent=1 // pred_check_branch
      %56 = sbr.rel (0) target = $region29
    $region28: #{fno_forward.1} parent=1 // pred_region
      _
    $region29: #{fno_forward.1} parent=1 // pred_fallthru
      _
    // Predicated region
    $region30: #{fno_forward.1} parent=1 // pred_check
      _
    $region31: #{fno_forward.1} parent=1 // pred_check_branch
      %58 = sbr.rel (0) target = $region33
    $region32: #{fno_forward.1} parent=1 // pred_region
      %s60 = ssub.s32 4096, 4096
      %61 = vsyncadd [#allocation5], %s60
      %s62 = sshll.u32 [#allocation6], 4
      %s63 = int_to_ptr.vmem [resolvable:$true] %s62
      %68 = dma.hbm_to_vmem [thread:$0]  %s7, 4096, %s63, [#allocation5], 64, 64, 4
    $region33: #{fno_forward.1} parent=1 // pred_fallthru
      _
    // Predicated region
    $region34: #{fno_forward.1} parent=1 // pred_check
      _
    $region35: #{fno_forward.1} parent=1 // pred_check_branch
      %70 = sbr.rel (0) target = $region37
    $region36: #{fno_forward.1} parent=1 // pred_region
      %s72 = ssub.s32 1024, 1024
      %73 = vsyncadd [#allocation8], %s72
      %s74 = sshll.u32 [#allocation7], 4
      %s75 = int_to_ptr.vmem [resolvable:$true] %s74
      %80 = dma.hbm_to_vmem [thread:$0]  %s8, 1024, %s75, [#allocation8], 64, 64, 4
    $region37: #{fno_forward.1} parent=1 // pred_fallthru
      _
    // Predicated region
    $region38: #{fno_forward.1} parent=1 // pred_check
      _
    $region39: #{fno_forward.1} parent=1 // pred_check_branch
      %82 = sbr.rel (0) target = $region41
    $region40: #{fno_forward.1} parent=1 // pred_region
      _
    $region41: #{fno_forward.1} parent=1 // pred_fallthru
      _
    // Predicated region
    $region42: #{fno_forward.1} parent=1 // pred_check
      _
    $region43: #{fno_forward.1} parent=1 // pred_check_branch
      %84 = sbr.rel (0) target = $region45
    $region44: #{fno_forward.1} parent=1 // pred_region
      %s86 = ssub.s32 256, 256
      %87 = vsyncadd [#allocation8], %s86
      %s88 = sshll.u32 [#allocation9], 4
      %s89 = int_to_ptr.vmem [resolvable:$true] %s88
      %94 = dma.hbm_to_vmem [thread:$0]  %s10, 256, %s89, [#allocation8], 64, 64, 4
    $region45: #{fno_forward.1} parent=1 // pred_fallthru
      _
    // Predicated region
    $region46: #{fno_forward.1} parent=1 // pred_check
      _
    $region47: #{fno_forward.1} parent=1 // pred_check_branch
      %96 = sbr.rel (0) target = $region49
    $region48: #{fno_forward.1} parent=1 // pred_region
      _
    $region49: #{fno_forward.1} parent=1 // pred_fallthru
      _
    // Predicated region
    $region50: #{fno_forward.1} parent=1 // pred_check
      _
    $region51: #{fno_forward.1} parent=1 // pred_check_branch
      %98 = sbr.rel (0) target = $region53
    $region52: #{fno_forward.1} parent=1 // pred_region
      %s100 = ssub.s32 1024, 1024
      %101 = vsyncadd [#allocation11], %s100
      %s102 = sshll.u32 [#allocation10], 4
      %s103 = int_to_ptr.vmem [resolvable:$true] %s102
      %108 = dma.hbm_to_vmem [thread:$0]  %s12, 1024, %s103, [#allocation11], 64, 64, 4
    $region53: #{fno_forward.1} parent=1 // pred_fallthru
      _
    // Predicated region
    $region54: #{fno_forward.1} parent=1 // pred_check
      _
    $region55: #{fno_forward.1} parent=1 // pred_check_branch
      %110 = sbr.rel (0) target = $region57
    $region56: #{fno_forward.1} parent=1 // pred_region
      %s112 = ssub.s32 16, 16
      %113 = vsyncadd [#allocation11], %s112
      %s115 = sshll.u32 [#allocation12], 4
      %s116 = int_to_ptr.vmem [resolvable:$true] %s115
      %118 = dma.hbm_to_vmem [thread:$0]  %s13, 16, %s116, [#allocation11]
    $region57: #{fno_forward.1} parent=1 // pred_fallthru
      _
    // Predicated region
    $region58: #{fno_forward.1} parent=1 // pred_check
      _
    $region59: #{fno_forward.1} parent=1 // pred_check_branch
      %120 = sbr.rel (0) target = $region61
    $region60: #{fno_forward.1} parent=1 // pred_region
      %121 = dma.done [#allocation3], 256
    $region61: #{fno_forward.1} parent=1 // pred_fallthru
      _
    // Predicated region
    $region62: #{fno_forward.1} parent=1 // pred_check
      _
    $region63: #{fno_forward.1} parent=1 // pred_check_branch
      %123 = sbr.rel (0) target = $region65
    $region64: #{fno_forward.1} parent=1 // pred_region
      %124 = dma.done [#allocation5], 256
    $region65: #{fno_forward.1} parent=1 // pred_fallthru
      _
    // Predicated region
    $region66: #{fno_forward.1} parent=1 // pred_check
      _
    $region67: #{fno_forward.1} parent=1 // pred_check_branch
      %126 = sbr.rel (0) target = $region69
    $region68: #{fno_forward.1} parent=1 // pred_region
      %127 = dma.done [#allocation5], 4096
    $region69: #{fno_forward.1} parent=1 // pred_fallthru
      _
    // Predicated region
    $region70: #{fno_forward.1} parent=1 // pred_check
      _
    $region71: #{fno_forward.1} parent=1 // pred_check_branch
      %129 = sbr.rel (0) target = $region73
    $region72: #{fno_forward.1} parent=1 // pred_region
      %130 = dma.done [#allocation8], 1024
    $region73: #{fno_forward.1} parent=1 // pred_fallthru
      _
    // Predicated region
    $region74: #{fno_forward.1} parent=1 // pred_check
      _
    $region75: #{fno_forward.1} parent=1 // pred_check_branch
      %132 = sbr.rel (0) target = $region77
    $region76: #{fno_forward.1} parent=1 // pred_region
      %133 = dma.done [#allocation8], 256
    $region77: #{fno_forward.1} parent=1 // pred_fallthru
      _
    // Predicated region
    $region78: #{fno_forward.1} parent=1 // pred_check
      _
    $region79: #{fno_forward.1} parent=1 // pred_check_branch
      %135 = sbr.rel (0) target = $region81
    $region80: #{fno_forward.1} parent=1 // pred_region
      %136 = dma.done [#allocation11], 1024
    $region81: #{fno_forward.1} parent=1 // pred_fallthru
      _
    // Predicated region
    $region82: #{fno_forward.1} parent=1 // pred_check
      _
    $region83: #{fno_forward.1} parent=1 // pred_check_branch
      %138 = sbr.rel (0) target = $region85
    $region84: #{fno_forward.1} parent=1 // pred_region
      %139 = dma.done [#allocation11], 16
    $region85: #{fno_forward.1} parent=1 // pred_fallthru
      _
    %v141 = vld [vmem:[%s0] sm:$0xff]
    %v142 = vld [vmem:[%s0 + $0x8] sm:$0xff]
    %v143 = vld [vmem:[%s0 + $0x10] sm:$0xff]
    %v144 = vld [vmem:[%s0 + $0x18] sm:$0xff]
    %v145 = vpack.c.bf16 %v142, %v141
    %v146 = vpack.c.bf16 %v144, %v143
    %v147 = vld [vmem:[%s1] sm:$0x3]
    %v148 = vld [vmem:[%s2] sm:$0x1]
    %v150 = vlaneseq
    %v151 = vshrl.u32 %v150, 7
    %v152 = vsub.s32 0, %v151
    %v153 = vrot.slane %v148, %v152
    %vm155 = vcmask 31744
    %v157 = vsel %vm155, %v145, 0
    %v160 = vsel %vm155, %v146, 0
    %vm162 = vcmask 1041408
    %v164 = vsel %vm162, %v147, 0
    %166 = vmatprep.subr.bf16.mxu0 0
    %167 = vmatpush1.bf16.msra.mxu0 %v164
    %168 = vmatprep.subr.bf16.mxu0 0
    %169 = vmatpush1.bf16.msra.mxu0 0
    %170 = vmatprep.subr.bf16.mxu0 0
    %171 = vmatpush1.bf16.msra.mxu0 0
    %172 = vmatprep.subr.bf16.mxu0 0
    %173 = vmatpush1.bf16.msra.mxu0 0
    %174 = vmatprep.subr.bf16.mxu0 0
    %175 = vmatpush1.bf16.msra.mxu0 0
    %176 = vmatprep.subr.bf16.mxu0 0
    %177 = vmatpush1.bf16.msra.mxu0 0
    %178 = vmatprep.subr.bf16.mxu0 0
    %179 = vmatpush1.bf16.msra.mxu0 0
    %180 = vmatprep.subr.bf16.mxu0 0
    %181 = vmatpush1.bf16.msra.mxu0 0
    %182 = vmatprep.subr.bf16.mxu0 0
    %183 = vmatpush1.bf16.msra.mxu0 0
    %184 = vmatprep.subr.bf16.mxu0 0
    %185 = vmatpush1.bf16.msra.mxu0 0
    %186 = vmatprep.subr.bf16.mxu0 0
    %187 = vmatpush1.bf16.msra.mxu0 0
    %188 = vmatprep.subr.bf16.mxu0 0
    %189 = vmatpush1.bf16.msra.mxu0 0
    %190 = vmatprep.subr.bf16.mxu0 0
    %191 = vmatpush1.bf16.msra.mxu0 0
    %192 = vmatprep.subr.bf16.mxu0 0
    %193 = vmatpush1.bf16.msra.mxu0 0
    %194 = vmatprep.subr.bf16.mxu0 0
    %195 = vmatpush1.bf16.msra.mxu0 0
    %196 = vmatprep.subr.bf16.mxu0 0
    %197 = vmatpush1.bf16.msra.mxu0 0
    %198 = vmatprep.mubr.bf16.mxu0 0
    %199 = vmatmul.mubr.bf16.gmra.mrb[0].mxu0 %v157
    %v200 = vpop.f32.mrb[0].mxu0
    %v201 = vadd.f32 %v153, %v200
    %v202 = vpop.f32.mrb[0].mxu0
    %v203 = vpop.f32.mrb[0].mxu0
    %v204 = vadd.f32 %v153, %v203
    %v205 = vpop.f32.mrb[0].mxu0
    %206 = vmatprep.mubr.bf16.mxu0 0
    %207 = vmatmul.mubr.bf16.gmra.mrb[0].mxu0 %v160
    %v208 = vpop.f32.mrb[0].mxu0
    %v209 = vadd.f32 %v153, %v208
    %v210 = vpop.f32.mrb[0].mxu0
    %v211 = vpop.f32.mrb[0].mxu0
    %v212 = vadd.f32 %v153, %v211
    %v213 = vpop.f32.mrb[0].mxu0
    %214 = vdwg.mxu0
    %v215 = vpack.c.bf16 %v204, %v201
    %v216 = vpack.c.bf16 %v212, %v209
    %v217 = vld [vmem:[#allocation7] sm:$0xf]
    %v218 = vld [vmem:[#allocation7 + $0x4] sm:$0xf]
    %v219 = vld [vmem:[#allocation7 + $0x8] sm:$0xf]
    %v220 = vld [vmem:[#allocation7 + $0xc] sm:$0xf]
    %v221 = vld [vmem:[%s9] sm:$0x1]
    %v223 = vlaneseq
    %v224 = vshrl.u32 %v223, 7
    %v225 = vsub.s32 0, %v224
    %v226 = vrot.slane %v221, %v225
    %v232 = vunpack.c.l.b16 %v217
    %v233 = vunpack.c.l.b16 %v218
    %v234 = vunpack.c.l.b16 %v219
    %v235 = vunpack.c.l.b16 %v220
    %v236 = vpack.c.b16 %v233, %v232
    %v237 = vpack.c.b16 %v235, %v234
    %vm240 = vcmask 261120
    %v242 = vsel %vm240, %v215, 0
    %v245 = vsel %vm240, %v216, 0
    %247 = vmatprep.subr.bf16.mxu0 0
    %248 = vmatpush1.bf16.msra.mxu0 %v236
    %249 = vmatprep.subr.bf16.mxu0 0
    %250 = vmatpush1.bf16.msra.mxu0 %v237
    %251 = vmatprep.subr.bf16.mxu0 0
    %252 = vmatpush1.bf16.msra.mxu0 0
    %253 = vmatprep.subr.bf16.mxu0 0
    %254 = vmatpush1.bf16.msra.mxu0 0
    %255 = vmatprep.subr.bf16.mxu0 0
    %256 = vmatpush1.bf16.msra.mxu0 0
    %257 = vmatprep.subr.bf16.mxu0 0
    %258 = vmatpush1.bf16.msra.mxu0 0
    %259 = vmatprep.subr.bf16.mxu0 0
    %260 = vmatpush1.bf16.msra.mxu0 0
    %261 = vmatprep.subr.bf16.mxu0 0
    %262 = vmatpush1.bf16.msra.mxu0 0
    %263 = vmatprep.subr.bf16.mxu0 0
    %264 = vmatpush1.bf16.msra.mxu0 0
    %265 = vmatprep.subr.bf16.mxu0 0
    %266 = vmatpush1.bf16.msra.mxu0 0
    %267 = vmatprep.subr.bf16.mxu0 0
    %268 = vmatpush1.bf16.msra.mxu0 0
    %269 = vmatprep.subr.bf16.mxu0 0
    %270 = vmatpush1.bf16.msra.mxu0 0
    %271 = vmatprep.subr.bf16.mxu0 0
    %272 = vmatpush1.bf16.msra.mxu0 0
    %273 = vmatprep.subr.bf16.mxu0 0
    %274 = vmatpush1.bf16.msra.mxu0 0
    %275 = vmatprep.subr.bf16.mxu0 0
    %276 = vmatpush1.bf16.msra.mxu0 0
    %277 = vmatprep.subr.bf16.mxu0 0
    %278 = vmatpush1.bf16.msra.mxu0 0
    %279 = vmatprep.mubr.bf16.mxu0 0
    %280 = vmatmul.mubr.bf16.gmra.mrb[0].mxu0 %v242
    %v281 = vpop.f32.mrb[0].mxu0
    %v282 = vadd.f32 %v226, %v281
    %v283 = vpop.f32.mrb[0].mxu0
    %v284 = vpop.f32.mrb[0].mxu0
    %v285 = vadd.f32 %v226, %v284
    %v286 = vpop.f32.mrb[0].mxu0
    %287 = vmatprep.mubr.bf16.mxu0 0
    %288 = vmatmul.mubr.bf16.gmra.mrb[0].mxu0 %v245
    %v289 = vpop.f32.mrb[0].mxu0
    %v290 = vadd.f32 %v226, %v289
    %v291 = vpop.f32.mrb[0].mxu0
    %v292 = vpop.f32.mrb[0].mxu0
    %v293 = vadd.f32 %v226, %v292
    %v294 = vpop.f32.mrb[0].mxu0
    %295 = vdwg.mxu0
    %v296 = vld [vmem:[#allocation2] sm:$0xf]
    %v298 = vsel %vm240, %v296, 0
    %300 = vmatprep.subr.mxu0 0.0
    %301 = vmatpush1.msra.mxu0 %v201
    %302 = vmatprep.subr.mxu0 0.0
    %303 = vmatpush1.msra.mxu0 %v204
    %304 = vmatprep.subr.mxu0 0.0
    %305 = vmatpush1.msra.mxu0 %v209
    %306 = vmatprep.subr.mxu0 0.0
    %307 = vmatpush1.msra.mxu0 %v212
    %308 = vmatprep.subr.mxu0 0.0
    %309 = vmatpush1.msra.mxu0 0.0
    %310 = vmatprep.subr.mxu0 0.0
    %311 = vmatpush1.msra.mxu0 0.0
    %312 = vmatprep.subr.mxu0 0.0
    %313 = vmatpush1.msra.mxu0 0.0
    %314 = vmatprep.subr.mxu0 0.0
    %315 = vmatpush1.msra.mxu0 0.0
    %316 = vmatprep.subr.mxu0 0.0
    %317 = vmatpush1.msra.mxu0 0.0
    %318 = vmatprep.subr.mxu0 0.0
    %319 = vmatpush1.msra.mxu0 0.0
    %320 = vmatprep.subr.mxu0 0.0
    %321 = vmatpush1.msra.mxu0 0.0
    %322 = vmatprep.subr.mxu0 0.0
    %323 = vmatpush1.msra.mxu0 0.0
    %324 = vmatprep.subr.mxu0 0.0
    %325 = vmatpush1.msra.mxu0 0.0
    %326 = vmatprep.subr.mxu0 0.0
    %327 = vmatpush1.msra.mxu0 0.0
    %328 = vmatprep.subr.mxu0 0.0
    %329 = vmatpush1.msra.mxu0 0.0
    %330 = vmatprep.subr.mxu0 0.0
    %331 = vmatpush1.msra.mxu0 0.0
    %332 = vmatprep.subr.mxu0 0.0
    %333 = vmatpush1.msra.mxu0 0.0
    %334 = vmatprep.subr.mxu0 0.0
    %335 = vmatpush1.msra.mxu0 0.0
    %336 = vmatprep.subr.mxu0 0.0
    %337 = vmatpush1.msra.mxu0 0.0
    %338 = vmatprep.subr.mxu0 0.0
    %339 = vmatpush1.msra.mxu0 0.0
    %340 = vmatprep.subr.mxu0 0.0
    %341 = vmatpush1.msra.mxu0 0.0
    %342 = vmatprep.subr.mxu0 0.0
    %343 = vmatpush1.msra.mxu0 0.0
    %344 = vmatprep.subr.mxu0 0.0
    %345 = vmatpush1.msra.mxu0 0.0
    %346 = vmatprep.subr.mxu0 0.0
    %347 = vmatpush1.msra.mxu0 0.0
    %348 = vmatprep.subr.mxu0 0.0
    %349 = vmatpush1.msra.mxu0 0.0
    %350 = vmatprep.subr.mxu0 0.0
    %351 = vmatpush1.msra.mxu0 0.0
    %352 = vmatprep.subr.mxu0 0.0
    %353 = vmatpush1.msra.mxu0 0.0
    %354 = vmatprep.subr.mxu0 0.0
    %355 = vmatpush1.msra.mxu0 0.0
    %356 = vmatprep.subr.mxu0 0.0
    %357 = vmatpush1.msra.mxu0 0.0
    %358 = vmatprep.subr.mxu0 0.0
    %359 = vmatpush1.msra.mxu0 0.0
    %360 = vmatprep.subr.mxu0 0.0
    %361 = vmatpush1.msra.mxu0 0.0
    %362 = vmatprep.subr.mxu0 0.0
    %363 = vmatpush1.msra.mxu0 0.0
    %364 = vmatprep.mubr.f32.mxu0 0.0
    %365 = vmatmul.mubr.f32.gmra.mrb[0].mxu0 %v298
    %v366 = vpop.f32.mrb[0].mxu0
    %v367 = vadd.f32 0.0, %v366
    %v368 = vpop.f32.mrb[0].mxu0
    %369 = vdwg.mxu0
    %v370 = vld [vmem:[#allocation4] sm:$0xf]
    %v372 = vsel %vm240, %v370, 0
    %374 = vmatprep.subr.mxu0 0.0
    %375 = vmatpush1.msra.mxu0 %v201
    %376 = vmatprep.subr.mxu0 0.0
    %377 = vmatpush1.msra.mxu0 %v204
    %378 = vmatprep.subr.mxu0 0.0
    %379 = vmatpush1.msra.mxu0 %v209
    %380 = vmatprep.subr.mxu0 0.0
    %381 = vmatpush1.msra.mxu0 %v212
    %382 = vmatprep.subr.mxu0 0.0
    %383 = vmatpush1.msra.mxu0 0.0
    %384 = vmatprep.subr.mxu0 0.0
    %385 = vmatpush1.msra.mxu0 0.0
    %386 = vmatprep.subr.mxu0 0.0
    %387 = vmatpush1.msra.mxu0 0.0
    %388 = vmatprep.subr.mxu0 0.0
    %389 = vmatpush1.msra.mxu0 0.0
    %390 = vmatprep.subr.mxu0 0.0
    %391 = vmatpush1.msra.mxu0 0.0
    %392 = vmatprep.subr.mxu0 0.0
    %393 = vmatpush1.msra.mxu0 0.0
    %394 = vmatprep.subr.mxu0 0.0
    %395 = vmatpush1.msra.mxu0 0.0
    %396 = vmatprep.subr.mxu0 0.0
    %397 = vmatpush1.msra.mxu0 0.0
    %398 = vmatprep.subr.mxu0 0.0
    %399 = vmatpush1.msra.mxu0 0.0
    %400 = vmatprep.subr.mxu0 0.0
    %401 = vmatpush1.msra.mxu0 0.0
    %402 = vmatprep.subr.mxu0 0.0
    %403 = vmatpush1.msra.mxu0 0.0
    %404 = vmatprep.subr.mxu0 0.0
    %405 = vmatpush1.msra.mxu0 0.0
    %406 = vmatprep.subr.mxu0 0.0
    %407 = vmatpush1.msra.mxu0 0.0
    %408 = vmatprep.subr.mxu0 0.0
    %409 = vmatpush1.msra.mxu0 0.0
    %410 = vmatprep.subr.mxu0 0.0
    %411 = vmatpush1.msra.mxu0 0.0
    %412 = vmatprep.subr.mxu0 0.0
    %413 = vmatpush1.msra.mxu0 0.0
    %414 = vmatprep.subr.mxu0 0.0
    %415 = vmatpush1.msra.mxu0 0.0
    %416 = vmatprep.subr.mxu0 0.0
    %417 = vmatpush1.msra.mxu0 0.0
    %418 = vmatprep.subr.mxu0 0.0
    %419 = vmatpush1.msra.mxu0 0.0
    %420 = vmatprep.subr.mxu0 0.0
    %421 = vmatpush1.msra.mxu0 0.0
    %422 = vmatprep.subr.mxu0 0.0
    %423 = vmatpush1.msra.mxu0 0.0
    %424 = vmatprep.subr.mxu0 0.0
    %425 = vmatpush1.msra.mxu0 0.0
    %426 = vmatprep.subr.mxu0 0.0
    %427 = vmatpush1.msra.mxu0 0.0
    %428 = vmatprep.subr.mxu0 0.0
    %429 = vmatpush1.msra.mxu0 0.0
    %430 = vmatprep.subr.mxu0 0.0
    %431 = vmatpush1.msra.mxu0 0.0
    %432 = vmatprep.subr.mxu0 0.0
    %433 = vmatpush1.msra.mxu0 0.0
    %434 = vmatprep.subr.mxu0 0.0
    %435 = vmatpush1.msra.mxu0 0.0
    %436 = vmatprep.subr.mxu0 0.0
    %437 = vmatpush1.msra.mxu0 0.0
    %438 = vmatprep.mubr.f32.mxu0 0.0
    %439 = vmatmul.mubr.f32.gmra.mrb[0].mxu0 %v372
    %v440 = vpop.f32.mrb[0].mxu0
    %v441 = vadd.f32 0.0, %v440
    %v442 = vpop.f32.mrb[0].mxu0
    %443 = vdwg.mxu0
    %v444 = vpack.c.bf16 %v367, %v367
    %v445 = vld [vmem:[%s6] sm:$0xf]
    %v446 = vld [vmem:[%s6 + $0x4] sm:$0xf]
    %v447 = vld [vmem:[%s6 + $0x8] sm:$0xf]
    %v448 = vld [vmem:[%s6 + $0xc] sm:$0xf]
    %v449 = vpack.c.bf16 %v441, %v441
    %v450 = vld [vmem:[#allocation6] sm:$0xf]
    %v451 = vld [vmem:[#allocation6 + $0x4] sm:$0xf]
    %v452 = vld [vmem:[#allocation6 + $0x8] sm:$0xf]
    %v453 = vld [vmem:[#allocation6 + $0xc] sm:$0xf]
    %v458 = vunpack.c.l.b16 %v450
    %v459 = vunpack.c.l.b16 %v451
    %v460 = vunpack.c.l.b16 %v452
    %v461 = vunpack.c.l.b16 %v453
    %v462 = vpack.c.b16 %v459, %v458
    %v463 = vpack.c.b16 %v461, %v460
    %v467 = vsel %vm240, %v449, 0
    %469 = vmatprep.subr.bf16.mxu0 0
    %470 = vmatpush1.bf16.msra.mxu0 %v462
    %471 = vmatprep.subr.bf16.mxu0 0
    %472 = vmatpush1.bf16.msra.mxu0 %v463
    %473 = vmatprep.subr.bf16.mxu0 0
    %474 = vmatpush1.bf16.msra.mxu0 0
    %475 = vmatprep.subr.bf16.mxu0 0
    %476 = vmatpush1.bf16.msra.mxu0 0
    %477 = vmatprep.subr.bf16.mxu0 0
    %478 = vmatpush1.bf16.msra.mxu0 0
    %479 = vmatprep.subr.bf16.mxu0 0
    %480 = vmatpush1.bf16.msra.mxu0 0
    %481 = vmatprep.subr.bf16.mxu0 0
    %482 = vmatpush1.bf16.msra.mxu0 0
    %483 = vmatprep.subr.bf16.mxu0 0
    %484 = vmatpush1.bf16.msra.mxu0 0
    %485 = vmatprep.subr.bf16.mxu0 0
    %486 = vmatpush1.bf16.msra.mxu0 0
    %487 = vmatprep.subr.bf16.mxu0 0
    %488 = vmatpush1.bf16.msra.mxu0 0
    %489 = vmatprep.subr.bf16.mxu0 0
    %490 = vmatpush1.bf16.msra.mxu0 0
    %491 = vmatprep.subr.bf16.mxu0 0
    %492 = vmatpush1.bf16.msra.mxu0 0
    %493 = vmatprep.subr.bf16.mxu0 0
    %494 = vmatpush1.bf16.msra.mxu0 0
    %495 = vmatprep.subr.bf16.mxu0 0
    %496 = vmatpush1.bf16.msra.mxu0 0
    %497 = vmatprep.subr.bf16.mxu0 0
    %498 = vmatpush1.bf16.msra.mxu0 0
    %499 = vmatprep.subr.bf16.mxu0 0
    %500 = vmatpush1.bf16.msra.mxu0 0
    %501 = vmatprep.mubr.bf16.mxu0 0
    %502 = vmatmul.mubr.bf16.gmra.mrb[0].mxu0 %v467
    %v503 = vpop.f32.mrb[0].mxu0
    %v504 = vadd.f32 0.0, %v503
    %v505 = vpop.f32.mrb[0].mxu0
    %v506 = vpop.f32.mrb[0].mxu0
    %v507 = vpop.f32.mrb[0].mxu0
    %508 = vdwg.mxu0
    %v513 = vunpack.c.l.b16 %v445
    %v514 = vunpack.c.l.b16 %v446
    %v515 = vunpack.c.l.b16 %v447
    %v516 = vunpack.c.l.b16 %v448
    %v517 = vpack.c.b16 %v514, %v513
    %v518 = vpack.c.b16 %v516, %v515
    %v522 = vsel %vm240, %v444, 0
    %524 = vmatprep.subr.bf16.mxu0 0
    %525 = vmatpush1.bf16.msra.mxu0 %v517
    %526 = vmatprep.subr.bf16.mxu0 0
    %527 = vmatpush1.bf16.msra.mxu0 %v518
    %528 = vmatprep.subr.bf16.mxu0 0
    %529 = vmatpush1.bf16.msra.mxu0 0
    %530 = vmatprep.subr.bf16.mxu0 0
    %531 = vmatpush1.bf16.msra.mxu0 0
    %532 = vmatprep.subr.bf16.mxu0 0
    %533 = vmatpush1.bf16.msra.mxu0 0
    %534 = vmatprep.subr.bf16.mxu0 0
    %535 = vmatpush1.bf16.msra.mxu0 0
    %536 = vmatprep.subr.bf16.mxu0 0
    %537 = vmatpush1.bf16.msra.mxu0 0
    %538 = vmatprep.subr.bf16.mxu0 0
    %539 = vmatpush1.bf16.msra.mxu0 0
    %540 = vmatprep.subr.bf16.mxu0 0
    %541 = vmatpush1.bf16.msra.mxu0 0
    %542 = vmatprep.subr.bf16.mxu0 0
    %543 = vmatpush1.bf16.msra.mxu0 0
    %544 = vmatprep.subr.bf16.mxu0 0
    %545 = vmatpush1.bf16.msra.mxu0 0
    %546 = vmatprep.subr.bf16.mxu0 0
    %547 = vmatpush1.bf16.msra.mxu0 0
    %548 = vmatprep.subr.bf16.mxu0 0
    %549 = vmatpush1.bf16.msra.mxu0 0
    %550 = vmatprep.subr.bf16.mxu0 0
    %551 = vmatpush1.bf16.msra.mxu0 0
    %552 = vmatprep.subr.bf16.mxu0 0
    %553 = vmatpush1.bf16.msra.mxu0 0
    %554 = vmatprep.subr.bf16.mxu0 0
    %555 = vmatpush1.bf16.msra.mxu0 0
    %556 = vmatprep.mubr.bf16.mxu0 0
    %557 = vmatmul.mubr.bf16.gmra.mrb[0].mxu0 %v522
    %v558 = vpop.f32.mrb[0].mxu0
    %v559 = vadd.f32 %v504, %v558
    %v560 = vpop.f32.mrb[0].mxu0
    %v561 = vpop.f32.mrb[0].mxu0
    %v562 = vpop.f32.mrb[0].mxu0
    %563 = vdwg.mxu0
    %v564 = vld [vmem:[%s5] sm:$0xff]
    %v565 = vld [vmem:[%s5 + $0x8] sm:$0xff]
    %v566 = vld [vmem:[%s5 + $0x10] sm:$0xff]
    %v567 = vld [vmem:[%s5 + $0x18] sm:$0xff]
    %v569 = vsel %vm155, %v564, 0
    %v572 = vsel %vm155, %v565, 0
    %v575 = vsel %vm155, %v566, 0
    %v578 = vsel %vm155, %v567, 0
    %vm580 = vcmask 1043456
    %v582 = vsel %vm580, %v559, 0
    %584 = vmatprep.subr.mxu0 0.0
    %585 = vmatpush1.msra.mxu0 %v582
    %586 = vmatprep.subr.mxu0 0.0
    %587 = vmatpush1.msra.mxu0 0.0
    %588 = vmatprep.subr.mxu0 0.0
    %589 = vmatpush1.msra.mxu0 0.0
    %590 = vmatprep.subr.mxu0 0.0
    %591 = vmatpush1.msra.mxu0 0.0
    %592 = vmatprep.subr.mxu0 0.0
    %593 = vmatpush1.msra.mxu0 0.0
    %594 = vmatprep.subr.mxu0 0.0
    %595 = vmatpush1.msra.mxu0 0.0
    %596 = vmatprep.subr.mxu0 0.0
    %597 = vmatpush1.msra.mxu0 0.0
    %598 = vmatprep.subr.mxu0 0.0
    %599 = vmatpush1.msra.mxu0 0.0
    %600 = vmatprep.subr.mxu0 0.0
    %601 = vmatpush1.msra.mxu0 0.0
    %602 = vmatprep.subr.mxu0 0.0
    %603 = vmatpush1.msra.mxu0 0.0
    %604 = vmatprep.subr.mxu0 0.0
    %605 = vmatpush1.msra.mxu0 0.0
    %606 = vmatprep.subr.mxu0 0.0
    %607 = vmatpush1.msra.mxu0 0.0
    %608 = vmatprep.subr.mxu0 0.0
    %609 = vmatpush1.msra.mxu0 0.0
    %610 = vmatprep.subr.mxu0 0.0
    %611 = vmatpush1.msra.mxu0 0.0
    %612 = vmatprep.subr.mxu0 0.0
    %613 = vmatpush1.msra.mxu0 0.0
    %614 = vmatprep.subr.mxu0 0.0
    %615 = vmatpush1.msra.mxu0 0.0
    %616 = vmatprep.subr.mxu0 0.0
    %617 = vmatpush1.msra.mxu0 0.0
    %618 = vmatprep.subr.mxu0 0.0
    %619 = vmatpush1.msra.mxu0 0.0
    %620 = vmatprep.subr.mxu0 0.0
    %621 = vmatpush1.msra.mxu0 0.0
    %622 = vmatprep.subr.mxu0 0.0
    %623 = vmatpush1.msra.mxu0 0.0
    %624 = vmatprep.subr.mxu0 0.0
    %625 = vmatpush1.msra.mxu0 0.0
    %626 = vmatprep.subr.mxu0 0.0
    %627 = vmatpush1.msra.mxu0 0.0
    %628 = vmatprep.subr.mxu0 0.0
    %629 = vmatpush1.msra.mxu0 0.0
    %630 = vmatprep.subr.mxu0 0.0
    %631 = vmatpush1.msra.mxu0 0.0
    %632 = vmatprep.subr.mxu0 0.0
    %633 = vmatpush1.msra.mxu0 0.0
    %634 = vmatprep.subr.mxu0 0.0
    %635 = vmatpush1.msra.mxu0 0.0
    %636 = vmatprep.subr.mxu0 0.0
    %637 = vmatpush1.msra.mxu0 0.0
    %638 = vmatprep.subr.mxu0 0.0
    %639 = vmatpush1.msra.mxu0 0.0
    %640 = vmatprep.subr.mxu0 0.0
    %641 = vmatpush1.msra.mxu0 0.0
    %642 = vmatprep.subr.mxu0 0.0
    %643 = vmatpush1.msra.mxu0 0.0
    %644 = vmatprep.subr.mxu0 0.0
    %645 = vmatpush1.msra.mxu0 0.0
    %646 = vmatprep.subr.mxu0 0.0
    %647 = vmatpush1.msra.mxu0 0.0
    %648 = vmatprep.mubr.f32.mxu0 0.0
    %649 = vmatmul.mubr.f32.gmra.mrb[0].mxu0 %v569
    %v650 = vpop.f32.mrb[0].mxu0
    %v651 = vadd.f32 0.0, %v650
    %v652 = vpop.f32.mrb[0].mxu0
    %653 = vmatprep.mubr.f32.mxu0 0.0
    %654 = vmatmul.mubr.f32.gmra.mrb[0].mxu0 %v572
    %v655 = vpop.f32.mrb[0].mxu0
    %v656 = vadd.f32 0.0, %v655
    %v657 = vpop.f32.mrb[0].mxu0
    %658 = vmatprep.mubr.f32.mxu0 0.0
    %659 = vmatmul.mubr.f32.gmra.mrb[0].mxu0 %v575
    %v660 = vpop.f32.mrb[0].mxu0
    %v661 = vadd.f32 0.0, %v660
    %v662 = vpop.f32.mrb[0].mxu0
    %663 = vmatprep.mubr.f32.mxu0 0.0
    %664 = vmatmul.mubr.f32.gmra.mrb[0].mxu0 %v578
    %v665 = vpop.f32.mrb[0].mxu0
    %v666 = vadd.f32 0.0, %v665
    %v667 = vpop.f32.mrb[0].mxu0
    %668 = vdwg.mxu0
    %v669 = vadd.f32 %v282, %v651
    %v670 = vadd.f32 %v285, %v656
    %v671 = vadd.f32 %v290, %v661
    %v672 = vadd.f32 %v293, %v666
    %s673 = scalar_lea.vmem [#allocation2], 4
    %v674 = vld [vmem:[%s673] sm:$0xf]
    %v676 = vsel %vm240, %v674, 0
    %678 = vmatprep.subr.mxu0 0.0
    %679 = vmatpush1.msra.mxu0 %v201
    %680 = vmatprep.subr.mxu0 0.0
    %681 = vmatpush1.msra.mxu0 %v204
    %682 = vmatprep.subr.mxu0 0.0
    %683 = vmatpush1.msra.mxu0 %v209
    %684 = vmatprep.subr.mxu0 0.0
    %685 = vmatpush1.msra.mxu0 %v212
    %686 = vmatprep.subr.mxu0 0.0
    %687 = vmatpush1.msra.mxu0 0.0
    %688 = vmatprep.subr.mxu0 0.0
    %689 = vmatpush1.msra.mxu0 0.0
    %690 = vmatprep.subr.mxu0 0.0
    %691 = vmatpush1.msra.mxu0 0.0
    %692 = vmatprep.subr.mxu0 0.0
    %693 = vmatpush1.msra.mxu0 0.0
    %694 = vmatprep.subr.mxu0 0.0
    %695 = vmatpush1.msra.mxu0 0.0
    %696 = vmatprep.subr.mxu0 0.0
    %697 = vmatpush1.msra.mxu0 0.0
    %698 = vmatprep.subr.mxu0 0.0
    %699 = vmatpush1.msra.mxu0 0.0
    %700 = vmatprep.subr.mxu0 0.0
    %701 = vmatpush1.msra.mxu0 0.0
    %702 = vmatprep.subr.mxu0 0.0
    %703 = vmatpush1.msra.mxu0 0.0
    %704 = vmatprep.subr.mxu0 0.0
    %705 = vmatpush1.msra.mxu0 0.0
    %706 = vmatprep.subr.mxu0 0.0
    %707 = vmatpush1.msra.mxu0 0.0
    %708 = vmatprep.subr.mxu0 0.0
    %709 = vmatpush1.msra.mxu0 0.0
    %710 = vmatprep.subr.mxu0 0.0
    %711 = vmatpush1.msra.mxu0 0.0
    %712 = vmatprep.subr.mxu0 0.0
    %713 = vmatpush1.msra.mxu0 0.0
    %714 = vmatprep.subr.mxu0 0.0
    %715 = vmatpush1.msra.mxu0 0.0
    %716 = vmatprep.subr.mxu0 0.0
    %717 = vmatpush1.msra.mxu0 0.0
    %718 = vmatprep.subr.mxu0 0.0
    %719 = vmatpush1.msra.mxu0 0.0
    %720 = vmatprep.subr.mxu0 0.0
    %721 = vmatpush1.msra.mxu0 0.0
    %722 = vmatprep.subr.mxu0 0.0
    %723 = vmatpush1.msra.mxu0 0.0
    %724 = vmatprep.subr.mxu0 0.0
    %725 = vmatpush1.msra.mxu0 0.0
    %726 = vmatprep.subr.mxu0 0.0
    %727 = vmatpush1.msra.mxu0 0.0
    %728 = vmatprep.subr.mxu0 0.0
    %729 = vmatpush1.msra.mxu0 0.0
    %730 = vmatprep.subr.mxu0 0.0
    %731 = vmatpush1.msra.mxu0 0.0
    %732 = vmatprep.subr.mxu0 0.0
    %733 = vmatpush1.msra.mxu0 0.0
    %734 = vmatprep.subr.mxu0 0.0
    %735 = vmatpush1.msra.mxu0 0.0
    %736 = vmatprep.subr.mxu0 0.0
    %737 = vmatpush1.msra.mxu0 0.0
    %738 = vmatprep.subr.mxu0 0.0
    %739 = vmatpush1.msra.mxu0 0.0
    %740 = vmatprep.subr.mxu0 0.0
    %741 = vmatpush1.msra.mxu0 0.0
    %742 = vmatprep.mubr.f32.mxu0 0.0
    %743 = vmatmul.mubr.f32.gmra.mrb[0].mxu0 %v676
    %v744 = vpop.f32.mrb[0].mxu0
    %v745 = vadd.f32 0.0, %v744
    %v746 = vpop.f32.mrb[0].mxu0
    %747 = vdwg.mxu0
    %s748 = scalar_lea.vmem [#allocation4], 4
    %v749 = vld [vmem:[%s748] sm:$0xf]
    %v751 = vsel %vm240, %v749, 0
    %753 = vmatprep.subr.mxu0 0.0
    %754 = vmatpush1.msra.mxu0 %v201
    %755 = vmatprep.subr.mxu0 0.0
    %756 = vmatpush1.msra.mxu0 %v204
    %757 = vmatprep.subr.mxu0 0.0
    %758 = vmatpush1.msra.mxu0 %v209
    %759 = vmatprep.subr.mxu0 0.0
    %760 = vmatpush1.msra.mxu0 %v212
    %761 = vmatprep.subr.mxu0 0.0
    %762 = vmatpush1.msra.mxu0 0.0
    %763 = vmatprep.subr.mxu0 0.0
    %764 = vmatpush1.msra.mxu0 0.0
    %765 = vmatprep.subr.mxu0 0.0
    %766 = vmatpush1.msra.mxu0 0.0
    %767 = vmatprep.subr.mxu0 0.0
    %768 = vmatpush1.msra.mxu0 0.0
    %769 = vmatprep.subr.mxu0 0.0
    %770 = vmatpush1.msra.mxu0 0.0
    %771 = vmatprep.subr.mxu0 0.0
    %772 = vmatpush1.msra.mxu0 0.0
    %773 = vmatprep.subr.mxu0 0.0
    %774 = vmatpush1.msra.mxu0 0.0
    %775 = vmatprep.subr.mxu0 0.0
    %776 = vmatpush1.msra.mxu0 0.0
    %777 = vmatprep.subr.mxu0 0.0
    %778 = vmatpush1.msra.mxu0 0.0
    %779 = vmatprep.subr.mxu0 0.0
    %780 = vmatpush1.msra.mxu0 0.0
    %781 = vmatprep.subr.mxu0 0.0
    %782 = vmatpush1.msra.mxu0 0.0
    %783 = vmatprep.subr.mxu0 0.0
    %784 = vmatpush1.msra.mxu0 0.0
    %785 = vmatprep.subr.mxu0 0.0
    %786 = vmatpush1.msra.mxu0 0.0
    %787 = vmatprep.subr.mxu0 0.0
    %788 = vmatpush1.msra.mxu0 0.0
    %789 = vmatprep.subr.mxu0 0.0
    %790 = vmatpush1.msra.mxu0 0.0
    %791 = vmatprep.subr.mxu0 0.0
    %792 = vmatpush1.msra.mxu0 0.0
    %793 = vmatprep.subr.mxu0 0.0
    %794 = vmatpush1.msra.mxu0 0.0
    %795 = vmatprep.subr.mxu0 0.0
    %796 = vmatpush1.msra.mxu0 0.0
    %797 = vmatprep.subr.mxu0 0.0
    %798 = vmatpush1.msra.mxu0 0.0
    %799 = vmatprep.subr.mxu0 0.0
    %800 = vmatpush1.msra.mxu0 0.0
    %801 = vmatprep.subr.mxu0 0.0
    %802 = vmatpush1.msra.mxu0 0.0
    %803 = vmatprep.subr.mxu0 0.0
    %804 = vmatpush1.msra.mxu0 0.0
    %805 = vmatprep.subr.mxu0 0.0
    %806 = vmatpush1.msra.mxu0 0.0
    %807 = vmatprep.subr.mxu0 0.0
    %808 = vmatpush1.msra.mxu0 0.0
    %809 = vmatprep.subr.mxu0 0.0
    %810 = vmatpush1.msra.mxu0 0.0
    %811 = vmatprep.subr.mxu0 0.0
    %812 = vmatpush1.msra.mxu0 0.0
    %813 = vmatprep.subr.mxu0 0.0
    %814 = vmatpush1.msra.mxu0 0.0
    %815 = vmatprep.subr.mxu0 0.0
    %816 = vmatpush1.msra.mxu0 0.0
    %817 = vmatprep.mubr.f32.mxu0 0.0
    %818 = vmatmul.mubr.f32.gmra.mrb[0].mxu0 %v751
    %v819 = vpop.f32.mrb[0].mxu0
    %v820 = vadd.f32 0.0, %v819
    %v821 = vpop.f32.mrb[0].mxu0
    %822 = vdwg.mxu0
    %v823 = vpack.c.bf16 %v745, %v745
    %s824 = scalar_lea.vmem %s6, 16
    %v825 = vld [vmem:[%s824] sm:$0xf]
    %v826 = vld [vmem:[%s824 + $0x4] sm:$0xf]
    %v827 = vld [vmem:[%s824 + $0x8] sm:$0xf]
    %v828 = vld [vmem:[%s824 + $0xc] sm:$0xf]
    %v829 = vpack.c.bf16 %v820, %v820
    %s830 = scalar_lea.vmem [#allocation6], 16
    %v831 = vld [vmem:[%s830] sm:$0xf]
    %v832 = vld [vmem:[%s830 + $0x4] sm:$0xf]
    %v833 = vld [vmem:[%s830 + $0x8] sm:$0xf]
    %v834 = vld [vmem:[%s830 + $0xc] sm:$0xf]
    %v839 = vunpack.c.l.b16 %v831
    %v840 = vunpack.c.l.b16 %v832
    %v841 = vunpack.c.l.b16 %v833
    %v842 = vunpack.c.l.b16 %v834
    %v843 = vpack.c.b16 %v840, %v839
    %v844 = vpack.c.b16 %v842, %v841
    %v848 = vsel %vm240, %v829, 0
    %850 = vmatprep.subr.bf16.mxu0 0
    %851 = vmatpush1.bf16.msra.mxu0 %v843
    %852 = vmatprep.subr.bf16.mxu0 0
    %853 = vmatpush1.bf16.msra.mxu0 %v844
    %854 = vmatprep.subr.bf16.mxu0 0
    %855 = vmatpush1.bf16.msra.mxu0 0
    %856 = vmatprep.subr.bf16.mxu0 0
    %857 = vmatpush1.bf16.msra.mxu0 0
    %858 = vmatprep.subr.bf16.mxu0 0
    %859 = vmatpush1.bf16.msra.mxu0 0
    %860 = vmatprep.subr.bf16.mxu0 0
    %861 = vmatpush1.bf16.msra.mxu0 0
    %862 = vmatprep.subr.bf16.mxu0 0
    %863 = vmatpush1.bf16.msra.mxu0 0
    %864 = vmatprep.subr.bf16.mxu0 0
    %865 = vmatpush1.bf16.msra.mxu0 0
    %866 = vmatprep.subr.bf16.mxu0 0
    %867 = vmatpush1.bf16.msra.mxu0 0
    %868 = vmatprep.subr.bf16.mxu0 0
    %869 = vmatpush1.bf16.msra.mxu0 0
    %870 = vmatprep.subr.bf16.mxu0 0
    %871 = vmatpush1.bf16.msra.mxu0 0
    %872 = vmatprep.subr.bf16.mxu0 0
    %873 = vmatpush1.bf16.msra.mxu0 0
    %874 = vmatprep.subr.bf16.mxu0 0
    %875 = vmatpush1.bf16.msra.mxu0 0
    %876 = vmatprep.subr.bf16.mxu0 0
    %877 = vmatpush1.bf16.msra.mxu0 0
    %878 = vmatprep.subr.bf16.mxu0 0
    %879 = vmatpush1.bf16.msra.mxu0 0
    %880 = vmatprep.subr.bf16.mxu0 0
    %881 = vmatpush1.bf16.msra.mxu0 0
    %882 = vmatprep.mubr.bf16.mxu0 0
    %883 = vmatmul.mubr.bf16.gmra.mrb[0].mxu0 %v848
    %v884 = vpop.f32.mrb[0].mxu0
    %v885 = vadd.f32 0.0, %v884
    %v886 = vpop.f32.mrb[0].mxu0
    %v887 = vpop.f32.mrb[0].mxu0
    %v888 = vpop.f32.mrb[0].mxu0
    %889 = vdwg.mxu0
    %v894 = vunpack.c.l.b16 %v825
    %v895 = vunpack.c.l.b16 %v826
    %v896 = vunpack.c.l.b16 %v827
    %v897 = vunpack.c.l.b16 %v828
    %v898 = vpack.c.b16 %v895, %v894
    %v899 = vpack.c.b16 %v897, %v896
    %v903 = vsel %vm240, %v823, 0
    %905 = vmatprep.subr.bf16.mxu0 0
    %906 = vmatpush1.bf16.msra.mxu0 %v898
    %907 = vmatprep.subr.bf16.mxu0 0
    %908 = vmatpush1.bf16.msra.mxu0 %v899
    %909 = vmatprep.subr.bf16.mxu0 0
    %910 = vmatpush1.bf16.msra.mxu0 0
    %911 = vmatprep.subr.bf16.mxu0 0
    %912 = vmatpush1.bf16.msra.mxu0 0
    %913 = vmatprep.subr.bf16.mxu0 0
    %914 = vmatpush1.bf16.msra.mxu0 0
    %915 = vmatprep.subr.bf16.mxu0 0
    %916 = vmatpush1.bf16.msra.mxu0 0
    %917 = vmatprep.subr.bf16.mxu0 0
    %918 = vmatpush1.bf16.msra.mxu0 0
    %919 = vmatprep.subr.bf16.mxu0 0
    %920 = vmatpush1.bf16.msra.mxu0 0
    %921 = vmatprep.subr.bf16.mxu0 0
    %922 = vmatpush1.bf16.msra.mxu0 0
    %923 = vmatprep.subr.bf16.mxu0 0
    %924 = vmatpush1.bf16.msra.mxu0 0
    %925 = vmatprep.subr.bf16.mxu0 0
    %926 = vmatpush1.bf16.msra.mxu0 0
    %927 = vmatprep.subr.bf16.mxu0 0
    %928 = vmatpush1.bf16.msra.mxu0 0
    %929 = vmatprep.subr.bf16.mxu0 0
    %930 = vmatpush1.bf16.msra.mxu0 0
    %931 = vmatprep.subr.bf16.mxu0 0
    %932 = vmatpush1.bf16.msra.mxu0 0
    %933 = vmatprep.subr.bf16.mxu0 0
    %934 = vmatpush1.bf16.msra.mxu0 0
    %935 = vmatprep.subr.bf16.mxu0 0
    %936 = vmatpush1.bf16.msra.mxu0 0
    %937 = vmatprep.mubr.bf16.mxu0 0
    %938 = vmatmul.mubr.bf16.gmra.mrb[0].mxu0 %v903
    %v939 = vpop.f32.mrb[0].mxu0
    %v940 = vadd.f32 %v885, %v939
    %v941 = vpop.f32.mrb[0].mxu0
    %v942 = vpop.f32.mrb[0].mxu0
    %v943 = vpop.f32.mrb[0].mxu0
    %944 = vdwg.mxu0
    %s945 = scalar_lea.vmem %s5, 32
    %v946 = vld [vmem:[%s945] sm:$0xff]
    %v947 = vld [vmem:[%s945 + $0x8] sm:$0xff]
    %v948 = vld [vmem:[%s945 + $0x10] sm:$0xff]
    %v949 = vld [vmem:[%s945 + $0x18] sm:$0xff]
    %v951 = vsel %vm155, %v946, 0
    %v954 = vsel %vm155, %v947, 0
    %v957 = vsel %vm155, %v948, 0
    %v960 = vsel %vm155, %v949, 0
    %v963 = vsel %vm580, %v940, 0
    %965 = vmatprep.subr.mxu0 0.0
    %966 = vmatpush1.msra.mxu0 %v963
    %967 = vmatprep.subr.mxu0 0.0
    %968 = vmatpush1.msra.mxu0 0.0
    %969 = vmatprep.subr.mxu0 0.0
    %970 = vmatpush1.msra.mxu0 0.0
    %971 = vmatprep.subr.mxu0 0.0
    %972 = vmatpush1.msra.mxu0 0.0
    %973 = vmatprep.subr.mxu0 0.0
    %974 = vmatpush1.msra.mxu0 0.0
    %975 = vmatprep.subr.mxu0 0.0
    %976 = vmatpush1.msra.mxu0 0.0
    %977 = vmatprep.subr.mxu0 0.0
    %978 = vmatpush1.msra.mxu0 0.0
    %979 = vmatprep.subr.mxu0 0.0
    %980 = vmatpush1.msra.mxu0 0.0
    %981 = vmatprep.subr.mxu0 0.0
    %982 = vmatpush1.msra.mxu0 0.0
    %983 = vmatprep.subr.mxu0 0.0
    %984 = vmatpush1.msra.mxu0 0.0
    %985 = vmatprep.subr.mxu0 0.0
    %986 = vmatpush1.msra.mxu0 0.0
    %987 = vmatprep.subr.mxu0 0.0
    %988 = vmatpush1.msra.mxu0 0.0
    %989 = vmatprep.subr.mxu0 0.0
    %990 = vmatpush1.msra.mxu0 0.0
    %991 = vmatprep.subr.mxu0 0.0
    %992 = vmatpush1.msra.mxu0 0.0
    %993 = vmatprep.subr.mxu0 0.0
    %994 = vmatpush1.msra.mxu0 0.0
    %995 = vmatprep.subr.mxu0 0.0
    %996 = vmatpush1.msra.mxu0 0.0
    %997 = vmatprep.subr.mxu0 0.0
    %998 = vmatpush1.msra.mxu0 0.0
    %999 = vmatprep.subr.mxu0 0.0
    %1000 = vmatpush1.msra.mxu0 0.0
    %1001 = vmatprep.subr.mxu0 0.0
    %1002 = vmatpush1.msra.mxu0 0.0
    %1003 = vmatprep.subr.mxu0 0.0
    %1004 = vmatpush1.msra.mxu0 0.0
    %1005 = vmatprep.subr.mxu0 0.0
    %1006 = vmatpush1.msra.mxu0 0.0
    %1007 = vmatprep.subr.mxu0 0.0
    %1008 = vmatpush1.msra.mxu0 0.0
    %1009 = vmatprep.subr.mxu0 0.0
    %1010 = vmatpush1.msra.mxu0 0.0
    %1011 = vmatprep.subr.mxu0 0.0
    %1012 = vmatpush1.msra.mxu0 0.0
    %1013 = vmatprep.subr.mxu0 0.0
    %1014 = vmatpush1.msra.mxu0 0.0
    %1015 = vmatprep.subr.mxu0 0.0
    %1016 = vmatpush1.msra.mxu0 0.0
    %1017 = vmatprep.subr.mxu0 0.0
    %1018 = vmatpush1.msra.mxu0 0.0
    %1019 = vmatprep.subr.mxu0 0.0
    %1020 = vmatpush1.msra.mxu0 0.0
    %1021 = vmatprep.subr.mxu0 0.0
    %1022 = vmatpush1.msra.mxu0 0.0
    %1023 = vmatprep.subr.mxu0 0.0
    %1024 = vmatpush1.msra.mxu0 0.0
    %1025 = vmatprep.subr.mxu0 0.0
    %1026 = vmatpush1.msra.mxu0 0.0
    %1027 = vmatprep.subr.mxu0 0.0
    %1028 = vmatpush1.msra.mxu0 0.0
    %1029 = vmatprep.mubr.f32.mxu0 0.0
    %1030 = vmatmul.mubr.f32.gmra.mrb[0].mxu0 %v951
    %v1031 = vpop.f32.mrb[0].mxu0
    %v1032 = vadd.f32 0.0, %v1031
    %v1033 = vpop.f32.mrb[0].mxu0
    %1034 = vmatprep.mubr.f32.mxu0 0.0
    %1035 = vmatmul.mubr.f32.gmra.mrb[0].mxu0 %v954
    %v1036 = vpop.f32.mrb[0].mxu0
    %v1037 = vadd.f32 0.0, %v1036
    %v1038 = vpop.f32.mrb[0].mxu0
    %1039 = vmatprep.mubr.f32.mxu0 0.0
    %1040 = vmatmul.mubr.f32.gmra.mrb[0].mxu0 %v957
    %v1041 = vpop.f32.mrb[0].mxu0
    %v1042 = vadd.f32 0.0, %v1041
    %v1043 = vpop.f32.mrb[0].mxu0
    %1044 = vmatprep.mubr.f32.mxu0 0.0
    %1045 = vmatmul.mubr.f32.gmra.mrb[0].mxu0 %v960
    %v1046 = vpop.f32.mrb[0].mxu0
    %v1047 = vadd.f32 0.0, %v1046
    %v1048 = vpop.f32.mrb[0].mxu0
    %1049 = vdwg.mxu0
    %v1050 = vadd.f32 %v669, %v1032
    %v1051 = vadd.f32 %v670, %v1037
    %v1052 = vadd.f32 %v671, %v1042
    %v1053 = vadd.f32 %v672, %v1047
    %s1054 = scalar_lea.vmem [#allocation2], 8
    %v1055 = vld [vmem:[%s1054] sm:$0xf]
    %v1057 = vsel %vm240, %v1055, 0
    %1059 = vmatprep.subr.mxu0 0.0
    %1060 = vmatpush1.msra.mxu0 %v201
    %1061 = vmatprep.subr.mxu0 0.0
    %1062 = vmatpush1.msra.mxu0 %v204
    %1063 = vmatprep.subr.mxu0 0.0
    %1064 = vmatpush1.msra.mxu0 %v209
    %1065 = vmatprep.subr.mxu0 0.0
    %1066 = vmatpush1.msra.mxu0 %v212
    %1067 = vmatprep.subr.mxu0 0.0
    %1068 = vmatpush1.msra.mxu0 0.0
    %1069 = vmatprep.subr.mxu0 0.0
    %1070 = vmatpush1.msra.mxu0 0.0
    %1071 = vmatprep.subr.mxu0 0.0
    %1072 = vmatpush1.msra.mxu0 0.0
    %1073 = vmatprep.subr.mxu0 0.0
    %1074 = vmatpush1.msra.mxu0 0.0
    %1075 = vmatprep.subr.mxu0 0.0
    %1076 = vmatpush1.msra.mxu0 0.0
    %1077 = vmatprep.subr.mxu0 0.0
    %1078 = vmatpush1.msra.mxu0 0.0
    %1079 = vmatprep.subr.mxu0 0.0
    %1080 = vmatpush1.msra.mxu0 0.0
    %1081 = vmatprep.subr.mxu0 0.0
    %1082 = vmatpush1.msra.mxu0 0.0
    %1083 = vmatprep.subr.mxu0 0.0
    %1084 = vmatpush1.msra.mxu0 0.0
    %1085 = vmatprep.subr.mxu0 0.0
    %1086 = vmatpush1.msra.mxu0 0.0
    %1087 = vmatprep.subr.mxu0 0.0
    %1088 = vmatpush1.msra.mxu0 0.0
    %1089 = vmatprep.subr.mxu0 0.0
    %1090 = vmatpush1.msra.mxu0 0.0
    %1091 = vmatprep.subr.mxu0 0.0
    %1092 = vmatpush1.msra.mxu0 0.0
    %1093 = vmatprep.subr.mxu0 0.0
    %1094 = vmatpush1.msra.mxu0 0.0
    %1095 = vmatprep.subr.mxu0 0.0
    %1096 = vmatpush1.msra.mxu0 0.0
    %1097 = vmatprep.subr.mxu0 0.0
    %1098 = vmatpush1.msra.mxu0 0.0
    %1099 = vmatprep.subr.mxu0 0.0
    %1100 = vmatpush1.msra.mxu0 0.0
    %1101 = vmatprep.subr.mxu0 0.0
    %1102 = vmatpush1.msra.mxu0 0.0
    %1103 = vmatprep.subr.mxu0 0.0
    %1104 = vmatpush1.msra.mxu0 0.0
    %1105 = vmatprep.subr.mxu0 0.0
    %1106 = vmatpush1.msra.mxu0 0.0
    %1107 = vmatprep.subr.mxu0 0.0
    %1108 = vmatpush1.msra.mxu0 0.0
    %1109 = vmatprep.subr.mxu0 0.0
    %1110 = vmatpush1.msra.mxu0 0.0
    %1111 = vmatprep.subr.mxu0 0.0
    %1112 = vmatpush1.msra.mxu0 0.0
    %1113 = vmatprep.subr.mxu0 0.0
    %1114 = vmatpush1.msra.mxu0 0.0
    %1115 = vmatprep.subr.mxu0 0.0
    %1116 = vmatpush1.msra.mxu0 0.0
    %1117 = vmatprep.subr.mxu0 0.0
    %1118 = vmatpush1.msra.mxu0 0.0
    %1119 = vmatprep.subr.mxu0 0.0
    %1120 = vmatpush1.msra.mxu0 0.0
    %1121 = vmatprep.subr.mxu0 0.0
    %1122 = vmatpush1.msra.mxu0 0.0
    %1123 = vmatprep.mubr.f32.mxu0 0.0
    %1124 = vmatmul.mubr.f32.gmra.mrb[0].mxu0 %v1057
    %v1125 = vpop.f32.mrb[0].mxu0
    %v1126 = vadd.f32 0.0, %v1125
    %v1127 = vpop.f32.mrb[0].mxu0
    %1128 = vdwg.mxu0
    %s1129 = scalar_lea.vmem [#allocation4], 8
    %v1130 = vld [vmem:[%s1129] sm:$0xf]
    %v1132 = vsel %vm240, %v1130, 0
    %1134 = vmatprep.subr.mxu0 0.0
    %1135 = vmatpush1.msra.mxu0 %v201
    %1136 = vmatprep.subr.mxu0 0.0
    %1137 = vmatpush1.msra.mxu0 %v204
    %1138 = vmatprep.subr.mxu0 0.0
    %1139 = vmatpush1.msra.mxu0 %v209
    %1140 = vmatprep.subr.mxu0 0.0
    %1141 = vmatpush1.msra.mxu0 %v212
    %1142 = vmatprep.subr.mxu0 0.0
    %1143 = vmatpush1.msra.mxu0 0.0
    %1144 = vmatprep.subr.mxu0 0.0
    %1145 = vmatpush1.msra.mxu0 0.0
    %1146 = vmatprep.subr.mxu0 0.0
    %1147 = vmatpush1.msra.mxu0 0.0
    %1148 = vmatprep.subr.mxu0 0.0
    %1149 = vmatpush1.msra.mxu0 0.0
    %1150 = vmatprep.subr.mxu0 0.0
    %1151 = vmatpush1.msra.mxu0 0.0
    %1152 = vmatprep.subr.mxu0 0.0
    %1153 = vmatpush1.msra.mxu0 0.0
    %1154 = vmatprep.subr.mxu0 0.0
    %1155 = vmatpush1.msra.mxu0 0.0
    %1156 = vmatprep.subr.mxu0 0.0
    %1157 = vmatpush1.msra.mxu0 0.0
    %1158 = vmatprep.subr.mxu0 0.0
    %1159 = vmatpush1.msra.mxu0 0.0
    %1160 = vmatprep.subr.mxu0 0.0
    %1161 = vmatpush1.msra.mxu0 0.0
    %1162 = vmatprep.subr.mxu0 0.0
    %1163 = vmatpush1.msra.mxu0 0.0
    %1164 = vmatprep.subr.mxu0 0.0
    %1165 = vmatpush1.msra.mxu0 0.0
    %1166 = vmatprep.subr.mxu0 0.0
    %1167 = vmatpush1.msra.mxu0 0.0
    %1168 = vmatprep.subr.mxu0 0.0
    %1169 = vmatpush1.msra.mxu0 0.0
    %1170 = vmatprep.subr.mxu0 0.0
    %1171 = vmatpush1.msra.mxu0 0.0
    %1172 = vmatprep.subr.mxu0 0.0
    %1173 = vmatpush1.msra.mxu0 0.0
    %1174 = vmatprep.subr.mxu0 0.0
    %1175 = vmatpush1.msra.mxu0 0.0
    %1176 = vmatprep.subr.mxu0 0.0
    %1177 = vmatpush1.msra.mxu0 0.0
    %1178 = vmatprep.subr.mxu0 0.0
    %1179 = vmatpush1.msra.mxu0 0.0
    %1180 = vmatprep.subr.mxu0 0.0
    %1181 = vmatpush1.msra.mxu0 0.0
    %1182 = vmatprep.subr.mxu0 0.0
    %1183 = vmatpush1.msra.mxu0 0.0
    %1184 = vmatprep.subr.mxu0 0.0
    %1185 = vmatpush1.msra.mxu0 0.0
    %1186 = vmatprep.subr.mxu0 0.0
    %1187 = vmatpush1.msra.mxu0 0.0
    %1188 = vmatprep.subr.mxu0 0.0
    %1189 = vmatpush1.msra.mxu0 0.0
    %1190 = vmatprep.subr.mxu0 0.0
    %1191 = vmatpush1.msra.mxu0 0.0
    %1192 = vmatprep.subr.mxu0 0.0
    %1193 = vmatpush1.msra.mxu0 0.0
    %1194 = vmatprep.subr.mxu0 0.0
    %1195 = vmatpush1.msra.mxu0 0.0
    %1196 = vmatprep.subr.mxu0 0.0
    %1197 = vmatpush1.msra.mxu0 0.0
    %1198 = vmatprep.mubr.f32.mxu0 0.0
    %1199 = vmatmul.mubr.f32.gmra.mrb[0].mxu0 %v1132
    %v1200 = vpop.f32.mrb[0].mxu0
    %v1201 = vadd.f32 0.0, %v1200
    %v1202 = vpop.f32.mrb[0].mxu0
    %1203 = vdwg.mxu0
    %v1204 = vpack.c.bf16 %v1126, %v1126
    %s1205 = scalar_lea.vmem %s6, 32
    %v1206 = vld [vmem:[%s1205] sm:$0xf]
    %v1207 = vld [vmem:[%s1205 + $0x4] sm:$0xf]
    %v1208 = vld [vmem:[%s1205 + $0x8] sm:$0xf]
    %v1209 = vld [vmem:[%s1205 + $0xc] sm:$0xf]
    %v1210 = vpack.c.bf16 %v1201, %v1201
    %s1211 = scalar_lea.vmem [#allocation6], 32
    %v1212 = vld [vmem:[%s1211] sm:$0xf]
    %v1213 = vld [vmem:[%s1211 + $0x4] sm:$0xf]
    %v1214 = vld [vmem:[%s1211 + $0x8] sm:$0xf]
    %v1215 = vld [vmem:[%s1211 + $0xc] sm:$0xf]
    %v1220 = vunpack.c.l.b16 %v1212
    %v1221 = vunpack.c.l.b16 %v1213
    %v1222 = vunpack.c.l.b16 %v1214
    %v1223 = vunpack.c.l.b16 %v1215
    %v1224 = vpack.c.b16 %v1221, %v1220
    %v1225 = vpack.c.b16 %v1223, %v1222
    %v1229 = vsel %vm240, %v1210, 0
    %1231 = vmatprep.subr.bf16.mxu0 0
    %1232 = vmatpush1.bf16.msra.mxu0 %v1224
    %1233 = vmatprep.subr.bf16.mxu0 0
    %1234 = vmatpush1.bf16.msra.mxu0 %v1225
    %1235 = vmatprep.subr.bf16.mxu0 0
    %1236 = vmatpush1.bf16.msra.mxu0 0
    %1237 = vmatprep.subr.bf16.mxu0 0
    %1238 = vmatpush1.bf16.msra.mxu0 0
    %1239 = vmatprep.subr.bf16.mxu0 0
    %1240 = vmatpush1.bf16.msra.mxu0 0
    %1241 = vmatprep.subr.bf16.mxu0 0
    %1242 = vmatpush1.bf16.msra.mxu0 0
    %1243 = vmatprep.subr.bf16.mxu0 0
    %1244 = vmatpush1.bf16.msra.mxu0 0
    %1245 = vmatprep.subr.bf16.mxu0 0
    %1246 = vmatpush1.bf16.msra.mxu0 0
    %1247 = vmatprep.subr.bf16.mxu0 0
    %1248 = vmatpush1.bf16.msra.mxu0 0
    %1249 = vmatprep.subr.bf16.mxu0 0
    %1250 = vmatpush1.bf16.msra.mxu0 0
    %1251 = vmatprep.subr.bf16.mxu0 0
    %1252 = vmatpush1.bf16.msra.mxu0 0
    %1253 = vmatprep.subr.bf16.mxu0 0
    %1254 = vmatpush1.bf16.msra.mxu0 0
    %1255 = vmatprep.subr.bf16.mxu0 0
    %1256 = vmatpush1.bf16.msra.mxu0 0
    %1257 = vmatprep.subr.bf16.mxu0 0
    %1258 = vmatpush1.bf16.msra.mxu0 0
    %1259 = vmatprep.subr.bf16.mxu0 0
    %1260 = vmatpush1.bf16.msra.mxu0 0
    %1261 = vmatprep.subr.bf16.mxu0 0
    %1262 = vmatpush1.bf16.msra.mxu0 0
    %1263 = vmatprep.mubr.bf16.mxu0 0
    %1264 = vmatmul.mubr.bf16.gmra.mrb[0].mxu0 %v1229
    %v1265 = vpop.f32.mrb[0].mxu0
    %v1266 = vadd.f32 0.0, %v1265
    %v1267 = vpop.f32.mrb[0].mxu0
    %v1268 = vpop.f32.mrb[0].mxu0
    %v1269 = vpop.f32.mrb[0].mxu0
    %1270 = vdwg.mxu0
    %v1275 = vunpack.c.l.b16 %v1206
    %v1276 = vunpack.c.l.b16 %v1207
    %v1277 = vunpack.c.l.b16 %v1208
    %v1278 = vunpack.c.l.b16 %v1209
    %v1279 = vpack.c.b16 %v1276, %v1275
    %v1280 = vpack.c.b16 %v1278, %v1277
    %v1284 = vsel %vm240, %v1204, 0
    %1286 = vmatprep.subr.bf16.mxu0 0
    %1287 = vmatpush1.bf16.msra.mxu0 %v1279
    %1288 = vmatprep.subr.bf16.mxu0 0
    %1289 = vmatpush1.bf16.msra.mxu0 %v1280
    %1290 = vmatprep.subr.bf16.mxu0 0
    %1291 = vmatpush1.bf16.msra.mxu0 0
    %1292 = vmatprep.subr.bf16.mxu0 0
    %1293 = vmatpush1.bf16.msra.mxu0 0
    %1294 = vmatprep.subr.bf16.mxu0 0
    %1295 = vmatpush1.bf16.msra.mxu0 0
    %1296 = vmatprep.subr.bf16.mxu0 0
    %1297 = vmatpush1.bf16.msra.mxu0 0
    %1298 = vmatprep.subr.bf16.mxu0 0
    %1299 = vmatpush1.bf16.msra.mxu0 0
    %1300 = vmatprep.subr.bf16.mxu0 0
    %1301 = vmatpush1.bf16.msra.mxu0 0
    %1302 = vmatprep.subr.bf16.mxu0 0
    %1303 = vmatpush1.bf16.msra.mxu0 0
    %1304 = vmatprep.subr.bf16.mxu0 0
    %1305 = vmatpush1.bf16.msra.mxu0 0
    %1306 = vmatprep.subr.bf16.mxu0 0
    %1307 = vmatpush1.bf16.msra.mxu0 0
    %1308 = vmatprep.subr.bf16.mxu0 0
    %1309 = vmatpush1.bf16.msra.mxu0 0
    %1310 = vmatprep.subr.bf16.mxu0 0
    %1311 = vmatpush1.bf16.msra.mxu0 0
    %1312 = vmatprep.subr.bf16.mxu0 0
    %1313 = vmatpush1.bf16.msra.mxu0 0
    %1314 = vmatprep.subr.bf16.mxu0 0
    %1315 = vmatpush1.bf16.msra.mxu0 0
    %1316 = vmatprep.subr.bf16.mxu0 0
    %1317 = vmatpush1.bf16.msra.mxu0 0
    %1318 = vmatprep.mubr.bf16.mxu0 0
    %1319 = vmatmul.mubr.bf16.gmra.mrb[0].mxu0 %v1284
    %v1320 = vpop.f32.mrb[0].mxu0
    %v1321 = vadd.f32 %v1266, %v1320
    %v1322 = vpop.f32.mrb[0].mxu0
    %v1323 = vpop.f32.mrb[0].mxu0
    %v1324 = vpop.f32.mrb[0].mxu0
    %1325 = vdwg.mxu0
    %s1326 = scalar_lea.vmem %s5, 64
    %v1327 = vld [vmem:[%s1326] sm:$0xff]
    %v1328 = vld [vmem:[%s1326 + $0x8] sm:$0xff]
    %v1329 = vld [vmem:[%s1326 + $0x10] sm:$0xff]
    %v1330 = vld [vmem:[%s1326 + $0x18] sm:$0xff]
    %v1332 = vsel %vm155, %v1327, 0
    %v1335 = vsel %vm155, %v1328, 0
    %v1338 = vsel %vm155, %v1329, 0
    %v1341 = vsel %vm155, %v1330, 0
    %v1344 = vsel %vm580, %v1321, 0
    %1346 = vmatprep.subr.mxu0 0.0
    %1347 = vmatpush1.msra.mxu0 %v1344
    %1348 = vmatprep.subr.mxu0 0.0
    %1349 = vmatpush1.msra.mxu0 0.0
    %1350 = vmatprep.subr.mxu0 0.0
    %1351 = vmatpush1.msra.mxu0 0.0
    %1352 = vmatprep.subr.mxu0 0.0
    %1353 = vmatpush1.msra.mxu0 0.0
    %1354 = vmatprep.subr.mxu0 0.0
    %1355 = vmatpush1.msra.mxu0 0.0
    %1356 = vmatprep.subr.mxu0 0.0
    %1357 = vmatpush1.msra.mxu0 0.0
    %1358 = vmatprep.subr.mxu0 0.0
    %1359 = vmatpush1.msra.mxu0 0.0
    %1360 = vmatprep.subr.mxu0 0.0
    %1361 = vmatpush1.msra.mxu0 0.0
    %1362 = vmatprep.subr.mxu0 0.0
    %1363 = vmatpush1.msra.mxu0 0.0
    %1364 = vmatprep.subr.mxu0 0.0
    %1365 = vmatpush1.msra.mxu0 0.0
    %1366 = vmatprep.subr.mxu0 0.0
    %1367 = vmatpush1.msra.mxu0 0.0
    %1368 = vmatprep.subr.mxu0 0.0
    %1369 = vmatpush1.msra.mxu0 0.0
    %1370 = vmatprep.subr.mxu0 0.0
    %1371 = vmatpush1.msra.mxu0 0.0
    %1372 = vmatprep.subr.mxu0 0.0
    %1373 = vmatpush1.msra.mxu0 0.0
    %1374 = vmatprep.subr.mxu0 0.0
    %1375 = vmatpush1.msra.mxu0 0.0
    %1376 = vmatprep.subr.mxu0 0.0
    %1377 = vmatpush1.msra.mxu0 0.0
    %1378 = vmatprep.subr.mxu0 0.0
    %1379 = vmatpush1.msra.mxu0 0.0
    %1380 = vmatprep.subr.mxu0 0.0
    %1381 = vmatpush1.msra.mxu0 0.0
    %1382 = vmatprep.subr.mxu0 0.0
    %1383 = vmatpush1.msra.mxu0 0.0
    %1384 = vmatprep.subr.mxu0 0.0
    %1385 = vmatpush1.msra.mxu0 0.0
    %1386 = vmatprep.subr.mxu0 0.0
    %1387 = vmatpush1.msra.mxu0 0.0
    %1388 = vmatprep.subr.mxu0 0.0
    %1389 = vmatpush1.msra.mxu0 0.0
    %1390 = vmatprep.subr.mxu0 0.0
    %1391 = vmatpush1.msra.mxu0 0.0
    %1392 = vmatprep.subr.mxu0 0.0
    %1393 = vmatpush1.msra.mxu0 0.0
    %1394 = vmatprep.subr.mxu0 0.0
    %1395 = vmatpush1.msra.mxu0 0.0
    %1396 = vmatprep.subr.mxu0 0.0
    %1397 = vmatpush1.msra.mxu0 0.0
    %1398 = vmatprep.subr.mxu0 0.0
    %1399 = vmatpush1.msra.mxu0 0.0
    %1400 = vmatprep.subr.mxu0 0.0
    %1401 = vmatpush1.msra.mxu0 0.0
    %1402 = vmatprep.subr.mxu0 0.0
    %1403 = vmatpush1.msra.mxu0 0.0
    %1404 = vmatprep.subr.mxu0 0.0
    %1405 = vmatpush1.msra.mxu0 0.0
    %1406 = vmatprep.subr.mxu0 0.0
    %1407 = vmatpush1.msra.mxu0 0.0
    %1408 = vmatprep.subr.mxu0 0.0
    %1409 = vmatpush1.msra.mxu0 0.0
    %1410 = vmatprep.mubr.f32.mxu0 0.0
    %1411 = vmatmul.mubr.f32.gmra.mrb[0].mxu0 %v1332
    %v1412 = vpop.f32.mrb[0].mxu0
    %v1413 = vadd.f32 0.0, %v1412
    %v1414 = vpop.f32.mrb[0].mxu0
    %1415 = vmatprep.mubr.f32.mxu0 0.0
    %1416 = vmatmul.mubr.f32.gmra.mrb[0].mxu0 %v1335
    %v1417 = vpop.f32.mrb[0].mxu0
    %v1418 = vadd.f32 0.0, %v1417
    %v1419 = vpop.f32.mrb[0].mxu0
    %1420 = vmatprep.mubr.f32.mxu0 0.0
    %1421 = vmatmul.mubr.f32.gmra.mrb[0].mxu0 %v1338
    %v1422 = vpop.f32.mrb[0].mxu0
    %v1423 = vadd.f32 0.0, %v1422
    %v1424 = vpop.f32.mrb[0].mxu0
    %1425 = vmatprep.mubr.f32.mxu0 0.0
    %1426 = vmatmul.mubr.f32.gmra.mrb[0].mxu0 %v1341
    %v1427 = vpop.f32.mrb[0].mxu0
    %v1428 = vadd.f32 0.0, %v1427
    %v1429 = vpop.f32.mrb[0].mxu0
    %1430 = vdwg.mxu0
    %v1431 = vadd.f32 %v1050, %v1413
    %v1432 = vadd.f32 %v1051, %v1418
    %v1433 = vadd.f32 %v1052, %v1423
    %v1434 = vadd.f32 %v1053, %v1428
    %s1435 = scalar_lea.vmem [#allocation2], 12
    %v1436 = vld [vmem:[%s1435] sm:$0xf]
    %v1438 = vsel %vm240, %v1436, 0
    %1440 = vmatprep.subr.mxu0 0.0
    %1441 = vmatpush1.msra.mxu0 %v201
    %1442 = vmatprep.subr.mxu0 0.0
    %1443 = vmatpush1.msra.mxu0 %v204
    %1444 = vmatprep.subr.mxu0 0.0
    %1445 = vmatpush1.msra.mxu0 %v209
    %1446 = vmatprep.subr.mxu0 0.0
    %1447 = vmatpush1.msra.mxu0 %v212
    %1448 = vmatprep.subr.mxu0 0.0
    %1449 = vmatpush1.msra.mxu0 0.0
    %1450 = vmatprep.subr.mxu0 0.0
    %1451 = vmatpush1.msra.mxu0 0.0
    %1452 = vmatprep.subr.mxu0 0.0
    %1453 = vmatpush1.msra.mxu0 0.0
    %1454 = vmatprep.subr.mxu0 0.0
    %1455 = vmatpush1.msra.mxu0 0.0
    %1456 = vmatprep.subr.mxu0 0.0
    %1457 = vmatpush1.msra.mxu0 0.0
    %1458 = vmatprep.subr.mxu0 0.0
    %1459 = vmatpush1.msra.mxu0 0.0
    %1460 = vmatprep.subr.mxu0 0.0
    %1461 = vmatpush1.msra.mxu0 0.0
    %1462 = vmatprep.subr.mxu0 0.0
    %1463 = vmatpush1.msra.mxu0 0.0
    %1464 = vmatprep.subr.mxu0 0.0
    %1465 = vmatpush1.msra.mxu0 0.0
    %1466 = vmatprep.subr.mxu0 0.0
    %1467 = vmatpush1.msra.mxu0 0.0
    %1468 = vmatprep.subr.mxu0 0.0
    %1469 = vmatpush1.msra.mxu0 0.0
    %1470 = vmatprep.subr.mxu0 0.0
    %1471 = vmatpush1.msra.mxu0 0.0
    %1472 = vmatprep.subr.mxu0 0.0
    %1473 = vmatpush1.msra.mxu0 0.0
    %1474 = vmatprep.subr.mxu0 0.0
    %1475 = vmatpush1.msra.mxu0 0.0
    %1476 = vmatprep.subr.mxu0 0.0
    %1477 = vmatpush1.msra.mxu0 0.0
    %1478 = vmatprep.subr.mxu0 0.0
    %1479 = vmatpush1.msra.mxu0 0.0
    %1480 = vmatprep.subr.mxu0 0.0
    %1481 = vmatpush1.msra.mxu0 0.0
    %1482 = vmatprep.subr.mxu0 0.0
    %1483 = vmatpush1.msra.mxu0 0.0
    %1484 = vmatprep.subr.mxu0 0.0
    %1485 = vmatpush1.msra.mxu0 0.0
    %1486 = vmatprep.subr.mxu0 0.0
    %1487 = vmatpush1.msra.mxu0 0.0
    %1488 = vmatprep.subr.mxu0 0.0
    %1489 = vmatpush1.msra.mxu0 0.0
    %1490 = vmatprep.subr.mxu0 0.0
    %1491 = vmatpush1.msra.mxu0 0.0
    %1492 = vmatprep.subr.mxu0 0.0
    %1493 = vmatpush1.msra.mxu0 0.0
    %1494 = vmatprep.subr.mxu0 0.0
    %1495 = vmatpush1.msra.mxu0 0.0
    %1496 = vmatprep.subr.mxu0 0.0
    %1497 = vmatpush1.msra.mxu0 0.0
    %1498 = vmatprep.subr.mxu0 0.0
    %1499 = vmatpush1.msra.mxu0 0.0
    %1500 = vmatprep.subr.mxu0 0.0
    %1501 = vmatpush1.msra.mxu0 0.0
    %1502 = vmatprep.subr.mxu0 0.0
    %1503 = vmatpush1.msra.mxu0 0.0
    %1504 = vmatprep.mubr.f32.mxu0 0.0
    %1505 = vmatmul.mubr.f32.gmra.mrb[0].mxu0 %v1438
    %v1506 = vpop.f32.mrb[0].mxu0
    %v1507 = vadd.f32 0.0, %v1506
    %v1508 = vpop.f32.mrb[0].mxu0
    %1509 = vdwg.mxu0
    %s1510 = scalar_lea.vmem [#allocation4], 12
    %v1511 = vld [vmem:[%s1510] sm:$0xf]
    %v1513 = vsel %vm240, %v1511, 0
    %1515 = vmatprep.subr.mxu0 0.0
    %1516 = vmatpush1.msra.mxu0 %v201
    %1517 = vmatprep.subr.mxu0 0.0
    %1518 = vmatpush1.msra.mxu0 %v204
    %1519 = vmatprep.subr.mxu0 0.0
    %1520 = vmatpush1.msra.mxu0 %v209
    %1521 = vmatprep.subr.mxu0 0.0
    %1522 = vmatpush1.msra.mxu0 %v212
    %1523 = vmatprep.subr.mxu0 0.0
    %1524 = vmatpush1.msra.mxu0 0.0
    %1525 = vmatprep.subr.mxu0 0.0
    %1526 = vmatpush1.msra.mxu0 0.0
    %1527 = vmatprep.subr.mxu0 0.0
    %1528 = vmatpush1.msra.mxu0 0.0
    %1529 = vmatprep.subr.mxu0 0.0
    %1530 = vmatpush1.msra.mxu0 0.0
    %1531 = vmatprep.subr.mxu0 0.0
    %1532 = vmatpush1.msra.mxu0 0.0
    %1533 = vmatprep.subr.mxu0 0.0
    %1534 = vmatpush1.msra.mxu0 0.0
    %1535 = vmatprep.subr.mxu0 0.0
    %1536 = vmatpush1.msra.mxu0 0.0
    %1537 = vmatprep.subr.mxu0 0.0
    %1538 = vmatpush1.msra.mxu0 0.0
    %1539 = vmatprep.subr.mxu0 0.0
    %1540 = vmatpush1.msra.mxu0 0.0
    %1541 = vmatprep.subr.mxu0 0.0
    %1542 = vmatpush1.msra.mxu0 0.0
    %1543 = vmatprep.subr.mxu0 0.0
    %1544 = vmatpush1.msra.mxu0 0.0
    %1545 = vmatprep.subr.mxu0 0.0
    %1546 = vmatpush1.msra.mxu0 0.0
    %1547 = vmatprep.subr.mxu0 0.0
    %1548 = vmatpush1.msra.mxu0 0.0
    %1549 = vmatprep.subr.mxu0 0.0
    %1550 = vmatpush1.msra.mxu0 0.0
    %1551 = vmatprep.subr.mxu0 0.0
    %1552 = vmatpush1.msra.mxu0 0.0
    %1553 = vmatprep.subr.mxu0 0.0
    %1554 = vmatpush1.msra.mxu0 0.0
    %1555 = vmatprep.subr.mxu0 0.0
    %1556 = vmatpush1.msra.mxu0 0.0
    %1557 = vmatprep.subr.mxu0 0.0
    %1558 = vmatpush1.msra.mxu0 0.0
    %1559 = vmatprep.subr.mxu0 0.0
    %1560 = vmatpush1.msra.mxu0 0.0
    %1561 = vmatprep.subr.mxu0 0.0
    %1562 = vmatpush1.msra.mxu0 0.0
    %1563 = vmatprep.subr.mxu0 0.0
    %1564 = vmatpush1.msra.mxu0 0.0
    %1565 = vmatprep.subr.mxu0 0.0
    %1566 = vmatpush1.msra.mxu0 0.0
    %1567 = vmatprep.subr.mxu0 0.0
    %1568 = vmatpush1.msra.mxu0 0.0
    %1569 = vmatprep.subr.mxu0 0.0
    %1570 = vmatpush1.msra.mxu0 0.0
    %1571 = vmatprep.subr.mxu0 0.0
    %1572 = vmatpush1.msra.mxu0 0.0
    %1573 = vmatprep.subr.mxu0 0.0
    %1574 = vmatpush1.msra.mxu0 0.0
    %1575 = vmatprep.subr.mxu0 0.0
    %1576 = vmatpush1.msra.mxu0 0.0
    %1577 = vmatprep.subr.mxu0 0.0
    %1578 = vmatpush1.msra.mxu0 0.0
    %1579 = vmatprep.mubr.f32.mxu0 0.0
    %1580 = vmatmul.mubr.f32.gmra.mrb[0].mxu0 %v1513
    %v1581 = vpop.f32.mrb[0].mxu0
    %v1582 = vadd.f32 0.0, %v1581
    %v1583 = vpop.f32.mrb[0].mxu0
    %1584 = vdwg.mxu0
    %v1585 = vpack.c.bf16 %v1507, %v1507
    %s1586 = scalar_lea.vmem %s6, 48
    %v1587 = vld [vmem:[%s1586] sm:$0xf]
    %v1588 = vld [vmem:[%s1586 + $0x4] sm:$0xf]
    %v1589 = vld [vmem:[%s1586 + $0x8] sm:$0xf]
    %v1590 = vld [vmem:[%s1586 + $0xc] sm:$0xf]
    %v1591 = vpack.c.bf16 %v1582, %v1582
    %s1592 = scalar_lea.vmem [#allocation6], 48
    %v1593 = vld [vmem:[%s1592] sm:$0xf]
    %v1594 = vld [vmem:[%s1592 + $0x4] sm:$0xf]
    %v1595 = vld [vmem:[%s1592 + $0x8] sm:$0xf]
    %v1596 = vld [vmem:[%s1592 + $0xc] sm:$0xf]
    %v1601 = vunpack.c.l.b16 %v1593
    %v1602 = vunpack.c.l.b16 %v1594
    %v1603 = vunpack.c.l.b16 %v1595
    %v1604 = vunpack.c.l.b16 %v1596
    %v1605 = vpack.c.b16 %v1602, %v1601
    %v1606 = vpack.c.b16 %v1604, %v1603
    %v1610 = vsel %vm240, %v1591, 0
    %1612 = vmatprep.subr.bf16.mxu0 0
    %1613 = vmatpush1.bf16.msra.mxu0 %v1605
    %1614 = vmatprep.subr.bf16.mxu0 0
    %1615 = vmatpush1.bf16.msra.mxu0 %v1606
    %1616 = vmatprep.subr.bf16.mxu0 0
    %1617 = vmatpush1.bf16.msra.mxu0 0
    %1618 = vmatprep.subr.bf16.mxu0 0
    %1619 = vmatpush1.bf16.msra.mxu0 0
    %1620 = vmatprep.subr.bf16.mxu0 0
    %1621 = vmatpush1.bf16.msra.mxu0 0
    %1622 = vmatprep.subr.bf16.mxu0 0
    %1623 = vmatpush1.bf16.msra.mxu0 0
    %1624 = vmatprep.subr.bf16.mxu0 0
    %1625 = vmatpush1.bf16.msra.mxu0 0
    %1626 = vmatprep.subr.bf16.mxu0 0
    %1627 = vmatpush1.bf16.msra.mxu0 0
    %1628 = vmatprep.subr.bf16.mxu0 0
    %1629 = vmatpush1.bf16.msra.mxu0 0
    %1630 = vmatprep.subr.bf16.mxu0 0
    %1631 = vmatpush1.bf16.msra.mxu0 0
    %1632 = vmatprep.subr.bf16.mxu0 0
    %1633 = vmatpush1.bf16.msra.mxu0 0
    %1634 = vmatprep.subr.bf16.mxu0 0
    %1635 = vmatpush1.bf16.msra.mxu0 0
    %1636 = vmatprep.subr.bf16.mxu0 0
    %1637 = vmatpush1.bf16.msra.mxu0 0
    %1638 = vmatprep.subr.bf16.mxu0 0
    %1639 = vmatpush1.bf16.msra.mxu0 0
    %1640 = vmatprep.subr.bf16.mxu0 0
    %1641 = vmatpush1.bf16.msra.mxu0 0
    %1642 = vmatprep.subr.bf16.mxu0 0
    %1643 = vmatpush1.bf16.msra.mxu0 0
    %1644 = vmatprep.mubr.bf16.mxu0 0
    %1645 = vmatmul.mubr.bf16.gmra.mrb[0].mxu0 %v1610
    %v1646 = vpop.f32.mrb[0].mxu0
    %v1647 = vadd.f32 0.0, %v1646
    %v1648 = vpop.f32.mrb[0].mxu0
    %v1649 = vpop.f32.mrb[0].mxu0
    %v1650 = vpop.f32.mrb[0].mxu0
    %1651 = vdwg.mxu0
    %v1656 = vunpack.c.l.b16 %v1587
    %v1657 = vunpack.c.l.b16 %v1588
    %v1658 = vunpack.c.l.b16 %v1589
    %v1659 = vunpack.c.l.b16 %v1590
    %v1660 = vpack.c.b16 %v1657, %v1656
    %v1661 = vpack.c.b16 %v1659, %v1658
    %v1665 = vsel %vm240, %v1585, 0
    %1667 = vmatprep.subr.bf16.mxu0 0
    %1668 = vmatpush1.bf16.msra.mxu0 %v1660
    %1669 = vmatprep.subr.bf16.mxu0 0
    %1670 = vmatpush1.bf16.msra.mxu0 %v1661
    %1671 = vmatprep.subr.bf16.mxu0 0
    %1672 = vmatpush1.bf16.msra.mxu0 0
    %1673 = vmatprep.subr.bf16.mxu0 0
    %1674 = vmatpush1.bf16.msra.mxu0 0
    %1675 = vmatprep.subr.bf16.mxu0 0
    %1676 = vmatpush1.bf16.msra.mxu0 0
    %1677 = vmatprep.subr.bf16.mxu0 0
    %1678 = vmatpush1.bf16.msra.mxu0 0
    %1679 = vmatprep.subr.bf16.mxu0 0
    %1680 = vmatpush1.bf16.msra.mxu0 0
    %1681 = vmatprep.subr.bf16.mxu0 0
    %1682 = vmatpush1.bf16.msra.mxu0 0
    %1683 = vmatprep.subr.bf16.mxu0 0
    %1684 = vmatpush1.bf16.msra.mxu0 0
    %1685 = vmatprep.subr.bf16.mxu0 0
    %1686 = vmatpush1.bf16.msra.mxu0 0
    %1687 = vmatprep.subr.bf16.mxu0 0
    %1688 = vmatpush1.bf16.msra.mxu0 0
    %1689 = vmatprep.subr.bf16.mxu0 0
    %1690 = vmatpush1.bf16.msra.mxu0 0
    %1691 = vmatprep.subr.bf16.mxu0 0
    %1692 = vmatpush1.bf16.msra.mxu0 0
    %1693 = vmatprep.subr.bf16.mxu0 0
    %1694 = vmatpush1.bf16.msra.mxu0 0
    %1695 = vmatprep.subr.bf16.mxu0 0
    %1696 = vmatpush1.bf16.msra.mxu0 0
    %1697 = vmatprep.subr.bf16.mxu0 0
    %1698 = vmatpush1.bf16.msra.mxu0 0
    %1699 = vmatprep.mubr.bf16.mxu0 0
    %1700 = vmatmul.mubr.bf16.gmra.mrb[0].mxu0 %v1665
    %v1701 = vpop.f32.mrb[0].mxu0
    %v1702 = vadd.f32 %v1647, %v1701
    %v1703 = vpop.f32.mrb[0].mxu0
    %v1704 = vpop.f32.mrb[0].mxu0
    %v1705 = vpop.f32.mrb[0].mxu0
    %1706 = vdwg.mxu0
    %s1707 = scalar_lea.vmem %s5, 96
    %v1708 = vld [vmem:[%s1707] sm:$0xff]
    %v1709 = vld [vmem:[%s1707 + $0x8] sm:$0xff]
    %v1710 = vld [vmem:[%s1707 + $0x10] sm:$0xff]
    %v1711 = vld [vmem:[%s1707 + $0x18] sm:$0xff]
    %v1713 = vsel %vm155, %v1708, 0
    %v1716 = vsel %vm155, %v1709, 0
    %v1719 = vsel %vm155, %v1710, 0
    %v1722 = vsel %vm155, %v1711, 0
    %v1725 = vsel %vm580, %v1702, 0
    %1727 = vmatprep.subr.mxu0 0.0
    %1728 = vmatpush1.msra.mxu0 %v1725
    %1729 = vmatprep.subr.mxu0 0.0
    %1730 = vmatpush1.msra.mxu0 0.0
    %1731 = vmatprep.subr.mxu0 0.0
    %1732 = vmatpush1.msra.mxu0 0.0
    %1733 = vmatprep.subr.mxu0 0.0
    %1734 = vmatpush1.msra.mxu0 0.0
    %1735 = vmatprep.subr.mxu0 0.0
    %1736 = vmatpush1.msra.mxu0 0.0
    %1737 = vmatprep.subr.mxu0 0.0
    %1738 = vmatpush1.msra.mxu0 0.0
    %1739 = vmatprep.subr.mxu0 0.0
    %1740 = vmatpush1.msra.mxu0 0.0
    %1741 = vmatprep.subr.mxu0 0.0
    %1742 = vmatpush1.msra.mxu0 0.0
    %1743 = vmatprep.subr.mxu0 0.0
    %1744 = vmatpush1.msra.mxu0 0.0
    %1745 = vmatprep.subr.mxu0 0.0
    %1746 = vmatpush1.msra.mxu0 0.0
    %1747 = vmatprep.subr.mxu0 0.0
    %1748 = vmatpush1.msra.mxu0 0.0
    %1749 = vmatprep.subr.mxu0 0.0
    %1750 = vmatpush1.msra.mxu0 0.0
    %1751 = vmatprep.subr.mxu0 0.0
    %1752 = vmatpush1.msra.mxu0 0.0
    %1753 = vmatprep.subr.mxu0 0.0
    %1754 = vmatpush1.msra.mxu0 0.0
    %1755 = vmatprep.subr.mxu0 0.0
    %1756 = vmatpush1.msra.mxu0 0.0
    %1757 = vmatprep.subr.mxu0 0.0
    %1758 = vmatpush1.msra.mxu0 0.0
    %1759 = vmatprep.subr.mxu0 0.0
    %1760 = vmatpush1.msra.mxu0 0.0
    %1761 = vmatprep.subr.mxu0 0.0
    %1762 = vmatpush1.msra.mxu0 0.0
    %1763 = vmatprep.subr.mxu0 0.0
    %1764 = vmatpush1.msra.mxu0 0.0
    %1765 = vmatprep.subr.mxu0 0.0
    %1766 = vmatpush1.msra.mxu0 0.0
    %1767 = vmatprep.subr.mxu0 0.0
    %1768 = vmatpush1.msra.mxu0 0.0
    %1769 = vmatprep.subr.mxu0 0.0
    %1770 = vmatpush1.msra.mxu0 0.0
    %1771 = vmatprep.subr.mxu0 0.0
    %1772 = vmatpush1.msra.mxu0 0.0
    %1773 = vmatprep.subr.mxu0 0.0
    %1774 = vmatpush1.msra.mxu0 0.0
    %1775 = vmatprep.subr.mxu0 0.0
    %1776 = vmatpush1.msra.mxu0 0.0
    %1777 = vmatprep.subr.mxu0 0.0
    %1778 = vmatpush1.msra.mxu0 0.0
    %1779 = vmatprep.subr.mxu0 0.0
    %1780 = vmatpush1.msra.mxu0 0.0
    %1781 = vmatprep.subr.mxu0 0.0
    %1782 = vmatpush1.msra.mxu0 0.0
    %1783 = vmatprep.subr.mxu0 0.0
    %1784 = vmatpush1.msra.mxu0 0.0
    %1785 = vmatprep.subr.mxu0 0.0
    %1786 = vmatpush1.msra.mxu0 0.0
    %1787 = vmatprep.subr.mxu0 0.0
    %1788 = vmatpush1.msra.mxu0 0.0
    %1789 = vmatprep.subr.mxu0 0.0
    %1790 = vmatpush1.msra.mxu0 0.0
    %1791 = vmatprep.mubr.f32.mxu0 0.0
    %1792 = vmatmul.mubr.f32.gmra.mrb[0].mxu0 %v1713
    %v1793 = vpop.f32.mrb[0].mxu0
    %v1794 = vadd.f32 0.0, %v1793
    %v1795 = vpop.f32.mrb[0].mxu0
    %1796 = vmatprep.mubr.f32.mxu0 0.0
    %1797 = vmatmul.mubr.f32.gmra.mrb[0].mxu0 %v1716
    %v1798 = vpop.f32.mrb[0].mxu0
    %v1799 = vadd.f32 0.0, %v1798
    %v1800 = vpop.f32.mrb[0].mxu0
    %1801 = vmatprep.mubr.f32.mxu0 0.0
    %1802 = vmatmul.mubr.f32.gmra.mrb[0].mxu0 %v1719
    %v1803 = vpop.f32.mrb[0].mxu0
    %v1804 = vadd.f32 0.0, %v1803
    %v1805 = vpop.f32.mrb[0].mxu0
    %1806 = vmatprep.mubr.f32.mxu0 0.0
    %1807 = vmatmul.mubr.f32.gmra.mrb[0].mxu0 %v1722
    %v1808 = vpop.f32.mrb[0].mxu0
    %v1809 = vadd.f32 0.0, %v1808
    %v1810 = vpop.f32.mrb[0].mxu0
    %1811 = vdwg.mxu0
    %v1812 = vadd.f32 %v1431, %v1794
    %v1813 = vadd.f32 %v1432, %v1799
    %v1814 = vadd.f32 %v1433, %v1804
    %v1815 = vadd.f32 %v1434, %v1809
    %v1816 = vmul.f32 %v1812, 0.5
    %v1817 = vmul.f32 %v1813, 0.5
    %v1818 = vmul.f32 %v1814, 0.5
    %v1819 = vmul.f32 %v1815, 0.5
    %v1820 = vmul.f32 %v1812, 0.70710677
    %v1821 = vmul.f32 %v1813, 0.70710677
    %v1822 = vmul.f32 %v1814, 0.70710677
    %v1823 = vmul.f32 %v1815, 0.70710677
    %v1824 = verf.f32.pop %v1820
    %v1825 = verf.f32.pop %v1821
    %v1826 = verf.f32.pop %v1822
    %v1827 = verf.f32.pop %v1823
    %v1828 = vadd.f32 %v1824, 1.0
    %v1829 = vadd.f32 %v1825, 1.0
    %v1830 = vadd.f32 %v1826, 1.0
    %v1831 = vadd.f32 %v1827, 1.0
    %v1832 = vmul.f32 %v1816, %v1828
    %v1833 = vmul.f32 %v1817, %v1829
    %v1834 = vmul.f32 %v1818, %v1830
    %v1835 = vmul.f32 %v1819, %v1831
    %v1836 = vpack.c.bf16 %v1833, %v1832
    %v1837 = vpack.c.bf16 %v1835, %v1834
    %s1838 = scalar_lea.vmem [#allocation7], 16
    %v1839 = vld [vmem:[%s1838] sm:$0xf]
    %v1840 = vld [vmem:[%s1838 + $0x4] sm:$0xf]
    %v1841 = vld [vmem:[%s1838 + $0x8] sm:$0xf]
    %v1842 = vld [vmem:[%s1838 + $0xc] sm:$0xf]
    %s1843 = scalar_lea.vmem %s9, 1
    %v1844 = vld [vmem:[%s1843] sm:$0x1]
    %v1846 = vlaneseq
    %v1847 = vshrl.u32 %v1846, 7
    %v1848 = vsub.s32 0, %v1847
    %v1849 = vrot.slane %v1844, %v1848
    %v1855 = vunpack.c.l.b16 %v1839
    %v1856 = vunpack.c.l.b16 %v1840
    %v1857 = vunpack.c.l.b16 %v1841
    %v1858 = vunpack.c.l.b16 %v1842
    %v1859 = vpack.c.b16 %v1856, %v1855
    %v1860 = vpack.c.b16 %v1858, %v1857
    %v1864 = vsel %vm240, %v1836, 0
    %v1867 = vsel %vm240, %v1837, 0
    %1869 = vmatprep.subr.bf16.mxu0 0
    %1870 = vmatpush1.bf16.msra.mxu0 %v1859
    %1871 = vmatprep.subr.bf16.mxu0 0
    %1872 = vmatpush1.bf16.msra.mxu0 %v1860
    %1873 = vmatprep.subr.bf16.mxu0 0
    %1874 = vmatpush1.bf16.msra.mxu0 0
    %1875 = vmatprep.subr.bf16.mxu0 0
    %1876 = vmatpush1.bf16.msra.mxu0 0
    %1877 = vmatprep.subr.bf16.mxu0 0
    %1878 = vmatpush1.bf16.msra.mxu0 0
    %1879 = vmatprep.subr.bf16.mxu0 0
    %1880 = vmatpush1.bf16.msra.mxu0 0
    %1881 = vmatprep.subr.bf16.mxu0 0
    %1882 = vmatpush1.bf16.msra.mxu0 0
    %1883 = vmatprep.subr.bf16.mxu0 0
    %1884 = vmatpush1.bf16.msra.mxu0 0
    %1885 = vmatprep.subr.bf16.mxu0 0
    %1886 = vmatpush1.bf16.msra.mxu0 0
    %1887 = vmatprep.subr.bf16.mxu0 0
    %1888 = vmatpush1.bf16.msra.mxu0 0
    %1889 = vmatprep.subr.bf16.mxu0 0
    %1890 = vmatpush1.bf16.msra.mxu0 0
    %1891 = vmatprep.subr.bf16.mxu0 0
    %1892 = vmatpush1.bf16.msra.mxu0 0
    %1893 = vmatprep.subr.bf16.mxu0 0
    %1894 = vmatpush1.bf16.msra.mxu0 0
    %1895 = vmatprep.subr.bf16.mxu0 0
    %1896 = vmatpush1.bf16.msra.mxu0 0
    %1897 = vmatprep.subr.bf16.mxu0 0
    %1898 = vmatpush1.bf16.msra.mxu0 0
    %1899 = vmatprep.subr.bf16.mxu0 0
    %1900 = vmatpush1.bf16.msra.mxu0 0
    %1901 = vmatprep.mubr.bf16.mxu0 0
    %1902 = vmatmul.mubr.bf16.gmra.mrb[0].mxu0 %v1864
    %v1903 = vpop.f32.mrb[0].mxu0
    %v1904 = vadd.f32 %v1849, %v1903
    %v1905 = vpop.f32.mrb[0].mxu0
    %v1906 = vpop.f32.mrb[0].mxu0
    %v1907 = vadd.f32 %v1849, %v1906
    %v1908 = vpop.f32.mrb[0].mxu0
    %1909 = vmatprep.mubr.bf16.mxu0 0
    %1910 = vmatmul.mubr.bf16.gmra.mrb[0].mxu0 %v1867
    %v1911 = vpop.f32.mrb[0].mxu0
    %v1912 = vadd.f32 %v1849, %v1911
    %v1913 = vpop.f32.mrb[0].mxu0
    %v1914 = vpop.f32.mrb[0].mxu0
    %v1915 = vadd.f32 %v1849, %v1914
    %v1916 = vpop.f32.mrb[0].mxu0
    %1917 = vdwg.mxu0
    %1918 = vmatprep.subr.mxu0 0.0
    %1919 = vmatpush1.msra.mxu0 %v1832
    %1920 = vmatprep.subr.mxu0 0.0
    %1921 = vmatpush1.msra.mxu0 %v1833
    %1922 = vmatprep.subr.mxu0 0.0
    %1923 = vmatpush1.msra.mxu0 %v1834
    %1924 = vmatprep.subr.mxu0 0.0
    %1925 = vmatpush1.msra.mxu0 %v1835
    %1926 = vmatprep.subr.mxu0 0.0
    %1927 = vmatpush1.msra.mxu0 0.0
    %1928 = vmatprep.subr.mxu0 0.0
    %1929 = vmatpush1.msra.mxu0 0.0
    %1930 = vmatprep.subr.mxu0 0.0
    %1931 = vmatpush1.msra.mxu0 0.0
    %1932 = vmatprep.subr.mxu0 0.0
    %1933 = vmatpush1.msra.mxu0 0.0
    %1934 = vmatprep.subr.mxu0 0.0
    %1935 = vmatpush1.msra.mxu0 0.0
    %1936 = vmatprep.subr.mxu0 0.0
    %1937 = vmatpush1.msra.mxu0 0.0
    %1938 = vmatprep.subr.mxu0 0.0
    %1939 = vmatpush1.msra.mxu0 0.0
    %1940 = vmatprep.subr.mxu0 0.0
    %1941 = vmatpush1.msra.mxu0 0.0
    %1942 = vmatprep.subr.mxu0 0.0
    %1943 = vmatpush1.msra.mxu0 0.0
    %1944 = vmatprep.subr.mxu0 0.0
    %1945 = vmatpush1.msra.mxu0 0.0
    %1946 = vmatprep.subr.mxu0 0.0
    %1947 = vmatpush1.msra.mxu0 0.0
    %1948 = vmatprep.subr.mxu0 0.0
    %1949 = vmatpush1.msra.mxu0 0.0
    %1950 = vmatprep.subr.mxu0 0.0
    %1951 = vmatpush1.msra.mxu0 0.0
    %1952 = vmatprep.subr.mxu0 0.0
    %1953 = vmatpush1.msra.mxu0 0.0
    %1954 = vmatprep.subr.mxu0 0.0
    %1955 = vmatpush1.msra.mxu0 0.0
    %1956 = vmatprep.subr.mxu0 0.0
    %1957 = vmatpush1.msra.mxu0 0.0
    %1958 = vmatprep.subr.mxu0 0.0
    %1959 = vmatpush1.msra.mxu0 0.0
    %1960 = vmatprep.subr.mxu0 0.0
    %1961 = vmatpush1.msra.mxu0 0.0
    %1962 = vmatprep.subr.mxu0 0.0
    %1963 = vmatpush1.msra.mxu0 0.0
    %1964 = vmatprep.subr.mxu0 0.0
    %1965 = vmatpush1.msra.mxu0 0.0
    %1966 = vmatprep.subr.mxu0 0.0
    %1967 = vmatpush1.msra.mxu0 0.0
    %1968 = vmatprep.subr.mxu0 0.0
    %1969 = vmatpush1.msra.mxu0 0.0
    %1970 = vmatprep.subr.mxu0 0.0
    %1971 = vmatpush1.msra.mxu0 0.0
    %1972 = vmatprep.subr.mxu0 0.0
    %1973 = vmatpush1.msra.mxu0 0.0
    %1974 = vmatprep.subr.mxu0 0.0
    %1975 = vmatpush1.msra.mxu0 0.0
    %1976 = vmatprep.subr.mxu0 0.0
    %1977 = vmatpush1.msra.mxu0 0.0
    %1978 = vmatprep.subr.mxu0 0.0
    %1979 = vmatpush1.msra.mxu0 0.0
    %1980 = vmatprep.subr.mxu0 0.0
    %1981 = vmatpush1.msra.mxu0 0.0
    %1982 = vmatprep.mubr.f32.mxu0 0.0
    %1983 = vmatmul.mubr.f32.gmra.mrb[0].mxu0 %v298
    %v1984 = vpop.f32.mrb[0].mxu0
    %v1985 = vadd.f32 0.0, %v1984
    %v1986 = vpop.f32.mrb[0].mxu0
    %1987 = vdwg.mxu0
    %1988 = vmatprep.subr.mxu0 0.0
    %1989 = vmatpush1.msra.mxu0 %v1832
    %1990 = vmatprep.subr.mxu0 0.0
    %1991 = vmatpush1.msra.mxu0 %v1833
    %1992 = vmatprep.subr.mxu0 0.0
    %1993 = vmatpush1.msra.mxu0 %v1834
    %1994 = vmatprep.subr.mxu0 0.0
    %1995 = vmatpush1.msra.mxu0 %v1835
    %1996 = vmatprep.subr.mxu0 0.0
    %1997 = vmatpush1.msra.mxu0 0.0
    %1998 = vmatprep.subr.mxu0 0.0
    %1999 = vmatpush1.msra.mxu0 0.0
    %2000 = vmatprep.subr.mxu0 0.0
    %2001 = vmatpush1.msra.mxu0 0.0
    %2002 = vmatprep.subr.mxu0 0.0
    %2003 = vmatpush1.msra.mxu0 0.0
    %2004 = vmatprep.subr.mxu0 0.0
    %2005 = vmatpush1.msra.mxu0 0.0
    %2006 = vmatprep.subr.mxu0 0.0
    %2007 = vmatpush1.msra.mxu0 0.0
    %2008 = vmatprep.subr.mxu0 0.0
    %2009 = vmatpush1.msra.mxu0 0.0
    %2010 = vmatprep.subr.mxu0 0.0
    %2011 = vmatpush1.msra.mxu0 0.0
    %2012 = vmatprep.subr.mxu0 0.0
    %2013 = vmatpush1.msra.mxu0 0.0
    %2014 = vmatprep.subr.mxu0 0.0
    %2015 = vmatpush1.msra.mxu0 0.0
    %2016 = vmatprep.subr.mxu0 0.0
    %2017 = vmatpush1.msra.mxu0 0.0
    %2018 = vmatprep.subr.mxu0 0.0
    %2019 = vmatpush1.msra.mxu0 0.0
    %2020 = vmatprep.subr.mxu0 0.0
    %2021 = vmatpush1.msra.mxu0 0.0
    %2022 = vmatprep.subr.mxu0 0.0
    %2023 = vmatpush1.msra.mxu0 0.0
    %2024 = vmatprep.subr.mxu0 0.0
    %2025 = vmatpush1.msra.mxu0 0.0
    %2026 = vmatprep.subr.mxu0 0.0
    %2027 = vmatpush1.msra.mxu0 0.0
    %2028 = vmatprep.subr.mxu0 0.0
    %2029 = vmatpush1.msra.mxu0 0.0
    %2030 = vmatprep.subr.mxu0 0.0
    %2031 = vmatpush1.msra.mxu0 0.0
    %2032 = vmatprep.subr.mxu0 0.0
    %2033 = vmatpush1.msra.mxu0 0.0
    %2034 = vmatprep.subr.mxu0 0.0
    %2035 = vmatpush1.msra.mxu0 0.0
    %2036 = vmatprep.subr.mxu0 0.0
    %2037 = vmatpush1.msra.mxu0 0.0
    %2038 = vmatprep.subr.mxu0 0.0
    %2039 = vmatpush1.msra.mxu0 0.0
    %2040 = vmatprep.subr.mxu0 0.0
    %2041 = vmatpush1.msra.mxu0 0.0
    %2042 = vmatprep.subr.mxu0 0.0
    %2043 = vmatpush1.msra.mxu0 0.0
    %2044 = vmatprep.subr.mxu0 0.0
    %2045 = vmatpush1.msra.mxu0 0.0
    %2046 = vmatprep.subr.mxu0 0.0
    %2047 = vmatpush1.msra.mxu0 0.0
    %2048 = vmatprep.subr.mxu0 0.0
    %2049 = vmatpush1.msra.mxu0 0.0
    %2050 = vmatprep.subr.mxu0 0.0
    %2051 = vmatpush1.msra.mxu0 0.0
    %2052 = vmatprep.mubr.f32.mxu0 0.0
    %2053 = vmatmul.mubr.f32.gmra.mrb[0].mxu0 %v372
    %v2054 = vpop.f32.mrb[0].mxu0
    %v2055 = vadd.f32 0.0, %v2054
    %v2056 = vpop.f32.mrb[0].mxu0
    %2057 = vdwg.mxu0
    %v2058 = vpack.c.bf16 %v1985, %v1985
    %s2059 = scalar_lea.vmem %s6, 64
    %v2060 = vld [vmem:[%s2059] sm:$0xf]
    %v2061 = vld [vmem:[%s2059 + $0x4] sm:$0xf]
    %v2062 = vld [vmem:[%s2059 + $0x8] sm:$0xf]
    %v2063 = vld [vmem:[%s2059 + $0xc] sm:$0xf]
    %v2064 = vpack.c.bf16 %v2055, %v2055
    %s2065 = scalar_lea.vmem [#allocation6], 64
    %v2066 = vld [vmem:[%s2065] sm:$0xf]
    %v2067 = vld [vmem:[%s2065 + $0x4] sm:$0xf]
    %v2068 = vld [vmem:[%s2065 + $0x8] sm:$0xf]
    %v2069 = vld [vmem:[%s2065 + $0xc] sm:$0xf]
    %v2074 = vunpack.c.l.b16 %v2066
    %v2075 = vunpack.c.l.b16 %v2067
    %v2076 = vunpack.c.l.b16 %v2068
    %v2077 = vunpack.c.l.b16 %v2069
    %v2078 = vpack.c.b16 %v2075, %v2074
    %v2079 = vpack.c.b16 %v2077, %v2076
    %v2083 = vsel %vm240, %v2064, 0
    %2085 = vmatprep.subr.bf16.mxu0 0
    %2086 = vmatpush1.bf16.msra.mxu0 %v2078
    %2087 = vmatprep.subr.bf16.mxu0 0
    %2088 = vmatpush1.bf16.msra.mxu0 %v2079
    %2089 = vmatprep.subr.bf16.mxu0 0
    %2090 = vmatpush1.bf16.msra.mxu0 0
    %2091 = vmatprep.subr.bf16.mxu0 0
    %2092 = vmatpush1.bf16.msra.mxu0 0
    %2093 = vmatprep.subr.bf16.mxu0 0
    %2094 = vmatpush1.bf16.msra.mxu0 0
    %2095 = vmatprep.subr.bf16.mxu0 0
    %2096 = vmatpush1.bf16.msra.mxu0 0
    %2097 = vmatprep.subr.bf16.mxu0 0
    %2098 = vmatpush1.bf16.msra.mxu0 0
    %2099 = vmatprep.subr.bf16.mxu0 0
    %2100 = vmatpush1.bf16.msra.mxu0 0
    %2101 = vmatprep.subr.bf16.mxu0 0
    %2102 = vmatpush1.bf16.msra.mxu0 0
    %2103 = vmatprep.subr.bf16.mxu0 0
    %2104 = vmatpush1.bf16.msra.mxu0 0
    %2105 = vmatprep.subr.bf16.mxu0 0
    %2106 = vmatpush1.bf16.msra.mxu0 0
    %2107 = vmatprep.subr.bf16.mxu0 0
    %2108 = vmatpush1.bf16.msra.mxu0 0
    %2109 = vmatprep.subr.bf16.mxu0 0
    %2110 = vmatpush1.bf16.msra.mxu0 0
    %2111 = vmatprep.subr.bf16.mxu0 0
    %2112 = vmatpush1.bf16.msra.mxu0 0
    %2113 = vmatprep.subr.bf16.mxu0 0
    %2114 = vmatpush1.bf16.msra.mxu0 0
    %2115 = vmatprep.subr.bf16.mxu0 0
    %2116 = vmatpush1.bf16.msra.mxu0 0
    %2117 = vmatprep.mubr.bf16.mxu0 0
    %2118 = vmatmul.mubr.bf16.gmra.mrb[0].mxu0 %v2083
    %v2119 = vpop.f32.mrb[0].mxu0
    %v2120 = vadd.f32 0.0, %v2119
    %v2121 = vpop.f32.mrb[0].mxu0
    %v2122 = vpop.f32.mrb[0].mxu0
    %v2123 = vpop.f32.mrb[0].mxu0
    %2124 = vdwg.mxu0
    %v2129 = vunpack.c.l.b16 %v2060
    %v2130 = vunpack.c.l.b16 %v2061
    %v2131 = vunpack.c.l.b16 %v2062
    %v2132 = vunpack.c.l.b16 %v2063
    %v2133 = vpack.c.b16 %v2130, %v2129
    %v2134 = vpack.c.b16 %v2132, %v2131
    %v2138 = vsel %vm240, %v2058, 0
    %2140 = vmatprep.subr.bf16.mxu0 0
    %2141 = vmatpush1.bf16.msra.mxu0 %v2133
    %2142 = vmatprep.subr.bf16.mxu0 0
    %2143 = vmatpush1.bf16.msra.mxu0 %v2134
    %2144 = vmatprep.subr.bf16.mxu0 0
    %2145 = vmatpush1.bf16.msra.mxu0 0
    %2146 = vmatprep.subr.bf16.mxu0 0
    %2147 = vmatpush1.bf16.msra.mxu0 0
    %2148 = vmatprep.subr.bf16.mxu0 0
    %2149 = vmatpush1.bf16.msra.mxu0 0
    %2150 = vmatprep.subr.bf16.mxu0 0
    %2151 = vmatpush1.bf16.msra.mxu0 0
    %2152 = vmatprep.subr.bf16.mxu0 0
    %2153 = vmatpush1.bf16.msra.mxu0 0
    %2154 = vmatprep.subr.bf16.mxu0 0
    %2155 = vmatpush1.bf16.msra.mxu0 0
    %2156 = vmatprep.subr.bf16.mxu0 0
    %2157 = vmatpush1.bf16.msra.mxu0 0
    %2158 = vmatprep.subr.bf16.mxu0 0
    %2159 = vmatpush1.bf16.msra.mxu0 0
    %2160 = vmatprep.subr.bf16.mxu0 0
    %2161 = vmatpush1.bf16.msra.mxu0 0
    %2162 = vmatprep.subr.bf16.mxu0 0
    %2163 = vmatpush1.bf16.msra.mxu0 0
    %2164 = vmatprep.subr.bf16.mxu0 0
    %2165 = vmatpush1.bf16.msra.mxu0 0
    %2166 = vmatprep.subr.bf16.mxu0 0
    %2167 = vmatpush1.bf16.msra.mxu0 0
    %2168 = vmatprep.subr.bf16.mxu0 0
    %2169 = vmatpush1.bf16.msra.mxu0 0
    %2170 = vmatprep.subr.bf16.mxu0 0
    %2171 = vmatpush1.bf16.msra.mxu0 0
    %2172 = vmatprep.mubr.bf16.mxu0 0
    %2173 = vmatmul.mubr.bf16.gmra.mrb[0].mxu0 %v2138
    %v2174 = vpop.f32.mrb[0].mxu0
    %v2175 = vadd.f32 %v2120, %v2174
    %v2176 = vpop.f32.mrb[0].mxu0
    %v2177 = vpop.f32.mrb[0].mxu0
    %v2178 = vpop.f32.mrb[0].mxu0
    %2179 = vdwg.mxu0
    %v2181 = vsel %vm580, %v2175, 0
    %2183 = vmatprep.subr.mxu0 0.0
    %2184 = vmatpush1.msra.mxu0 %v2181
    %2185 = vmatprep.subr.mxu0 0.0
    %2186 = vmatpush1.msra.mxu0 0.0
    %2187 = vmatprep.subr.mxu0 0.0
    %2188 = vmatpush1.msra.mxu0 0.0
    %2189 = vmatprep.subr.mxu0 0.0
    %2190 = vmatpush1.msra.mxu0 0.0
    %2191 = vmatprep.subr.mxu0 0.0
    %2192 = vmatpush1.msra.mxu0 0.0
    %2193 = vmatprep.subr.mxu0 0.0
    %2194 = vmatpush1.msra.mxu0 0.0
    %2195 = vmatprep.subr.mxu0 0.0
    %2196 = vmatpush1.msra.mxu0 0.0
    %2197 = vmatprep.subr.mxu0 0.0
    %2198 = vmatpush1.msra.mxu0 0.0
    %2199 = vmatprep.subr.mxu0 0.0
    %2200 = vmatpush1.msra.mxu0 0.0
    %2201 = vmatprep.subr.mxu0 0.0
    %2202 = vmatpush1.msra.mxu0 0.0
    %2203 = vmatprep.subr.mxu0 0.0
    %2204 = vmatpush1.msra.mxu0 0.0
    %2205 = vmatprep.subr.mxu0 0.0
    %2206 = vmatpush1.msra.mxu0 0.0
    %2207 = vmatprep.subr.mxu0 0.0
    %2208 = vmatpush1.msra.mxu0 0.0
    %2209 = vmatprep.subr.mxu0 0.0
    %2210 = vmatpush1.msra.mxu0 0.0
    %2211 = vmatprep.subr.mxu0 0.0
    %2212 = vmatpush1.msra.mxu0 0.0
    %2213 = vmatprep.subr.mxu0 0.0
    %2214 = vmatpush1.msra.mxu0 0.0
    %2215 = vmatprep.subr.mxu0 0.0
    %2216 = vmatpush1.msra.mxu0 0.0
    %2217 = vmatprep.subr.mxu0 0.0
    %2218 = vmatpush1.msra.mxu0 0.0
    %2219 = vmatprep.subr.mxu0 0.0
    %2220 = vmatpush1.msra.mxu0 0.0
    %2221 = vmatprep.subr.mxu0 0.0
    %2222 = vmatpush1.msra.mxu0 0.0
    %2223 = vmatprep.subr.mxu0 0.0
    %2224 = vmatpush1.msra.mxu0 0.0
    %2225 = vmatprep.subr.mxu0 0.0
    %2226 = vmatpush1.msra.mxu0 0.0
    %2227 = vmatprep.subr.mxu0 0.0
    %2228 = vmatpush1.msra.mxu0 0.0
    %2229 = vmatprep.subr.mxu0 0.0
    %2230 = vmatpush1.msra.mxu0 0.0
    %2231 = vmatprep.subr.mxu0 0.0
    %2232 = vmatpush1.msra.mxu0 0.0
    %2233 = vmatprep.subr.mxu0 0.0
    %2234 = vmatpush1.msra.mxu0 0.0
    %2235 = vmatprep.subr.mxu0 0.0
    %2236 = vmatpush1.msra.mxu0 0.0
    %2237 = vmatprep.subr.mxu0 0.0
    %2238 = vmatpush1.msra.mxu0 0.0
    %2239 = vmatprep.subr.mxu0 0.0
    %2240 = vmatpush1.msra.mxu0 0.0
    %2241 = vmatprep.subr.mxu0 0.0
    %2242 = vmatpush1.msra.mxu0 0.0
    %2243 = vmatprep.subr.mxu0 0.0
    %2244 = vmatpush1.msra.mxu0 0.0
    %2245 = vmatprep.subr.mxu0 0.0
    %2246 = vmatpush1.msra.mxu0 0.0
    %2247 = vmatprep.mubr.f32.mxu0 0.0
    %2248 = vmatmul.mubr.f32.gmra.mrb[0].mxu0 %v569
    %v2249 = vpop.f32.mrb[0].mxu0
    %v2250 = vadd.f32 0.0, %v2249
    %v2251 = vpop.f32.mrb[0].mxu0
    %2252 = vmatprep.mubr.f32.mxu0 0.0
    %2253 = vmatmul.mubr.f32.gmra.mrb[0].mxu0 %v572
    %v2254 = vpop.f32.mrb[0].mxu0
    %v2255 = vadd.f32 0.0, %v2254
    %v2256 = vpop.f32.mrb[0].mxu0
    %2257 = vmatprep.mubr.f32.mxu0 0.0
    %2258 = vmatmul.mubr.f32.gmra.mrb[0].mxu0 %v575
    %v2259 = vpop.f32.mrb[0].mxu0
    %v2260 = vadd.f32 0.0, %v2259
    %v2261 = vpop.f32.mrb[0].mxu0
    %2262 = vmatprep.mubr.f32.mxu0 0.0
    %2263 = vmatmul.mubr.f32.gmra.mrb[0].mxu0 %v578
    %v2264 = vpop.f32.mrb[0].mxu0
    %v2265 = vadd.f32 0.0, %v2264
    %v2266 = vpop.f32.mrb[0].mxu0
    %2267 = vdwg.mxu0
    %v2268 = vadd.f32 %v1904, %v2250
    %v2269 = vadd.f32 %v1907, %v2255
    %v2270 = vadd.f32 %v1912, %v2260
    %v2271 = vadd.f32 %v1915, %v2265
    %2272 = vmatprep.subr.mxu0 0.0
    %2273 = vmatpush1.msra.mxu0 %v1832
    %2274 = vmatprep.subr.mxu0 0.0
    %2275 = vmatpush1.msra.mxu0 %v1833
    %2276 = vmatprep.subr.mxu0 0.0
    %2277 = vmatpush1.msra.mxu0 %v1834
    %2278 = vmatprep.subr.mxu0 0.0
    %2279 = vmatpush1.msra.mxu0 %v1835
    %2280 = vmatprep.subr.mxu0 0.0
    %2281 = vmatpush1.msra.mxu0 0.0
    %2282 = vmatprep.subr.mxu0 0.0
    %2283 = vmatpush1.msra.mxu0 0.0
    %2284 = vmatprep.subr.mxu0 0.0
    %2285 = vmatpush1.msra.mxu0 0.0
    %2286 = vmatprep.subr.mxu0 0.0
    %2287 = vmatpush1.msra.mxu0 0.0
    %2288 = vmatprep.subr.mxu0 0.0
    %2289 = vmatpush1.msra.mxu0 0.0
    %2290 = vmatprep.subr.mxu0 0.0
    %2291 = vmatpush1.msra.mxu0 0.0
    %2292 = vmatprep.subr.mxu0 0.0
    %2293 = vmatpush1.msra.mxu0 0.0
    %2294 = vmatprep.subr.mxu0 0.0
    %2295 = vmatpush1.msra.mxu0 0.0
    %2296 = vmatprep.subr.mxu0 0.0
    %2297 = vmatpush1.msra.mxu0 0.0
    %2298 = vmatprep.subr.mxu0 0.0
    %2299 = vmatpush1.msra.mxu0 0.0
    %2300 = vmatprep.subr.mxu0 0.0
    %2301 = vmatpush1.msra.mxu0 0.0
    %2302 = vmatprep.subr.mxu0 0.0
    %2303 = vmatpush1.msra.mxu0 0.0
    %2304 = vmatprep.subr.mxu0 0.0
    %2305 = vmatpush1.msra.mxu0 0.0
    %2306 = vmatprep.subr.mxu0 0.0
    %2307 = vmatpush1.msra.mxu0 0.0
    %2308 = vmatprep.subr.mxu0 0.0
    %2309 = vmatpush1.msra.mxu0 0.0
    %2310 = vmatprep.subr.mxu0 0.0
    %2311 = vmatpush1.msra.mxu0 0.0
    %2312 = vmatprep.subr.mxu0 0.0
    %2313 = vmatpush1.msra.mxu0 0.0
    %2314 = vmatprep.subr.mxu0 0.0
    %2315 = vmatpush1.msra.mxu0 0.0
    %2316 = vmatprep.subr.mxu0 0.0
    %2317 = vmatpush1.msra.mxu0 0.0
    %2318 = vmatprep.subr.mxu0 0.0
    %2319 = vmatpush1.msra.mxu0 0.0
    %2320 = vmatprep.subr.mxu0 0.0
    %2321 = vmatpush1.msra.mxu0 0.0
    %2322 = vmatprep.subr.mxu0 0.0
    %2323 = vmatpush1.msra.mxu0 0.0
    %2324 = vmatprep.subr.mxu0 0.0
    %2325 = vmatpush1.msra.mxu0 0.0
    %2326 = vmatprep.subr.mxu0 0.0
    %2327 = vmatpush1.msra.mxu0 0.0
    %2328 = vmatprep.subr.mxu0 0.0
    %2329 = vmatpush1.msra.mxu0 0.0
    %2330 = vmatprep.subr.mxu0 0.0
    %2331 = vmatpush1.msra.mxu0 0.0
    %2332 = vmatprep.subr.mxu0 0.0
    %2333 = vmatpush1.msra.mxu0 0.0
    %2334 = vmatprep.subr.mxu0 0.0
    %2335 = vmatpush1.msra.mxu0 0.0
    %2336 = vmatprep.mubr.f32.mxu0 0.0
    %2337 = vmatmul.mubr.f32.gmra.mrb[0].mxu0 %v676
    %v2338 = vpop.f32.mrb[0].mxu0
    %v2339 = vadd.f32 0.0, %v2338
    %v2340 = vpop.f32.mrb[0].mxu0
    %2341 = vdwg.mxu0
    %2342 = vmatprep.subr.mxu0 0.0
    %2343 = vmatpush1.msra.mxu0 %v1832
    %2344 = vmatprep.subr.mxu0 0.0
    %2345 = vmatpush1.msra.mxu0 %v1833
    %2346 = vmatprep.subr.mxu0 0.0
    %2347 = vmatpush1.msra.mxu0 %v1834
    %2348 = vmatprep.subr.mxu0 0.0
    %2349 = vmatpush1.msra.mxu0 %v1835
    %2350 = vmatprep.subr.mxu0 0.0
    %2351 = vmatpush1.msra.mxu0 0.0
    %2352 = vmatprep.subr.mxu0 0.0
    %2353 = vmatpush1.msra.mxu0 0.0
    %2354 = vmatprep.subr.mxu0 0.0
    %2355 = vmatpush1.msra.mxu0 0.0
    %2356 = vmatprep.subr.mxu0 0.0
    %2357 = vmatpush1.msra.mxu0 0.0
    %2358 = vmatprep.subr.mxu0 0.0
    %2359 = vmatpush1.msra.mxu0 0.0
    %2360 = vmatprep.subr.mxu0 0.0
    %2361 = vmatpush1.msra.mxu0 0.0
    %2362 = vmatprep.subr.mxu0 0.0
    %2363 = vmatpush1.msra.mxu0 0.0
    %2364 = vmatprep.subr.mxu0 0.0
    %2365 = vmatpush1.msra.mxu0 0.0
    %2366 = vmatprep.subr.mxu0 0.0
    %2367 = vmatpush1.msra.mxu0 0.0
    %2368 = vmatprep.subr.mxu0 0.0
    %2369 = vmatpush1.msra.mxu0 0.0
    %2370 = vmatprep.subr.mxu0 0.0
    %2371 = vmatpush1.msra.mxu0 0.0
    %2372 = vmatprep.subr.mxu0 0.0
    %2373 = vmatpush1.msra.mxu0 0.0
    %2374 = vmatprep.subr.mxu0 0.0
    %2375 = vmatpush1.msra.mxu0 0.0
    %2376 = vmatprep.subr.mxu0 0.0
    %2377 = vmatpush1.msra.mxu0 0.0
    %2378 = vmatprep.subr.mxu0 0.0
    %2379 = vmatpush1.msra.mxu0 0.0
    %2380 = vmatprep.subr.mxu0 0.0
    %2381 = vmatpush1.msra.mxu0 0.0
    %2382 = vmatprep.subr.mxu0 0.0
    %2383 = vmatpush1.msra.mxu0 0.0
    %2384 = vmatprep.subr.mxu0 0.0
    %2385 = vmatpush1.msra.mxu0 0.0
    %2386 = vmatprep.subr.mxu0 0.0
    %2387 = vmatpush1.msra.mxu0 0.0
    %2388 = vmatprep.subr.mxu0 0.0
    %2389 = vmatpush1.msra.mxu0 0.0
    %2390 = vmatprep.subr.mxu0 0.0
    %2391 = vmatpush1.msra.mxu0 0.0
    %2392 = vmatprep.subr.mxu0 0.0
    %2393 = vmatpush1.msra.mxu0 0.0
    %2394 = vmatprep.subr.mxu0 0.0
    %2395 = vmatpush1.msra.mxu0 0.0
    %2396 = vmatprep.subr.mxu0 0.0
    %2397 = vmatpush1.msra.mxu0 0.0
    %2398 = vmatprep.subr.mxu0 0.0
    %2399 = vmatpush1.msra.mxu0 0.0
    %2400 = vmatprep.subr.mxu0 0.0
    %2401 = vmatpush1.msra.mxu0 0.0
    %2402 = vmatprep.subr.mxu0 0.0
    %2403 = vmatpush1.msra.mxu0 0.0
    %2404 = vmatprep.subr.mxu0 0.0
    %2405 = vmatpush1.msra.mxu0 0.0
    %2406 = vmatprep.mubr.f32.mxu0 0.0
    %2407 = vmatmul.mubr.f32.gmra.mrb[0].mxu0 %v751
    %v2408 = vpop.f32.mrb[0].mxu0
    %v2409 = vadd.f32 0.0, %v2408
    %v2410 = vpop.f32.mrb[0].mxu0
    %2411 = vdwg.mxu0
    %v2412 = vpack.c.bf16 %v2339, %v2339
    %s2413 = scalar_lea.vmem %s6, 80
    %v2414 = vld [vmem:[%s2413] sm:$0xf]
    %v2415 = vld [vmem:[%s2413 + $0x4] sm:$0xf]
    %v2416 = vld [vmem:[%s2413 + $0x8] sm:$0xf]
    %v2417 = vld [vmem:[%s2413 + $0xc] sm:$0xf]
    %v2418 = vpack.c.bf16 %v2409, %v2409
    %s2419 = scalar_lea.vmem [#allocation6], 80
    %v2420 = vld [vmem:[%s2419] sm:$0xf]
    %v2421 = vld [vmem:[%s2419 + $0x4] sm:$0xf]
    %v2422 = vld [vmem:[%s2419 + $0x8] sm:$0xf]
    %v2423 = vld [vmem:[%s2419 + $0xc] sm:$0xf]
    %v2428 = vunpack.c.l.b16 %v2420
    %v2429 = vunpack.c.l.b16 %v2421
    %v2430 = vunpack.c.l.b16 %v2422
    %v2431 = vunpack.c.l.b16 %v2423
    %v2432 = vpack.c.b16 %v2429, %v2428
    %v2433 = vpack.c.b16 %v2431, %v2430
    %v2437 = vsel %vm240, %v2418, 0
    %2439 = vmatprep.subr.bf16.mxu0 0
    %2440 = vmatpush1.bf16.msra.mxu0 %v2432
    %2441 = vmatprep.subr.bf16.mxu0 0
    %2442 = vmatpush1.bf16.msra.mxu0 %v2433
    %2443 = vmatprep.subr.bf16.mxu0 0
    %2444 = vmatpush1.bf16.msra.mxu0 0
    %2445 = vmatprep.subr.bf16.mxu0 0
    %2446 = vmatpush1.bf16.msra.mxu0 0
    %2447 = vmatprep.subr.bf16.mxu0 0
    %2448 = vmatpush1.bf16.msra.mxu0 0
    %2449 = vmatprep.subr.bf16.mxu0 0
    %2450 = vmatpush1.bf16.msra.mxu0 0
    %2451 = vmatprep.subr.bf16.mxu0 0
    %2452 = vmatpush1.bf16.msra.mxu0 0
    %2453 = vmatprep.subr.bf16.mxu0 0
    %2454 = vmatpush1.bf16.msra.mxu0 0
    %2455 = vmatprep.subr.bf16.mxu0 0
    %2456 = vmatpush1.bf16.msra.mxu0 0
    %2457 = vmatprep.subr.bf16.mxu0 0
    %2458 = vmatpush1.bf16.msra.mxu0 0
    %2459 = vmatprep.subr.bf16.mxu0 0
    %2460 = vmatpush1.bf16.msra.mxu0 0
    %2461 = vmatprep.subr.bf16.mxu0 0
    %2462 = vmatpush1.bf16.msra.mxu0 0
    %2463 = vmatprep.subr.bf16.mxu0 0
    %2464 = vmatpush1.bf16.msra.mxu0 0
    %2465 = vmatprep.subr.bf16.mxu0 0
    %2466 = vmatpush1.bf16.msra.mxu0 0
    %2467 = vmatprep.subr.bf16.mxu0 0
    %2468 = vmatpush1.bf16.msra.mxu0 0
    %2469 = vmatprep.subr.bf16.mxu0 0
    %2470 = vmatpush1.bf16.msra.mxu0 0
    %2471 = vmatprep.mubr.bf16.mxu0 0
    %2472 = vmatmul.mubr.bf16.gmra.mrb[0].mxu0 %v2437
    %v2473 = vpop.f32.mrb[0].mxu0
    %v2474 = vadd.f32 0.0, %v2473
    %v2475 = vpop.f32.mrb[0].mxu0
    %v2476 = vpop.f32.mrb[0].mxu0
    %v2477 = vpop.f32.mrb[0].mxu0
    %2478 = vdwg.mxu0
    %v2483 = vunpack.c.l.b16 %v2414
    %v2484 = vunpack.c.l.b16 %v2415
    %v2485 = vunpack.c.l.b16 %v2416
    %v2486 = vunpack.c.l.b16 %v2417
    %v2487 = vpack.c.b16 %v2484, %v2483
    %v2488 = vpack.c.b16 %v2486, %v2485
    %v2492 = vsel %vm240, %v2412, 0
    %2494 = vmatprep.subr.bf16.mxu0 0
    %2495 = vmatpush1.bf16.msra.mxu0 %v2487
    %2496 = vmatprep.subr.bf16.mxu0 0
    %2497 = vmatpush1.bf16.msra.mxu0 %v2488
    %2498 = vmatprep.subr.bf16.mxu0 0
    %2499 = vmatpush1.bf16.msra.mxu0 0
    %2500 = vmatprep.subr.bf16.mxu0 0
    %2501 = vmatpush1.bf16.msra.mxu0 0
    %2502 = vmatprep.subr.bf16.mxu0 0
    %2503 = vmatpush1.bf16.msra.mxu0 0
    %2504 = vmatprep.subr.bf16.mxu0 0
    %2505 = vmatpush1.bf16.msra.mxu0 0
    %2506 = vmatprep.subr.bf16.mxu0 0
    %2507 = vmatpush1.bf16.msra.mxu0 0
    %2508 = vmatprep.subr.bf16.mxu0 0
    %2509 = vmatpush1.bf16.msra.mxu0 0
    %2510 = vmatprep.subr.bf16.mxu0 0
    %2511 = vmatpush1.bf16.msra.mxu0 0
    %2512 = vmatprep.subr.bf16.mxu0 0
    %2513 = vmatpush1.bf16.msra.mxu0 0
    %2514 = vmatprep.subr.bf16.mxu0 0
    %2515 = vmatpush1.bf16.msra.mxu0 0
    %2516 = vmatprep.subr.bf16.mxu0 0
    %2517 = vmatpush1.bf16.msra.mxu0 0
    %2518 = vmatprep.subr.bf16.mxu0 0
    %2519 = vmatpush1.bf16.msra.mxu0 0
    %2520 = vmatprep.subr.bf16.mxu0 0
    %2521 = vmatpush1.bf16.msra.mxu0 0
    %2522 = vmatprep.subr.bf16.mxu0 0
    %2523 = vmatpush1.bf16.msra.mxu0 0
    %2524 = vmatprep.subr.bf16.mxu0 0
    %2525 = vmatpush1.bf16.msra.mxu0 0
    %2526 = vmatprep.mubr.bf16.mxu0 0
    %2527 = vmatmul.mubr.bf16.gmra.mrb[0].mxu0 %v2492
    %v2528 = vpop.f32.mrb[0].mxu0
    %v2529 = vadd.f32 %v2474, %v2528
    %v2530 = vpop.f32.mrb[0].mxu0
    %v2531 = vpop.f32.mrb[0].mxu0
    %v2532 = vpop.f32.mrb[0].mxu0
    %2533 = vdwg.mxu0
    %v2535 = vsel %vm580, %v2529, 0
    %2537 = vmatprep.subr.mxu0 0.0
    %2538 = vmatpush1.msra.mxu0 %v2535
    %2539 = vmatprep.subr.mxu0 0.0
    %2540 = vmatpush1.msra.mxu0 0.0
    %2541 = vmatprep.subr.mxu0 0.0
    %2542 = vmatpush1.msra.mxu0 0.0
    %2543 = vmatprep.subr.mxu0 0.0
    %2544 = vmatpush1.msra.mxu0 0.0
    %2545 = vmatprep.subr.mxu0 0.0
    %2546 = vmatpush1.msra.mxu0 0.0
    %2547 = vmatprep.subr.mxu0 0.0
    %2548 = vmatpush1.msra.mxu0 0.0
    %2549 = vmatprep.subr.mxu0 0.0
    %2550 = vmatpush1.msra.mxu0 0.0
    %2551 = vmatprep.subr.mxu0 0.0
    %2552 = vmatpush1.msra.mxu0 0.0
    %2553 = vmatprep.subr.mxu0 0.0
    %2554 = vmatpush1.msra.mxu0 0.0
    %2555 = vmatprep.subr.mxu0 0.0
    %2556 = vmatpush1.msra.mxu0 0.0
    %2557 = vmatprep.subr.mxu0 0.0
    %2558 = vmatpush1.msra.mxu0 0.0
    %2559 = vmatprep.subr.mxu0 0.0
    %2560 = vmatpush1.msra.mxu0 0.0
    %2561 = vmatprep.subr.mxu0 0.0
    %2562 = vmatpush1.msra.mxu0 0.0
    %2563 = vmatprep.subr.mxu0 0.0
    %2564 = vmatpush1.msra.mxu0 0.0
    %2565 = vmatprep.subr.mxu0 0.0
    %2566 = vmatpush1.msra.mxu0 0.0
    %2567 = vmatprep.subr.mxu0 0.0
    %2568 = vmatpush1.msra.mxu0 0.0
    %2569 = vmatprep.subr.mxu0 0.0
    %2570 = vmatpush1.msra.mxu0 0.0
    %2571 = vmatprep.subr.mxu0 0.0
    %2572 = vmatpush1.msra.mxu0 0.0
    %2573 = vmatprep.subr.mxu0 0.0
    %2574 = vmatpush1.msra.mxu0 0.0
    %2575 = vmatprep.subr.mxu0 0.0
    %2576 = vmatpush1.msra.mxu0 0.0
    %2577 = vmatprep.subr.mxu0 0.0
    %2578 = vmatpush1.msra.mxu0 0.0
    %2579 = vmatprep.subr.mxu0 0.0
    %2580 = vmatpush1.msra.mxu0 0.0
    %2581 = vmatprep.subr.mxu0 0.0
    %2582 = vmatpush1.msra.mxu0 0.0
    %2583 = vmatprep.subr.mxu0 0.0
    %2584 = vmatpush1.msra.mxu0 0.0
    %2585 = vmatprep.subr.mxu0 0.0
    %2586 = vmatpush1.msra.mxu0 0.0
    %2587 = vmatprep.subr.mxu0 0.0
    %2588 = vmatpush1.msra.mxu0 0.0
    %2589 = vmatprep.subr.mxu0 0.0
    %2590 = vmatpush1.msra.mxu0 0.0
    %2591 = vmatprep.subr.mxu0 0.0
    %2592 = vmatpush1.msra.mxu0 0.0
    %2593 = vmatprep.subr.mxu0 0.0
    %2594 = vmatpush1.msra.mxu0 0.0
    %2595 = vmatprep.subr.mxu0 0.0
    %2596 = vmatpush1.msra.mxu0 0.0
    %2597 = vmatprep.subr.mxu0 0.0
    %2598 = vmatpush1.msra.mxu0 0.0
    %2599 = vmatprep.subr.mxu0 0.0
    %2600 = vmatpush1.msra.mxu0 0.0
    %2601 = vmatprep.mubr.f32.mxu0 0.0
    %2602 = vmatmul.mubr.f32.gmra.mrb[0].mxu0 %v951
    %v2603 = vpop.f32.mrb[0].mxu0
    %v2604 = vadd.f32 0.0, %v2603
    %v2605 = vpop.f32.mrb[0].mxu0
    %2606 = vmatprep.mubr.f32.mxu0 0.0
    %2607 = vmatmul.mubr.f32.gmra.mrb[0].mxu0 %v954
    %v2608 = vpop.f32.mrb[0].mxu0
    %v2609 = vadd.f32 0.0, %v2608
    %v2610 = vpop.f32.mrb[0].mxu0
    %2611 = vmatprep.mubr.f32.mxu0 0.0
    %2612 = vmatmul.mubr.f32.gmra.mrb[0].mxu0 %v957
    %v2613 = vpop.f32.mrb[0].mxu0
    %v2614 = vadd.f32 0.0, %v2613
    %v2615 = vpop.f32.mrb[0].mxu0
    %2616 = vmatprep.mubr.f32.mxu0 0.0
    %2617 = vmatmul.mubr.f32.gmra.mrb[0].mxu0 %v960
    %v2618 = vpop.f32.mrb[0].mxu0
    %v2619 = vadd.f32 0.0, %v2618
    %v2620 = vpop.f32.mrb[0].mxu0
    %2621 = vdwg.mxu0
    %v2622 = vadd.f32 %v2268, %v2604
    %v2623 = vadd.f32 %v2269, %v2609
    %v2624 = vadd.f32 %v2270, %v2614
    %v2625 = vadd.f32 %v2271, %v2619
    %2626 = vmatprep.subr.mxu0 0.0
    %2627 = vmatpush1.msra.mxu0 %v1832
    %2628 = vmatprep.subr.mxu0 0.0
    %2629 = vmatpush1.msra.mxu0 %v1833
    %2630 = vmatprep.subr.mxu0 0.0
    %2631 = vmatpush1.msra.mxu0 %v1834
    %2632 = vmatprep.subr.mxu0 0.0
    %2633 = vmatpush1.msra.mxu0 %v1835
    %2634 = vmatprep.subr.mxu0 0.0
    %2635 = vmatpush1.msra.mxu0 0.0
    %2636 = vmatprep.subr.mxu0 0.0
    %2637 = vmatpush1.msra.mxu0 0.0
    %2638 = vmatprep.subr.mxu0 0.0
    %2639 = vmatpush1.msra.mxu0 0.0
    %2640 = vmatprep.subr.mxu0 0.0
    %2641 = vmatpush1.msra.mxu0 0.0
    %2642 = vmatprep.subr.mxu0 0.0
    %2643 = vmatpush1.msra.mxu0 0.0
    %2644 = vmatprep.subr.mxu0 0.0
    %2645 = vmatpush1.msra.mxu0 0.0
    %2646 = vmatprep.subr.mxu0 0.0
    %2647 = vmatpush1.msra.mxu0 0.0
    %2648 = vmatprep.subr.mxu0 0.0
    %2649 = vmatpush1.msra.mxu0 0.0
    %2650 = vmatprep.subr.mxu0 0.0
    %2651 = vmatpush1.msra.mxu0 0.0
    %2652 = vmatprep.subr.mxu0 0.0
    %2653 = vmatpush1.msra.mxu0 0.0
    %2654 = vmatprep.subr.mxu0 0.0
    %2655 = vmatpush1.msra.mxu0 0.0
    %2656 = vmatprep.subr.mxu0 0.0
    %2657 = vmatpush1.msra.mxu0 0.0
    %2658 = vmatprep.subr.mxu0 0.0
    %2659 = vmatpush1.msra.mxu0 0.0
    %2660 = vmatprep.subr.mxu0 0.0
    %2661 = vmatpush1.msra.mxu0 0.0
    %2662 = vmatprep.subr.mxu0 0.0
    %2663 = vmatpush1.msra.mxu0 0.0
    %2664 = vmatprep.subr.mxu0 0.0
    %2665 = vmatpush1.msra.mxu0 0.0
    %2666 = vmatprep.subr.mxu0 0.0
    %2667 = vmatpush1.msra.mxu0 0.0
    %2668 = vmatprep.subr.mxu0 0.0
    %2669 = vmatpush1.msra.mxu0 0.0
    %2670 = vmatprep.subr.mxu0 0.0
    %2671 = vmatpush1.msra.mxu0 0.0
    %2672 = vmatprep.subr.mxu0 0.0
    %2673 = vmatpush1.msra.mxu0 0.0
    %2674 = vmatprep.subr.mxu0 0.0
    %2675 = vmatpush1.msra.mxu0 0.0
    %2676 = vmatprep.subr.mxu0 0.0
    %2677 = vmatpush1.msra.mxu0 0.0
    %2678 = vmatprep.subr.mxu0 0.0
    %2679 = vmatpush1.msra.mxu0 0.0
    %2680 = vmatprep.subr.mxu0 0.0
    %2681 = vmatpush1.msra.mxu0 0.0
    %2682 = vmatprep.subr.mxu0 0.0
    %2683 = vmatpush1.msra.mxu0 0.0
    %2684 = vmatprep.subr.mxu0 0.0
    %2685 = vmatpush1.msra.mxu0 0.0
    %2686 = vmatprep.subr.mxu0 0.0
    %2687 = vmatpush1.msra.mxu0 0.0
    %2688 = vmatprep.subr.mxu0 0.0
    %2689 = vmatpush1.msra.mxu0 0.0
    %2690 = vmatprep.mubr.f32.mxu0 0.0
    %2691 = vmatmul.mubr.f32.gmra.mrb[0].mxu0 %v1057
    %v2692 = vpop.f32.mrb[0].mxu0
    %v2693 = vadd.f32 0.0, %v2692
    %v2694 = vpop.f32.mrb[0].mxu0
    %2695 = vdwg.mxu0
    %2696 = vmatprep.subr.mxu0 0.0
    %2697 = vmatpush1.msra.mxu0 %v1832
    %2698 = vmatprep.subr.mxu0 0.0
    %2699 = vmatpush1.msra.mxu0 %v1833
    %2700 = vmatprep.subr.mxu0 0.0
    %2701 = vmatpush1.msra.mxu0 %v1834
    %2702 = vmatprep.subr.mxu0 0.0
    %2703 = vmatpush1.msra.mxu0 %v1835
    %2704 = vmatprep.subr.mxu0 0.0
    %2705 = vmatpush1.msra.mxu0 0.0
    %2706 = vmatprep.subr.mxu0 0.0
    %2707 = vmatpush1.msra.mxu0 0.0
    %2708 = vmatprep.subr.mxu0 0.0
    %2709 = vmatpush1.msra.mxu0 0.0
    %2710 = vmatprep.subr.mxu0 0.0
    %2711 = vmatpush1.msra.mxu0 0.0
    %2712 = vmatprep.subr.mxu0 0.0
    %2713 = vmatpush1.msra.mxu0 0.0
    %2714 = vmatprep.subr.mxu0 0.0
    %2715 = vmatpush1.msra.mxu0 0.0
    %2716 = vmatprep.subr.mxu0 0.0
    %2717 = vmatpush1.msra.mxu0 0.0
    %2718 = vmatprep.subr.mxu0 0.0
    %2719 = vmatpush1.msra.mxu0 0.0
    %2720 = vmatprep.subr.mxu0 0.0
    %2721 = vmatpush1.msra.mxu0 0.0
    %2722 = vmatprep.subr.mxu0 0.0
    %2723 = vmatpush1.msra.mxu0 0.0
    %2724 = vmatprep.subr.mxu0 0.0
    %2725 = vmatpush1.msra.mxu0 0.0
    %2726 = vmatprep.subr.mxu0 0.0
    %2727 = vmatpush1.msra.mxu0 0.0
    %2728 = vmatprep.subr.mxu0 0.0
    %2729 = vmatpush1.msra.mxu0 0.0
    %2730 = vmatprep.subr.mxu0 0.0
    %2731 = vmatpush1.msra.mxu0 0.0
    %2732 = vmatprep.subr.mxu0 0.0
    %2733 = vmatpush1.msra.mxu0 0.0
    %2734 = vmatprep.subr.mxu0 0.0
    %2735 = vmatpush1.msra.mxu0 0.0
    %2736 = vmatprep.subr.mxu0 0.0
    %2737 = vmatpush1.msra.mxu0 0.0
    %2738 = vmatprep.subr.mxu0 0.0
    %2739 = vmatpush1.msra.mxu0 0.0
    %2740 = vmatprep.subr.mxu0 0.0
    %2741 = vmatpush1.msra.mxu0 0.0
    %2742 = vmatprep.subr.mxu0 0.0
    %2743 = vmatpush1.msra.mxu0 0.0
    %2744 = vmatprep.subr.mxu0 0.0
    %2745 = vmatpush1.msra.mxu0 0.0
    %2746 = vmatprep.subr.mxu0 0.0
    %2747 = vmatpush1.msra.mxu0 0.0
    %2748 = vmatprep.subr.mxu0 0.0
    %2749 = vmatpush1.msra.mxu0 0.0
    %2750 = vmatprep.subr.mxu0 0.0
    %2751 = vmatpush1.msra.mxu0 0.0
    %2752 = vmatprep.subr.mxu0 0.0
    %2753 = vmatpush1.msra.mxu0 0.0
    %2754 = vmatprep.subr.mxu0 0.0
    %2755 = vmatpush1.msra.mxu0 0.0
    %2756 = vmatprep.subr.mxu0 0.0
    %2757 = vmatpush1.msra.mxu0 0.0
    %2758 = vmatprep.subr.mxu0 0.0
    %2759 = vmatpush1.msra.mxu0 0.0
    %2760 = vmatprep.mubr.f32.mxu0 0.0
    %2761 = vmatmul.mubr.f32.gmra.mrb[0].mxu0 %v1132
    %v2762 = vpop.f32.mrb[0].mxu0
    %v2763 = vadd.f32 0.0, %v2762
    %v2764 = vpop.f32.mrb[0].mxu0
    %2765 = vdwg.mxu0
    %v2766 = vpack.c.bf16 %v2693, %v2693
    %s2767 = scalar_lea.vmem %s6, 96
    %v2768 = vld [vmem:[%s2767] sm:$0xf]
    %v2769 = vld [vmem:[%s2767 + $0x4] sm:$0xf]
    %v2770 = vld [vmem:[%s2767 + $0x8] sm:$0xf]
    %v2771 = vld [vmem:[%s2767 + $0xc] sm:$0xf]
    %v2772 = vpack.c.bf16 %v2763, %v2763
    %s2773 = scalar_lea.vmem [#allocation6], 96
    %v2774 = vld [vmem:[%s2773] sm:$0xf]
    %v2775 = vld [vmem:[%s2773 + $0x4] sm:$0xf]
    %v2776 = vld [vmem:[%s2773 + $0x8] sm:$0xf]
    %v2777 = vld [vmem:[%s2773 + $0xc] sm:$0xf]
    %v2782 = vunpack.c.l.b16 %v2774
    %v2783 = vunpack.c.l.b16 %v2775
    %v2784 = vunpack.c.l.b16 %v2776
    %v2785 = vunpack.c.l.b16 %v2777
    %v2786 = vpack.c.b16 %v2783, %v2782
    %v2787 = vpack.c.b16 %v2785, %v2784
    %v2791 = vsel %vm240, %v2772, 0
    %2793 = vmatprep.subr.bf16.mxu0 0
    %2794 = vmatpush1.bf16.msra.mxu0 %v2786
    %2795 = vmatprep.subr.bf16.mxu0 0
    %2796 = vmatpush1.bf16.msra.mxu0 %v2787
    %2797 = vmatprep.subr.bf16.mxu0 0
    %2798 = vmatpush1.bf16.msra.mxu0 0
    %2799 = vmatprep.subr.bf16.mxu0 0
    %2800 = vmatpush1.bf16.msra.mxu0 0
    %2801 = vmatprep.subr.bf16.mxu0 0
    %2802 = vmatpush1.bf16.msra.mxu0 0
    %2803 = vmatprep.subr.bf16.mxu0 0
    %2804 = vmatpush1.bf16.msra.mxu0 0
    %2805 = vmatprep.subr.bf16.mxu0 0
    %2806 = vmatpush1.bf16.msra.mxu0 0
    %2807 = vmatprep.subr.bf16.mxu0 0
    %2808 = vmatpush1.bf16.msra.mxu0 0
    %2809 = vmatprep.subr.bf16.mxu0 0
    %2810 = vmatpush1.bf16.msra.mxu0 0
    %2811 = vmatprep.subr.bf16.mxu0 0
    %2812 = vmatpush1.bf16.msra.mxu0 0
    %2813 = vmatprep.subr.bf16.mxu0 0
    %2814 = vmatpush1.bf16.msra.mxu0 0
    %2815 = vmatprep.subr.bf16.mxu0 0
    %2816 = vmatpush1.bf16.msra.mxu0 0
    %2817 = vmatprep.subr.bf16.mxu0 0
    %2818 = vmatpush1.bf16.msra.mxu0 0
    %2819 = vmatprep.subr.bf16.mxu0 0
    %2820 = vmatpush1.bf16.msra.mxu0 0
    %2821 = vmatprep.subr.bf16.mxu0 0
    %2822 = vmatpush1.bf16.msra.mxu0 0
    %2823 = vmatprep.subr.bf16.mxu0 0
    %2824 = vmatpush1.bf16.msra.mxu0 0
    %2825 = vmatprep.mubr.bf16.mxu0 0
    %2826 = vmatmul.mubr.bf16.gmra.mrb[0].mxu0 %v2791
    %v2827 = vpop.f32.mrb[0].mxu0
    %v2828 = vadd.f32 0.0, %v2827
    %v2829 = vpop.f32.mrb[0].mxu0
    %v2830 = vpop.f32.mrb[0].mxu0
    %v2831 = vpop.f32.mrb[0].mxu0
    %2832 = vdwg.mxu0
    %v2837 = vunpack.c.l.b16 %v2768
    %v2838 = vunpack.c.l.b16 %v2769
    %v2839 = vunpack.c.l.b16 %v2770
    %v2840 = vunpack.c.l.b16 %v2771
    %v2841 = vpack.c.b16 %v2838, %v2837
    %v2842 = vpack.c.b16 %v2840, %v2839
    %v2846 = vsel %vm240, %v2766, 0
    %2848 = vmatprep.subr.bf16.mxu0 0
    %2849 = vmatpush1.bf16.msra.mxu0 %v2841
    %2850 = vmatprep.subr.bf16.mxu0 0
    %2851 = vmatpush1.bf16.msra.mxu0 %v2842
    %2852 = vmatprep.subr.bf16.mxu0 0
    %2853 = vmatpush1.bf16.msra.mxu0 0
    %2854 = vmatprep.subr.bf16.mxu0 0
    %2855 = vmatpush1.bf16.msra.mxu0 0
    %2856 = vmatprep.subr.bf16.mxu0 0
    %2857 = vmatpush1.bf16.msra.mxu0 0
    %2858 = vmatprep.subr.bf16.mxu0 0
    %2859 = vmatpush1.bf16.msra.mxu0 0
    %2860 = vmatprep.subr.bf16.mxu0 0
    %2861 = vmatpush1.bf16.msra.mxu0 0
    %2862 = vmatprep.subr.bf16.mxu0 0
    %2863 = vmatpush1.bf16.msra.mxu0 0
    %2864 = vmatprep.subr.bf16.mxu0 0
    %2865 = vmatpush1.bf16.msra.mxu0 0
    %2866 = vmatprep.subr.bf16.mxu0 0
    %2867 = vmatpush1.bf16.msra.mxu0 0
    %2868 = vmatprep.subr.bf16.mxu0 0
    %2869 = vmatpush1.bf16.msra.mxu0 0
    %2870 = vmatprep.subr.bf16.mxu0 0
    %2871 = vmatpush1.bf16.msra.mxu0 0
    %2872 = vmatprep.subr.bf16.mxu0 0
    %2873 = vmatpush1.bf16.msra.mxu0 0
    %2874 = vmatprep.subr.bf16.mxu0 0
    %2875 = vmatpush1.bf16.msra.mxu0 0
    %2876 = vmatprep.subr.bf16.mxu0 0
    %2877 = vmatpush1.bf16.msra.mxu0 0
    %2878 = vmatprep.subr.bf16.mxu0 0
    %2879 = vmatpush1.bf16.msra.mxu0 0
    %2880 = vmatprep.mubr.bf16.mxu0 0
    %2881 = vmatmul.mubr.bf16.gmra.mrb[0].mxu0 %v2846
    %v2882 = vpop.f32.mrb[0].mxu0
    %v2883 = vadd.f32 %v2828, %v2882
    %v2884 = vpop.f32.mrb[0].mxu0
    %v2885 = vpop.f32.mrb[0].mxu0
    %v2886 = vpop.f32.mrb[0].mxu0
    %2887 = vdwg.mxu0
    %v2889 = vsel %vm580, %v2883, 0
    %2891 = vmatprep.subr.mxu0 0.0
    %2892 = vmatpush1.msra.mxu0 %v2889
    %2893 = vmatprep.subr.mxu0 0.0
    %2894 = vmatpush1.msra.mxu0 0.0
    %2895 = vmatprep.subr.mxu0 0.0
    %2896 = vmatpush1.msra.mxu0 0.0
    %2897 = vmatprep.subr.mxu0 0.0
    %2898 = vmatpush1.msra.mxu0 0.0
    %2899 = vmatprep.subr.mxu0 0.0
    %2900 = vmatpush1.msra.mxu0 0.0
    %2901 = vmatprep.subr.mxu0 0.0
    %2902 = vmatpush1.msra.mxu0 0.0
    %2903 = vmatprep.subr.mxu0 0.0
    %2904 = vmatpush1.msra.mxu0 0.0
    %2905 = vmatprep.subr.mxu0 0.0
    %2906 = vmatpush1.msra.mxu0 0.0
    %2907 = vmatprep.subr.mxu0 0.0
    %2908 = vmatpush1.msra.mxu0 0.0
    %2909 = vmatprep.subr.mxu0 0.0
    %2910 = vmatpush1.msra.mxu0 0.0
    %2911 = vmatprep.subr.mxu0 0.0
    %2912 = vmatpush1.msra.mxu0 0.0
    %2913 = vmatprep.subr.mxu0 0.0
    %2914 = vmatpush1.msra.mxu0 0.0
    %2915 = vmatprep.subr.mxu0 0.0
    %2916 = vmatpush1.msra.mxu0 0.0
    %2917 = vmatprep.subr.mxu0 0.0
    %2918 = vmatpush1.msra.mxu0 0.0
    %2919 = vmatprep.subr.mxu0 0.0
    %2920 = vmatpush1.msra.mxu0 0.0
    %2921 = vmatprep.subr.mxu0 0.0
    %2922 = vmatpush1.msra.mxu0 0.0
    %2923 = vmatprep.subr.mxu0 0.0
    %2924 = vmatpush1.msra.mxu0 0.0
    %2925 = vmatprep.subr.mxu0 0.0
    %2926 = vmatpush1.msra.mxu0 0.0
    %2927 = vmatprep.subr.mxu0 0.0
    %2928 = vmatpush1.msra.mxu0 0.0
    %2929 = vmatprep.subr.mxu0 0.0
    %2930 = vmatpush1.msra.mxu0 0.0
    %2931 = vmatprep.subr.mxu0 0.0
    %2932 = vmatpush1.msra.mxu0 0.0
    %2933 = vmatprep.subr.mxu0 0.0
    %2934 = vmatpush1.msra.mxu0 0.0
    %2935 = vmatprep.subr.mxu0 0.0
    %2936 = vmatpush1.msra.mxu0 0.0
    %2937 = vmatprep.subr.mxu0 0.0
    %2938 = vmatpush1.msra.mxu0 0.0
    %2939 = vmatprep.subr.mxu0 0.0
    %2940 = vmatpush1.msra.mxu0 0.0
    %2941 = vmatprep.subr.mxu0 0.0
    %2942 = vmatpush1.msra.mxu0 0.0
    %2943 = vmatprep.subr.mxu0 0.0
    %2944 = vmatpush1.msra.mxu0 0.0
    %2945 = vmatprep.subr.mxu0 0.0
    %2946 = vmatpush1.msra.mxu0 0.0
    %2947 = vmatprep.subr.mxu0 0.0
    %2948 = vmatpush1.msra.mxu0 0.0
    %2949 = vmatprep.subr.mxu0 0.0
    %2950 = vmatpush1.msra.mxu0 0.0
    %2951 = vmatprep.subr.mxu0 0.0
    %2952 = vmatpush1.msra.mxu0 0.0
    %2953 = vmatprep.subr.mxu0 0.0
    %2954 = vmatpush1.msra.mxu0 0.0
    %2955 = vmatprep.mubr.f32.mxu0 0.0
    %2956 = vmatmul.mubr.f32.gmra.mrb[0].mxu0 %v1332
    %v2957 = vpop.f32.mrb[0].mxu0
    %v2958 = vadd.f32 0.0, %v2957
    %v2959 = vpop.f32.mrb[0].mxu0
    %2960 = vmatprep.mubr.f32.mxu0 0.0
    %2961 = vmatmul.mubr.f32.gmra.mrb[0].mxu0 %v1335
    %v2962 = vpop.f32.mrb[0].mxu0
    %v2963 = vadd.f32 0.0, %v2962
    %v2964 = vpop.f32.mrb[0].mxu0
    %2965 = vmatprep.mubr.f32.mxu0 0.0
    %2966 = vmatmul.mubr.f32.gmra.mrb[0].mxu0 %v1338
    %v2967 = vpop.f32.mrb[0].mxu0
    %v2968 = vadd.f32 0.0, %v2967
    %v2969 = vpop.f32.mrb[0].mxu0
    %2970 = vmatprep.mubr.f32.mxu0 0.0
    %2971 = vmatmul.mubr.f32.gmra.mrb[0].mxu0 %v1341
    %v2972 = vpop.f32.mrb[0].mxu0
    %v2973 = vadd.f32 0.0, %v2972
    %v2974 = vpop.f32.mrb[0].mxu0
    %2975 = vdwg.mxu0
    %v2976 = vadd.f32 %v2622, %v2958
    %v2977 = vadd.f32 %v2623, %v2963
    %v2978 = vadd.f32 %v2624, %v2968
    %v2979 = vadd.f32 %v2625, %v2973
    %2980 = vmatprep.subr.mxu0 0.0
    %2981 = vmatpush1.msra.mxu0 %v1832
    %2982 = vmatprep.subr.mxu0 0.0
    %2983 = vmatpush1.msra.mxu0 %v1833
    %2984 = vmatprep.subr.mxu0 0.0
    %2985 = vmatpush1.msra.mxu0 %v1834
    %2986 = vmatprep.subr.mxu0 0.0
    %2987 = vmatpush1.msra.mxu0 %v1835
    %2988 = vmatprep.subr.mxu0 0.0
    %2989 = vmatpush1.msra.mxu0 0.0
    %2990 = vmatprep.subr.mxu0 0.0
    %2991 = vmatpush1.msra.mxu0 0.0
    %2992 = vmatprep.subr.mxu0 0.0
    %2993 = vmatpush1.msra.mxu0 0.0
    %2994 = vmatprep.subr.mxu0 0.0
    %2995 = vmatpush1.msra.mxu0 0.0
    %2996 = vmatprep.subr.mxu0 0.0
    %2997 = vmatpush1.msra.mxu0 0.0
    %2998 = vmatprep.subr.mxu0 0.0
    %2999 = vmatpush1.msra.mxu0 0.0
    %3000 = vmatprep.subr.mxu0 0.0
    %3001 = vmatpush1.msra.mxu0 0.0
    %3002 = vmatprep.subr.mxu0 0.0
    %3003 = vmatpush1.msra.mxu0 0.0
    %3004 = vmatprep.subr.mxu0 0.0
    %3005 = vmatpush1.msra.mxu0 0.0
    %3006 = vmatprep.subr.mxu0 0.0
    %3007 = vmatpush1.msra.mxu0 0.0
    %3008 = vmatprep.subr.mxu0 0.0
    %3009 = vmatpush1.msra.mxu0 0.0
    %3010 = vmatprep.subr.mxu0 0.0
    %3011 = vmatpush1.msra.mxu0 0.0
    %3012 = vmatprep.subr.mxu0 0.0
    %3013 = vmatpush1.msra.mxu0 0.0
    %3014 = vmatprep.subr.mxu0 0.0
    %3015 = vmatpush1.msra.mxu0 0.0
    %3016 = vmatprep.subr.mxu0 0.0
    %3017 = vmatpush1.msra.mxu0 0.0
    %3018 = vmatprep.subr.mxu0 0.0
    %3019 = vmatpush1.msra.mxu0 0.0
    %3020 = vmatprep.subr.mxu0 0.0
    %3021 = vmatpush1.msra.mxu0 0.0
    %3022 = vmatprep.subr.mxu0 0.0
    %3023 = vmatpush1.msra.mxu0 0.0
    %3024 = vmatprep.subr.mxu0 0.0
    %3025 = vmatpush1.msra.mxu0 0.0
    %3026 = vmatprep.subr.mxu0 0.0
    %3027 = vmatpush1.msra.mxu0 0.0
    %3028 = vmatprep.subr.mxu0 0.0
    %3029 = vmatpush1.msra.mxu0 0.0
    %3030 = vmatprep.subr.mxu0 0.0
    %3031 = vmatpush1.msra.mxu0 0.0
    %3032 = vmatprep.subr.mxu0 0.0
    %3033 = vmatpush1.msra.mxu0 0.0
    %3034 = vmatprep.subr.mxu0 0.0
    %3035 = vmatpush1.msra.mxu0 0.0
    %3036 = vmatprep.subr.mxu0 0.0
    %3037 = vmatpush1.msra.mxu0 0.0
    %3038 = vmatprep.subr.mxu0 0.0
    %3039 = vmatpush1.msra.mxu0 0.0
    %3040 = vmatprep.subr.mxu0 0.0
    %3041 = vmatpush1.msra.mxu0 0.0
    %3042 = vmatprep.subr.mxu0 0.0
    %3043 = vmatpush1.msra.mxu0 0.0
    %3044 = vmatprep.mubr.f32.mxu0 0.0
    %3045 = vmatmul.mubr.f32.gmra.mrb[0].mxu0 %v1438
    %v3046 = vpop.f32.mrb[0].mxu0
    %v3047 = vadd.f32 0.0, %v3046
    %v3048 = vpop.f32.mrb[0].mxu0
    %3049 = vdwg.mxu0
    %3050 = vmatprep.subr.mxu0 0.0
    %3051 = vmatpush1.msra.mxu0 %v1832
    %3052 = vmatprep.subr.mxu0 0.0
    %3053 = vmatpush1.msra.mxu0 %v1833
    %3054 = vmatprep.subr.mxu0 0.0
    %3055 = vmatpush1.msra.mxu0 %v1834
    %3056 = vmatprep.subr.mxu0 0.0
    %3057 = vmatpush1.msra.mxu0 %v1835
    %3058 = vmatprep.subr.mxu0 0.0
    %3059 = vmatpush1.msra.mxu0 0.0
    %3060 = vmatprep.subr.mxu0 0.0
    %3061 = vmatpush1.msra.mxu0 0.0
    %3062 = vmatprep.subr.mxu0 0.0
    %3063 = vmatpush1.msra.mxu0 0.0
    %3064 = vmatprep.subr.mxu0 0.0
    %3065 = vmatpush1.msra.mxu0 0.0
    %3066 = vmatprep.subr.mxu0 0.0
    %3067 = vmatpush1.msra.mxu0 0.0
    %3068 = vmatprep.subr.mxu0 0.0
    %3069 = vmatpush1.msra.mxu0 0.0
    %3070 = vmatprep.subr.mxu0 0.0
    %3071 = vmatpush1.msra.mxu0 0.0
    %3072 = vmatprep.subr.mxu0 0.0
    %3073 = vmatpush1.msra.mxu0 0.0
    %3074 = vmatprep.subr.mxu0 0.0
    %3075 = vmatpush1.msra.mxu0 0.0
    %3076 = vmatprep.subr.mxu0 0.0
    %3077 = vmatpush1.msra.mxu0 0.0
    %3078 = vmatprep.subr.mxu0 0.0
    %3079 = vmatpush1.msra.mxu0 0.0
    %3080 = vmatprep.subr.mxu0 0.0
    %3081 = vmatpush1.msra.mxu0 0.0
    %3082 = vmatprep.subr.mxu0 0.0
    %3083 = vmatpush1.msra.mxu0 0.0
    %3084 = vmatprep.subr.mxu0 0.0
    %3085 = vmatpush1.msra.mxu0 0.0
    %3086 = vmatprep.subr.mxu0 0.0
    %3087 = vmatpush1.msra.mxu0 0.0
    %3088 = vmatprep.subr.mxu0 0.0
    %3089 = vmatpush1.msra.mxu0 0.0
    %3090 = vmatprep.subr.mxu0 0.0
    %3091 = vmatpush1.msra.mxu0 0.0
    %3092 = vmatprep.subr.mxu0 0.0
    %3093 = vmatpush1.msra.mxu0 0.0
    %3094 = vmatprep.subr.mxu0 0.0
    %3095 = vmatpush1.msra.mxu0 0.0
    %3096 = vmatprep.subr.mxu0 0.0
    %3097 = vmatpush1.msra.mxu0 0.0
    %3098 = vmatprep.subr.mxu0 0.0
    %3099 = vmatpush1.msra.mxu0 0.0
    %3100 = vmatprep.subr.mxu0 0.0
    %3101 = vmatpush1.msra.mxu0 0.0
    %3102 = vmatprep.subr.mxu0 0.0
    %3103 = vmatpush1.msra.mxu0 0.0
    %3104 = vmatprep.subr.mxu0 0.0
    %3105 = vmatpush1.msra.mxu0 0.0
    %3106 = vmatprep.subr.mxu0 0.0
    %3107 = vmatpush1.msra.mxu0 0.0
    %3108 = vmatprep.subr.mxu0 0.0
    %3109 = vmatpush1.msra.mxu0 0.0
    %3110 = vmatprep.subr.mxu0 0.0
    %3111 = vmatpush1.msra.mxu0 0.0
    %3112 = vmatprep.subr.mxu0 0.0
    %3113 = vmatpush1.msra.mxu0 0.0
    %3114 = vmatprep.mubr.f32.mxu0 0.0
    %3115 = vmatmul.mubr.f32.gmra.mrb[0].mxu0 %v1513
    %v3116 = vpop.f32.mrb[0].mxu0
    %v3117 = vadd.f32 0.0, %v3116
    %v3118 = vpop.f32.mrb[0].mxu0
    %3119 = vdwg.mxu0
    %v3120 = vpack.c.bf16 %v3047, %v3047
    %s3121 = scalar_lea.vmem %s6, 112
    %v3122 = vld [vmem:[%s3121] sm:$0xf]
    %v3123 = vld [vmem:[%s3121 + $0x4] sm:$0xf]
    %v3124 = vld [vmem:[%s3121 + $0x8] sm:$0xf]
    %v3125 = vld [vmem:[%s3121 + $0xc] sm:$0xf]
    %v3126 = vpack.c.bf16 %v3117, %v3117
    %s3127 = scalar_lea.vmem [#allocation6], 112
    %v3128 = vld [vmem:[%s3127] sm:$0xf]
    %v3129 = vld [vmem:[%s3127 + $0x4] sm:$0xf]
    %v3130 = vld [vmem:[%s3127 + $0x8] sm:$0xf]
    %v3131 = vld [vmem:[%s3127 + $0xc] sm:$0xf]
    %v3136 = vunpack.c.l.b16 %v3128
    %v3137 = vunpack.c.l.b16 %v3129
    %v3138 = vunpack.c.l.b16 %v3130
    %v3139 = vunpack.c.l.b16 %v3131
    %v3140 = vpack.c.b16 %v3137, %v3136
    %v3141 = vpack.c.b16 %v3139, %v3138
    %v3145 = vsel %vm240, %v3126, 0
    %3147 = vmatprep.subr.bf16.mxu0 0
    %3148 = vmatpush1.bf16.msra.mxu0 %v3140
    %3149 = vmatprep.subr.bf16.mxu0 0
    %3150 = vmatpush1.bf16.msra.mxu0 %v3141
    %3151 = vmatprep.subr.bf16.mxu0 0
    %3152 = vmatpush1.bf16.msra.mxu0 0
    %3153 = vmatprep.subr.bf16.mxu0 0
    %3154 = vmatpush1.bf16.msra.mxu0 0
    %3155 = vmatprep.subr.bf16.mxu0 0
    %3156 = vmatpush1.bf16.msra.mxu0 0
    %3157 = vmatprep.subr.bf16.mxu0 0
    %3158 = vmatpush1.bf16.msra.mxu0 0
    %3159 = vmatprep.subr.bf16.mxu0 0
    %3160 = vmatpush1.bf16.msra.mxu0 0
    %3161 = vmatprep.subr.bf16.mxu0 0
    %3162 = vmatpush1.bf16.msra.mxu0 0
    %3163 = vmatprep.subr.bf16.mxu0 0
    %3164 = vmatpush1.bf16.msra.mxu0 0
    %3165 = vmatprep.subr.bf16.mxu0 0
    %3166 = vmatpush1.bf16.msra.mxu0 0
    %3167 = vmatprep.subr.bf16.mxu0 0
    %3168 = vmatpush1.bf16.msra.mxu0 0
    %3169 = vmatprep.subr.bf16.mxu0 0
    %3170 = vmatpush1.bf16.msra.mxu0 0
    %3171 = vmatprep.subr.bf16.mxu0 0
    %3172 = vmatpush1.bf16.msra.mxu0 0
    %3173 = vmatprep.subr.bf16.mxu0 0
    %3174 = vmatpush1.bf16.msra.mxu0 0
    %3175 = vmatprep.subr.bf16.mxu0 0
    %3176 = vmatpush1.bf16.msra.mxu0 0
    %3177 = vmatprep.subr.bf16.mxu0 0
    %3178 = vmatpush1.bf16.msra.mxu0 0
    %3179 = vmatprep.mubr.bf16.mxu0 0
    %3180 = vmatmul.mubr.bf16.gmra.mrb[0].mxu0 %v3145
    %v3181 = vpop.f32.mrb[0].mxu0
    %v3182 = vadd.f32 0.0, %v3181
    %v3183 = vpop.f32.mrb[0].mxu0
    %v3184 = vpop.f32.mrb[0].mxu0
    %v3185 = vpop.f32.mrb[0].mxu0
    %3186 = vdwg.mxu0
    %v3191 = vunpack.c.l.b16 %v3122
    %v3192 = vunpack.c.l.b16 %v3123
    %v3193 = vunpack.c.l.b16 %v3124
    %v3194 = vunpack.c.l.b16 %v3125
    %v3195 = vpack.c.b16 %v3192, %v3191
    %v3196 = vpack.c.b16 %v3194, %v3193
    %v3200 = vsel %vm240, %v3120, 0
    %3202 = vmatprep.subr.bf16.mxu0 0
    %3203 = vmatpush1.bf16.msra.mxu0 %v3195
    %3204 = vmatprep.subr.bf16.mxu0 0
    %3205 = vmatpush1.bf16.msra.mxu0 %v3196
    %3206 = vmatprep.subr.bf16.mxu0 0
    %3207 = vmatpush1.bf16.msra.mxu0 0
    %3208 = vmatprep.subr.bf16.mxu0 0
    %3209 = vmatpush1.bf16.msra.mxu0 0
    %3210 = vmatprep.subr.bf16.mxu0 0
    %3211 = vmatpush1.bf16.msra.mxu0 0
    %3212 = vmatprep.subr.bf16.mxu0 0
    %3213 = vmatpush1.bf16.msra.mxu0 0
    %3214 = vmatprep.subr.bf16.mxu0 0
    %3215 = vmatpush1.bf16.msra.mxu0 0
    %3216 = vmatprep.subr.bf16.mxu0 0
    %3217 = vmatpush1.bf16.msra.mxu0 0
    %3218 = vmatprep.subr.bf16.mxu0 0
    %3219 = vmatpush1.bf16.msra.mxu0 0
    %3220 = vmatprep.subr.bf16.mxu0 0
    %3221 = vmatpush1.bf16.msra.mxu0 0
    %3222 = vmatprep.subr.bf16.mxu0 0
    %3223 = vmatpush1.bf16.msra.mxu0 0
    %3224 = vmatprep.subr.bf16.mxu0 0
    %3225 = vmatpush1.bf16.msra.mxu0 0
    %3226 = vmatprep.subr.bf16.mxu0 0
    %3227 = vmatpush1.bf16.msra.mxu0 0
    %3228 = vmatprep.subr.bf16.mxu0 0
    %3229 = vmatpush1.bf16.msra.mxu0 0
    %3230 = vmatprep.subr.bf16.mxu0 0
    %3231 = vmatpush1.bf16.msra.mxu0 0
    %3232 = vmatprep.subr.bf16.mxu0 0
    %3233 = vmatpush1.bf16.msra.mxu0 0
    %3234 = vmatprep.mubr.bf16.mxu0 0
    %3235 = vmatmul.mubr.bf16.gmra.mrb[0].mxu0 %v3200
    %v3236 = vpop.f32.mrb[0].mxu0
    %v3237 = vadd.f32 %v3182, %v3236
    %v3238 = vpop.f32.mrb[0].mxu0
    %v3239 = vpop.f32.mrb[0].mxu0
    %v3240 = vpop.f32.mrb[0].mxu0
    %3241 = vdwg.mxu0
    %v3243 = vsel %vm580, %v3237, 0
    %3245 = vmatprep.subr.mxu0 0.0
    %3246 = vmatpush1.msra.mxu0 %v3243
    %3247 = vmatprep.subr.mxu0 0.0
    %3248 = vmatpush1.msra.mxu0 0.0
    %3249 = vmatprep.subr.mxu0 0.0
    %3250 = vmatpush1.msra.mxu0 0.0
    %3251 = vmatprep.subr.mxu0 0.0
    %3252 = vmatpush1.msra.mxu0 0.0
    %3253 = vmatprep.subr.mxu0 0.0
    %3254 = vmatpush1.msra.mxu0 0.0
    %3255 = vmatprep.subr.mxu0 0.0
    %3256 = vmatpush1.msra.mxu0 0.0
    %3257 = vmatprep.subr.mxu0 0.0
    %3258 = vmatpush1.msra.mxu0 0.0
    %3259 = vmatprep.subr.mxu0 0.0
    %3260 = vmatpush1.msra.mxu0 0.0
    %3261 = vmatprep.subr.mxu0 0.0
    %3262 = vmatpush1.msra.mxu0 0.0
    %3263 = vmatprep.subr.mxu0 0.0
    %3264 = vmatpush1.msra.mxu0 0.0
    %3265 = vmatprep.subr.mxu0 0.0
    %3266 = vmatpush1.msra.mxu0 0.0
    %3267 = vmatprep.subr.mxu0 0.0
    %3268 = vmatpush1.msra.mxu0 0.0
    %3269 = vmatprep.subr.mxu0 0.0
    %3270 = vmatpush1.msra.mxu0 0.0
    %3271 = vmatprep.subr.mxu0 0.0
    %3272 = vmatpush1.msra.mxu0 0.0
    %3273 = vmatprep.subr.mxu0 0.0
    %3274 = vmatpush1.msra.mxu0 0.0
    %3275 = vmatprep.subr.mxu0 0.0
    %3276 = vmatpush1.msra.mxu0 0.0
    %3277 = vmatprep.subr.mxu0 0.0
    %3278 = vmatpush1.msra.mxu0 0.0
    %3279 = vmatprep.subr.mxu0 0.0
    %3280 = vmatpush1.msra.mxu0 0.0
    %3281 = vmatprep.subr.mxu0 0.0
    %3282 = vmatpush1.msra.mxu0 0.0
    %3283 = vmatprep.subr.mxu0 0.0
    %3284 = vmatpush1.msra.mxu0 0.0
    %3285 = vmatprep.subr.mxu0 0.0
    %3286 = vmatpush1.msra.mxu0 0.0
    %3287 = vmatprep.subr.mxu0 0.0
    %3288 = vmatpush1.msra.mxu0 0.0
    %3289 = vmatprep.subr.mxu0 0.0
    %3290 = vmatpush1.msra.mxu0 0.0
    %3291 = vmatprep.subr.mxu0 0.0
    %3292 = vmatpush1.msra.mxu0 0.0
    %3293 = vmatprep.subr.mxu0 0.0
    %3294 = vmatpush1.msra.mxu0 0.0
    %3295 = vmatprep.subr.mxu0 0.0
    %3296 = vmatpush1.msra.mxu0 0.0
    %3297 = vmatprep.subr.mxu0 0.0
    %3298 = vmatpush1.msra.mxu0 0.0
    %3299 = vmatprep.subr.mxu0 0.0
    %3300 = vmatpush1.msra.mxu0 0.0
    %3301 = vmatprep.subr.mxu0 0.0
    %3302 = vmatpush1.msra.mxu0 0.0
    %3303 = vmatprep.subr.mxu0 0.0
    %3304 = vmatpush1.msra.mxu0 0.0
    %3305 = vmatprep.subr.mxu0 0.0
    %3306 = vmatpush1.msra.mxu0 0.0
    %3307 = vmatprep.subr.mxu0 0.0
    %3308 = vmatpush1.msra.mxu0 0.0
    %3309 = vmatprep.mubr.f32.mxu0 0.0
    %3310 = vmatmul.mubr.f32.gmra.mrb[0].mxu0 %v1713
    %v3311 = vpop.f32.mrb[0].mxu0
    %v3312 = vadd.f32 0.0, %v3311
    %v3313 = vpop.f32.mrb[0].mxu0
    %3314 = vmatprep.mubr.f32.mxu0 0.0
    %3315 = vmatmul.mubr.f32.gmra.mrb[0].mxu0 %v1716
    %v3316 = vpop.f32.mrb[0].mxu0
    %v3317 = vadd.f32 0.0, %v3316
    %v3318 = vpop.f32.mrb[0].mxu0
    %3319 = vmatprep.mubr.f32.mxu0 0.0
    %3320 = vmatmul.mubr.f32.gmra.mrb[0].mxu0 %v1719
    %v3321 = vpop.f32.mrb[0].mxu0
    %v3322 = vadd.f32 0.0, %v3321
    %v3323 = vpop.f32.mrb[0].mxu0
    %3324 = vmatprep.mubr.f32.mxu0 0.0
    %3325 = vmatmul.mubr.f32.gmra.mrb[0].mxu0 %v1722
    %v3326 = vpop.f32.mrb[0].mxu0
    %v3327 = vadd.f32 0.0, %v3326
    %v3328 = vpop.f32.mrb[0].mxu0
    %3329 = vdwg.mxu0
    %v3330 = vadd.f32 %v2976, %v3312
    %v3331 = vadd.f32 %v2977, %v3317
    %v3332 = vadd.f32 %v2978, %v3322
    %v3333 = vadd.f32 %v2979, %v3327
    %v3334 = vmul.f32 %v3330, 0.5
    %v3335 = vmul.f32 %v3331, 0.5
    %v3336 = vmul.f32 %v3332, 0.5
    %v3337 = vmul.f32 %v3333, 0.5
    %v3338 = vmul.f32 %v3330, 0.70710677
    %v3339 = vmul.f32 %v3331, 0.70710677
    %v3340 = vmul.f32 %v3332, 0.70710677
    %v3341 = vmul.f32 %v3333, 0.70710677
    %v3342 = verf.f32.pop %v3338
    %v3343 = verf.f32.pop %v3339
    %v3344 = verf.f32.pop %v3340
    %v3345 = verf.f32.pop %v3341
    %v3346 = vadd.f32 %v3342, 1.0
    %v3347 = vadd.f32 %v3343, 1.0
    %v3348 = vadd.f32 %v3344, 1.0
    %v3349 = vadd.f32 %v3345, 1.0
    %v3350 = vmul.f32 %v3334, %v3346
    %v3351 = vmul.f32 %v3335, %v3347
    %v3352 = vmul.f32 %v3336, %v3348
    %v3353 = vmul.f32 %v3337, %v3349
    %v3354 = vpack.c.bf16 %v3351, %v3350
    %v3355 = vpack.c.bf16 %v3353, %v3352
    %s3356 = scalar_lea.vmem [#allocation7], 32
    %v3357 = vld [vmem:[%s3356] sm:$0xf]
    %v3358 = vld [vmem:[%s3356 + $0x4] sm:$0xf]
    %v3359 = vld [vmem:[%s3356 + $0x8] sm:$0xf]
    %v3360 = vld [vmem:[%s3356 + $0xc] sm:$0xf]
    %s3361 = scalar_lea.vmem %s9, 2
    %v3362 = vld [vmem:[%s3361] sm:$0x1]
    %v3364 = vlaneseq
    %v3365 = vshrl.u32 %v3364, 7
    %v3366 = vsub.s32 0, %v3365
    %v3367 = vrot.slane %v3362, %v3366
    %v3373 = vunpack.c.l.b16 %v3357
    %v3374 = vunpack.c.l.b16 %v3358
    %v3375 = vunpack.c.l.b16 %v3359
    %v3376 = vunpack.c.l.b16 %v3360
    %v3377 = vpack.c.b16 %v3374, %v3373
    %v3378 = vpack.c.b16 %v3376, %v3375
    %v3382 = vsel %vm240, %v3354, 0
    %v3385 = vsel %vm240, %v3355, 0
    %3387 = vmatprep.subr.bf16.mxu0 0
    %3388 = vmatpush1.bf16.msra.mxu0 %v3377
    %3389 = vmatprep.subr.bf16.mxu0 0
    %3390 = vmatpush1.bf16.msra.mxu0 %v3378
    %3391 = vmatprep.subr.bf16.mxu0 0
    %3392 = vmatpush1.bf16.msra.mxu0 0
    %3393 = vmatprep.subr.bf16.mxu0 0
    %3394 = vmatpush1.bf16.msra.mxu0 0
    %3395 = vmatprep.subr.bf16.mxu0 0
    %3396 = vmatpush1.bf16.msra.mxu0 0
    %3397 = vmatprep.subr.bf16.mxu0 0
    %3398 = vmatpush1.bf16.msra.mxu0 0
    %3399 = vmatprep.subr.bf16.mxu0 0
    %3400 = vmatpush1.bf16.msra.mxu0 0
    %3401 = vmatprep.subr.bf16.mxu0 0
    %3402 = vmatpush1.bf16.msra.mxu0 0
    %3403 = vmatprep.subr.bf16.mxu0 0
    %3404 = vmatpush1.bf16.msra.mxu0 0
    %3405 = vmatprep.subr.bf16.mxu0 0
    %3406 = vmatpush1.bf16.msra.mxu0 0
    %3407 = vmatprep.subr.bf16.mxu0 0
    %3408 = vmatpush1.bf16.msra.mxu0 0
    %3409 = vmatprep.subr.bf16.mxu0 0
    %3410 = vmatpush1.bf16.msra.mxu0 0
    %3411 = vmatprep.subr.bf16.mxu0 0
    %3412 = vmatpush1.bf16.msra.mxu0 0
    %3413 = vmatprep.subr.bf16.mxu0 0
    %3414 = vmatpush1.bf16.msra.mxu0 0
    %3415 = vmatprep.subr.bf16.mxu0 0
    %3416 = vmatpush1.bf16.msra.mxu0 0
    %3417 = vmatprep.subr.bf16.mxu0 0
    %3418 = vmatpush1.bf16.msra.mxu0 0
    %3419 = vmatprep.mubr.bf16.mxu0 0
    %3420 = vmatmul.mubr.bf16.gmra.mrb[0].mxu0 %v3382
    %v3421 = vpop.f32.mrb[0].mxu0
    %v3422 = vadd.f32 %v3367, %v3421
    %v3423 = vpop.f32.mrb[0].mxu0
    %v3424 = vpop.f32.mrb[0].mxu0
    %v3425 = vadd.f32 %v3367, %v3424
    %v3426 = vpop.f32.mrb[0].mxu0
    %3427 = vmatprep.mubr.bf16.mxu0 0
    %3428 = vmatmul.mubr.bf16.gmra.mrb[0].mxu0 %v3385
    %v3429 = vpop.f32.mrb[0].mxu0
    %v3430 = vadd.f32 %v3367, %v3429
    %v3431 = vpop.f32.mrb[0].mxu0
    %v3432 = vpop.f32.mrb[0].mxu0
    %v3433 = vadd.f32 %v3367, %v3432
    %v3434 = vpop.f32.mrb[0].mxu0
    %3435 = vdwg.mxu0
    %3436 = vmatprep.subr.mxu0 0.0
    %3437 = vmatpush1.msra.mxu0 %v3350
    %3438 = vmatprep.subr.mxu0 0.0
    %3439 = vmatpush1.msra.mxu0 %v3351
    %3440 = vmatprep.subr.mxu0 0.0
    %3441 = vmatpush1.msra.mxu0 %v3352
    %3442 = vmatprep.subr.mxu0 0.0
    %3443 = vmatpush1.msra.mxu0 %v3353
    %3444 = vmatprep.subr.mxu0 0.0
    %3445 = vmatpush1.msra.mxu0 0.0
    %3446 = vmatprep.subr.mxu0 0.0
    %3447 = vmatpush1.msra.mxu0 0.0
    %3448 = vmatprep.subr.mxu0 0.0
    %3449 = vmatpush1.msra.mxu0 0.0
    %3450 = vmatprep.subr.mxu0 0.0
    %3451 = vmatpush1.msra.mxu0 0.0
    %3452 = vmatprep.subr.mxu0 0.0
    %3453 = vmatpush1.msra.mxu0 0.0
    %3454 = vmatprep.subr.mxu0 0.0
    %3455 = vmatpush1.msra.mxu0 0.0
    %3456 = vmatprep.subr.mxu0 0.0
    %3457 = vmatpush1.msra.mxu0 0.0
    %3458 = vmatprep.subr.mxu0 0.0
    %3459 = vmatpush1.msra.mxu0 0.0
    %3460 = vmatprep.subr.mxu0 0.0
    %3461 = vmatpush1.msra.mxu0 0.0
    %3462 = vmatprep.subr.mxu0 0.0
    %3463 = vmatpush1.msra.mxu0 0.0
    %3464 = vmatprep.subr.mxu0 0.0
    %3465 = vmatpush1.msra.mxu0 0.0
    %3466 = vmatprep.subr.mxu0 0.0
    %3467 = vmatpush1.msra.mxu0 0.0
    %3468 = vmatprep.subr.mxu0 0.0
    %3469 = vmatpush1.msra.mxu0 0.0
    %3470 = vmatprep.subr.mxu0 0.0
    %3471 = vmatpush1.msra.mxu0 0.0
    %3472 = vmatprep.subr.mxu0 0.0
    %3473 = vmatpush1.msra.mxu0 0.0
    %3474 = vmatprep.subr.mxu0 0.0
    %3475 = vmatpush1.msra.mxu0 0.0
    %3476 = vmatprep.subr.mxu0 0.0
    %3477 = vmatpush1.msra.mxu0 0.0
    %3478 = vmatprep.subr.mxu0 0.0
    %3479 = vmatpush1.msra.mxu0 0.0
    %3480 = vmatprep.subr.mxu0 0.0
    %3481 = vmatpush1.msra.mxu0 0.0
    %3482 = vmatprep.subr.mxu0 0.0
    %3483 = vmatpush1.msra.mxu0 0.0
    %3484 = vmatprep.subr.mxu0 0.0
    %3485 = vmatpush1.msra.mxu0 0.0
    %3486 = vmatprep.subr.mxu0 0.0
    %3487 = vmatpush1.msra.mxu0 0.0
    %3488 = vmatprep.subr.mxu0 0.0
    %3489 = vmatpush1.msra.mxu0 0.0
    %3490 = vmatprep.subr.mxu0 0.0
    %3491 = vmatpush1.msra.mxu0 0.0
    %3492 = vmatprep.subr.mxu0 0.0
    %3493 = vmatpush1.msra.mxu0 0.0
    %3494 = vmatprep.subr.mxu0 0.0
    %3495 = vmatpush1.msra.mxu0 0.0
    %3496 = vmatprep.subr.mxu0 0.0
    %3497 = vmatpush1.msra.mxu0 0.0
    %3498 = vmatprep.subr.mxu0 0.0
    %3499 = vmatpush1.msra.mxu0 0.0
    %3500 = vmatprep.mubr.f32.mxu0 0.0
    %3501 = vmatmul.mubr.f32.gmra.mrb[0].mxu0 %v298
    %v3502 = vpop.f32.mrb[0].mxu0
    %v3503 = vadd.f32 0.0, %v3502
    %v3504 = vpop.f32.mrb[0].mxu0
    %3505 = vdwg.mxu0
    %3506 = vmatprep.subr.mxu0 0.0
    %3507 = vmatpush1.msra.mxu0 %v3350
    %3508 = vmatprep.subr.mxu0 0.0
    %3509 = vmatpush1.msra.mxu0 %v3351
    %3510 = vmatprep.subr.mxu0 0.0
    %3511 = vmatpush1.msra.mxu0 %v3352
    %3512 = vmatprep.subr.mxu0 0.0
    %3513 = vmatpush1.msra.mxu0 %v3353
    %3514 = vmatprep.subr.mxu0 0.0
    %3515 = vmatpush1.msra.mxu0 0.0
    %3516 = vmatprep.subr.mxu0 0.0
    %3517 = vmatpush1.msra.mxu0 0.0
    %3518 = vmatprep.subr.mxu0 0.0
    %3519 = vmatpush1.msra.mxu0 0.0
    %3520 = vmatprep.subr.mxu0 0.0
    %3521 = vmatpush1.msra.mxu0 0.0
    %3522 = vmatprep.subr.mxu0 0.0
    %3523 = vmatpush1.msra.mxu0 0.0
    %3524 = vmatprep.subr.mxu0 0.0
    %3525 = vmatpush1.msra.mxu0 0.0
    %3526 = vmatprep.subr.mxu0 0.0
    %3527 = vmatpush1.msra.mxu0 0.0
    %3528 = vmatprep.subr.mxu0 0.0
    %3529 = vmatpush1.msra.mxu0 0.0
    %3530 = vmatprep.subr.mxu0 0.0
    %3531 = vmatpush1.msra.mxu0 0.0
    %3532 = vmatprep.subr.mxu0 0.0
    %3533 = vmatpush1.msra.mxu0 0.0
    %3534 = vmatprep.subr.mxu0 0.0
    %3535 = vmatpush1.msra.mxu0 0.0
    %3536 = vmatprep.subr.mxu0 0.0
    %3537 = vmatpush1.msra.mxu0 0.0
    %3538 = vmatprep.subr.mxu0 0.0
    %3539 = vmatpush1.msra.mxu0 0.0
    %3540 = vmatprep.subr.mxu0 0.0
    %3541 = vmatpush1.msra.mxu0 0.0
    %3542 = vmatprep.subr.mxu0 0.0
    %3543 = vmatpush1.msra.mxu0 0.0
    %3544 = vmatprep.subr.mxu0 0.0
    %3545 = vmatpush1.msra.mxu0 0.0
    %3546 = vmatprep.subr.mxu0 0.0
    %3547 = vmatpush1.msra.mxu0 0.0
    %3548 = vmatprep.subr.mxu0 0.0
    %3549 = vmatpush1.msra.mxu0 0.0
    %3550 = vmatprep.subr.mxu0 0.0
    %3551 = vmatpush1.msra.mxu0 0.0
    %3552 = vmatprep.subr.mxu0 0.0
    %3553 = vmatpush1.msra.mxu0 0.0
    %3554 = vmatprep.subr.mxu0 0.0
    %3555 = vmatpush1.msra.mxu0 0.0
    %3556 = vmatprep.subr.mxu0 0.0
    %3557 = vmatpush1.msra.mxu0 0.0
    %3558 = vmatprep.subr.mxu0 0.0
    %3559 = vmatpush1.msra.mxu0 0.0
    %3560 = vmatprep.subr.mxu0 0.0
    %3561 = vmatpush1.msra.mxu0 0.0
    %3562 = vmatprep.subr.mxu0 0.0
    %3563 = vmatpush1.msra.mxu0 0.0
    %3564 = vmatprep.subr.mxu0 0.0
    %3565 = vmatpush1.msra.mxu0 0.0
    %3566 = vmatprep.subr.mxu0 0.0
    %3567 = vmatpush1.msra.mxu0 0.0
    %3568 = vmatprep.subr.mxu0 0.0
    %3569 = vmatpush1.msra.mxu0 0.0
    %3570 = vmatprep.mubr.f32.mxu0 0.0
    %3571 = vmatmul.mubr.f32.gmra.mrb[0].mxu0 %v372
    %v3572 = vpop.f32.mrb[0].mxu0
    %v3573 = vadd.f32 0.0, %v3572
    %v3574 = vpop.f32.mrb[0].mxu0
    %3575 = vdwg.mxu0
    %v3576 = vpack.c.bf16 %v3503, %v3503
    %s3577 = scalar_lea.vmem %s6, 128
    %v3578 = vld [vmem:[%s3577] sm:$0xf]
    %v3579 = vld [vmem:[%s3577 + $0x4] sm:$0xf]
    %v3580 = vld [vmem:[%s3577 + $0x8] sm:$0xf]
    %v3581 = vld [vmem:[%s3577 + $0xc] sm:$0xf]
    %v3582 = vpack.c.bf16 %v3573, %v3573
    %s3583 = scalar_lea.vmem [#allocation6], 128
    %v3584 = vld [vmem:[%s3583] sm:$0xf]
    %v3585 = vld [vmem:[%s3583 + $0x4] sm:$0xf]
    %v3586 = vld [vmem:[%s3583 + $0x8] sm:$0xf]
    %v3587 = vld [vmem:[%s3583 + $0xc] sm:$0xf]
    %v3592 = vunpack.c.l.b16 %v3584
    %v3593 = vunpack.c.l.b16 %v3585
    %v3594 = vunpack.c.l.b16 %v3586
    %v3595 = vunpack.c.l.b16 %v3587
    %v3596 = vpack.c.b16 %v3593, %v3592
    %v3597 = vpack.c.b16 %v3595, %v3594
    %v3601 = vsel %vm240, %v3582, 0
    %3603 = vmatprep.subr.bf16.mxu0 0
    %3604 = vmatpush1.bf16.msra.mxu0 %v3596
    %3605 = vmatprep.subr.bf16.mxu0 0
    %3606 = vmatpush1.bf16.msra.mxu0 %v3597
    %3607 = vmatprep.subr.bf16.mxu0 0
    %3608 = vmatpush1.bf16.msra.mxu0 0
    %3609 = vmatprep.subr.bf16.mxu0 0
    %3610 = vmatpush1.bf16.msra.mxu0 0
    %3611 = vmatprep.subr.bf16.mxu0 0
    %3612 = vmatpush1.bf16.msra.mxu0 0
    %3613 = vmatprep.subr.bf16.mxu0 0
    %3614 = vmatpush1.bf16.msra.mxu0 0
    %3615 = vmatprep.subr.bf16.mxu0 0
    %3616 = vmatpush1.bf16.msra.mxu0 0
    %3617 = vmatprep.subr.bf16.mxu0 0
    %3618 = vmatpush1.bf16.msra.mxu0 0
    %3619 = vmatprep.subr.bf16.mxu0 0
    %3620 = vmatpush1.bf16.msra.mxu0 0
    %3621 = vmatprep.subr.bf16.mxu0 0
    %3622 = vmatpush1.bf16.msra.mxu0 0
    %3623 = vmatprep.subr.bf16.mxu0 0
    %3624 = vmatpush1.bf16.msra.mxu0 0
    %3625 = vmatprep.subr.bf16.mxu0 0
    %3626 = vmatpush1.bf16.msra.mxu0 0
    %3627 = vmatprep.subr.bf16.mxu0 0
    %3628 = vmatpush1.bf16.msra.mxu0 0
    %3629 = vmatprep.subr.bf16.mxu0 0
    %3630 = vmatpush1.bf16.msra.mxu0 0
    %3631 = vmatprep.subr.bf16.mxu0 0
    %3632 = vmatpush1.bf16.msra.mxu0 0
    %3633 = vmatprep.subr.bf16.mxu0 0
    %3634 = vmatpush1.bf16.msra.mxu0 0
    %3635 = vmatprep.mubr.bf16.mxu0 0
    %3636 = vmatmul.mubr.bf16.gmra.mrb[0].mxu0 %v3601
    %v3637 = vpop.f32.mrb[0].mxu0
    %v3638 = vadd.f32 0.0, %v3637
    %v3639 = vpop.f32.mrb[0].mxu0
    %v3640 = vpop.f32.mrb[0].mxu0
    %v3641 = vpop.f32.mrb[0].mxu0
    %3642 = vdwg.mxu0
    %v3647 = vunpack.c.l.b16 %v3578
    %v3648 = vunpack.c.l.b16 %v3579
    %v3649 = vunpack.c.l.b16 %v3580
    %v3650 = vunpack.c.l.b16 %v3581
    %v3651 = vpack.c.b16 %v3648, %v3647
    %v3652 = vpack.c.b16 %v3650, %v3649
    %v3656 = vsel %vm240, %v3576, 0
    %3658 = vmatprep.subr.bf16.mxu0 0
    %3659 = vmatpush1.bf16.msra.mxu0 %v3651
    %3660 = vmatprep.subr.bf16.mxu0 0
    %3661 = vmatpush1.bf16.msra.mxu0 %v3652
    %3662 = vmatprep.subr.bf16.mxu0 0
    %3663 = vmatpush1.bf16.msra.mxu0 0
    %3664 = vmatprep.subr.bf16.mxu0 0
    %3665 = vmatpush1.bf16.msra.mxu0 0
    %3666 = vmatprep.subr.bf16.mxu0 0
    %3667 = vmatpush1.bf16.msra.mxu0 0
    %3668 = vmatprep.subr.bf16.mxu0 0
    %3669 = vmatpush1.bf16.msra.mxu0 0
    %3670 = vmatprep.subr.bf16.mxu0 0
    %3671 = vmatpush1.bf16.msra.mxu0 0
    %3672 = vmatprep.subr.bf16.mxu0 0
    %3673 = vmatpush1.bf16.msra.mxu0 0
    %3674 = vmatprep.subr.bf16.mxu0 0
    %3675 = vmatpush1.bf16.msra.mxu0 0
    %3676 = vmatprep.subr.bf16.mxu0 0
    %3677 = vmatpush1.bf16.msra.mxu0 0
    %3678 = vmatprep.subr.bf16.mxu0 0
    %3679 = vmatpush1.bf16.msra.mxu0 0
    %3680 = vmatprep.subr.bf16.mxu0 0
    %3681 = vmatpush1.bf16.msra.mxu0 0
    %3682 = vmatprep.subr.bf16.mxu0 0
    %3683 = vmatpush1.bf16.msra.mxu0 0
    %3684 = vmatprep.subr.bf16.mxu0 0
    %3685 = vmatpush1.bf16.msra.mxu0 0
    %3686 = vmatprep.subr.bf16.mxu0 0
    %3687 = vmatpush1.bf16.msra.mxu0 0
    %3688 = vmatprep.subr.bf16.mxu0 0
    %3689 = vmatpush1.bf16.msra.mxu0 0
    %3690 = vmatprep.mubr.bf16.mxu0 0
    %3691 = vmatmul.mubr.bf16.gmra.mrb[0].mxu0 %v3656
    %v3692 = vpop.f32.mrb[0].mxu0
    %v3693 = vadd.f32 %v3638, %v3692
    %v3694 = vpop.f32.mrb[0].mxu0
    %v3695 = vpop.f32.mrb[0].mxu0
    %v3696 = vpop.f32.mrb[0].mxu0
    %3697 = vdwg.mxu0
    %v3699 = vsel %vm580, %v3693, 0
    %3701 = vmatprep.subr.mxu0 0.0
    %3702 = vmatpush1.msra.mxu0 %v3699
    %3703 = vmatprep.subr.mxu0 0.0
    %3704 = vmatpush1.msra.mxu0 0.0
    %3705 = vmatprep.subr.mxu0 0.0
    %3706 = vmatpush1.msra.mxu0 0.0
    %3707 = vmatprep.subr.mxu0 0.0
    %3708 = vmatpush1.msra.mxu0 0.0
    %3709 = vmatprep.subr.mxu0 0.0
    %3710 = vmatpush1.msra.mxu0 0.0
    %3711 = vmatprep.subr.mxu0 0.0
    %3712 = vmatpush1.msra.mxu0 0.0
    %3713 = vmatprep.subr.mxu0 0.0
    %3714 = vmatpush1.msra.mxu0 0.0
    %3715 = vmatprep.subr.mxu0 0.0
    %3716 = vmatpush1.msra.mxu0 0.0
    %3717 = vmatprep.subr.mxu0 0.0
    %3718 = vmatpush1.msra.mxu0 0.0
    %3719 = vmatprep.subr.mxu0 0.0
    %3720 = vmatpush1.msra.mxu0 0.0
    %3721 = vmatprep.subr.mxu0 0.0
    %3722 = vmatpush1.msra.mxu0 0.0
    %3723 = vmatprep.subr.mxu0 0.0
    %3724 = vmatpush1.msra.mxu0 0.0
    %3725 = vmatprep.subr.mxu0 0.0
    %3726 = vmatpush1.msra.mxu0 0.0
    %3727 = vmatprep.subr.mxu0 0.0
    %3728 = vmatpush1.msra.mxu0 0.0
    %3729 = vmatprep.subr.mxu0 0.0
    %3730 = vmatpush1.msra.mxu0 0.0
    %3731 = vmatprep.subr.mxu0 0.0
    %3732 = vmatpush1.msra.mxu0 0.0
    %3733 = vmatprep.subr.mxu0 0.0
    %3734 = vmatpush1.msra.mxu0 0.0
    %3735 = vmatprep.subr.mxu0 0.0
    %3736 = vmatpush1.msra.mxu0 0.0
    %3737 = vmatprep.subr.mxu0 0.0
    %3738 = vmatpush1.msra.mxu0 0.0
    %3739 = vmatprep.subr.mxu0 0.0
    %3740 = vmatpush1.msra.mxu0 0.0
    %3741 = vmatprep.subr.mxu0 0.0
    %3742 = vmatpush1.msra.mxu0 0.0
    %3743 = vmatprep.subr.mxu0 0.0
    %3744 = vmatpush1.msra.mxu0 0.0
    %3745 = vmatprep.subr.mxu0 0.0
    %3746 = vmatpush1.msra.mxu0 0.0
    %3747 = vmatprep.subr.mxu0 0.0
    %3748 = vmatpush1.msra.mxu0 0.0
    %3749 = vmatprep.subr.mxu0 0.0
    %3750 = vmatpush1.msra.mxu0 0.0
    %3751 = vmatprep.subr.mxu0 0.0
    %3752 = vmatpush1.msra.mxu0 0.0
    %3753 = vmatprep.subr.mxu0 0.0
    %3754 = vmatpush1.msra.mxu0 0.0
    %3755 = vmatprep.subr.mxu0 0.0
    %3756 = vmatpush1.msra.mxu0 0.0
    %3757 = vmatprep.subr.mxu0 0.0
    %3758 = vmatpush1.msra.mxu0 0.0
    %3759 = vmatprep.subr.mxu0 0.0
    %3760 = vmatpush1.msra.mxu0 0.0
    %3761 = vmatprep.subr.mxu0 0.0
    %3762 = vmatpush1.msra.mxu0 0.0
    %3763 = vmatprep.subr.mxu0 0.0
    %3764 = vmatpush1.msra.mxu0 0.0
    %3765 = vmatprep.mubr.f32.mxu0 0.0
    %3766 = vmatmul.mubr.f32.gmra.mrb[0].mxu0 %v569
    %v3767 = vpop.f32.mrb[0].mxu0
    %v3768 = vadd.f32 0.0, %v3767
    %v3769 = vpop.f32.mrb[0].mxu0
    %3770 = vmatprep.mubr.f32.mxu0 0.0
    %3771 = vmatmul.mubr.f32.gmra.mrb[0].mxu0 %v572
    %v3772 = vpop.f32.mrb[0].mxu0
    %v3773 = vadd.f32 0.0, %v3772
    %v3774 = vpop.f32.mrb[0].mxu0
    %3775 = vmatprep.mubr.f32.mxu0 0.0
    %3776 = vmatmul.mubr.f32.gmra.mrb[0].mxu0 %v575
    %v3777 = vpop.f32.mrb[0].mxu0
    %v3778 = vadd.f32 0.0, %v3777
    %v3779 = vpop.f32.mrb[0].mxu0
    %3780 = vmatprep.mubr.f32.mxu0 0.0
    %3781 = vmatmul.mubr.f32.gmra.mrb[0].mxu0 %v578
    %v3782 = vpop.f32.mrb[0].mxu0
    %v3783 = vadd.f32 0.0, %v3782
    %v3784 = vpop.f32.mrb[0].mxu0
    %3785 = vdwg.mxu0
    %v3786 = vadd.f32 %v3422, %v3768
    %v3787 = vadd.f32 %v3425, %v3773
    %v3788 = vadd.f32 %v3430, %v3778
    %v3789 = vadd.f32 %v3433, %v3783
    %3790 = vmatprep.subr.mxu0 0.0
    %3791 = vmatpush1.msra.mxu0 %v3350
    %3792 = vmatprep.subr.mxu0 0.0
    %3793 = vmatpush1.msra.mxu0 %v3351
    %3794 = vmatprep.subr.mxu0 0.0
    %3795 = vmatpush1.msra.mxu0 %v3352
    %3796 = vmatprep.subr.mxu0 0.0
    %3797 = vmatpush1.msra.mxu0 %v3353
    %3798 = vmatprep.subr.mxu0 0.0
    %3799 = vmatpush1.msra.mxu0 0.0
    %3800 = vmatprep.subr.mxu0 0.0
    %3801 = vmatpush1.msra.mxu0 0.0
    %3802 = vmatprep.subr.mxu0 0.0
    %3803 = vmatpush1.msra.mxu0 0.0
    %3804 = vmatprep.subr.mxu0 0.0
    %3805 = vmatpush1.msra.mxu0 0.0
    %3806 = vmatprep.subr.mxu0 0.0
    %3807 = vmatpush1.msra.mxu0 0.0
    %3808 = vmatprep.subr.mxu0 0.0
    %3809 = vmatpush1.msra.mxu0 0.0
    %3810 = vmatprep.subr.mxu0 0.0
    %3811 = vmatpush1.msra.mxu0 0.0
    %3812 = vmatprep.subr.mxu0 0.0
    %3813 = vmatpush1.msra.mxu0 0.0
    %3814 = vmatprep.subr.mxu0 0.0
    %3815 = vmatpush1.msra.mxu0 0.0
    %3816 = vmatprep.subr.mxu0 0.0
    %3817 = vmatpush1.msra.mxu0 0.0
    %3818 = vmatprep.subr.mxu0 0.0
    %3819 = vmatpush1.msra.mxu0 0.0
    %3820 = vmatprep.subr.mxu0 0.0
    %3821 = vmatpush1.msra.mxu0 0.0
    %3822 = vmatprep.subr.mxu0 0.0
    %3823 = vmatpush1.msra.mxu0 0.0
    %3824 = vmatprep.subr.mxu0 0.0
    %3825 = vmatpush1.msra.mxu0 0.0
    %3826 = vmatprep.subr.mxu0 0.0
    %3827 = vmatpush1.msra.mxu0 0.0
    %3828 = vmatprep.subr.mxu0 0.0
    %3829 = vmatpush1.msra.mxu0 0.0
    %3830 = vmatprep.subr.mxu0 0.0
    %3831 = vmatpush1.msra.mxu0 0.0
    %3832 = vmatprep.subr.mxu0 0.0
    %3833 = vmatpush1.msra.mxu0 0.0
    %3834 = vmatprep.subr.mxu0 0.0
    %3835 = vmatpush1.msra.mxu0 0.0
    %3836 = vmatprep.subr.mxu0 0.0
    %3837 = vmatpush1.msra.mxu0 0.0
    %3838 = vmatprep.subr.mxu0 0.0
    %3839 = vmatpush1.msra.mxu0 0.0
    %3840 = vmatprep.subr.mxu0 0.0
    %3841 = vmatpush1.msra.mxu0 0.0
    %3842 = vmatprep.subr.mxu0 0.0
    %3843 = vmatpush1.msra.mxu0 0.0
    %3844 = vmatprep.subr.mxu0 0.0
    %3845 = vmatpush1.msra.mxu0 0.0
    %3846 = vmatprep.subr.mxu0 0.0
    %3847 = vmatpush1.msra.mxu0 0.0
    %3848 = vmatprep.subr.mxu0 0.0
    %3849 = vmatpush1.msra.mxu0 0.0
    %3850 = vmatprep.subr.mxu0 0.0
    %3851 = vmatpush1.msra.mxu0 0.0
    %3852 = vmatprep.subr.mxu0 0.0
    %3853 = vmatpush1.msra.mxu0 0.0
    %3854 = vmatprep.mubr.f32.mxu0 0.0
    %3855 = vmatmul.mubr.f32.gmra.mrb[0].mxu0 %v676
    %v3856 = vpop.f32.mrb[0].mxu0
    %v3857 = vadd.f32 0.0, %v3856
    %v3858 = vpop.f32.mrb[0].mxu0
    %3859 = vdwg.mxu0
    %3860 = vmatprep.subr.mxu0 0.0
    %3861 = vmatpush1.msra.mxu0 %v3350
    %3862 = vmatprep.subr.mxu0 0.0
    %3863 = vmatpush1.msra.mxu0 %v3351
    %3864 = vmatprep.subr.mxu0 0.0
    %3865 = vmatpush1.msra.mxu0 %v3352
    %3866 = vmatprep.subr.mxu0 0.0
    %3867 = vmatpush1.msra.mxu0 %v3353
    %3868 = vmatprep.subr.mxu0 0.0
    %3869 = vmatpush1.msra.mxu0 0.0
    %3870 = vmatprep.subr.mxu0 0.0
    %3871 = vmatpush1.msra.mxu0 0.0
    %3872 = vmatprep.subr.mxu0 0.0
    %3873 = vmatpush1.msra.mxu0 0.0
    %3874 = vmatprep.subr.mxu0 0.0
    %3875 = vmatpush1.msra.mxu0 0.0
    %3876 = vmatprep.subr.mxu0 0.0
    %3877 = vmatpush1.msra.mxu0 0.0
    %3878 = vmatprep.subr.mxu0 0.0
    %3879 = vmatpush1.msra.mxu0 0.0
    %3880 = vmatprep.subr.mxu0 0.0
    %3881 = vmatpush1.msra.mxu0 0.0
    %3882 = vmatprep.subr.mxu0 0.0
    %3883 = vmatpush1.msra.mxu0 0.0
    %3884 = vmatprep.subr.mxu0 0.0
    %3885 = vmatpush1.msra.mxu0 0.0
    %3886 = vmatprep.subr.mxu0 0.0
    %3887 = vmatpush1.msra.mxu0 0.0
    %3888 = vmatprep.subr.mxu0 0.0
    %3889 = vmatpush1.msra.mxu0 0.0
    %3890 = vmatprep.subr.mxu0 0.0
    %3891 = vmatpush1.msra.mxu0 0.0
    %3892 = vmatprep.subr.mxu0 0.0
    %3893 = vmatpush1.msra.mxu0 0.0
    %3894 = vmatprep.subr.mxu0 0.0
    %3895 = vmatpush1.msra.mxu0 0.0
    %3896 = vmatprep.subr.mxu0 0.0
    %3897 = vmatpush1.msra.mxu0 0.0
    %3898 = vmatprep.subr.mxu0 0.0
    %3899 = vmatpush1.msra.mxu0 0.0
    %3900 = vmatprep.subr.mxu0 0.0
    %3901 = vmatpush1.msra.mxu0 0.0
    %3902 = vmatprep.subr.mxu0 0.0
    %3903 = vmatpush1.msra.mxu0 0.0
    %3904 = vmatprep.subr.mxu0 0.0
    %3905 = vmatpush1.msra.mxu0 0.0
    %3906 = vmatprep.subr.mxu0 0.0
    %3907 = vmatpush1.msra.mxu0 0.0
    %3908 = vmatprep.subr.mxu0 0.0
    %3909 = vmatpush1.msra.mxu0 0.0
    %3910 = vmatprep.subr.mxu0 0.0
    %3911 = vmatpush1.msra.mxu0 0.0
    %3912 = vmatprep.subr.mxu0 0.0
    %3913 = vmatpush1.msra.mxu0 0.0
    %3914 = vmatprep.subr.mxu0 0.0
    %3915 = vmatpush1.msra.mxu0 0.0
    %3916 = vmatprep.subr.mxu0 0.0
    %3917 = vmatpush1.msra.mxu0 0.0
    %3918 = vmatprep.subr.mxu0 0.0
    %3919 = vmatpush1.msra.mxu0 0.0
    %3920 = vmatprep.subr.mxu0 0.0
    %3921 = vmatpush1.msra.mxu0 0.0
    %3922 = vmatprep.subr.mxu0 0.0
    %3923 = vmatpush1.msra.mxu0 0.0
    %3924 = vmatprep.mubr.f32.mxu0 0.0
    %3925 = vmatmul.mubr.f32.gmra.mrb[0].mxu0 %v751
    %v3926 = vpop.f32.mrb[0].mxu0
    %v3927 = vadd.f32 0.0, %v3926
    %v3928 = vpop.f32.mrb[0].mxu0
    %3929 = vdwg.mxu0
    %v3930 = vpack.c.bf16 %v3857, %v3857
    %s3931 = scalar_lea.vmem %s6, 144
    %v3932 = vld [vmem:[%s3931] sm:$0xf]
    %v3933 = vld [vmem:[%s3931 + $0x4] sm:$0xf]
    %v3934 = vld [vmem:[%s3931 + $0x8] sm:$0xf]
    %v3935 = vld [vmem:[%s3931 + $0xc] sm:$0xf]
    %v3936 = vpack.c.bf16 %v3927, %v3927
    %s3937 = scalar_lea.vmem [#allocation6], 144
    %v3938 = vld [vmem:[%s3937] sm:$0xf]
    %v3939 = vld [vmem:[%s3937 + $0x4] sm:$0xf]
    %v3940 = vld [vmem:[%s3937 + $0x8] sm:$0xf]
    %v3941 = vld [vmem:[%s3937 + $0xc] sm:$0xf]
    %v3946 = vunpack.c.l.b16 %v3938
    %v3947 = vunpack.c.l.b16 %v3939
    %v3948 = vunpack.c.l.b16 %v3940
    %v3949 = vunpack.c.l.b16 %v3941
    %v3950 = vpack.c.b16 %v3947, %v3946
    %v3951 = vpack.c.b16 %v3949, %v3948
    %v3955 = vsel %vm240, %v3936, 0
    %3957 = vmatprep.subr.bf16.mxu0 0
    %3958 = vmatpush1.bf16.msra.mxu0 %v3950
    %3959 = vmatprep.subr.bf16.mxu0 0
    %3960 = vmatpush1.bf16.msra.mxu0 %v3951
    %3961 = vmatprep.subr.bf16.mxu0 0
    %3962 = vmatpush1.bf16.msra.mxu0 0
    %3963 = vmatprep.subr.bf16.mxu0 0
    %3964 = vmatpush1.bf16.msra.mxu0 0
    %3965 = vmatprep.subr.bf16.mxu0 0
    %3966 = vmatpush1.bf16.msra.mxu0 0
    %3967 = vmatprep.subr.bf16.mxu0 0
    %3968 = vmatpush1.bf16.msra.mxu0 0
    %3969 = vmatprep.subr.bf16.mxu0 0
    %3970 = vmatpush1.bf16.msra.mxu0 0
    %3971 = vmatprep.subr.bf16.mxu0 0
    %3972 = vmatpush1.bf16.msra.mxu0 0
    %3973 = vmatprep.subr.bf16.mxu0 0
    %3974 = vmatpush1.bf16.msra.mxu0 0
    %3975 = vmatprep.subr.bf16.mxu0 0
    %3976 = vmatpush1.bf16.msra.mxu0 0
    %3977 = vmatprep.subr.bf16.mxu0 0
    %3978 = vmatpush1.bf16.msra.mxu0 0
    %3979 = vmatprep.subr.bf16.mxu0 0
    %3980 = vmatpush1.bf16.msra.mxu0 0
    %3981 = vmatprep.subr.bf16.mxu0 0
    %3982 = vmatpush1.bf16.msra.mxu0 0
    %3983 = vmatprep.subr.bf16.mxu0 0
    %3984 = vmatpush1.bf16.msra.mxu0 0
    %3985 = vmatprep.subr.bf16.mxu0 0
    %3986 = vmatpush1.bf16.msra.mxu0 0
    %3987 = vmatprep.subr.bf16.mxu0 0
    %3988 = vmatpush1.bf16.msra.mxu0 0
    %3989 = vmatprep.mubr.bf16.mxu0 0
    %3990 = vmatmul.mubr.bf16.gmra.mrb[0].mxu0 %v3955
    %v3991 = vpop.f32.mrb[0].mxu0
    %v3992 = vadd.f32 0.0, %v3991
    %v3993 = vpop.f32.mrb[0].mxu0
    %v3994 = vpop.f32.mrb[0].mxu0
    %v3995 = vpop.f32.mrb[0].mxu0
    %3996 = vdwg.mxu0
    %v4001 = vunpack.c.l.b16 %v3932
    %v4002 = vunpack.c.l.b16 %v3933
    %v4003 = vunpack.c.l.b16 %v3934
    %v4004 = vunpack.c.l.b16 %v3935
    %v4005 = vpack.c.b16 %v4002, %v4001
    %v4006 = vpack.c.b16 %v4004, %v4003
    %v4010 = vsel %vm240, %v3930, 0
    %4012 = vmatprep.subr.bf16.mxu0 0
    %4013 = vmatpush1.bf16.msra.mxu0 %v4005
    %4014 = vmatprep.subr.bf16.mxu0 0
    %4015 = vmatpush1.bf16.msra.mxu0 %v4006
    %4016 = vmatprep.subr.bf16.mxu0 0
    %4017 = vmatpush1.bf16.msra.mxu0 0
    %4018 = vmatprep.subr.bf16.mxu0 0
    %4019 = vmatpush1.bf16.msra.mxu0 0
    %4020 = vmatprep.subr.bf16.mxu0 0
    %4021 = vmatpush1.bf16.msra.mxu0 0
    %4022 = vmatprep.subr.bf16.mxu0 0
    %4023 = vmatpush1.bf16.msra.mxu0 0
    %4024 = vmatprep.subr.bf16.mxu0 0
    %4025 = vmatpush1.bf16.msra.mxu0 0
    %4026 = vmatprep.subr.bf16.mxu0 0
    %4027 = vmatpush1.bf16.msra.mxu0 0
    %4028 = vmatprep.subr.bf16.mxu0 0
    %4029 = vmatpush1.bf16.msra.mxu0 0
    %4030 = vmatprep.subr.bf16.mxu0 0
    %4031 = vmatpush1.bf16.msra.mxu0 0
    %4032 = vmatprep.subr.bf16.mxu0 0
    %4033 = vmatpush1.bf16.msra.mxu0 0
    %4034 = vmatprep.subr.bf16.mxu0 0
    %4035 = vmatpush1.bf16.msra.mxu0 0
    %4036 = vmatprep.subr.bf16.mxu0 0
    %4037 = vmatpush1.bf16.msra.mxu0 0
    %4038 = vmatprep.subr.bf16.mxu0 0
    %4039 = vmatpush1.bf16.msra.mxu0 0
    %4040 = vmatprep.subr.bf16.mxu0 0
    %4041 = vmatpush1.bf16.msra.mxu0 0
    %4042 = vmatprep.subr.bf16.mxu0 0
    %4043 = vmatpush1.bf16.msra.mxu0 0
    %4044 = vmatprep.mubr.bf16.mxu0 0
    %4045 = vmatmul.mubr.bf16.gmra.mrb[0].mxu0 %v4010
    %v4046 = vpop.f32.mrb[0].mxu0
    %v4047 = vadd.f32 %v3992, %v4046
    %v4048 = vpop.f32.mrb[0].mxu0
    %v4049 = vpop.f32.mrb[0].mxu0
    %v4050 = vpop.f32.mrb[0].mxu0
    %4051 = vdwg.mxu0
    %v4053 = vsel %vm580, %v4047, 0
    %4055 = vmatprep.subr.mxu0 0.0
    %4056 = vmatpush1.msra.mxu0 %v4053
    %4057 = vmatprep.subr.mxu0 0.0
    %4058 = vmatpush1.msra.mxu0 0.0
    %4059 = vmatprep.subr.mxu0 0.0
    %4060 = vmatpush1.msra.mxu0 0.0
    %4061 = vmatprep.subr.mxu0 0.0
    %4062 = vmatpush1.msra.mxu0 0.0
    %4063 = vmatprep.subr.mxu0 0.0
    %4064 = vmatpush1.msra.mxu0 0.0
    %4065 = vmatprep.subr.mxu0 0.0
    %4066 = vmatpush1.msra.mxu0 0.0
    %4067 = vmatprep.subr.mxu0 0.0
    %4068 = vmatpush1.msra.mxu0 0.0
    %4069 = vmatprep.subr.mxu0 0.0
    %4070 = vmatpush1.msra.mxu0 0.0
    %4071 = vmatprep.subr.mxu0 0.0
    %4072 = vmatpush1.msra.mxu0 0.0
    %4073 = vmatprep.subr.mxu0 0.0
    %4074 = vmatpush1.msra.mxu0 0.0
    %4075 = vmatprep.subr.mxu0 0.0
    %4076 = vmatpush1.msra.mxu0 0.0
    %4077 = vmatprep.subr.mxu0 0.0
    %4078 = vmatpush1.msra.mxu0 0.0
    %4079 = vmatprep.subr.mxu0 0.0
    %4080 = vmatpush1.msra.mxu0 0.0
    %4081 = vmatprep.subr.mxu0 0.0
    %4082 = vmatpush1.msra.mxu0 0.0
    %4083 = vmatprep.subr.mxu0 0.0
    %4084 = vmatpush1.msra.mxu0 0.0
    %4085 = vmatprep.subr.mxu0 0.0
    %4086 = vmatpush1.msra.mxu0 0.0
    %4087 = vmatprep.subr.mxu0 0.0
    %4088 = vmatpush1.msra.mxu0 0.0
    %4089 = vmatprep.subr.mxu0 0.0
    %4090 = vmatpush1.msra.mxu0 0.0
    %4091 = vmatprep.subr.mxu0 0.0
    %4092 = vmatpush1.msra.mxu0 0.0
    %4093 = vmatprep.subr.mxu0 0.0
    %4094 = vmatpush1.msra.mxu0 0.0
    %4095 = vmatprep.subr.mxu0 0.0
    %4096 = vmatpush1.msra.mxu0 0.0
    %4097 = vmatprep.subr.mxu0 0.0
    %4098 = vmatpush1.msra.mxu0 0.0
    %4099 = vmatprep.subr.mxu0 0.0
    %4100 = vmatpush1.msra.mxu0 0.0
    %4101 = vmatprep.subr.mxu0 0.0
    %4102 = vmatpush1.msra.mxu0 0.0
    %4103 = vmatprep.subr.mxu0 0.0
    %4104 = vmatpush1.msra.mxu0 0.0
    %4105 = vmatprep.subr.mxu0 0.0
    %4106 = vmatpush1.msra.mxu0 0.0
    %4107 = vmatprep.subr.mxu0 0.0
    %4108 = vmatpush1.msra.mxu0 0.0
    %4109 = vmatprep.subr.mxu0 0.0
    %4110 = vmatpush1.msra.mxu0 0.0
    %4111 = vmatprep.subr.mxu0 0.0
    %4112 = vmatpush1.msra.mxu0 0.0
    %4113 = vmatprep.subr.mxu0 0.0
    %4114 = vmatpush1.msra.mxu0 0.0
    %4115 = vmatprep.subr.mxu0 0.0
    %4116 = vmatpush1.msra.mxu0 0.0
    %4117 = vmatprep.subr.mxu0 0.0
    %4118 = vmatpush1.msra.mxu0 0.0
    %4119 = vmatprep.mubr.f32.mxu0 0.0
    %4120 = vmatmul.mubr.f32.gmra.mrb[0].mxu0 %v951
    %v4121 = vpop.f32.mrb[0].mxu0
    %v4122 = vadd.f32 0.0, %v4121
    %v4123 = vpop.f32.mrb[0].mxu0
    %4124 = vmatprep.mubr.f32.mxu0 0.0
    %4125 = vmatmul.mubr.f32.gmra.mrb[0].mxu0 %v954
    %v4126 = vpop.f32.mrb[0].mxu0
    %v4127 = vadd.f32 0.0, %v4126
    %v4128 = vpop.f32.mrb[0].mxu0
    %4129 = vmatprep.mubr.f32.mxu0 0.0
    %4130 = vmatmul.mubr.f32.gmra.mrb[0].mxu0 %v957
    %v4131 = vpop.f32.mrb[0].mxu0
    %v4132 = vadd.f32 0.0, %v4131
    %v4133 = vpop.f32.mrb[0].mxu0
    %4134 = vmatprep.mubr.f32.mxu0 0.0
    %4135 = vmatmul.mubr.f32.gmra.mrb[0].mxu0 %v960
    %v4136 = vpop.f32.mrb[0].mxu0
    %v4137 = vadd.f32 0.0, %v4136
    %v4138 = vpop.f32.mrb[0].mxu0
    %4139 = vdwg.mxu0
    %v4140 = vadd.f32 %v3786, %v4122
    %v4141 = vadd.f32 %v3787, %v4127
    %v4142 = vadd.f32 %v3788, %v4132
    %v4143 = vadd.f32 %v3789, %v4137
    %4144 = vmatprep.subr.mxu0 0.0
    %4145 = vmatpush1.msra.mxu0 %v3350
    %4146 = vmatprep.subr.mxu0 0.0
    %4147 = vmatpush1.msra.mxu0 %v3351
    %4148 = vmatprep.subr.mxu0 0.0
    %4149 = vmatpush1.msra.mxu0 %v3352
    %4150 = vmatprep.subr.mxu0 0.0
    %4151 = vmatpush1.msra.mxu0 %v3353
    %4152 = vmatprep.subr.mxu0 0.0
    %4153 = vmatpush1.msra.mxu0 0.0
    %4154 = vmatprep.subr.mxu0 0.0
    %4155 = vmatpush1.msra.mxu0 0.0
    %4156 = vmatprep.subr.mxu0 0.0
    %4157 = vmatpush1.msra.mxu0 0.0
    %4158 = vmatprep.subr.mxu0 0.0
    %4159 = vmatpush1.msra.mxu0 0.0
    %4160 = vmatprep.subr.mxu0 0.0
    %4161 = vmatpush1.msra.mxu0 0.0
    %4162 = vmatprep.subr.mxu0 0.0
    %4163 = vmatpush1.msra.mxu0 0.0
    %4164 = vmatprep.subr.mxu0 0.0
    %4165 = vmatpush1.msra.mxu0 0.0
    %4166 = vmatprep.subr.mxu0 0.0
    %4167 = vmatpush1.msra.mxu0 0.0
    %4168 = vmatprep.subr.mxu0 0.0
    %4169 = vmatpush1.msra.mxu0 0.0
    %4170 = vmatprep.subr.mxu0 0.0
    %4171 = vmatpush1.msra.mxu0 0.0
    %4172 = vmatprep.subr.mxu0 0.0
    %4173 = vmatpush1.msra.mxu0 0.0
    %4174 = vmatprep.subr.mxu0 0.0
    %4175 = vmatpush1.msra.mxu0 0.0
    %4176 = vmatprep.subr.mxu0 0.0
    %4177 = vmatpush1.msra.mxu0 0.0
    %4178 = vmatprep.subr.mxu0 0.0
    %4179 = vmatpush1.msra.mxu0 0.0
    %4180 = vmatprep.subr.mxu0 0.0
    %4181 = vmatpush1.msra.mxu0 0.0
    %4182 = vmatprep.subr.mxu0 0.0
    %4183 = vmatpush1.msra.mxu0 0.0
    %4184 = vmatprep.subr.mxu0 0.0
    %4185 = vmatpush1.msra.mxu0 0.0
    %4186 = vmatprep.subr.mxu0 0.0
    %4187 = vmatpush1.msra.mxu0 0.0
    %4188 = vmatprep.subr.mxu0 0.0
    %4189 = vmatpush1.msra.mxu0 0.0
    %4190 = vmatprep.subr.mxu0 0.0
    %4191 = vmatpush1.msra.mxu0 0.0
    %4192 = vmatprep.subr.mxu0 0.0
    %4193 = vmatpush1.msra.mxu0 0.0
    %4194 = vmatprep.subr.mxu0 0.0
    %4195 = vmatpush1.msra.mxu0 0.0
    %4196 = vmatprep.subr.mxu0 0.0
    %4197 = vmatpush1.msra.mxu0 0.0
    %4198 = vmatprep.subr.mxu0 0.0
    %4199 = vmatpush1.msra.mxu0 0.0
    %4200 = vmatprep.subr.mxu0 0.0
    %4201 = vmatpush1.msra.mxu0 0.0
    %4202 = vmatprep.subr.mxu0 0.0
    %4203 = vmatpush1.msra.mxu0 0.0
    %4204 = vmatprep.subr.mxu0 0.0
    %4205 = vmatpush1.msra.mxu0 0.0
    %4206 = vmatprep.subr.mxu0 0.0
    %4207 = vmatpush1.msra.mxu0 0.0
    %4208 = vmatprep.mubr.f32.mxu0 0.0
    %4209 = vmatmul.mubr.f32.gmra.mrb[0].mxu0 %v1057
    %v4210 = vpop.f32.mrb[0].mxu0
    %v4211 = vadd.f32 0.0, %v4210
    %v4212 = vpop.f32.mrb[0].mxu0
    %4213 = vdwg.mxu0
    %4214 = vmatprep.subr.mxu0 0.0
    %4215 = vmatpush1.msra.mxu0 %v3350
    %4216 = vmatprep.subr.mxu0 0.0
    %4217 = vmatpush1.msra.mxu0 %v3351
    %4218 = vmatprep.subr.mxu0 0.0
    %4219 = vmatpush1.msra.mxu0 %v3352
    %4220 = vmatprep.subr.mxu0 0.0
    %4221 = vmatpush1.msra.mxu0 %v3353
    %4222 = vmatprep.subr.mxu0 0.0
    %4223 = vmatpush1.msra.mxu0 0.0
    %4224 = vmatprep.subr.mxu0 0.0
    %4225 = vmatpush1.msra.mxu0 0.0
    %4226 = vmatprep.subr.mxu0 0.0
    %4227 = vmatpush1.msra.mxu0 0.0
    %4228 = vmatprep.subr.mxu0 0.0
    %4229 = vmatpush1.msra.mxu0 0.0
    %4230 = vmatprep.subr.mxu0 0.0
    %4231 = vmatpush1.msra.mxu0 0.0
    %4232 = vmatprep.subr.mxu0 0.0
    %4233 = vmatpush1.msra.mxu0 0.0
    %4234 = vmatprep.subr.mxu0 0.0
    %4235 = vmatpush1.msra.mxu0 0.0
    %4236 = vmatprep.subr.mxu0 0.0
    %4237 = vmatpush1.msra.mxu0 0.0
    %4238 = vmatprep.subr.mxu0 0.0
    %4239 = vmatpush1.msra.mxu0 0.0
    %4240 = vmatprep.subr.mxu0 0.0
    %4241 = vmatpush1.msra.mxu0 0.0
    %4242 = vmatprep.subr.mxu0 0.0
    %4243 = vmatpush1.msra.mxu0 0.0
    %4244 = vmatprep.subr.mxu0 0.0
    %4245 = vmatpush1.msra.mxu0 0.0
    %4246 = vmatprep.subr.mxu0 0.0
    %4247 = vmatpush1.msra.mxu0 0.0
    %4248 = vmatprep.subr.mxu0 0.0
    %4249 = vmatpush1.msra.mxu0 0.0
    %4250 = vmatprep.subr.mxu0 0.0
    %4251 = vmatpush1.msra.mxu0 0.0
    %4252 = vmatprep.subr.mxu0 0.0
    %4253 = vmatpush1.msra.mxu0 0.0
    %4254 = vmatprep.subr.mxu0 0.0
    %4255 = vmatpush1.msra.mxu0 0.0
    %4256 = vmatprep.subr.mxu0 0.0
    %4257 = vmatpush1.msra.mxu0 0.0
    %4258 = vmatprep.subr.mxu0 0.0
    %4259 = vmatpush1.msra.mxu0 0.0
    %4260 = vmatprep.subr.mxu0 0.0
    %4261 = vmatpush1.msra.mxu0 0.0
    %4262 = vmatprep.subr.mxu0 0.0
    %4263 = vmatpush1.msra.mxu0 0.0
    %4264 = vmatprep.subr.mxu0 0.0
    %4265 = vmatpush1.msra.mxu0 0.0
    %4266 = vmatprep.subr.mxu0 0.0
    %4267 = vmatpush1.msra.mxu0 0.0
    %4268 = vmatprep.subr.mxu0 0.0
    %4269 = vmatpush1.msra.mxu0 0.0
    %4270 = vmatprep.subr.mxu0 0.0
    %4271 = vmatpush1.msra.mxu0 0.0
    %4272 = vmatprep.subr.mxu0 0.0
    %4273 = vmatpush1.msra.mxu0 0.0
    %4274 = vmatprep.subr.mxu0 0.0
    %4275 = vmatpush1.msra.mxu0 0.0
    %4276 = vmatprep.subr.mxu0 0.0
    %4277 = vmatpush1.msra.mxu0 0.0
    %4278 = vmatprep.mubr.f32.mxu0 0.0
    %4279 = vmatmul.mubr.f32.gmra.mrb[0].mxu0 %v1132
    %v4280 = vpop.f32.mrb[0].mxu0
    %v4281 = vadd.f32 0.0, %v4280
    %v4282 = vpop.f32.mrb[0].mxu0
    %4283 = vdwg.mxu0
    %v4284 = vpack.c.bf16 %v4211, %v4211
    %s4285 = scalar_lea.vmem %s6, 160
    %v4286 = vld [vmem:[%s4285] sm:$0xf]
    %v4287 = vld [vmem:[%s4285 + $0x4] sm:$0xf]
    %v4288 = vld [vmem:[%s4285 + $0x8] sm:$0xf]
    %v4289 = vld [vmem:[%s4285 + $0xc] sm:$0xf]
    %v4290 = vpack.c.bf16 %v4281, %v4281
    %s4291 = scalar_lea.vmem [#allocation6], 160
    %v4292 = vld [vmem:[%s4291] sm:$0xf]
    %v4293 = vld [vmem:[%s4291 + $0x4] sm:$0xf]
    %v4294 = vld [vmem:[%s4291 + $0x8] sm:$0xf]
    %v4295 = vld [vmem:[%s4291 + $0xc] sm:$0xf]
    %v4300 = vunpack.c.l.b16 %v4292
    %v4301 = vunpack.c.l.b16 %v4293
    %v4302 = vunpack.c.l.b16 %v4294
    %v4303 = vunpack.c.l.b16 %v4295
    %v4304 = vpack.c.b16 %v4301, %v4300
    %v4305 = vpack.c.b16 %v4303, %v4302
    %v4309 = vsel %vm240, %v4290, 0
    %4311 = vmatprep.subr.bf16.mxu0 0
    %4312 = vmatpush1.bf16.msra.mxu0 %v4304
    %4313 = vmatprep.subr.bf16.mxu0 0
    %4314 = vmatpush1.bf16.msra.mxu0 %v4305
    %4315 = vmatprep.subr.bf16.mxu0 0
    %4316 = vmatpush1.bf16.msra.mxu0 0
    %4317 = vmatprep.subr.bf16.mxu0 0
    %4318 = vmatpush1.bf16.msra.mxu0 0
    %4319 = vmatprep.subr.bf16.mxu0 0
    %4320 = vmatpush1.bf16.msra.mxu0 0
    %4321 = vmatprep.subr.bf16.mxu0 0
    %4322 = vmatpush1.bf16.msra.mxu0 0
    %4323 = vmatprep.subr.bf16.mxu0 0
    %4324 = vmatpush1.bf16.msra.mxu0 0
    %4325 = vmatprep.subr.bf16.mxu0 0
    %4326 = vmatpush1.bf16.msra.mxu0 0
    %4327 = vmatprep.subr.bf16.mxu0 0
    %4328 = vmatpush1.bf16.msra.mxu0 0
    %4329 = vmatprep.subr.bf16.mxu0 0
    %4330 = vmatpush1.bf16.msra.mxu0 0
    %4331 = vmatprep.subr.bf16.mxu0 0
    %4332 = vmatpush1.bf16.msra.mxu0 0
    %4333 = vmatprep.subr.bf16.mxu0 0
    %4334 = vmatpush1.bf16.msra.mxu0 0
    %4335 = vmatprep.subr.bf16.mxu0 0
    %4336 = vmatpush1.bf16.msra.mxu0 0
    %4337 = vmatprep.subr.bf16.mxu0 0
    %4338 = vmatpush1.bf16.msra.mxu0 0
    %4339 = vmatprep.subr.bf16.mxu0 0
    %4340 = vmatpush1.bf16.msra.mxu0 0
    %4341 = vmatprep.subr.bf16.mxu0 0
    %4342 = vmatpush1.bf16.msra.mxu0 0
    %4343 = vmatprep.mubr.bf16.mxu0 0
    %4344 = vmatmul.mubr.bf16.gmra.mrb[0].mxu0 %v4309
    %v4345 = vpop.f32.mrb[0].mxu0
    %v4346 = vadd.f32 0.0, %v4345
    %v4347 = vpop.f32.mrb[0].mxu0
    %v4348 = vpop.f32.mrb[0].mxu0
    %v4349 = vpop.f32.mrb[0].mxu0
    %4350 = vdwg.mxu0
    %v4355 = vunpack.c.l.b16 %v4286
    %v4356 = vunpack.c.l.b16 %v4287
    %v4357 = vunpack.c.l.b16 %v4288
    %v4358 = vunpack.c.l.b16 %v4289
    %v4359 = vpack.c.b16 %v4356, %v4355
    %v4360 = vpack.c.b16 %v4358, %v4357
    %v4364 = vsel %vm240, %v4284, 0
    %4366 = vmatprep.subr.bf16.mxu0 0
    %4367 = vmatpush1.bf16.msra.mxu0 %v4359
    %4368 = vmatprep.subr.bf16.mxu0 0
    %4369 = vmatpush1.bf16.msra.mxu0 %v4360
    %4370 = vmatprep.subr.bf16.mxu0 0
    %4371 = vmatpush1.bf16.msra.mxu0 0
    %4372 = vmatprep.subr.bf16.mxu0 0
    %4373 = vmatpush1.bf16.msra.mxu0 0
    %4374 = vmatprep.subr.bf16.mxu0 0
    %4375 = vmatpush1.bf16.msra.mxu0 0
    %4376 = vmatprep.subr.bf16.mxu0 0
    %4377 = vmatpush1.bf16.msra.mxu0 0
    %4378 = vmatprep.subr.bf16.mxu0 0
    %4379 = vmatpush1.bf16.msra.mxu0 0
    %4380 = vmatprep.subr.bf16.mxu0 0
    %4381 = vmatpush1.bf16.msra.mxu0 0
    %4382 = vmatprep.subr.bf16.mxu0 0
    %4383 = vmatpush1.bf16.msra.mxu0 0
    %4384 = vmatprep.subr.bf16.mxu0 0
    %4385 = vmatpush1.bf16.msra.mxu0 0
    %4386 = vmatprep.subr.bf16.mxu0 0
    %4387 = vmatpush1.bf16.msra.mxu0 0
    %4388 = vmatprep.subr.bf16.mxu0 0
    %4389 = vmatpush1.bf16.msra.mxu0 0
    %4390 = vmatprep.subr.bf16.mxu0 0
    %4391 = vmatpush1.bf16.msra.mxu0 0
    %4392 = vmatprep.subr.bf16.mxu0 0
    %4393 = vmatpush1.bf16.msra.mxu0 0
    %4394 = vmatprep.subr.bf16.mxu0 0
    %4395 = vmatpush1.bf16.msra.mxu0 0
    %4396 = vmatprep.subr.bf16.mxu0 0
    %4397 = vmatpush1.bf16.msra.mxu0 0
    %4398 = vmatprep.mubr.bf16.mxu0 0
    %4399 = vmatmul.mubr.bf16.gmra.mrb[0].mxu0 %v4364
    %v4400 = vpop.f32.mrb[0].mxu0
    %v4401 = vadd.f32 %v4346, %v4400
    %v4402 = vpop.f32.mrb[0].mxu0
    %v4403 = vpop.f32.mrb[0].mxu0
    %v4404 = vpop.f32.mrb[0].mxu0
    %4405 = vdwg.mxu0
    %v4407 = vsel %vm580, %v4401, 0
    %4409 = vmatprep.subr.mxu0 0.0
    %4410 = vmatpush1.msra.mxu0 %v4407
    %4411 = vmatprep.subr.mxu0 0.0
    %4412 = vmatpush1.msra.mxu0 0.0
    %4413 = vmatprep.subr.mxu0 0.0
    %4414 = vmatpush1.msra.mxu0 0.0
    %4415 = vmatprep.subr.mxu0 0.0
    %4416 = vmatpush1.msra.mxu0 0.0
    %4417 = vmatprep.subr.mxu0 0.0
    %4418 = vmatpush1.msra.mxu0 0.0
    %4419 = vmatprep.subr.mxu0 0.0
    %4420 = vmatpush1.msra.mxu0 0.0
    %4421 = vmatprep.subr.mxu0 0.0
    %4422 = vmatpush1.msra.mxu0 0.0
    %4423 = vmatprep.subr.mxu0 0.0
    %4424 = vmatpush1.msra.mxu0 0.0
    %4425 = vmatprep.subr.mxu0 0.0
    %4426 = vmatpush1.msra.mxu0 0.0
    %4427 = vmatprep.subr.mxu0 0.0
    %4428 = vmatpush1.msra.mxu0 0.0
    %4429 = vmatprep.subr.mxu0 0.0
    %4430 = vmatpush1.msra.mxu0 0.0
    %4431 = vmatprep.subr.mxu0 0.0
    %4432 = vmatpush1.msra.mxu0 0.0
    %4433 = vmatprep.subr.mxu0 0.0
    %4434 = vmatpush1.msra.mxu0 0.0
    %4435 = vmatprep.subr.mxu0 0.0
    %4436 = vmatpush1.msra.mxu0 0.0
    %4437 = vmatprep.subr.mxu0 0.0
    %4438 = vmatpush1.msra.mxu0 0.0
    %4439 = vmatprep.subr.mxu0 0.0
    %4440 = vmatpush1.msra.mxu0 0.0
    %4441 = vmatprep.subr.mxu0 0.0
    %4442 = vmatpush1.msra.mxu0 0.0
    %4443 = vmatprep.subr.mxu0 0.0
    %4444 = vmatpush1.msra.mxu0 0.0
    %4445 = vmatprep.subr.mxu0 0.0
    %4446 = vmatpush1.msra.mxu0 0.0
    %4447 = vmatprep.subr.mxu0 0.0
    %4448 = vmatpush1.msra.mxu0 0.0
    %4449 = vmatprep.subr.mxu0 0.0
    %4450 = vmatpush1.msra.mxu0 0.0
    %4451 = vmatprep.subr.mxu0 0.0
    %4452 = vmatpush1.msra.mxu0 0.0
    %4453 = vmatprep.subr.mxu0 0.0
    %4454 = vmatpush1.msra.mxu0 0.0
    %4455 = vmatprep.subr.mxu0 0.0
    %4456 = vmatpush1.msra.mxu0 0.0
    %4457 = vmatprep.subr.mxu0 0.0
    %4458 = vmatpush1.msra.mxu0 0.0
    %4459 = vmatprep.subr.mxu0 0.0
    %4460 = vmatpush1.msra.mxu0 0.0
    %4461 = vmatprep.subr.mxu0 0.0
    %4462 = vmatpush1.msra.mxu0 0.0
    %4463 = vmatprep.subr.mxu0 0.0
    %4464 = vmatpush1.msra.mxu0 0.0
    %4465 = vmatprep.subr.mxu0 0.0
    %4466 = vmatpush1.msra.mxu0 0.0
    %4467 = vmatprep.subr.mxu0 0.0
    %4468 = vmatpush1.msra.mxu0 0.0
    %4469 = vmatprep.subr.mxu0 0.0
    %4470 = vmatpush1.msra.mxu0 0.0
    %4471 = vmatprep.subr.mxu0 0.0
    %4472 = vmatpush1.msra.mxu0 0.0
    %4473 = vmatprep.mubr.f32.mxu0 0.0
    %4474 = vmatmul.mubr.f32.gmra.mrb[0].mxu0 %v1332
    %v4475 = vpop.f32.mrb[0].mxu0
    %v4476 = vadd.f32 0.0, %v4475
    %v4477 = vpop.f32.mrb[0].mxu0
    %4478 = vmatprep.mubr.f32.mxu0 0.0
    %4479 = vmatmul.mubr.f32.gmra.mrb[0].mxu0 %v1335
    %v4480 = vpop.f32.mrb[0].mxu0
    %v4481 = vadd.f32 0.0, %v4480
    %v4482 = vpop.f32.mrb[0].mxu0
    %4483 = vmatprep.mubr.f32.mxu0 0.0
    %4484 = vmatmul.mubr.f32.gmra.mrb[0].mxu0 %v1338
    %v4485 = vpop.f32.mrb[0].mxu0
    %v4486 = vadd.f32 0.0, %v4485
    %v4487 = vpop.f32.mrb[0].mxu0
    %4488 = vmatprep.mubr.f32.mxu0 0.0
    %4489 = vmatmul.mubr.f32.gmra.mrb[0].mxu0 %v1341
    %v4490 = vpop.f32.mrb[0].mxu0
    %v4491 = vadd.f32 0.0, %v4490
    %v4492 = vpop.f32.mrb[0].mxu0
    %4493 = vdwg.mxu0
    %v4494 = vadd.f32 %v4140, %v4476
    %v4495 = vadd.f32 %v4141, %v4481
    %v4496 = vadd.f32 %v4142, %v4486
    %v4497 = vadd.f32 %v4143, %v4491
    %4498 = vmatprep.subr.mxu0 0.0
    %4499 = vmatpush1.msra.mxu0 %v3350
    %4500 = vmatprep.subr.mxu0 0.0
    %4501 = vmatpush1.msra.mxu0 %v3351
    %4502 = vmatprep.subr.mxu0 0.0
    %4503 = vmatpush1.msra.mxu0 %v3352
    %4504 = vmatprep.subr.mxu0 0.0
    %4505 = vmatpush1.msra.mxu0 %v3353
    %4506 = vmatprep.subr.mxu0 0.0
    %4507 = vmatpush1.msra.mxu0 0.0
    %4508 = vmatprep.subr.mxu0 0.0
    %4509 = vmatpush1.msra.mxu0 0.0
    %4510 = vmatprep.subr.mxu0 0.0
    %4511 = vmatpush1.msra.mxu0 0.0
    %4512 = vmatprep.subr.mxu0 0.0
    %4513 = vmatpush1.msra.mxu0 0.0
    %4514 = vmatprep.subr.mxu0 0.0
    %4515 = vmatpush1.msra.mxu0 0.0
    %4516 = vmatprep.subr.mxu0 0.0
    %4517 = vmatpush1.msra.mxu0 0.0
    %4518 = vmatprep.subr.mxu0 0.0
    %4519 = vmatpush1.msra.mxu0 0.0
    %4520 = vmatprep.subr.mxu0 0.0
    %4521 = vmatpush1.msra.mxu0 0.0
    %4522 = vmatprep.subr.mxu0 0.0
    %4523 = vmatpush1.msra.mxu0 0.0
    %4524 = vmatprep.subr.mxu0 0.0
    %4525 = vmatpush1.msra.mxu0 0.0
    %4526 = vmatprep.subr.mxu0 0.0
    %4527 = vmatpush1.msra.mxu0 0.0
    %4528 = vmatprep.subr.mxu0 0.0
    %4529 = vmatpush1.msra.mxu0 0.0
    %4530 = vmatprep.subr.mxu0 0.0
    %4531 = vmatpush1.msra.mxu0 0.0
    %4532 = vmatprep.subr.mxu0 0.0
    %4533 = vmatpush1.msra.mxu0 0.0
    %4534 = vmatprep.subr.mxu0 0.0
    %4535 = vmatpush1.msra.mxu0 0.0
    %4536 = vmatprep.subr.mxu0 0.0
    %4537 = vmatpush1.msra.mxu0 0.0
    %4538 = vmatprep.subr.mxu0 0.0
    %4539 = vmatpush1.msra.mxu0 0.0
    %4540 = vmatprep.subr.mxu0 0.0
    %4541 = vmatpush1.msra.mxu0 0.0
    %4542 = vmatprep.subr.mxu0 0.0
    %4543 = vmatpush1.msra.mxu0 0.0
    %4544 = vmatprep.subr.mxu0 0.0
    %4545 = vmatpush1.msra.mxu0 0.0
    %4546 = vmatprep.subr.mxu0 0.0
    %4547 = vmatpush1.msra.mxu0 0.0
    %4548 = vmatprep.subr.mxu0 0.0
    %4549 = vmatpush1.msra.mxu0 0.0
    %4550 = vmatprep.subr.mxu0 0.0
    %4551 = vmatpush1.msra.mxu0 0.0
    %4552 = vmatprep.subr.mxu0 0.0
    %4553 = vmatpush1.msra.mxu0 0.0
    %4554 = vmatprep.subr.mxu0 0.0
    %4555 = vmatpush1.msra.mxu0 0.0
    %4556 = vmatprep.subr.mxu0 0.0
    %4557 = vmatpush1.msra.mxu0 0.0
    %4558 = vmatprep.subr.mxu0 0.0
    %4559 = vmatpush1.msra.mxu0 0.0
    %4560 = vmatprep.subr.mxu0 0.0
    %4561 = vmatpush1.msra.mxu0 0.0
    %4562 = vmatprep.mubr.f32.mxu0 0.0
    %4563 = vmatmul.mubr.f32.gmra.mrb[0].mxu0 %v1438
    %v4564 = vpop.f32.mrb[0].mxu0
    %v4565 = vadd.f32 0.0, %v4564
    %v4566 = vpop.f32.mrb[0].mxu0
    %4567 = vdwg.mxu0
    %4568 = vmatprep.subr.mxu0 0.0
    %4569 = vmatpush1.msra.mxu0 %v3350
    %4570 = vmatprep.subr.mxu0 0.0
    %4571 = vmatpush1.msra.mxu0 %v3351
    %4572 = vmatprep.subr.mxu0 0.0
    %4573 = vmatpush1.msra.mxu0 %v3352
    %4574 = vmatprep.subr.mxu0 0.0
    %4575 = vmatpush1.msra.mxu0 %v3353
    %4576 = vmatprep.subr.mxu0 0.0
    %4577 = vmatpush1.msra.mxu0 0.0
    %4578 = vmatprep.subr.mxu0 0.0
    %4579 = vmatpush1.msra.mxu0 0.0
    %4580 = vmatprep.subr.mxu0 0.0
    %4581 = vmatpush1.msra.mxu0 0.0
    %4582 = vmatprep.subr.mxu0 0.0
    %4583 = vmatpush1.msra.mxu0 0.0
    %4584 = vmatprep.subr.mxu0 0.0
    %4585 = vmatpush1.msra.mxu0 0.0
    %4586 = vmatprep.subr.mxu0 0.0
    %4587 = vmatpush1.msra.mxu0 0.0
    %4588 = vmatprep.subr.mxu0 0.0
    %4589 = vmatpush1.msra.mxu0 0.0
    %4590 = vmatprep.subr.mxu0 0.0
    %4591 = vmatpush1.msra.mxu0 0.0
    %4592 = vmatprep.subr.mxu0 0.0
    %4593 = vmatpush1.msra.mxu0 0.0
    %4594 = vmatprep.subr.mxu0 0.0
    %4595 = vmatpush1.msra.mxu0 0.0
    %4596 = vmatprep.subr.mxu0 0.0
    %4597 = vmatpush1.msra.mxu0 0.0
    %4598 = vmatprep.subr.mxu0 0.0
    %4599 = vmatpush1.msra.mxu0 0.0
    %4600 = vmatprep.subr.mxu0 0.0
    %4601 = vmatpush1.msra.mxu0 0.0
    %4602 = vmatprep.subr.mxu0 0.0
    %4603 = vmatpush1.msra.mxu0 0.0
    %4604 = vmatprep.subr.mxu0 0.0
    %4605 = vmatpush1.msra.mxu0 0.0
    %4606 = vmatprep.subr.mxu0 0.0
    %4607 = vmatpush1.msra.mxu0 0.0
    %4608 = vmatprep.subr.mxu0 0.0
    %4609 = vmatpush1.msra.mxu0 0.0
    %4610 = vmatprep.subr.mxu0 0.0
    %4611 = vmatpush1.msra.mxu0 0.0
    %4612 = vmatprep.subr.mxu0 0.0
    %4613 = vmatpush1.msra.mxu0 0.0
    %4614 = vmatprep.subr.mxu0 0.0
    %4615 = vmatpush1.msra.mxu0 0.0
    %4616 = vmatprep.subr.mxu0 0.0
    %4617 = vmatpush1.msra.mxu0 0.0
    %4618 = vmatprep.subr.mxu0 0.0
    %4619 = vmatpush1.msra.mxu0 0.0
    %4620 = vmatprep.subr.mxu0 0.0
    %4621 = vmatpush1.msra.mxu0 0.0
    %4622 = vmatprep.subr.mxu0 0.0
    %4623 = vmatpush1.msra.mxu0 0.0
    %4624 = vmatprep.subr.mxu0 0.0
    %4625 = vmatpush1.msra.mxu0 0.0
    %4626 = vmatprep.subr.mxu0 0.0
    %4627 = vmatpush1.msra.mxu0 0.0
    %4628 = vmatprep.subr.mxu0 0.0
    %4629 = vmatpush1.msra.mxu0 0.0
    %4630 = vmatprep.subr.mxu0 0.0
    %4631 = vmatpush1.msra.mxu0 0.0
    %4632 = vmatprep.mubr.f32.mxu0 0.0
    %4633 = vmatmul.mubr.f32.gmra.mrb[0].mxu0 %v1513
    %v4634 = vpop.f32.mrb[0].mxu0
    %v4635 = vadd.f32 0.0, %v4634
    %v4636 = vpop.f32.mrb[0].mxu0
    %4637 = vdwg.mxu0
    %v4638 = vpack.c.bf16 %v4565, %v4565
    %s4639 = scalar_lea.vmem %s6, 176
    %v4640 = vld [vmem:[%s4639] sm:$0xf]
    %v4641 = vld [vmem:[%s4639 + $0x4] sm:$0xf]
    %v4642 = vld [vmem:[%s4639 + $0x8] sm:$0xf]
    %v4643 = vld [vmem:[%s4639 + $0xc] sm:$0xf]
    %v4644 = vpack.c.bf16 %v4635, %v4635
    %s4645 = scalar_lea.vmem [#allocation6], 176
    %v4646 = vld [vmem:[%s4645] sm:$0xf]
    %v4647 = vld [vmem:[%s4645 + $0x4] sm:$0xf]
    %v4648 = vld [vmem:[%s4645 + $0x8] sm:$0xf]
    %v4649 = vld [vmem:[%s4645 + $0xc] sm:$0xf]
    %v4654 = vunpack.c.l.b16 %v4646
    %v4655 = vunpack.c.l.b16 %v4647
    %v4656 = vunpack.c.l.b16 %v4648
    %v4657 = vunpack.c.l.b16 %v4649
    %v4658 = vpack.c.b16 %v4655, %v4654
    %v4659 = vpack.c.b16 %v4657, %v4656
    %v4663 = vsel %vm240, %v4644, 0
    %4665 = vmatprep.subr.bf16.mxu0 0
    %4666 = vmatpush1.bf16.msra.mxu0 %v4658
    %4667 = vmatprep.subr.bf16.mxu0 0
    %4668 = vmatpush1.bf16.msra.mxu0 %v4659
    %4669 = vmatprep.subr.bf16.mxu0 0
    %4670 = vmatpush1.bf16.msra.mxu0 0
    %4671 = vmatprep.subr.bf16.mxu0 0
    %4672 = vmatpush1.bf16.msra.mxu0 0
    %4673 = vmatprep.subr.bf16.mxu0 0
    %4674 = vmatpush1.bf16.msra.mxu0 0
    %4675 = vmatprep.subr.bf16.mxu0 0
    %4676 = vmatpush1.bf16.msra.mxu0 0
    %4677 = vmatprep.subr.bf16.mxu0 0
    %4678 = vmatpush1.bf16.msra.mxu0 0
    %4679 = vmatprep.subr.bf16.mxu0 0
    %4680 = vmatpush1.bf16.msra.mxu0 0
    %4681 = vmatprep.subr.bf16.mxu0 0
    %4682 = vmatpush1.bf16.msra.mxu0 0
    %4683 = vmatprep.subr.bf16.mxu0 0
    %4684 = vmatpush1.bf16.msra.mxu0 0
    %4685 = vmatprep.subr.bf16.mxu0 0
    %4686 = vmatpush1.bf16.msra.mxu0 0
    %4687 = vmatprep.subr.bf16.mxu0 0
    %4688 = vmatpush1.bf16.msra.mxu0 0
    %4689 = vmatprep.subr.bf16.mxu0 0
    %4690 = vmatpush1.bf16.msra.mxu0 0
    %4691 = vmatprep.subr.bf16.mxu0 0
    %4692 = vmatpush1.bf16.msra.mxu0 0
    %4693 = vmatprep.subr.bf16.mxu0 0
    %4694 = vmatpush1.bf16.msra.mxu0 0
    %4695 = vmatprep.subr.bf16.mxu0 0
    %4696 = vmatpush1.bf16.msra.mxu0 0
    %4697 = vmatprep.mubr.bf16.mxu0 0
    %4698 = vmatmul.mubr.bf16.gmra.mrb[0].mxu0 %v4663
    %v4699 = vpop.f32.mrb[0].mxu0
    %v4700 = vadd.f32 0.0, %v4699
    %v4701 = vpop.f32.mrb[0].mxu0
    %v4702 = vpop.f32.mrb[0].mxu0
    %v4703 = vpop.f32.mrb[0].mxu0
    %4704 = vdwg.mxu0
    %v4709 = vunpack.c.l.b16 %v4640
    %v4710 = vunpack.c.l.b16 %v4641
    %v4711 = vunpack.c.l.b16 %v4642
    %v4712 = vunpack.c.l.b16 %v4643
    %v4713 = vpack.c.b16 %v4710, %v4709
    %v4714 = vpack.c.b16 %v4712, %v4711
    %v4718 = vsel %vm240, %v4638, 0
    %4720 = vmatprep.subr.bf16.mxu0 0
    %4721 = vmatpush1.bf16.msra.mxu0 %v4713
    %4722 = vmatprep.subr.bf16.mxu0 0
    %4723 = vmatpush1.bf16.msra.mxu0 %v4714
    %4724 = vmatprep.subr.bf16.mxu0 0
    %4725 = vmatpush1.bf16.msra.mxu0 0
    %4726 = vmatprep.subr.bf16.mxu0 0
    %4727 = vmatpush1.bf16.msra.mxu0 0
    %4728 = vmatprep.subr.bf16.mxu0 0
    %4729 = vmatpush1.bf16.msra.mxu0 0
    %4730 = vmatprep.subr.bf16.mxu0 0
    %4731 = vmatpush1.bf16.msra.mxu0 0
    %4732 = vmatprep.subr.bf16.mxu0 0
    %4733 = vmatpush1.bf16.msra.mxu0 0
    %4734 = vmatprep.subr.bf16.mxu0 0
    %4735 = vmatpush1.bf16.msra.mxu0 0
    %4736 = vmatprep.subr.bf16.mxu0 0
    %4737 = vmatpush1.bf16.msra.mxu0 0
    %4738 = vmatprep.subr.bf16.mxu0 0
    %4739 = vmatpush1.bf16.msra.mxu0 0
    %4740 = vmatprep.subr.bf16.mxu0 0
    %4741 = vmatpush1.bf16.msra.mxu0 0
    %4742 = vmatprep.subr.bf16.mxu0 0
    %4743 = vmatpush1.bf16.msra.mxu0 0
    %4744 = vmatprep.subr.bf16.mxu0 0
    %4745 = vmatpush1.bf16.msra.mxu0 0
    %4746 = vmatprep.subr.bf16.mxu0 0
    %4747 = vmatpush1.bf16.msra.mxu0 0
    %4748 = vmatprep.subr.bf16.mxu0 0
    %4749 = vmatpush1.bf16.msra.mxu0 0
    %4750 = vmatprep.subr.bf16.mxu0 0
    %4751 = vmatpush1.bf16.msra.mxu0 0
    %4752 = vmatprep.mubr.bf16.mxu0 0
    %4753 = vmatmul.mubr.bf16.gmra.mrb[0].mxu0 %v4718
    %v4754 = vpop.f32.mrb[0].mxu0
    %v4755 = vadd.f32 %v4700, %v4754
    %v4756 = vpop.f32.mrb[0].mxu0
    %v4757 = vpop.f32.mrb[0].mxu0
    %v4758 = vpop.f32.mrb[0].mxu0
    %4759 = vdwg.mxu0
    %v4761 = vsel %vm580, %v4755, 0
    %4763 = vmatprep.subr.mxu0 0.0
    %4764 = vmatpush1.msra.mxu0 %v4761
    %4765 = vmatprep.subr.mxu0 0.0
    %4766 = vmatpush1.msra.mxu0 0.0
    %4767 = vmatprep.subr.mxu0 0.0
    %4768 = vmatpush1.msra.mxu0 0.0
    %4769 = vmatprep.subr.mxu0 0.0
    %4770 = vmatpush1.msra.mxu0 0.0
    %4771 = vmatprep.subr.mxu0 0.0
    %4772 = vmatpush1.msra.mxu0 0.0
    %4773 = vmatprep.subr.mxu0 0.0
    %4774 = vmatpush1.msra.mxu0 0.0
    %4775 = vmatprep.subr.mxu0 0.0
    %4776 = vmatpush1.msra.mxu0 0.0
    %4777 = vmatprep.subr.mxu0 0.0
    %4778 = vmatpush1.msra.mxu0 0.0
    %4779 = vmatprep.subr.mxu0 0.0
    %4780 = vmatpush1.msra.mxu0 0.0
    %4781 = vmatprep.subr.mxu0 0.0
    %4782 = vmatpush1.msra.mxu0 0.0
    %4783 = vmatprep.subr.mxu0 0.0
    %4784 = vmatpush1.msra.mxu0 0.0
    %4785 = vmatprep.subr.mxu0 0.0
    %4786 = vmatpush1.msra.mxu0 0.0
    %4787 = vmatprep.subr.mxu0 0.0
    %4788 = vmatpush1.msra.mxu0 0.0
    %4789 = vmatprep.subr.mxu0 0.0
    %4790 = vmatpush1.msra.mxu0 0.0
    %4791 = vmatprep.subr.mxu0 0.0
    %4792 = vmatpush1.msra.mxu0 0.0
    %4793 = vmatprep.subr.mxu0 0.0
    %4794 = vmatpush1.msra.mxu0 0.0
    %4795 = vmatprep.subr.mxu0 0.0
    %4796 = vmatpush1.msra.mxu0 0.0
    %4797 = vmatprep.subr.mxu0 0.0
    %4798 = vmatpush1.msra.mxu0 0.0
    %4799 = vmatprep.subr.mxu0 0.0
    %4800 = vmatpush1.msra.mxu0 0.0
    %4801 = vmatprep.subr.mxu0 0.0
    %4802 = vmatpush1.msra.mxu0 0.0
    %4803 = vmatprep.subr.mxu0 0.0
    %4804 = vmatpush1.msra.mxu0 0.0
    %4805 = vmatprep.subr.mxu0 0.0
    %4806 = vmatpush1.msra.mxu0 0.0
    %4807 = vmatprep.subr.mxu0 0.0
    %4808 = vmatpush1.msra.mxu0 0.0
    %4809 = vmatprep.subr.mxu0 0.0
    %4810 = vmatpush1.msra.mxu0 0.0
    %4811 = vmatprep.subr.mxu0 0.0
    %4812 = vmatpush1.msra.mxu0 0.0
    %4813 = vmatprep.subr.mxu0 0.0
    %4814 = vmatpush1.msra.mxu0 0.0
    %4815 = vmatprep.subr.mxu0 0.0
    %4816 = vmatpush1.msra.mxu0 0.0
    %4817 = vmatprep.subr.mxu0 0.0
    %4818 = vmatpush1.msra.mxu0 0.0
    %4819 = vmatprep.subr.mxu0 0.0
    %4820 = vmatpush1.msra.mxu0 0.0
    %4821 = vmatprep.subr.mxu0 0.0
    %4822 = vmatpush1.msra.mxu0 0.0
    %4823 = vmatprep.subr.mxu0 0.0
    %4824 = vmatpush1.msra.mxu0 0.0
    %4825 = vmatprep.subr.mxu0 0.0
    %4826 = vmatpush1.msra.mxu0 0.0
    %4827 = vmatprep.mubr.f32.mxu0 0.0
    %4828 = vmatmul.mubr.f32.gmra.mrb[0].mxu0 %v1713
    %v4829 = vpop.f32.mrb[0].mxu0
    %v4830 = vadd.f32 0.0, %v4829
    %v4831 = vpop.f32.mrb[0].mxu0
    %4832 = vmatprep.mubr.f32.mxu0 0.0
    %4833 = vmatmul.mubr.f32.gmra.mrb[0].mxu0 %v1716
    %v4834 = vpop.f32.mrb[0].mxu0
    %v4835 = vadd.f32 0.0, %v4834
    %v4836 = vpop.f32.mrb[0].mxu0
    %4837 = vmatprep.mubr.f32.mxu0 0.0
    %4838 = vmatmul.mubr.f32.gmra.mrb[0].mxu0 %v1719
    %v4839 = vpop.f32.mrb[0].mxu0
    %v4840 = vadd.f32 0.0, %v4839
    %v4841 = vpop.f32.mrb[0].mxu0
    %4842 = vmatprep.mubr.f32.mxu0 0.0
    %4843 = vmatmul.mubr.f32.gmra.mrb[0].mxu0 %v1722
    %v4844 = vpop.f32.mrb[0].mxu0
    %v4845 = vadd.f32 0.0, %v4844
    %v4846 = vpop.f32.mrb[0].mxu0
    %4847 = vdwg.mxu0
    %v4848 = vadd.f32 %v4494, %v4830
    %v4849 = vadd.f32 %v4495, %v4835
    %v4850 = vadd.f32 %v4496, %v4840
    %v4851 = vadd.f32 %v4497, %v4845
    %v4852 = vmul.f32 %v4848, 0.5
    %v4853 = vmul.f32 %v4849, 0.5
    %v4854 = vmul.f32 %v4850, 0.5
    %v4855 = vmul.f32 %v4851, 0.5
    %v4856 = vmul.f32 %v4848, 0.70710677
    %v4857 = vmul.f32 %v4849, 0.70710677
    %v4858 = vmul.f32 %v4850, 0.70710677
    %v4859 = vmul.f32 %v4851, 0.70710677
    %v4860 = verf.f32.pop %v4856
    %v4861 = verf.f32.pop %v4857
    %v4862 = verf.f32.pop %v4858
    %v4863 = verf.f32.pop %v4859
    %v4864 = vadd.f32 %v4860, 1.0
    %v4865 = vadd.f32 %v4861, 1.0
    %v4866 = vadd.f32 %v4862, 1.0
    %v4867 = vadd.f32 %v4863, 1.0
    %v4868 = vmul.f32 %v4852, %v4864
    %v4869 = vmul.f32 %v4853, %v4865
    %v4870 = vmul.f32 %v4854, %v4866
    %v4871 = vmul.f32 %v4855, %v4867
    %v4872 = vpack.c.bf16 %v4869, %v4868
    %v4873 = vpack.c.bf16 %v4871, %v4870
    %s4874 = scalar_lea.vmem [#allocation7], 48
    %v4875 = vld [vmem:[%s4874] sm:$0xf]
    %v4876 = vld [vmem:[%s4874 + $0x4] sm:$0xf]
    %v4877 = vld [vmem:[%s4874 + $0x8] sm:$0xf]
    %v4878 = vld [vmem:[%s4874 + $0xc] sm:$0xf]
    %s4879 = scalar_lea.vmem %s9, 3
    %v4880 = vld [vmem:[%s4879] sm:$0x1]
    %v4882 = vlaneseq
    %v4883 = vshrl.u32 %v4882, 7
    %v4884 = vsub.s32 0, %v4883
    %v4885 = vrot.slane %v4880, %v4884
    %v4891 = vunpack.c.l.b16 %v4875
    %v4892 = vunpack.c.l.b16 %v4876
    %v4893 = vunpack.c.l.b16 %v4877
    %v4894 = vunpack.c.l.b16 %v4878
    %v4895 = vpack.c.b16 %v4892, %v4891
    %v4896 = vpack.c.b16 %v4894, %v4893
    %v4900 = vsel %vm240, %v4872, 0
    %v4903 = vsel %vm240, %v4873, 0
    %4905 = vmatprep.subr.bf16.mxu0 0
    %4906 = vmatpush1.bf16.msra.mxu0 %v4895
    %4907 = vmatprep.subr.bf16.mxu0 0
    %4908 = vmatpush1.bf16.msra.mxu0 %v4896
    %4909 = vmatprep.subr.bf16.mxu0 0
    %4910 = vmatpush1.bf16.msra.mxu0 0
    %4911 = vmatprep.subr.bf16.mxu0 0
    %4912 = vmatpush1.bf16.msra.mxu0 0
    %4913 = vmatprep.subr.bf16.mxu0 0
    %4914 = vmatpush1.bf16.msra.mxu0 0
    %4915 = vmatprep.subr.bf16.mxu0 0
    %4916 = vmatpush1.bf16.msra.mxu0 0
    %4917 = vmatprep.subr.bf16.mxu0 0
    %4918 = vmatpush1.bf16.msra.mxu0 0
    %4919 = vmatprep.subr.bf16.mxu0 0
    %4920 = vmatpush1.bf16.msra.mxu0 0
    %4921 = vmatprep.subr.bf16.mxu0 0
    %4922 = vmatpush1.bf16.msra.mxu0 0
    %4923 = vmatprep.subr.bf16.mxu0 0
    %4924 = vmatpush1.bf16.msra.mxu0 0
    %4925 = vmatprep.subr.bf16.mxu0 0
    %4926 = vmatpush1.bf16.msra.mxu0 0
    %4927 = vmatprep.subr.bf16.mxu0 0
    %4928 = vmatpush1.bf16.msra.mxu0 0
    %4929 = vmatprep.subr.bf16.mxu0 0
    %4930 = vmatpush1.bf16.msra.mxu0 0
    %4931 = vmatprep.subr.bf16.mxu0 0
    %4932 = vmatpush1.bf16.msra.mxu0 0
    %4933 = vmatprep.subr.bf16.mxu0 0
    %4934 = vmatpush1.bf16.msra.mxu0 0
    %4935 = vmatprep.subr.bf16.mxu0 0
    %4936 = vmatpush1.bf16.msra.mxu0 0
    %4937 = vmatprep.mubr.bf16.mxu0 0
    %4938 = vmatmul.mubr.bf16.gmra.mrb[0].mxu0 %v4900
    %v4939 = vpop.f32.mrb[0].mxu0
    %v4940 = vadd.f32 %v4885, %v4939
    %v4941 = vpop.f32.mrb[0].mxu0
    %v4942 = vpop.f32.mrb[0].mxu0
    %v4943 = vadd.f32 %v4885, %v4942
    %v4944 = vpop.f32.mrb[0].mxu0
    %4945 = vmatprep.mubr.bf16.mxu0 0
    %4946 = vmatmul.mubr.bf16.gmra.mrb[0].mxu0 %v4903
    %v4947 = vpop.f32.mrb[0].mxu0
    %v4948 = vadd.f32 %v4885, %v4947
    %v4949 = vpop.f32.mrb[0].mxu0
    %v4950 = vpop.f32.mrb[0].mxu0
    %v4951 = vadd.f32 %v4885, %v4950
    %v4952 = vpop.f32.mrb[0].mxu0
    %4953 = vdwg.mxu0
    %4954 = vmatprep.subr.mxu0 0.0
    %4955 = vmatpush1.msra.mxu0 %v4868
    %4956 = vmatprep.subr.mxu0 0.0
    %4957 = vmatpush1.msra.mxu0 %v4869
    %4958 = vmatprep.subr.mxu0 0.0
    %4959 = vmatpush1.msra.mxu0 %v4870
    %4960 = vmatprep.subr.mxu0 0.0
    %4961 = vmatpush1.msra.mxu0 %v4871
    %4962 = vmatprep.subr.mxu0 0.0
    %4963 = vmatpush1.msra.mxu0 0.0
    %4964 = vmatprep.subr.mxu0 0.0
    %4965 = vmatpush1.msra.mxu0 0.0
    %4966 = vmatprep.subr.mxu0 0.0
    %4967 = vmatpush1.msra.mxu0 0.0
    %4968 = vmatprep.subr.mxu0 0.0
    %4969 = vmatpush1.msra.mxu0 0.0
    %4970 = vmatprep.subr.mxu0 0.0
    %4971 = vmatpush1.msra.mxu0 0.0
    %4972 = vmatprep.subr.mxu0 0.0
    %4973 = vmatpush1.msra.mxu0 0.0
    %4974 = vmatprep.subr.mxu0 0.0
    %4975 = vmatpush1.msra.mxu0 0.0
    %4976 = vmatprep.subr.mxu0 0.0
    %4977 = vmatpush1.msra.mxu0 0.0
    %4978 = vmatprep.subr.mxu0 0.0
    %4979 = vmatpush1.msra.mxu0 0.0
    %4980 = vmatprep.subr.mxu0 0.0
    %4981 = vmatpush1.msra.mxu0 0.0
    %4982 = vmatprep.subr.mxu0 0.0
    %4983 = vmatpush1.msra.mxu0 0.0
    %4984 = vmatprep.subr.mxu0 0.0
    %4985 = vmatpush1.msra.mxu0 0.0
    %4986 = vmatprep.subr.mxu0 0.0
    %4987 = vmatpush1.msra.mxu0 0.0
    %4988 = vmatprep.subr.mxu0 0.0
    %4989 = vmatpush1.msra.mxu0 0.0
    %4990 = vmatprep.subr.mxu0 0.0
    %4991 = vmatpush1.msra.mxu0 0.0
    %4992 = vmatprep.subr.mxu0 0.0
    %4993 = vmatpush1.msra.mxu0 0.0
    %4994 = vmatprep.subr.mxu0 0.0
    %4995 = vmatpush1.msra.mxu0 0.0
    %4996 = vmatprep.subr.mxu0 0.0
    %4997 = vmatpush1.msra.mxu0 0.0
    %4998 = vmatprep.subr.mxu0 0.0
    %4999 = vmatpush1.msra.mxu0 0.0
    %5000 = vmatprep.subr.mxu0 0.0
    %5001 = vmatpush1.msra.mxu0 0.0
    %5002 = vmatprep.subr.mxu0 0.0
    %5003 = vmatpush1.msra.mxu0 0.0
    %5004 = vmatprep.subr.mxu0 0.0
    %5005 = vmatpush1.msra.mxu0 0.0
    %5006 = vmatprep.subr.mxu0 0.0
    %5007 = vmatpush1.msra.mxu0 0.0
    %5008 = vmatprep.subr.mxu0 0.0
    %5009 = vmatpush1.msra.mxu0 0.0
    %5010 = vmatprep.subr.mxu0 0.0
    %5011 = vmatpush1.msra.mxu0 0.0
    %5012 = vmatprep.subr.mxu0 0.0
    %5013 = vmatpush1.msra.mxu0 0.0
    %5014 = vmatprep.subr.mxu0 0.0
    %5015 = vmatpush1.msra.mxu0 0.0
    %5016 = vmatprep.subr.mxu0 0.0
    %5017 = vmatpush1.msra.mxu0 0.0
    %5018 = vmatprep.mubr.f32.mxu0 0.0
    %5019 = vmatmul.mubr.f32.gmra.mrb[0].mxu0 %v298
    %v5020 = vpop.f32.mrb[0].mxu0
    %v5021 = vadd.f32 0.0, %v5020
    %v5022 = vpop.f32.mrb[0].mxu0
    %5023 = vdwg.mxu0
    %5024 = vmatprep.subr.mxu0 0.0
    %5025 = vmatpush1.msra.mxu0 %v4868
    %5026 = vmatprep.subr.mxu0 0.0
    %5027 = vmatpush1.msra.mxu0 %v4869
    %5028 = vmatprep.subr.mxu0 0.0
    %5029 = vmatpush1.msra.mxu0 %v4870
    %5030 = vmatprep.subr.mxu0 0.0
    %5031 = vmatpush1.msra.mxu0 %v4871
    %5032 = vmatprep.subr.mxu0 0.0
    %5033 = vmatpush1.msra.mxu0 0.0
    %5034 = vmatprep.subr.mxu0 0.0
    %5035 = vmatpush1.msra.mxu0 0.0
    %5036 = vmatprep.subr.mxu0 0.0
    %5037 = vmatpush1.msra.mxu0 0.0
    %5038 = vmatprep.subr.mxu0 0.0
    %5039 = vmatpush1.msra.mxu0 0.0
    %5040 = vmatprep.subr.mxu0 0.0
    %5041 = vmatpush1.msra.mxu0 0.0
    %5042 = vmatprep.subr.mxu0 0.0
    %5043 = vmatpush1.msra.mxu0 0.0
    %5044 = vmatprep.subr.mxu0 0.0
    %5045 = vmatpush1.msra.mxu0 0.0
    %5046 = vmatprep.subr.mxu0 0.0
    %5047 = vmatpush1.msra.mxu0 0.0
    %5048 = vmatprep.subr.mxu0 0.0
    %5049 = vmatpush1.msra.mxu0 0.0
    %5050 = vmatprep.subr.mxu0 0.0
    %5051 = vmatpush1.msra.mxu0 0.0
    %5052 = vmatprep.subr.mxu0 0.0
    %5053 = vmatpush1.msra.mxu0 0.0
    %5054 = vmatprep.subr.mxu0 0.0
    %5055 = vmatpush1.msra.mxu0 0.0
    %5056 = vmatprep.subr.mxu0 0.0
    %5057 = vmatpush1.msra.mxu0 0.0
    %5058 = vmatprep.subr.mxu0 0.0
    %5059 = vmatpush1.msra.mxu0 0.0
    %5060 = vmatprep.subr.mxu0 0.0
    %5061 = vmatpush1.msra.mxu0 0.0
    %5062 = vmatprep.subr.mxu0 0.0
    %5063 = vmatpush1.msra.mxu0 0.0
    %5064 = vmatprep.subr.mxu0 0.0
    %5065 = vmatpush1.msra.mxu0 0.0
    %5066 = vmatprep.subr.mxu0 0.0
    %5067 = vmatpush1.msra.mxu0 0.0
    %5068 = vmatprep.subr.mxu0 0.0
    %5069 = vmatpush1.msra.mxu0 0.0
    %5070 = vmatprep.subr.mxu0 0.0
    %5071 = vmatpush1.msra.mxu0 0.0
    %5072 = vmatprep.subr.mxu0 0.0
    %5073 = vmatpush1.msra.mxu0 0.0
    %5074 = vmatprep.subr.mxu0 0.0
    %5075 = vmatpush1.msra.mxu0 0.0
    %5076 = vmatprep.subr.mxu0 0.0
    %5077 = vmatpush1.msra.mxu0 0.0
    %5078 = vmatprep.subr.mxu0 0.0
    %5079 = vmatpush1.msra.mxu0 0.0
    %5080 = vmatprep.subr.mxu0 0.0
    %5081 = vmatpush1.msra.mxu0 0.0
    %5082 = vmatprep.subr.mxu0 0.0
    %5083 = vmatpush1.msra.mxu0 0.0
    %5084 = vmatprep.subr.mxu0 0.0
    %5085 = vmatpush1.msra.mxu0 0.0
    %5086 = vmatprep.subr.mxu0 0.0
    %5087 = vmatpush1.msra.mxu0 0.0
    %5088 = vmatprep.mubr.f32.mxu0 0.0
    %5089 = vmatmul.mubr.f32.gmra.mrb[0].mxu0 %v372
    %v5090 = vpop.f32.mrb[0].mxu0
    %v5091 = vadd.f32 0.0, %v5090
    %v5092 = vpop.f32.mrb[0].mxu0
    %5093 = vdwg.mxu0
    %v5094 = vpack.c.bf16 %v5021, %v5021
    %s5095 = scalar_lea.vmem %s6, 192
    %v5096 = vld [vmem:[%s5095] sm:$0xf]
    %v5097 = vld [vmem:[%s5095 + $0x4] sm:$0xf]
    %v5098 = vld [vmem:[%s5095 + $0x8] sm:$0xf]
    %v5099 = vld [vmem:[%s5095 + $0xc] sm:$0xf]
    %v5100 = vpack.c.bf16 %v5091, %v5091
    %s5101 = scalar_lea.vmem [#allocation6], 192
    %v5102 = vld [vmem:[%s5101] sm:$0xf]
    %v5103 = vld [vmem:[%s5101 + $0x4] sm:$0xf]
    %v5104 = vld [vmem:[%s5101 + $0x8] sm:$0xf]
    %v5105 = vld [vmem:[%s5101 + $0xc] sm:$0xf]
    %v5110 = vunpack.c.l.b16 %v5102
    %v5111 = vunpack.c.l.b16 %v5103
    %v5112 = vunpack.c.l.b16 %v5104
    %v5113 = vunpack.c.l.b16 %v5105
    %v5114 = vpack.c.b16 %v5111, %v5110
    %v5115 = vpack.c.b16 %v5113, %v5112
    %v5119 = vsel %vm240, %v5100, 0
    %5121 = vmatprep.subr.bf16.mxu0 0
    %5122 = vmatpush1.bf16.msra.mxu0 %v5114
    %5123 = vmatprep.subr.bf16.mxu0 0
    %5124 = vmatpush1.bf16.msra.mxu0 %v5115
    %5125 = vmatprep.subr.bf16.mxu0 0
    %5126 = vmatpush1.bf16.msra.mxu0 0
    %5127 = vmatprep.subr.bf16.mxu0 0
    %5128 = vmatpush1.bf16.msra.mxu0 0
    %5129 = vmatprep.subr.bf16.mxu0 0
    %5130 = vmatpush1.bf16.msra.mxu0 0
    %5131 = vmatprep.subr.bf16.mxu0 0
    %5132 = vmatpush1.bf16.msra.mxu0 0
    %5133 = vmatprep.subr.bf16.mxu0 0
    %5134 = vmatpush1.bf16.msra.mxu0 0
    %5135 = vmatprep.subr.bf16.mxu0 0
    %5136 = vmatpush1.bf16.msra.mxu0 0
    %5137 = vmatprep.subr.bf16.mxu0 0
    %5138 = vmatpush1.bf16.msra.mxu0 0
    %5139 = vmatprep.subr.bf16.mxu0 0
    %5140 = vmatpush1.bf16.msra.mxu0 0
    %5141 = vmatprep.subr.bf16.mxu0 0
    %5142 = vmatpush1.bf16.msra.mxu0 0
    %5143 = vmatprep.subr.bf16.mxu0 0
    %5144 = vmatpush1.bf16.msra.mxu0 0
    %5145 = vmatprep.subr.bf16.mxu0 0
    %5146 = vmatpush1.bf16.msra.mxu0 0
    %5147 = vmatprep.subr.bf16.mxu0 0
    %5148 = vmatpush1.bf16.msra.mxu0 0
    %5149 = vmatprep.subr.bf16.mxu0 0
    %5150 = vmatpush1.bf16.msra.mxu0 0
    %5151 = vmatprep.subr.bf16.mxu0 0
    %5152 = vmatpush1.bf16.msra.mxu0 0
    %5153 = vmatprep.mubr.bf16.mxu0 0
    %5154 = vmatmul.mubr.bf16.gmra.mrb[0].mxu0 %v5119
    %v5155 = vpop.f32.mrb[0].mxu0
    %v5156 = vadd.f32 0.0, %v5155
    %v5157 = vpop.f32.mrb[0].mxu0
    %v5158 = vpop.f32.mrb[0].mxu0
    %v5159 = vpop.f32.mrb[0].mxu0
    %5160 = vdwg.mxu0
    %v5165 = vunpack.c.l.b16 %v5096
    %v5166 = vunpack.c.l.b16 %v5097
    %v5167 = vunpack.c.l.b16 %v5098
    %v5168 = vunpack.c.l.b16 %v5099
    %v5169 = vpack.c.b16 %v5166, %v5165
    %v5170 = vpack.c.b16 %v5168, %v5167
    %v5174 = vsel %vm240, %v5094, 0
    %5176 = vmatprep.subr.bf16.mxu0 0
    %5177 = vmatpush1.bf16.msra.mxu0 %v5169
    %5178 = vmatprep.subr.bf16.mxu0 0
    %5179 = vmatpush1.bf16.msra.mxu0 %v5170
    %5180 = vmatprep.subr.bf16.mxu0 0
    %5181 = vmatpush1.bf16.msra.mxu0 0
    %5182 = vmatprep.subr.bf16.mxu0 0
    %5183 = vmatpush1.bf16.msra.mxu0 0
    %5184 = vmatprep.subr.bf16.mxu0 0
    %5185 = vmatpush1.bf16.msra.mxu0 0
    %5186 = vmatprep.subr.bf16.mxu0 0
    %5187 = vmatpush1.bf16.msra.mxu0 0
    %5188 = vmatprep.subr.bf16.mxu0 0
    %5189 = vmatpush1.bf16.msra.mxu0 0
    %5190 = vmatprep.subr.bf16.mxu0 0
    %5191 = vmatpush1.bf16.msra.mxu0 0
    %5192 = vmatprep.subr.bf16.mxu0 0
    %5193 = vmatpush1.bf16.msra.mxu0 0
    %5194 = vmatprep.subr.bf16.mxu0 0
    %5195 = vmatpush1.bf16.msra.mxu0 0
    %5196 = vmatprep.subr.bf16.mxu0 0
    %5197 = vmatpush1.bf16.msra.mxu0 0
    %5198 = vmatprep.subr.bf16.mxu0 0
    %5199 = vmatpush1.bf16.msra.mxu0 0
    %5200 = vmatprep.subr.bf16.mxu0 0
    %5201 = vmatpush1.bf16.msra.mxu0 0
    %5202 = vmatprep.subr.bf16.mxu0 0
    %5203 = vmatpush1.bf16.msra.mxu0 0
    %5204 = vmatprep.subr.bf16.mxu0 0
    %5205 = vmatpush1.bf16.msra.mxu0 0
    %5206 = vmatprep.subr.bf16.mxu0 0
    %5207 = vmatpush1.bf16.msra.mxu0 0
    %5208 = vmatprep.mubr.bf16.mxu0 0
    %5209 = vmatmul.mubr.bf16.gmra.mrb[0].mxu0 %v5174
    %v5210 = vpop.f32.mrb[0].mxu0
    %v5211 = vadd.f32 %v5156, %v5210
    %v5212 = vpop.f32.mrb[0].mxu0
    %v5213 = vpop.f32.mrb[0].mxu0
    %v5214 = vpop.f32.mrb[0].mxu0
    %5215 = vdwg.mxu0
    %v5217 = vsel %vm580, %v5211, 0
    %5219 = vmatprep.subr.mxu0 0.0
    %5220 = vmatpush1.msra.mxu0 %v5217
    %5221 = vmatprep.subr.mxu0 0.0
    %5222 = vmatpush1.msra.mxu0 0.0
    %5223 = vmatprep.subr.mxu0 0.0
    %5224 = vmatpush1.msra.mxu0 0.0
    %5225 = vmatprep.subr.mxu0 0.0
    %5226 = vmatpush1.msra.mxu0 0.0
    %5227 = vmatprep.subr.mxu0 0.0
    %5228 = vmatpush1.msra.mxu0 0.0
    %5229 = vmatprep.subr.mxu0 0.0
    %5230 = vmatpush1.msra.mxu0 0.0
    %5231 = vmatprep.subr.mxu0 0.0
    %5232 = vmatpush1.msra.mxu0 0.0
    %5233 = vmatprep.subr.mxu0 0.0
    %5234 = vmatpush1.msra.mxu0 0.0
    %5235 = vmatprep.subr.mxu0 0.0
    %5236 = vmatpush1.msra.mxu0 0.0
    %5237 = vmatprep.subr.mxu0 0.0
    %5238 = vmatpush1.msra.mxu0 0.0
    %5239 = vmatprep.subr.mxu0 0.0
    %5240 = vmatpush1.msra.mxu0 0.0
    %5241 = vmatprep.subr.mxu0 0.0
    %5242 = vmatpush1.msra.mxu0 0.0
    %5243 = vmatprep.subr.mxu0 0.0
    %5244 = vmatpush1.msra.mxu0 0.0
    %5245 = vmatprep.subr.mxu0 0.0
    %5246 = vmatpush1.msra.mxu0 0.0
    %5247 = vmatprep.subr.mxu0 0.0
    %5248 = vmatpush1.msra.mxu0 0.0
    %5249 = vmatprep.subr.mxu0 0.0
    %5250 = vmatpush1.msra.mxu0 0.0
    %5251 = vmatprep.subr.mxu0 0.0
    %5252 = vmatpush1.msra.mxu0 0.0
    %5253 = vmatprep.subr.mxu0 0.0
    %5254 = vmatpush1.msra.mxu0 0.0
    %5255 = vmatprep.subr.mxu0 0.0
    %5256 = vmatpush1.msra.mxu0 0.0
    %5257 = vmatprep.subr.mxu0 0.0
    %5258 = vmatpush1.msra.mxu0 0.0
    %5259 = vmatprep.subr.mxu0 0.0
    %5260 = vmatpush1.msra.mxu0 0.0
    %5261 = vmatprep.subr.mxu0 0.0
    %5262 = vmatpush1.msra.mxu0 0.0
    %5263 = vmatprep.subr.mxu0 0.0
    %5264 = vmatpush1.msra.mxu0 0.0
    %5265 = vmatprep.subr.mxu0 0.0
    %5266 = vmatpush1.msra.mxu0 0.0
    %5267 = vmatprep.subr.mxu0 0.0
    %5268 = vmatpush1.msra.mxu0 0.0
    %5269 = vmatprep.subr.mxu0 0.0
    %5270 = vmatpush1.msra.mxu0 0.0
    %5271 = vmatprep.subr.mxu0 0.0
    %5272 = vmatpush1.msra.mxu0 0.0
    %5273 = vmatprep.subr.mxu0 0.0
    %5274 = vmatpush1.msra.mxu0 0.0
    %5275 = vmatprep.subr.mxu0 0.0
    %5276 = vmatpush1.msra.mxu0 0.0
    %5277 = vmatprep.subr.mxu0 0.0
    %5278 = vmatpush1.msra.mxu0 0.0
    %5279 = vmatprep.subr.mxu0 0.0
    %5280 = vmatpush1.msra.mxu0 0.0
    %5281 = vmatprep.subr.mxu0 0.0
    %5282 = vmatpush1.msra.mxu0 0.0
    %5283 = vmatprep.mubr.f32.mxu0 0.0
    %5284 = vmatmul.mubr.f32.gmra.mrb[0].mxu0 %v569
    %v5285 = vpop.f32.mrb[0].mxu0
    %v5286 = vadd.f32 0.0, %v5285
    %v5287 = vpop.f32.mrb[0].mxu0
    %5288 = vmatprep.mubr.f32.mxu0 0.0
    %5289 = vmatmul.mubr.f32.gmra.mrb[0].mxu0 %v572
    %v5290 = vpop.f32.mrb[0].mxu0
    %v5291 = vadd.f32 0.0, %v5290
    %v5292 = vpop.f32.mrb[0].mxu0
    %5293 = vmatprep.mubr.f32.mxu0 0.0
    %5294 = vmatmul.mubr.f32.gmra.mrb[0].mxu0 %v575
    %v5295 = vpop.f32.mrb[0].mxu0
    %v5296 = vadd.f32 0.0, %v5295
    %v5297 = vpop.f32.mrb[0].mxu0
    %5298 = vmatprep.mubr.f32.mxu0 0.0
    %5299 = vmatmul.mubr.f32.gmra.mrb[0].mxu0 %v578
    %v5300 = vpop.f32.mrb[0].mxu0
    %v5301 = vadd.f32 0.0, %v5300
    %v5302 = vpop.f32.mrb[0].mxu0
    %5303 = vdwg.mxu0
    %v5304 = vadd.f32 %v4940, %v5286
    %v5305 = vadd.f32 %v4943, %v5291
    %v5306 = vadd.f32 %v4948, %v5296
    %v5307 = vadd.f32 %v4951, %v5301
    %5308 = vmatprep.subr.mxu0 0.0
    %5309 = vmatpush1.msra.mxu0 %v4868
    %5310 = vmatprep.subr.mxu0 0.0
    %5311 = vmatpush1.msra.mxu0 %v4869
    %5312 = vmatprep.subr.mxu0 0.0
    %5313 = vmatpush1.msra.mxu0 %v4870
    %5314 = vmatprep.subr.mxu0 0.0
    %5315 = vmatpush1.msra.mxu0 %v4871
    %5316 = vmatprep.subr.mxu0 0.0
    %5317 = vmatpush1.msra.mxu0 0.0
    %5318 = vmatprep.subr.mxu0 0.0
    %5319 = vmatpush1.msra.mxu0 0.0
    %5320 = vmatprep.subr.mxu0 0.0
    %5321 = vmatpush1.msra.mxu0 0.0
    %5322 = vmatprep.subr.mxu0 0.0
    %5323 = vmatpush1.msra.mxu0 0.0
    %5324 = vmatprep.subr.mxu0 0.0
    %5325 = vmatpush1.msra.mxu0 0.0
    %5326 = vmatprep.subr.mxu0 0.0
    %5327 = vmatpush1.msra.mxu0 0.0
    %5328 = vmatprep.subr.mxu0 0.0
    %5329 = vmatpush1.msra.mxu0 0.0
    %5330 = vmatprep.subr.mxu0 0.0
    %5331 = vmatpush1.msra.mxu0 0.0
    %5332 = vmatprep.subr.mxu0 0.0
    %5333 = vmatpush1.msra.mxu0 0.0
    %5334 = vmatprep.subr.mxu0 0.0
    %5335 = vmatpush1.msra.mxu0 0.0
    %5336 = vmatprep.subr.mxu0 0.0
    %5337 = vmatpush1.msra.mxu0 0.0
    %5338 = vmatprep.subr.mxu0 0.0
    %5339 = vmatpush1.msra.mxu0 0.0
    %5340 = vmatprep.subr.mxu0 0.0
    %5341 = vmatpush1.msra.mxu0 0.0
    %5342 = vmatprep.subr.mxu0 0.0
    %5343 = vmatpush1.msra.mxu0 0.0
    %5344 = vmatprep.subr.mxu0 0.0
    %5345 = vmatpush1.msra.mxu0 0.0
    %5346 = vmatprep.subr.mxu0 0.0
    %5347 = vmatpush1.msra.mxu0 0.0
    %5348 = vmatprep.subr.mxu0 0.0
    %5349 = vmatpush1.msra.mxu0 0.0
    %5350 = vmatprep.subr.mxu0 0.0
    %5351 = vmatpush1.msra.mxu0 0.0
    %5352 = vmatprep.subr.mxu0 0.0
    %5353 = vmatpush1.msra.mxu0 0.0
    %5354 = vmatprep.subr.mxu0 0.0
    %5355 = vmatpush1.msra.mxu0 0.0
    %5356 = vmatprep.subr.mxu0 0.0
    %5357 = vmatpush1.msra.mxu0 0.0
    %5358 = vmatprep.subr.mxu0 0.0
    %5359 = vmatpush1.msra.mxu0 0.0
    %5360 = vmatprep.subr.mxu0 0.0
    %5361 = vmatpush1.msra.mxu0 0.0
    %5362 = vmatprep.subr.mxu0 0.0
    %5363 = vmatpush1.msra.mxu0 0.0
    %5364 = vmatprep.subr.mxu0 0.0
    %5365 = vmatpush1.msra.mxu0 0.0
    %5366 = vmatprep.subr.mxu0 0.0
    %5367 = vmatpush1.msra.mxu0 0.0
    %5368 = vmatprep.subr.mxu0 0.0
    %5369 = vmatpush1.msra.mxu0 0.0
    %5370 = vmatprep.subr.mxu0 0.0
    %5371 = vmatpush1.msra.mxu0 0.0
    %5372 = vmatprep.mubr.f32.mxu0 0.0
    %5373 = vmatmul.mubr.f32.gmra.mrb[0].mxu0 %v676
    %v5374 = vpop.f32.mrb[0].mxu0
    %v5375 = vadd.f32 0.0, %v5374
    %v5376 = vpop.f32.mrb[0].mxu0
    %5377 = vdwg.mxu0
    %5378 = vmatprep.subr.mxu0 0.0
    %5379 = vmatpush1.msra.mxu0 %v4868
    %5380 = vmatprep.subr.mxu0 0.0
    %5381 = vmatpush1.msra.mxu0 %v4869
    %5382 = vmatprep.subr.mxu0 0.0
    %5383 = vmatpush1.msra.mxu0 %v4870
    %5384 = vmatprep.subr.mxu0 0.0
    %5385 = vmatpush1.msra.mxu0 %v4871
    %5386 = vmatprep.subr.mxu0 0.0
    %5387 = vmatpush1.msra.mxu0 0.0
    %5388 = vmatprep.subr.mxu0 0.0
    %5389 = vmatpush1.msra.mxu0 0.0
    %5390 = vmatprep.subr.mxu0 0.0
    %5391 = vmatpush1.msra.mxu0 0.0
    %5392 = vmatprep.subr.mxu0 0.0
    %5393 = vmatpush1.msra.mxu0 0.0
    %5394 = vmatprep.subr.mxu0 0.0
    %5395 = vmatpush1.msra.mxu0 0.0
    %5396 = vmatprep.subr.mxu0 0.0
    %5397 = vmatpush1.msra.mxu0 0.0
    %5398 = vmatprep.subr.mxu0 0.0
    %5399 = vmatpush1.msra.mxu0 0.0
    %5400 = vmatprep.subr.mxu0 0.0
    %5401 = vmatpush1.msra.mxu0 0.0
    %5402 = vmatprep.subr.mxu0 0.0
    %5403 = vmatpush1.msra.mxu0 0.0
    %5404 = vmatprep.subr.mxu0 0.0
    %5405 = vmatpush1.msra.mxu0 0.0
    %5406 = vmatprep.subr.mxu0 0.0
    %5407 = vmatpush1.msra.mxu0 0.0
    %5408 = vmatprep.subr.mxu0 0.0
    %5409 = vmatpush1.msra.mxu0 0.0
    %5410 = vmatprep.subr.mxu0 0.0
    %5411 = vmatpush1.msra.mxu0 0.0
    %5412 = vmatprep.subr.mxu0 0.0
    %5413 = vmatpush1.msra.mxu0 0.0
    %5414 = vmatprep.subr.mxu0 0.0
    %5415 = vmatpush1.msra.mxu0 0.0
    %5416 = vmatprep.subr.mxu0 0.0
    %5417 = vmatpush1.msra.mxu0 0.0
    %5418 = vmatprep.subr.mxu0 0.0
    %5419 = vmatpush1.msra.mxu0 0.0
    %5420 = vmatprep.subr.mxu0 0.0
    %5421 = vmatpush1.msra.mxu0 0.0
    %5422 = vmatprep.subr.mxu0 0.0
    %5423 = vmatpush1.msra.mxu0 0.0
    %5424 = vmatprep.subr.mxu0 0.0
    %5425 = vmatpush1.msra.mxu0 0.0
    %5426 = vmatprep.subr.mxu0 0.0
    %5427 = vmatpush1.msra.mxu0 0.0
    %5428 = vmatprep.subr.mxu0 0.0
    %5429 = vmatpush1.msra.mxu0 0.0
    %5430 = vmatprep.subr.mxu0 0.0
    %5431 = vmatpush1.msra.mxu0 0.0
    %5432 = vmatprep.subr.mxu0 0.0
    %5433 = vmatpush1.msra.mxu0 0.0
    %5434 = vmatprep.subr.mxu0 0.0
    %5435 = vmatpush1.msra.mxu0 0.0
    %5436 = vmatprep.subr.mxu0 0.0
    %5437 = vmatpush1.msra.mxu0 0.0
    %5438 = vmatprep.subr.mxu0 0.0
    %5439 = vmatpush1.msra.mxu0 0.0
    %5440 = vmatprep.subr.mxu0 0.0
    %5441 = vmatpush1.msra.mxu0 0.0
    %5442 = vmatprep.mubr.f32.mxu0 0.0
    %5443 = vmatmul.mubr.f32.gmra.mrb[0].mxu0 %v751
    %v5444 = vpop.f32.mrb[0].mxu0
    %v5445 = vadd.f32 0.0, %v5444
    %v5446 = vpop.f32.mrb[0].mxu0
    %5447 = vdwg.mxu0
    %v5448 = vpack.c.bf16 %v5375, %v5375
    %s5449 = scalar_lea.vmem %s6, 208
    %v5450 = vld [vmem:[%s5449] sm:$0xf]
    %v5451 = vld [vmem:[%s5449 + $0x4] sm:$0xf]
    %v5452 = vld [vmem:[%s5449 + $0x8] sm:$0xf]
    %v5453 = vld [vmem:[%s5449 + $0xc] sm:$0xf]
    %v5454 = vpack.c.bf16 %v5445, %v5445
    %s5455 = scalar_lea.vmem [#allocation6], 208
    %v5456 = vld [vmem:[%s5455] sm:$0xf]
    %v5457 = vld [vmem:[%s5455 + $0x4] sm:$0xf]
    %v5458 = vld [vmem:[%s5455 + $0x8] sm:$0xf]
    %v5459 = vld [vmem:[%s5455 + $0xc] sm:$0xf]
    %v5464 = vunpack.c.l.b16 %v5456
    %v5465 = vunpack.c.l.b16 %v5457
    %v5466 = vunpack.c.l.b16 %v5458
    %v5467 = vunpack.c.l.b16 %v5459
    %v5468 = vpack.c.b16 %v5465, %v5464
    %v5469 = vpack.c.b16 %v5467, %v5466
    %v5473 = vsel %vm240, %v5454, 0
    %5475 = vmatprep.subr.bf16.mxu0 0
    %5476 = vmatpush1.bf16.msra.mxu0 %v5468
    %5477 = vmatprep.subr.bf16.mxu0 0
    %5478 = vmatpush1.bf16.msra.mxu0 %v5469
    %5479 = vmatprep.subr.bf16.mxu0 0
    %5480 = vmatpush1.bf16.msra.mxu0 0
    %5481 = vmatprep.subr.bf16.mxu0 0
    %5482 = vmatpush1.bf16.msra.mxu0 0
    %5483 = vmatprep.subr.bf16.mxu0 0
    %5484 = vmatpush1.bf16.msra.mxu0 0
    %5485 = vmatprep.subr.bf16.mxu0 0
    %5486 = vmatpush1.bf16.msra.mxu0 0
    %5487 = vmatprep.subr.bf16.mxu0 0
    %5488 = vmatpush1.bf16.msra.mxu0 0
    %5489 = vmatprep.subr.bf16.mxu0 0
    %5490 = vmatpush1.bf16.msra.mxu0 0
    %5491 = vmatprep.subr.bf16.mxu0 0
    %5492 = vmatpush1.bf16.msra.mxu0 0
    %5493 = vmatprep.subr.bf16.mxu0 0
    %5494 = vmatpush1.bf16.msra.mxu0 0
    %5495 = vmatprep.subr.bf16.mxu0 0
    %5496 = vmatpush1.bf16.msra.mxu0 0
    %5497 = vmatprep.subr.bf16.mxu0 0
    %5498 = vmatpush1.bf16.msra.mxu0 0
    %5499 = vmatprep.subr.bf16.mxu0 0
    %5500 = vmatpush1.bf16.msra.mxu0 0
    %5501 = vmatprep.subr.bf16.mxu0 0
    %5502 = vmatpush1.bf16.msra.mxu0 0
    %5503 = vmatprep.subr.bf16.mxu0 0
    %5504 = vmatpush1.bf16.msra.mxu0 0
    %5505 = vmatprep.subr.bf16.mxu0 0
    %5506 = vmatpush1.bf16.msra.mxu0 0
    %5507 = vmatprep.mubr.bf16.mxu0 0
    %5508 = vmatmul.mubr.bf16.gmra.mrb[0].mxu0 %v5473
    %v5509 = vpop.f32.mrb[0].mxu0
    %v5510 = vadd.f32 0.0, %v5509
    %v5511 = vpop.f32.mrb[0].mxu0
    %v5512 = vpop.f32.mrb[0].mxu0
    %v5513 = vpop.f32.mrb[0].mxu0
    %5514 = vdwg.mxu0
    %v5519 = vunpack.c.l.b16 %v5450
    %v5520 = vunpack.c.l.b16 %v5451
    %v5521 = vunpack.c.l.b16 %v5452
    %v5522 = vunpack.c.l.b16 %v5453
    %v5523 = vpack.c.b16 %v5520, %v5519
    %v5524 = vpack.c.b16 %v5522, %v5521
    %v5528 = vsel %vm240, %v5448, 0
    %5530 = vmatprep.subr.bf16.mxu0 0
    %5531 = vmatpush1.bf16.msra.mxu0 %v5523
    %5532 = vmatprep.subr.bf16.mxu0 0
    %5533 = vmatpush1.bf16.msra.mxu0 %v5524
    %5534 = vmatprep.subr.bf16.mxu0 0
    %5535 = vmatpush1.bf16.msra.mxu0 0
    %5536 = vmatprep.subr.bf16.mxu0 0
    %5537 = vmatpush1.bf16.msra.mxu0 0
    %5538 = vmatprep.subr.bf16.mxu0 0
    %5539 = vmatpush1.bf16.msra.mxu0 0
    %5540 = vmatprep.subr.bf16.mxu0 0
    %5541 = vmatpush1.bf16.msra.mxu0 0
    %5542 = vmatprep.subr.bf16.mxu0 0
    %5543 = vmatpush1.bf16.msra.mxu0 0
    %5544 = vmatprep.subr.bf16.mxu0 0
    %5545 = vmatpush1.bf16.msra.mxu0 0
    %5546 = vmatprep.subr.bf16.mxu0 0
    %5547 = vmatpush1.bf16.msra.mxu0 0
    %5548 = vmatprep.subr.bf16.mxu0 0
    %5549 = vmatpush1.bf16.msra.mxu0 0
    %5550 = vmatprep.subr.bf16.mxu0 0
    %5551 = vmatpush1.bf16.msra.mxu0 0
    %5552 = vmatprep.subr.bf16.mxu0 0
    %5553 = vmatpush1.bf16.msra.mxu0 0
    %5554 = vmatprep.subr.bf16.mxu0 0
    %5555 = vmatpush1.bf16.msra.mxu0 0
    %5556 = vmatprep.subr.bf16.mxu0 0
    %5557 = vmatpush1.bf16.msra.mxu0 0
    %5558 = vmatprep.subr.bf16.mxu0 0
    %5559 = vmatpush1.bf16.msra.mxu0 0
    %5560 = vmatprep.subr.bf16.mxu0 0
    %5561 = vmatpush1.bf16.msra.mxu0 0
    %5562 = vmatprep.mubr.bf16.mxu0 0
    %5563 = vmatmul.mubr.bf16.gmra.mrb[0].mxu0 %v5528
    %v5564 = vpop.f32.mrb[0].mxu0
    %v5565 = vadd.f32 %v5510, %v5564
    %v5566 = vpop.f32.mrb[0].mxu0
    %v5567 = vpop.f32.mrb[0].mxu0
    %v5568 = vpop.f32.mrb[0].mxu0
    %5569 = vdwg.mxu0
    %v5571 = vsel %vm580, %v5565, 0
    %5573 = vmatprep.subr.mxu0 0.0
    %5574 = vmatpush1.msra.mxu0 %v5571
    %5575 = vmatprep.subr.mxu0 0.0
    %5576 = vmatpush1.msra.mxu0 0.0
    %5577 = vmatprep.subr.mxu0 0.0
    %5578 = vmatpush1.msra.mxu0 0.0
    %5579 = vmatprep.subr.mxu0 0.0
    %5580 = vmatpush1.msra.mxu0 0.0
    %5581 = vmatprep.subr.mxu0 0.0
    %5582 = vmatpush1.msra.mxu0 0.0
    %5583 = vmatprep.subr.mxu0 0.0
    %5584 = vmatpush1.msra.mxu0 0.0
    %5585 = vmatprep.subr.mxu0 0.0
    %5586 = vmatpush1.msra.mxu0 0.0
    %5587 = vmatprep.subr.mxu0 0.0
    %5588 = vmatpush1.msra.mxu0 0.0
    %5589 = vmatprep.subr.mxu0 0.0
    %5590 = vmatpush1.msra.mxu0 0.0
    %5591 = vmatprep.subr.mxu0 0.0
    %5592 = vmatpush1.msra.mxu0 0.0
    %5593 = vmatprep.subr.mxu0 0.0
    %5594 = vmatpush1.msra.mxu0 0.0
    %5595 = vmatprep.subr.mxu0 0.0
    %5596 = vmatpush1.msra.mxu0 0.0
    %5597 = vmatprep.subr.mxu0 0.0
    %5598 = vmatpush1.msra.mxu0 0.0
    %5599 = vmatprep.subr.mxu0 0.0
    %5600 = vmatpush1.msra.mxu0 0.0
    %5601 = vmatprep.subr.mxu0 0.0
    %5602 = vmatpush1.msra.mxu0 0.0
    %5603 = vmatprep.subr.mxu0 0.0
    %5604 = vmatpush1.msra.mxu0 0.0
    %5605 = vmatprep.subr.mxu0 0.0
    %5606 = vmatpush1.msra.mxu0 0.0
    %5607 = vmatprep.subr.mxu0 0.0
    %5608 = vmatpush1.msra.mxu0 0.0
    %5609 = vmatprep.subr.mxu0 0.0
    %5610 = vmatpush1.msra.mxu0 0.0
    %5611 = vmatprep.subr.mxu0 0.0
    %5612 = vmatpush1.msra.mxu0 0.0
    %5613 = vmatprep.subr.mxu0 0.0
    %5614 = vmatpush1.msra.mxu0 0.0
    %5615 = vmatprep.subr.mxu0 0.0
    %5616 = vmatpush1.msra.mxu0 0.0
    %5617 = vmatprep.subr.mxu0 0.0
    %5618 = vmatpush1.msra.mxu0 0.0
    %5619 = vmatprep.subr.mxu0 0.0
    %5620 = vmatpush1.msra.mxu0 0.0
    %5621 = vmatprep.subr.mxu0 0.0
    %5622 = vmatpush1.msra.mxu0 0.0
    %5623 = vmatprep.subr.mxu0 0.0
    %5624 = vmatpush1.msra.mxu0 0.0
    %5625 = vmatprep.subr.mxu0 0.0
    %5626 = vmatpush1.msra.mxu0 0.0
    %5627 = vmatprep.subr.mxu0 0.0
    %5628 = vmatpush1.msra.mxu0 0.0
    %5629 = vmatprep.subr.mxu0 0.0
    %5630 = vmatpush1.msra.mxu0 0.0
    %5631 = vmatprep.subr.mxu0 0.0
    %5632 = vmatpush1.msra.mxu0 0.0
    %5633 = vmatprep.subr.mxu0 0.0
    %5634 = vmatpush1.msra.mxu0 0.0
    %5635 = vmatprep.subr.mxu0 0.0
    %5636 = vmatpush1.msra.mxu0 0.0
    %5637 = vmatprep.mubr.f32.mxu0 0.0
    %5638 = vmatmul.mubr.f32.gmra.mrb[0].mxu0 %v951
    %v5639 = vpop.f32.mrb[0].mxu0
    %v5640 = vadd.f32 0.0, %v5639
    %v5641 = vpop.f32.mrb[0].mxu0
    %5642 = vmatprep.mubr.f32.mxu0 0.0
    %5643 = vmatmul.mubr.f32.gmra.mrb[0].mxu0 %v954
    %v5644 = vpop.f32.mrb[0].mxu0
    %v5645 = vadd.f32 0.0, %v5644
    %v5646 = vpop.f32.mrb[0].mxu0
    %5647 = vmatprep.mubr.f32.mxu0 0.0
    %5648 = vmatmul.mubr.f32.gmra.mrb[0].mxu0 %v957
    %v5649 = vpop.f32.mrb[0].mxu0
    %v5650 = vadd.f32 0.0, %v5649
    %v5651 = vpop.f32.mrb[0].mxu0
    %5652 = vmatprep.mubr.f32.mxu0 0.0
    %5653 = vmatmul.mubr.f32.gmra.mrb[0].mxu0 %v960
    %v5654 = vpop.f32.mrb[0].mxu0
    %v5655 = vadd.f32 0.0, %v5654
    %v5656 = vpop.f32.mrb[0].mxu0
    %5657 = vdwg.mxu0
    %v5658 = vadd.f32 %v5304, %v5640
    %v5659 = vadd.f32 %v5305, %v5645
    %v5660 = vadd.f32 %v5306, %v5650
    %v5661 = vadd.f32 %v5307, %v5655
    %5662 = vmatprep.subr.mxu0 0.0
    %5663 = vmatpush1.msra.mxu0 %v4868
    %5664 = vmatprep.subr.mxu0 0.0
    %5665 = vmatpush1.msra.mxu0 %v4869
    %5666 = vmatprep.subr.mxu0 0.0
    %5667 = vmatpush1.msra.mxu0 %v4870
    %5668 = vmatprep.subr.mxu0 0.0
    %5669 = vmatpush1.msra.mxu0 %v4871
    %5670 = vmatprep.subr.mxu0 0.0
    %5671 = vmatpush1.msra.mxu0 0.0
    %5672 = vmatprep.subr.mxu0 0.0
    %5673 = vmatpush1.msra.mxu0 0.0
    %5674 = vmatprep.subr.mxu0 0.0
    %5675 = vmatpush1.msra.mxu0 0.0
    %5676 = vmatprep.subr.mxu0 0.0
    %5677 = vmatpush1.msra.mxu0 0.0
    %5678 = vmatprep.subr.mxu0 0.0
    %5679 = vmatpush1.msra.mxu0 0.0
    %5680 = vmatprep.subr.mxu0 0.0
    %5681 = vmatpush1.msra.mxu0 0.0
    %5682 = vmatprep.subr.mxu0 0.0
    %5683 = vmatpush1.msra.mxu0 0.0
    %5684 = vmatprep.subr.mxu0 0.0
    %5685 = vmatpush1.msra.mxu0 0.0
    %5686 = vmatprep.subr.mxu0 0.0
    %5687 = vmatpush1.msra.mxu0 0.0
    %5688 = vmatprep.subr.mxu0 0.0
    %5689 = vmatpush1.msra.mxu0 0.0
    %5690 = vmatprep.subr.mxu0 0.0
    %5691 = vmatpush1.msra.mxu0 0.0
    %5692 = vmatprep.subr.mxu0 0.0
    %5693 = vmatpush1.msra.mxu0 0.0
    %5694 = vmatprep.subr.mxu0 0.0
    %5695 = vmatpush1.msra.mxu0 0.0
    %5696 = vmatprep.subr.mxu0 0.0
    %5697 = vmatpush1.msra.mxu0 0.0
    %5698 = vmatprep.subr.mxu0 0.0
    %5699 = vmatpush1.msra.mxu0 0.0
    %5700 = vmatprep.subr.mxu0 0.0
    %5701 = vmatpush1.msra.mxu0 0.0
    %5702 = vmatprep.subr.mxu0 0.0
    %5703 = vmatpush1.msra.mxu0 0.0
    %5704 = vmatprep.subr.mxu0 0.0
    %5705 = vmatpush1.msra.mxu0 0.0
    %5706 = vmatprep.subr.mxu0 0.0
    %5707 = vmatpush1.msra.mxu0 0.0
    %5708 = vmatprep.subr.mxu0 0.0
    %5709 = vmatpush1.msra.mxu0 0.0
    %5710 = vmatprep.subr.mxu0 0.0
    %5711 = vmatpush1.msra.mxu0 0.0
    %5712 = vmatprep.subr.mxu0 0.0
    %5713 = vmatpush1.msra.mxu0 0.0
    %5714 = vmatprep.subr.mxu0 0.0
    %5715 = vmatpush1.msra.mxu0 0.0
    %5716 = vmatprep.subr.mxu0 0.0
    %5717 = vmatpush1.msra.mxu0 0.0
    %5718 = vmatprep.subr.mxu0 0.0
    %5719 = vmatpush1.msra.mxu0 0.0
    %5720 = vmatprep.subr.mxu0 0.0
    %5721 = vmatpush1.msra.mxu0 0.0
    %5722 = vmatprep.subr.mxu0 0.0
    %5723 = vmatpush1.msra.mxu0 0.0
    %5724 = vmatprep.subr.mxu0 0.0
    %5725 = vmatpush1.msra.mxu0 0.0
    %5726 = vmatprep.mubr.f32.mxu0 0.0
    %5727 = vmatmul.mubr.f32.gmra.mrb[0].mxu0 %v1057
    %v5728 = vpop.f32.mrb[0].mxu0
    %v5729 = vadd.f32 0.0, %v5728
    %v5730 = vpop.f32.mrb[0].mxu0
    %5731 = vdwg.mxu0
    %5732 = vmatprep.subr.mxu0 0.0
    %5733 = vmatpush1.msra.mxu0 %v4868
    %5734 = vmatprep.subr.mxu0 0.0
    %5735 = vmatpush1.msra.mxu0 %v4869
    %5736 = vmatprep.subr.mxu0 0.0
    %5737 = vmatpush1.msra.mxu0 %v4870
    %5738 = vmatprep.subr.mxu0 0.0
    %5739 = vmatpush1.msra.mxu0 %v4871
    %5740 = vmatprep.subr.mxu0 0.0
    %5741 = vmatpush1.msra.mxu0 0.0
    %5742 = vmatprep.subr.mxu0 0.0
    %5743 = vmatpush1.msra.mxu0 0.0
    %5744 = vmatprep.subr.mxu0 0.0
    %5745 = vmatpush1.msra.mxu0 0.0
    %5746 = vmatprep.subr.mxu0 0.0
    %5747 = vmatpush1.msra.mxu0 0.0
    %5748 = vmatprep.subr.mxu0 0.0
    %5749 = vmatpush1.msra.mxu0 0.0
    %5750 = vmatprep.subr.mxu0 0.0
    %5751 = vmatpush1.msra.mxu0 0.0
    %5752 = vmatprep.subr.mxu0 0.0
    %5753 = vmatpush1.msra.mxu0 0.0
    %5754 = vmatprep.subr.mxu0 0.0
    %5755 = vmatpush1.msra.mxu0 0.0
    %5756 = vmatprep.subr.mxu0 0.0
    %5757 = vmatpush1.msra.mxu0 0.0
    %5758 = vmatprep.subr.mxu0 0.0
    %5759 = vmatpush1.msra.mxu0 0.0
    %5760 = vmatprep.subr.mxu0 0.0
    %5761 = vmatpush1.msra.mxu0 0.0
    %5762 = vmatprep.subr.mxu0 0.0
    %5763 = vmatpush1.msra.mxu0 0.0
    %5764 = vmatprep.subr.mxu0 0.0
    %5765 = vmatpush1.msra.mxu0 0.0
    %5766 = vmatprep.subr.mxu0 0.0
    %5767 = vmatpush1.msra.mxu0 0.0
    %5768 = vmatprep.subr.mxu0 0.0
    %5769 = vmatpush1.msra.mxu0 0.0
    %5770 = vmatprep.subr.mxu0 0.0
    %5771 = vmatpush1.msra.mxu0 0.0
    %5772 = vmatprep.subr.mxu0 0.0
    %5773 = vmatpush1.msra.mxu0 0.0
    %5774 = vmatprep.subr.mxu0 0.0
    %5775 = vmatpush1.msra.mxu0 0.0
    %5776 = vmatprep.subr.mxu0 0.0
    %5777 = vmatpush1.msra.mxu0 0.0
    %5778 = vmatprep.subr.mxu0 0.0
    %5779 = vmatpush1.msra.mxu0 0.0
    %5780 = vmatprep.subr.mxu0 0.0
    %5781 = vmatpush1.msra.mxu0 0.0
    %5782 = vmatprep.subr.mxu0 0.0
    %5783 = vmatpush1.msra.mxu0 0.0
    %5784 = vmatprep.subr.mxu0 0.0
    %5785 = vmatpush1.msra.mxu0 0.0
    %5786 = vmatprep.subr.mxu0 0.0
    %5787 = vmatpush1.msra.mxu0 0.0
    %5788 = vmatprep.subr.mxu0 0.0
    %5789 = vmatpush1.msra.mxu0 0.0
    %5790 = vmatprep.subr.mxu0 0.0
    %5791 = vmatpush1.msra.mxu0 0.0
    %5792 = vmatprep.subr.mxu0 0.0
    %5793 = vmatpush1.msra.mxu0 0.0
    %5794 = vmatprep.subr.mxu0 0.0
    %5795 = vmatpush1.msra.mxu0 0.0
    %5796 = vmatprep.mubr.f32.mxu0 0.0
    %5797 = vmatmul.mubr.f32.gmra.mrb[0].mxu0 %v1132
    %v5798 = vpop.f32.mrb[0].mxu0
    %v5799 = vadd.f32 0.0, %v5798
    %v5800 = vpop.f32.mrb[0].mxu0
    %5801 = vdwg.mxu0
    %v5802 = vpack.c.bf16 %v5729, %v5729
    %s5803 = scalar_lea.vmem %s6, 224
    %v5804 = vld [vmem:[%s5803] sm:$0xf]
    %v5805 = vld [vmem:[%s5803 + $0x4] sm:$0xf]
    %v5806 = vld [vmem:[%s5803 + $0x8] sm:$0xf]
    %v5807 = vld [vmem:[%s5803 + $0xc] sm:$0xf]
    %v5808 = vpack.c.bf16 %v5799, %v5799
    %s5809 = scalar_lea.vmem [#allocation6], 224
    %v5810 = vld [vmem:[%s5809] sm:$0xf]
    %v5811 = vld [vmem:[%s5809 + $0x4] sm:$0xf]
    %v5812 = vld [vmem:[%s5809 + $0x8] sm:$0xf]
    %v5813 = vld [vmem:[%s5809 + $0xc] sm:$0xf]
    %v5818 = vunpack.c.l.b16 %v5810
    %v5819 = vunpack.c.l.b16 %v5811
    %v5820 = vunpack.c.l.b16 %v5812
    %v5821 = vunpack.c.l.b16 %v5813
    %v5822 = vpack.c.b16 %v5819, %v5818
    %v5823 = vpack.c.b16 %v5821, %v5820
    %v5827 = vsel %vm240, %v5808, 0
    %5829 = vmatprep.subr.bf16.mxu0 0
    %5830 = vmatpush1.bf16.msra.mxu0 %v5822
    %5831 = vmatprep.subr.bf16.mxu0 0
    %5832 = vmatpush1.bf16.msra.mxu0 %v5823
    %5833 = vmatprep.subr.bf16.mxu0 0
    %5834 = vmatpush1.bf16.msra.mxu0 0
    %5835 = vmatprep.subr.bf16.mxu0 0
    %5836 = vmatpush1.bf16.msra.mxu0 0
    %5837 = vmatprep.subr.bf16.mxu0 0
    %5838 = vmatpush1.bf16.msra.mxu0 0
    %5839 = vmatprep.subr.bf16.mxu0 0
    %5840 = vmatpush1.bf16.msra.mxu0 0
    %5841 = vmatprep.subr.bf16.mxu0 0
    %5842 = vmatpush1.bf16.msra.mxu0 0
    %5843 = vmatprep.subr.bf16.mxu0 0
    %5844 = vmatpush1.bf16.msra.mxu0 0
    %5845 = vmatprep.subr.bf16.mxu0 0
    %5846 = vmatpush1.bf16.msra.mxu0 0
    %5847 = vmatprep.subr.bf16.mxu0 0
    %5848 = vmatpush1.bf16.msra.mxu0 0
    %5849 = vmatprep.subr.bf16.mxu0 0
    %5850 = vmatpush1.bf16.msra.mxu0 0
    %5851 = vmatprep.subr.bf16.mxu0 0
    %5852 = vmatpush1.bf16.msra.mxu0 0
    %5853 = vmatprep.subr.bf16.mxu0 0
    %5854 = vmatpush1.bf16.msra.mxu0 0
    %5855 = vmatprep.subr.bf16.mxu0 0
    %5856 = vmatpush1.bf16.msra.mxu0 0
    %5857 = vmatprep.subr.bf16.mxu0 0
    %5858 = vmatpush1.bf16.msra.mxu0 0
    %5859 = vmatprep.subr.bf16.mxu0 0
    %5860 = vmatpush1.bf16.msra.mxu0 0
    %5861 = vmatprep.mubr.bf16.mxu0 0
    %5862 = vmatmul.mubr.bf16.gmra.mrb[0].mxu0 %v5827
    %v5863 = vpop.f32.mrb[0].mxu0
    %v5864 = vadd.f32 0.0, %v5863
    %v5865 = vpop.f32.mrb[0].mxu0
    %v5866 = vpop.f32.mrb[0].mxu0
    %v5867 = vpop.f32.mrb[0].mxu0
    %5868 = vdwg.mxu0
    %v5873 = vunpack.c.l.b16 %v5804
    %v5874 = vunpack.c.l.b16 %v5805
    %v5875 = vunpack.c.l.b16 %v5806
    %v5876 = vunpack.c.l.b16 %v5807
    %v5877 = vpack.c.b16 %v5874, %v5873
    %v5878 = vpack.c.b16 %v5876, %v5875
    %v5882 = vsel %vm240, %v5802, 0
    %5884 = vmatprep.subr.bf16.mxu0 0
    %5885 = vmatpush1.bf16.msra.mxu0 %v5877
    %5886 = vmatprep.subr.bf16.mxu0 0
    %5887 = vmatpush1.bf16.msra.mxu0 %v5878
    %5888 = vmatprep.subr.bf16.mxu0 0
    %5889 = vmatpush1.bf16.msra.mxu0 0
    %5890 = vmatprep.subr.bf16.mxu0 0
    %5891 = vmatpush1.bf16.msra.mxu0 0
    %5892 = vmatprep.subr.bf16.mxu0 0
    %5893 = vmatpush1.bf16.msra.mxu0 0
    %5894 = vmatprep.subr.bf16.mxu0 0
    %5895 = vmatpush1.bf16.msra.mxu0 0
    %5896 = vmatprep.subr.bf16.mxu0 0
    %5897 = vmatpush1.bf16.msra.mxu0 0
    %5898 = vmatprep.subr.bf16.mxu0 0
    %5899 = vmatpush1.bf16.msra.mxu0 0
    %5900 = vmatprep.subr.bf16.mxu0 0
    %5901 = vmatpush1.bf16.msra.mxu0 0
    %5902 = vmatprep.subr.bf16.mxu0 0
    %5903 = vmatpush1.bf16.msra.mxu0 0
    %5904 = vmatprep.subr.bf16.mxu0 0
    %5905 = vmatpush1.bf16.msra.mxu0 0
    %5906 = vmatprep.subr.bf16.mxu0 0
    %5907 = vmatpush1.bf16.msra.mxu0 0
    %5908 = vmatprep.subr.bf16.mxu0 0
    %5909 = vmatpush1.bf16.msra.mxu0 0
    %5910 = vmatprep.subr.bf16.mxu0 0
    %5911 = vmatpush1.bf16.msra.mxu0 0
    %5912 = vmatprep.subr.bf16.mxu0 0
    %5913 = vmatpush1.bf16.msra.mxu0 0
    %5914 = vmatprep.subr.bf16.mxu0 0
    %5915 = vmatpush1.bf16.msra.mxu0 0
    %5916 = vmatprep.mubr.bf16.mxu0 0
    %5917 = vmatmul.mubr.bf16.gmra.mrb[0].mxu0 %v5882
    %v5918 = vpop.f32.mrb[0].mxu0
    %v5919 = vadd.f32 %v5864, %v5918
    %v5920 = vpop.f32.mrb[0].mxu0
    %v5921 = vpop.f32.mrb[0].mxu0
    %v5922 = vpop.f32.mrb[0].mxu0
    %5923 = vdwg.mxu0
    %v5925 = vsel %vm580, %v5919, 0
    %5927 = vmatprep.subr.mxu0 0.0
    %5928 = vmatpush1.msra.mxu0 %v5925
    %5929 = vmatprep.subr.mxu0 0.0
    %5930 = vmatpush1.msra.mxu0 0.0
    %5931 = vmatprep.subr.mxu0 0.0
    %5932 = vmatpush1.msra.mxu0 0.0
    %5933 = vmatprep.subr.mxu0 0.0
    %5934 = vmatpush1.msra.mxu0 0.0
    %5935 = vmatprep.subr.mxu0 0.0
    %5936 = vmatpush1.msra.mxu0 0.0
    %5937 = vmatprep.subr.mxu0 0.0
    %5938 = vmatpush1.msra.mxu0 0.0
    %5939 = vmatprep.subr.mxu0 0.0
    %5940 = vmatpush1.msra.mxu0 0.0
    %5941 = vmatprep.subr.mxu0 0.0
    %5942 = vmatpush1.msra.mxu0 0.0
    %5943 = vmatprep.subr.mxu0 0.0
    %5944 = vmatpush1.msra.mxu0 0.0
    %5945 = vmatprep.subr.mxu0 0.0
    %5946 = vmatpush1.msra.mxu0 0.0
    %5947 = vmatprep.subr.mxu0 0.0
    %5948 = vmatpush1.msra.mxu0 0.0
    %5949 = vmatprep.subr.mxu0 0.0
    %5950 = vmatpush1.msra.mxu0 0.0
    %5951 = vmatprep.subr.mxu0 0.0
    %5952 = vmatpush1.msra.mxu0 0.0
    %5953 = vmatprep.subr.mxu0 0.0
    %5954 = vmatpush1.msra.mxu0 0.0
    %5955 = vmatprep.subr.mxu0 0.0
    %5956 = vmatpush1.msra.mxu0 0.0
    %5957 = vmatprep.subr.mxu0 0.0
    %5958 = vmatpush1.msra.mxu0 0.0
    %5959 = vmatprep.subr.mxu0 0.0
    %5960 = vmatpush1.msra.mxu0 0.0
    %5961 = vmatprep.subr.mxu0 0.0
    %5962 = vmatpush1.msra.mxu0 0.0
    %5963 = vmatprep.subr.mxu0 0.0
    %5964 = vmatpush1.msra.mxu0 0.0
    %5965 = vmatprep.subr.mxu0 0.0
    %5966 = vmatpush1.msra.mxu0 0.0
    %5967 = vmatprep.subr.mxu0 0.0
    %5968 = vmatpush1.msra.mxu0 0.0
    %5969 = vmatprep.subr.mxu0 0.0
    %5970 = vmatpush1.msra.mxu0 0.0
    %5971 = vmatprep.subr.mxu0 0.0
    %5972 = vmatpush1.msra.mxu0 0.0
    %5973 = vmatprep.subr.mxu0 0.0
    %5974 = vmatpush1.msra.mxu0 0.0
    %5975 = vmatprep.subr.mxu0 0.0
    %5976 = vmatpush1.msra.mxu0 0.0
    %5977 = vmatprep.subr.mxu0 0.0
    %5978 = vmatpush1.msra.mxu0 0.0
    %5979 = vmatprep.subr.mxu0 0.0
    %5980 = vmatpush1.msra.mxu0 0.0
    %5981 = vmatprep.subr.mxu0 0.0
    %5982 = vmatpush1.msra.mxu0 0.0
    %5983 = vmatprep.subr.mxu0 0.0
    %5984 = vmatpush1.msra.mxu0 0.0
    %5985 = vmatprep.subr.mxu0 0.0
    %5986 = vmatpush1.msra.mxu0 0.0
    %5987 = vmatprep.subr.mxu0 0.0
    %5988 = vmatpush1.msra.mxu0 0.0
    %5989 = vmatprep.subr.mxu0 0.0
    %5990 = vmatpush1.msra.mxu0 0.0
    %5991 = vmatprep.mubr.f32.mxu0 0.0
    %5992 = vmatmul.mubr.f32.gmra.mrb[0].mxu0 %v1332
    %v5993 = vpop.f32.mrb[0].mxu0
    %v5994 = vadd.f32 0.0, %v5993
    %v5995 = vpop.f32.mrb[0].mxu0
    %5996 = vmatprep.mubr.f32.mxu0 0.0
    %5997 = vmatmul.mubr.f32.gmra.mrb[0].mxu0 %v1335
    %v5998 = vpop.f32.mrb[0].mxu0
    %v5999 = vadd.f32 0.0, %v5998
    %v6000 = vpop.f32.mrb[0].mxu0
    %6001 = vmatprep.mubr.f32.mxu0 0.0
    %6002 = vmatmul.mubr.f32.gmra.mrb[0].mxu0 %v1338
    %v6003 = vpop.f32.mrb[0].mxu0
    %v6004 = vadd.f32 0.0, %v6003
    %v6005 = vpop.f32.mrb[0].mxu0
    %6006 = vmatprep.mubr.f32.mxu0 0.0
    %6007 = vmatmul.mubr.f32.gmra.mrb[0].mxu0 %v1341
    %v6008 = vpop.f32.mrb[0].mxu0
    %v6009 = vadd.f32 0.0, %v6008
    %v6010 = vpop.f32.mrb[0].mxu0
    %6011 = vdwg.mxu0
    %v6012 = vadd.f32 %v5658, %v5994
    %v6013 = vadd.f32 %v5659, %v5999
    %v6014 = vadd.f32 %v5660, %v6004
    %v6015 = vadd.f32 %v5661, %v6009
    %6016 = vmatprep.subr.mxu0 0.0
    %6017 = vmatpush1.msra.mxu0 %v4868
    %6018 = vmatprep.subr.mxu0 0.0
    %6019 = vmatpush1.msra.mxu0 %v4869
    %6020 = vmatprep.subr.mxu0 0.0
    %6021 = vmatpush1.msra.mxu0 %v4870
    %6022 = vmatprep.subr.mxu0 0.0
    %6023 = vmatpush1.msra.mxu0 %v4871
    %6024 = vmatprep.subr.mxu0 0.0
    %6025 = vmatpush1.msra.mxu0 0.0
    %6026 = vmatprep.subr.mxu0 0.0
    %6027 = vmatpush1.msra.mxu0 0.0
    %6028 = vmatprep.subr.mxu0 0.0
    %6029 = vmatpush1.msra.mxu0 0.0
    %6030 = vmatprep.subr.mxu0 0.0
    %6031 = vmatpush1.msra.mxu0 0.0
    %6032 = vmatprep.subr.mxu0 0.0
    %6033 = vmatpush1.msra.mxu0 0.0
    %6034 = vmatprep.subr.mxu0 0.0
    %6035 = vmatpush1.msra.mxu0 0.0
    %6036 = vmatprep.subr.mxu0 0.0
    %6037 = vmatpush1.msra.mxu0 0.0
    %6038 = vmatprep.subr.mxu0 0.0
    %6039 = vmatpush1.msra.mxu0 0.0
    %6040 = vmatprep.subr.mxu0 0.0
    %6041 = vmatpush1.msra.mxu0 0.0
    %6042 = vmatprep.subr.mxu0 0.0
    %6043 = vmatpush1.msra.mxu0 0.0
    %6044 = vmatprep.subr.mxu0 0.0
    %6045 = vmatpush1.msra.mxu0 0.0
    %6046 = vmatprep.subr.mxu0 0.0
    %6047 = vmatpush1.msra.mxu0 0.0
    %6048 = vmatprep.subr.mxu0 0.0
    %6049 = vmatpush1.msra.mxu0 0.0
    %6050 = vmatprep.subr.mxu0 0.0
    %6051 = vmatpush1.msra.mxu0 0.0
    %6052 = vmatprep.subr.mxu0 0.0
    %6053 = vmatpush1.msra.mxu0 0.0
    %6054 = vmatprep.subr.mxu0 0.0
    %6055 = vmatpush1.msra.mxu0 0.0
    %6056 = vmatprep.subr.mxu0 0.0
    %6057 = vmatpush1.msra.mxu0 0.0
    %6058 = vmatprep.subr.mxu0 0.0
    %6059 = vmatpush1.msra.mxu0 0.0
    %6060 = vmatprep.subr.mxu0 0.0
    %6061 = vmatpush1.msra.mxu0 0.0
    %6062 = vmatprep.subr.mxu0 0.0
    %6063 = vmatpush1.msra.mxu0 0.0
    %6064 = vmatprep.subr.mxu0 0.0
    %6065 = vmatpush1.msra.mxu0 0.0
    %6066 = vmatprep.subr.mxu0 0.0
    %6067 = vmatpush1.msra.mxu0 0.0
    %6068 = vmatprep.subr.mxu0 0.0
    %6069 = vmatpush1.msra.mxu0 0.0
    %6070 = vmatprep.subr.mxu0 0.0
    %6071 = vmatpush1.msra.mxu0 0.0
    %6072 = vmatprep.subr.mxu0 0.0
    %6073 = vmatpush1.msra.mxu0 0.0
    %6074 = vmatprep.subr.mxu0 0.0
    %6075 = vmatpush1.msra.mxu0 0.0
    %6076 = vmatprep.subr.mxu0 0.0
    %6077 = vmatpush1.msra.mxu0 0.0
    %6078 = vmatprep.subr.mxu0 0.0
    %6079 = vmatpush1.msra.mxu0 0.0
    %6080 = vmatprep.mubr.f32.mxu0 0.0
    %6081 = vmatmul.mubr.f32.gmra.mrb[0].mxu0 %v1438
    %v6082 = vpop.f32.mrb[0].mxu0
    %v6083 = vadd.f32 0.0, %v6082
    %v6084 = vpop.f32.mrb[0].mxu0
    %6085 = vdwg.mxu0
    %6086 = vmatprep.subr.mxu0 0.0
    %6087 = vmatpush1.msra.mxu0 %v4868
    %6088 = vmatprep.subr.mxu0 0.0
    %6089 = vmatpush1.msra.mxu0 %v4869
    %6090 = vmatprep.subr.mxu0 0.0
    %6091 = vmatpush1.msra.mxu0 %v4870
    %6092 = vmatprep.subr.mxu0 0.0
    %6093 = vmatpush1.msra.mxu0 %v4871
    %6094 = vmatprep.subr.mxu0 0.0
    %6095 = vmatpush1.msra.mxu0 0.0
    %6096 = vmatprep.subr.mxu0 0.0
    %6097 = vmatpush1.msra.mxu0 0.0
    %6098 = vmatprep.subr.mxu0 0.0
    %6099 = vmatpush1.msra.mxu0 0.0
    %6100 = vmatprep.subr.mxu0 0.0
    %6101 = vmatpush1.msra.mxu0 0.0
    %6102 = vmatprep.subr.mxu0 0.0
    %6103 = vmatpush1.msra.mxu0 0.0
    %6104 = vmatprep.subr.mxu0 0.0
    %6105 = vmatpush1.msra.mxu0 0.0
    %6106 = vmatprep.subr.mxu0 0.0
    %6107 = vmatpush1.msra.mxu0 0.0
    %6108 = vmatprep.subr.mxu0 0.0
    %6109 = vmatpush1.msra.mxu0 0.0
    %6110 = vmatprep.subr.mxu0 0.0
    %6111 = vmatpush1.msra.mxu0 0.0
    %6112 = vmatprep.subr.mxu0 0.0
    %6113 = vmatpush1.msra.mxu0 0.0
    %6114 = vmatprep.subr.mxu0 0.0
    %6115 = vmatpush1.msra.mxu0 0.0
    %6116 = vmatprep.subr.mxu0 0.0
    %6117 = vmatpush1.msra.mxu0 0.0
    %6118 = vmatprep.subr.mxu0 0.0
    %6119 = vmatpush1.msra.mxu0 0.0
    %6120 = vmatprep.subr.mxu0 0.0
    %6121 = vmatpush1.msra.mxu0 0.0
    %6122 = vmatprep.subr.mxu0 0.0
    %6123 = vmatpush1.msra.mxu0 0.0
    %6124 = vmatprep.subr.mxu0 0.0
    %6125 = vmatpush1.msra.mxu0 0.0
    %6126 = vmatprep.subr.mxu0 0.0
    %6127 = vmatpush1.msra.mxu0 0.0
    %6128 = vmatprep.subr.mxu0 0.0
    %6129 = vmatpush1.msra.mxu0 0.0
    %6130 = vmatprep.subr.mxu0 0.0
    %6131 = vmatpush1.msra.mxu0 0.0
    %6132 = vmatprep.subr.mxu0 0.0
    %6133 = vmatpush1.msra.mxu0 0.0
    %6134 = vmatprep.subr.mxu0 0.0
    %6135 = vmatpush1.msra.mxu0 0.0
    %6136 = vmatprep.subr.mxu0 0.0
    %6137 = vmatpush1.msra.mxu0 0.0
    %6138 = vmatprep.subr.mxu0 0.0
    %6139 = vmatpush1.msra.mxu0 0.0
    %6140 = vmatprep.subr.mxu0 0.0
    %6141 = vmatpush1.msra.mxu0 0.0
    %6142 = vmatprep.subr.mxu0 0.0
    %6143 = vmatpush1.msra.mxu0 0.0
    %6144 = vmatprep.subr.mxu0 0.0
    %6145 = vmatpush1.msra.mxu0 0.0
    %6146 = vmatprep.subr.mxu0 0.0
    %6147 = vmatpush1.msra.mxu0 0.0
    %6148 = vmatprep.subr.mxu0 0.0
    %6149 = vmatpush1.msra.mxu0 0.0
    %6150 = vmatprep.mubr.f32.mxu0 0.0
    %6151 = vmatmul.mubr.f32.gmra.mrb[0].mxu0 %v1513
    %v6152 = vpop.f32.mrb[0].mxu0
    %v6153 = vadd.f32 0.0, %v6152
    %v6154 = vpop.f32.mrb[0].mxu0
    %6155 = vdwg.mxu0
    %v6156 = vpack.c.bf16 %v6083, %v6083
    %s6157 = scalar_lea.vmem %s6, 240
    %v6158 = vld [vmem:[%s6157] sm:$0xf]
    %v6159 = vld [vmem:[%s6157 + $0x4] sm:$0xf]
    %v6160 = vld [vmem:[%s6157 + $0x8] sm:$0xf]
    %v6161 = vld [vmem:[%s6157 + $0xc] sm:$0xf]
    %v6162 = vpack.c.bf16 %v6153, %v6153
    %s6163 = scalar_lea.vmem [#allocation6], 240
    %v6164 = vld [vmem:[%s6163] sm:$0xf]
    %v6165 = vld [vmem:[%s6163 + $0x4] sm:$0xf]
    %v6166 = vld [vmem:[%s6163 + $0x8] sm:$0xf]
    %v6167 = vld [vmem:[%s6163 + $0xc] sm:$0xf]
    %v6172 = vunpack.c.l.b16 %v6164
    %v6173 = vunpack.c.l.b16 %v6165
    %v6174 = vunpack.c.l.b16 %v6166
    %v6175 = vunpack.c.l.b16 %v6167
    %v6176 = vpack.c.b16 %v6173, %v6172
    %v6177 = vpack.c.b16 %v6175, %v6174
    %v6181 = vsel %vm240, %v6162, 0
    %6183 = vmatprep.subr.bf16.mxu0 0
    %6184 = vmatpush1.bf16.msra.mxu0 %v6176
    %6185 = vmatprep.subr.bf16.mxu0 0
    %6186 = vmatpush1.bf16.msra.mxu0 %v6177
    %6187 = vmatprep.subr.bf16.mxu0 0
    %6188 = vmatpush1.bf16.msra.mxu0 0
    %6189 = vmatprep.subr.bf16.mxu0 0
    %6190 = vmatpush1.bf16.msra.mxu0 0
    %6191 = vmatprep.subr.bf16.mxu0 0
    %6192 = vmatpush1.bf16.msra.mxu0 0
    %6193 = vmatprep.subr.bf16.mxu0 0
    %6194 = vmatpush1.bf16.msra.mxu0 0
    %6195 = vmatprep.subr.bf16.mxu0 0
    %6196 = vmatpush1.bf16.msra.mxu0 0
    %6197 = vmatprep.subr.bf16.mxu0 0
    %6198 = vmatpush1.bf16.msra.mxu0 0
    %6199 = vmatprep.subr.bf16.mxu0 0
    %6200 = vmatpush1.bf16.msra.mxu0 0
    %6201 = vmatprep.subr.bf16.mxu0 0
    %6202 = vmatpush1.bf16.msra.mxu0 0
    %6203 = vmatprep.subr.bf16.mxu0 0
    %6204 = vmatpush1.bf16.msra.mxu0 0
    %6205 = vmatprep.subr.bf16.mxu0 0
    %6206 = vmatpush1.bf16.msra.mxu0 0
    %6207 = vmatprep.subr.bf16.mxu0 0
    %6208 = vmatpush1.bf16.msra.mxu0 0
    %6209 = vmatprep.subr.bf16.mxu0 0
    %6210 = vmatpush1.bf16.msra.mxu0 0
    %6211 = vmatprep.subr.bf16.mxu0 0
    %6212 = vmatpush1.bf16.msra.mxu0 0
    %6213 = vmatprep.subr.bf16.mxu0 0
    %6214 = vmatpush1.bf16.msra.mxu0 0
    %6215 = vmatprep.mubr.bf16.mxu0 0
    %6216 = vmatmul.mubr.bf16.gmra.mrb[0].mxu0 %v6181
    %v6217 = vpop.f32.mrb[0].mxu0
    %v6218 = vadd.f32 0.0, %v6217
    %v6219 = vpop.f32.mrb[0].mxu0
    %v6220 = vpop.f32.mrb[0].mxu0
    %v6221 = vpop.f32.mrb[0].mxu0
    %6222 = vdwg.mxu0
    %v6227 = vunpack.c.l.b16 %v6158
    %v6228 = vunpack.c.l.b16 %v6159
    %v6229 = vunpack.c.l.b16 %v6160
    %v6230 = vunpack.c.l.b16 %v6161
    %v6231 = vpack.c.b16 %v6228, %v6227
    %v6232 = vpack.c.b16 %v6230, %v6229
    %v6236 = vsel %vm240, %v6156, 0
    %6238 = vmatprep.subr.bf16.mxu0 0
    %6239 = vmatpush1.bf16.msra.mxu0 %v6231
    %6240 = vmatprep.subr.bf16.mxu0 0
    %6241 = vmatpush1.bf16.msra.mxu0 %v6232
    %6242 = vmatprep.subr.bf16.mxu0 0
    %6243 = vmatpush1.bf16.msra.mxu0 0
    %6244 = vmatprep.subr.bf16.mxu0 0
    %6245 = vmatpush1.bf16.msra.mxu0 0
    %6246 = vmatprep.subr.bf16.mxu0 0
    %6247 = vmatpush1.bf16.msra.mxu0 0
    %6248 = vmatprep.subr.bf16.mxu0 0
    %6249 = vmatpush1.bf16.msra.mxu0 0
    %6250 = vmatprep.subr.bf16.mxu0 0
    %6251 = vmatpush1.bf16.msra.mxu0 0
    %6252 = vmatprep.subr.bf16.mxu0 0
    %6253 = vmatpush1.bf16.msra.mxu0 0
    %6254 = vmatprep.subr.bf16.mxu0 0
    %6255 = vmatpush1.bf16.msra.mxu0 0
    %6256 = vmatprep.subr.bf16.mxu0 0
    %6257 = vmatpush1.bf16.msra.mxu0 0
    %6258 = vmatprep.subr.bf16.mxu0 0
    %6259 = vmatpush1.bf16.msra.mxu0 0
    %6260 = vmatprep.subr.bf16.mxu0 0
    %6261 = vmatpush1.bf16.msra.mxu0 0
    %6262 = vmatprep.subr.bf16.mxu0 0
    %6263 = vmatpush1.bf16.msra.mxu0 0
    %6264 = vmatprep.subr.bf16.mxu0 0
    %6265 = vmatpush1.bf16.msra.mxu0 0
    %6266 = vmatprep.subr.bf16.mxu0 0
    %6267 = vmatpush1.bf16.msra.mxu0 0
    %6268 = vmatprep.subr.bf16.mxu0 0
    %6269 = vmatpush1.bf16.msra.mxu0 0
    %6270 = vmatprep.mubr.bf16.mxu0 0
    %6271 = vmatmul.mubr.bf16.gmra.mrb[0].mxu0 %v6236
    %v6272 = vpop.f32.mrb[0].mxu0
    %v6273 = vadd.f32 %v6218, %v6272
    %v6274 = vpop.f32.mrb[0].mxu0
    %v6275 = vpop.f32.mrb[0].mxu0
    %v6276 = vpop.f32.mrb[0].mxu0
    %6277 = vdwg.mxu0
    %v6279 = vsel %vm580, %v6273, 0
    %6281 = vmatprep.subr.mxu0 0.0
    %6282 = vmatpush1.msra.mxu0 %v6279
    %6283 = vmatprep.subr.mxu0 0.0
    %6284 = vmatpush1.msra.mxu0 0.0
    %6285 = vmatprep.subr.mxu0 0.0
    %6286 = vmatpush1.msra.mxu0 0.0
    %6287 = vmatprep.subr.mxu0 0.0
    %6288 = vmatpush1.msra.mxu0 0.0
    %6289 = vmatprep.subr.mxu0 0.0
    %6290 = vmatpush1.msra.mxu0 0.0
    %6291 = vmatprep.subr.mxu0 0.0
    %6292 = vmatpush1.msra.mxu0 0.0
    %6293 = vmatprep.subr.mxu0 0.0
    %6294 = vmatpush1.msra.mxu0 0.0
    %6295 = vmatprep.subr.mxu0 0.0
    %6296 = vmatpush1.msra.mxu0 0.0
    %6297 = vmatprep.subr.mxu0 0.0
    %6298 = vmatpush1.msra.mxu0 0.0
    %6299 = vmatprep.subr.mxu0 0.0
    %6300 = vmatpush1.msra.mxu0 0.0
    %6301 = vmatprep.subr.mxu0 0.0
    %6302 = vmatpush1.msra.mxu0 0.0
    %6303 = vmatprep.subr.mxu0 0.0
    %6304 = vmatpush1.msra.mxu0 0.0
    %6305 = vmatprep.subr.mxu0 0.0
    %6306 = vmatpush1.msra.mxu0 0.0
    %6307 = vmatprep.subr.mxu0 0.0
    %6308 = vmatpush1.msra.mxu0 0.0
    %6309 = vmatprep.subr.mxu0 0.0
    %6310 = vmatpush1.msra.mxu0 0.0
    %6311 = vmatprep.subr.mxu0 0.0
    %6312 = vmatpush1.msra.mxu0 0.0
    %6313 = vmatprep.subr.mxu0 0.0
    %6314 = vmatpush1.msra.mxu0 0.0
    %6315 = vmatprep.subr.mxu0 0.0
    %6316 = vmatpush1.msra.mxu0 0.0
    %6317 = vmatprep.subr.mxu0 0.0
    %6318 = vmatpush1.msra.mxu0 0.0
    %6319 = vmatprep.subr.mxu0 0.0
    %6320 = vmatpush1.msra.mxu0 0.0
    %6321 = vmatprep.subr.mxu0 0.0
    %6322 = vmatpush1.msra.mxu0 0.0
    %6323 = vmatprep.subr.mxu0 0.0
    %6324 = vmatpush1.msra.mxu0 0.0
    %6325 = vmatprep.subr.mxu0 0.0
    %6326 = vmatpush1.msra.mxu0 0.0
    %6327 = vmatprep.subr.mxu0 0.0
    %6328 = vmatpush1.msra.mxu0 0.0
    %6329 = vmatprep.subr.mxu0 0.0
    %6330 = vmatpush1.msra.mxu0 0.0
    %6331 = vmatprep.subr.mxu0 0.0
    %6332 = vmatpush1.msra.mxu0 0.0
    %6333 = vmatprep.subr.mxu0 0.0
    %6334 = vmatpush1.msra.mxu0 0.0
    %6335 = vmatprep.subr.mxu0 0.0
    %6336 = vmatpush1.msra.mxu0 0.0
    %6337 = vmatprep.subr.mxu0 0.0
    %6338 = vmatpush1.msra.mxu0 0.0
    %6339 = vmatprep.subr.mxu0 0.0
    %6340 = vmatpush1.msra.mxu0 0.0
    %6341 = vmatprep.subr.mxu0 0.0
    %6342 = vmatpush1.msra.mxu0 0.0
    %6343 = vmatprep.subr.mxu0 0.0
    %6344 = vmatpush1.msra.mxu0 0.0
    %6345 = vmatprep.mubr.f32.mxu0 0.0
    %6346 = vmatmul.mubr.f32.gmra.mrb[0].mxu0 %v1713
    %v6347 = vpop.f32.mrb[0].mxu0
    %v6348 = vadd.f32 0.0, %v6347
    %v6349 = vpop.f32.mrb[0].mxu0
    %6350 = vmatprep.mubr.f32.mxu0 0.0
    %6351 = vmatmul.mubr.f32.gmra.mrb[0].mxu0 %v1716
    %v6352 = vpop.f32.mrb[0].mxu0
    %v6353 = vadd.f32 0.0, %v6352
    %v6354 = vpop.f32.mrb[0].mxu0
    %6355 = vmatprep.mubr.f32.mxu0 0.0
    %6356 = vmatmul.mubr.f32.gmra.mrb[0].mxu0 %v1719
    %v6357 = vpop.f32.mrb[0].mxu0
    %v6358 = vadd.f32 0.0, %v6357
    %v6359 = vpop.f32.mrb[0].mxu0
    %6360 = vmatprep.mubr.f32.mxu0 0.0
    %6361 = vmatmul.mubr.f32.gmra.mrb[0].mxu0 %v1722
    %v6362 = vpop.f32.mrb[0].mxu0
    %v6363 = vadd.f32 0.0, %v6362
    %v6364 = vpop.f32.mrb[0].mxu0
    %6365 = vdwg.mxu0
    %v6366 = vadd.f32 %v6012, %v6348
    %v6367 = vadd.f32 %v6013, %v6353
    %v6368 = vadd.f32 %v6014, %v6358
    %v6369 = vadd.f32 %v6015, %v6363
    %v6370 = vpack.c.bf16 %v6367, %v6366
    %v6371 = vpack.c.bf16 %v6369, %v6368
    %v6372 = vld [vmem:[#allocation9] sm:$0xf]
    %v6373 = vld [vmem:[#allocation9 + $0x4] sm:$0xf]
    %v6374 = vld [vmem:[#allocation9 + $0x8] sm:$0xf]
    %v6375 = vld [vmem:[#allocation9 + $0xc] sm:$0xf]
    %v6376 = vld [vmem:[%s11] sm:$0x1]
    %v6378 = vlaneseq
    %v6379 = vshrl.u32 %v6378, 7
    %v6380 = vsub.s32 0, %v6379
    %v6381 = vrot.slane %v6376, %v6380
    %v6387 = vunpack.c.l.b16 %v6372
    %v6388 = vunpack.c.l.b16 %v6373
    %v6389 = vunpack.c.l.b16 %v6374
    %v6390 = vunpack.c.l.b16 %v6375
    %v6391 = vpack.c.b16 %v6388, %v6387
    %v6392 = vpack.c.b16 %v6390, %v6389
    %v6396 = vsel %vm240, %v6370, 0
    %v6399 = vsel %vm240, %v6371, 0
    %6401 = vmatprep.subr.bf16.mxu0 0
    %6402 = vmatpush1.bf16.msra.mxu0 %v6391
    %6403 = vmatprep.subr.bf16.mxu0 0
    %6404 = vmatpush1.bf16.msra.mxu0 %v6392
    %6405 = vmatprep.subr.bf16.mxu0 0
    %6406 = vmatpush1.bf16.msra.mxu0 0
    %6407 = vmatprep.subr.bf16.mxu0 0
    %6408 = vmatpush1.bf16.msra.mxu0 0
    %6409 = vmatprep.subr.bf16.mxu0 0
    %6410 = vmatpush1.bf16.msra.mxu0 0
    %6411 = vmatprep.subr.bf16.mxu0 0
    %6412 = vmatpush1.bf16.msra.mxu0 0
    %6413 = vmatprep.subr.bf16.mxu0 0
    %6414 = vmatpush1.bf16.msra.mxu0 0
    %6415 = vmatprep.subr.bf16.mxu0 0
    %6416 = vmatpush1.bf16.msra.mxu0 0
    %6417 = vmatprep.subr.bf16.mxu0 0
    %6418 = vmatpush1.bf16.msra.mxu0 0
    %6419 = vmatprep.subr.bf16.mxu0 0
    %6420 = vmatpush1.bf16.msra.mxu0 0
    %6421 = vmatprep.subr.bf16.mxu0 0
    %6422 = vmatpush1.bf16.msra.mxu0 0
    %6423 = vmatprep.subr.bf16.mxu0 0
    %6424 = vmatpush1.bf16.msra.mxu0 0
    %6425 = vmatprep.subr.bf16.mxu0 0
    %6426 = vmatpush1.bf16.msra.mxu0 0
    %6427 = vmatprep.subr.bf16.mxu0 0
    %6428 = vmatpush1.bf16.msra.mxu0 0
    %6429 = vmatprep.subr.bf16.mxu0 0
    %6430 = vmatpush1.bf16.msra.mxu0 0
    %6431 = vmatprep.subr.bf16.mxu0 0
    %6432 = vmatpush1.bf16.msra.mxu0 0
    %6433 = vmatprep.mubr.bf16.mxu0 0
    %6434 = vmatmul.mubr.bf16.gmra.mrb[0].mxu0 %v6396
    %v6435 = vpop.f32.mrb[0].mxu0
    %v6436 = vadd.f32 %v6381, %v6435
    %v6437 = vpop.f32.mrb[0].mxu0
    %v6438 = vpop.f32.mrb[0].mxu0
    %v6439 = vadd.f32 %v6381, %v6438
    %v6440 = vpop.f32.mrb[0].mxu0
    %6441 = vmatprep.mubr.bf16.mxu0 0
    %6442 = vmatmul.mubr.bf16.gmra.mrb[0].mxu0 %v6399
    %v6443 = vpop.f32.mrb[0].mxu0
    %v6444 = vadd.f32 %v6381, %v6443
    %v6445 = vpop.f32.mrb[0].mxu0
    %v6446 = vpop.f32.mrb[0].mxu0
    %v6447 = vadd.f32 %v6381, %v6446
    %v6448 = vpop.f32.mrb[0].mxu0
    %6449 = vdwg.mxu0
    %v6450 = vmul.f32 %v6436, 0.5
    %v6451 = vmul.f32 %v6439, 0.5
    %v6452 = vmul.f32 %v6444, 0.5
    %v6453 = vmul.f32 %v6447, 0.5
    %v6454 = vmul.f32 %v6436, 0.70710677
    %v6455 = vmul.f32 %v6439, 0.70710677
    %v6456 = vmul.f32 %v6444, 0.70710677
    %v6457 = vmul.f32 %v6447, 0.70710677
    %v6458 = verf.f32.pop %v6454
    %v6459 = verf.f32.pop %v6455
    %v6460 = verf.f32.pop %v6456
    %v6461 = verf.f32.pop %v6457
    %v6462 = vadd.f32 %v6458, 1.0
    %v6463 = vadd.f32 %v6459, 1.0
    %v6464 = vadd.f32 %v6460, 1.0
    %v6465 = vadd.f32 %v6461, 1.0
    %v6466 = vmul.f32 %v6450, %v6462
    %v6467 = vmul.f32 %v6451, %v6463
    %v6468 = vmul.f32 %v6452, %v6464
    %v6469 = vmul.f32 %v6453, %v6465
    %v6470 = vpack.c.bf16 %v6467, %v6466
    %v6471 = vpack.c.bf16 %v6469, %v6468
    %v6472 = vld [vmem:[#allocation10] sm:$0xf]
    %v6473 = vld [vmem:[#allocation10 + $0x4] sm:$0xf]
    %v6474 = vld [vmem:[#allocation10 + $0x8] sm:$0xf]
    %v6475 = vld [vmem:[#allocation10 + $0xc] sm:$0xf]
    %v6476 = vld [vmem:[#allocation10 + $0x10] sm:$0xf]
    %v6477 = vld [vmem:[#allocation10 + $0x14] sm:$0xf]
    %v6478 = vld [vmem:[#allocation10 + $0x18] sm:$0xf]
    %v6479 = vld [vmem:[#allocation10 + $0x1c] sm:$0xf]
    %v6480 = vld [vmem:[#allocation10 + $0x20] sm:$0xf]
    %v6481 = vld [vmem:[#allocation10 + $0x24] sm:$0xf]
    %v6482 = vld [vmem:[#allocation10 + $0x28] sm:$0xf]
    %v6483 = vld [vmem:[#allocation10 + $0x2c] sm:$0xf]
    %v6484 = vld [vmem:[#allocation10 + $0x30] sm:$0xf]
    %v6485 = vld [vmem:[#allocation10 + $0x34] sm:$0xf]
    %v6486 = vld [vmem:[#allocation10 + $0x38] sm:$0xf]
    %v6487 = vld [vmem:[#allocation10 + $0x3c] sm:$0xf]
    %v6488 = vld [vmem:[#allocation12] sm:$0x1]
    %v6490 = vlaneseq
    %v6491 = vshrl.u32 %v6490, 7
    %v6492 = vsub.s32 0, %v6491
    %v6493 = vrot.slane %v6488, %v6492
    %v6511 = vunpack.c.l.b16 %v6472
    %v6512 = vunpack.c.l.b16 %v6473
    %v6513 = vunpack.c.l.b16 %v6474
    %v6514 = vunpack.c.l.b16 %v6475
    %v6515 = vunpack.c.l.b16 %v6476
    %v6516 = vunpack.c.l.b16 %v6477
    %v6517 = vunpack.c.l.b16 %v6478
    %v6518 = vunpack.c.l.b16 %v6479
    %v6519 = vunpack.c.l.b16 %v6480
    %v6520 = vunpack.c.l.b16 %v6481
    %v6521 = vunpack.c.l.b16 %v6482
    %v6522 = vunpack.c.l.b16 %v6483
    %v6523 = vunpack.c.l.b16 %v6484
    %v6524 = vunpack.c.l.b16 %v6485
    %v6525 = vunpack.c.l.b16 %v6486
    %v6526 = vunpack.c.l.b16 %v6487
    %v6527 = vpack.c.b16 %v6512, %v6511
    %v6528 = vpack.c.b16 %v6514, %v6513
    %v6529 = vpack.c.b16 %v6516, %v6515
    %v6530 = vpack.c.b16 %v6518, %v6517
    %v6531 = vpack.c.b16 %v6520, %v6519
    %v6532 = vpack.c.b16 %v6522, %v6521
    %v6533 = vpack.c.b16 %v6524, %v6523
    %v6534 = vpack.c.b16 %v6526, %v6525
    %6543 = vmatprep.subr.bf16.mxu0 0
    %6544 = vmatpush1.bf16.msra.mxu0 %v6527
    %6545 = vmatprep.subr.bf16.mxu0 0
    %6546 = vmatpush1.bf16.msra.mxu0 %v6528
    %6547 = vmatprep.subr.bf16.mxu0 0
    %6548 = vmatpush1.bf16.msra.mxu0 %v6529
    %6549 = vmatprep.subr.bf16.mxu0 0
    %6550 = vmatpush1.bf16.msra.mxu0 %v6530
    %6551 = vmatprep.subr.bf16.mxu0 0
    %6552 = vmatpush1.bf16.msra.mxu0 %v6531
    %6553 = vmatprep.subr.bf16.mxu0 0
    %6554 = vmatpush1.bf16.msra.mxu0 %v6532
    %6555 = vmatprep.subr.bf16.mxu0 0
    %6556 = vmatpush1.bf16.msra.mxu0 %v6533
    %6557 = vmatprep.subr.bf16.mxu0 0
    %6558 = vmatpush1.bf16.msra.mxu0 %v6534
    %6559 = vmatprep.subr.bf16.mxu0 0
    %6560 = vmatpush1.bf16.msra.mxu0 0
    %6561 = vmatprep.subr.bf16.mxu0 0
    %6562 = vmatpush1.bf16.msra.mxu0 0
    %6563 = vmatprep.subr.bf16.mxu0 0
    %6564 = vmatpush1.bf16.msra.mxu0 0
    %6565 = vmatprep.subr.bf16.mxu0 0
    %6566 = vmatpush1.bf16.msra.mxu0 0
    %6567 = vmatprep.subr.bf16.mxu0 0
    %6568 = vmatpush1.bf16.msra.mxu0 0
    %6569 = vmatprep.subr.bf16.mxu0 0
    %6570 = vmatpush1.bf16.msra.mxu0 0
    %6571 = vmatprep.subr.bf16.mxu0 0
    %6572 = vmatpush1.bf16.msra.mxu0 0
    %6573 = vmatprep.subr.bf16.mxu0 0
    %6574 = vmatpush1.bf16.msra.mxu0 0
    %6575 = vmatprep.mubr.bf16.mxu0 0
    %6576 = vmatmul.mubr.bf16.gmra.mrb[0].mxu0 %v6470
    %v6577 = vpop.f32.mrb[0].mxu0
    %v6578 = vadd.f32 %v6493, %v6577
    %v6579 = vpop.f32.mrb[0].mxu0
    %v6580 = vpop.f32.mrb[0].mxu0
    %v6581 = vadd.f32 %v6493, %v6580
    %v6582 = vpop.f32.mrb[0].mxu0
    %6583 = vmatprep.mubr.bf16.mxu0 0
    %6584 = vmatmul.mubr.bf16.gmra.mrb[0].mxu0 %v6471
    %v6585 = vpop.f32.mrb[0].mxu0
    %v6586 = vadd.f32 %v6493, %v6585
    %v6587 = vpop.f32.mrb[0].mxu0
    %v6588 = vpop.f32.mrb[0].mxu0
    %v6589 = vadd.f32 %v6493, %v6588
    %v6590 = vpop.f32.mrb[0].mxu0
    %6591 = vdwg.mxu0
    %6592 = vst [vmem:[%s14] sm:$0xff] %v6578
    %6593 = vst [vmem:[%s14 + $0x8] sm:$0xff] %v6581
    %6594 = vst [vmem:[%s14 + $0x10] sm:$0xff] %v6586
    %6595 = vst [vmem:[%s14 + $0x18] sm:$0xff] %v6589
    // Predicated region
    $region86: #{fno_forward.1} parent=1 // pred_check
      _
    $region87: #{fno_forward.1} parent=1 // pred_check_branch
      %6597 = sbr.rel (0) target = $region89
    $region88: #{fno_forward.1} parent=1 // pred_region
      _
    $region89: #{fno_forward.1} parent=1 // pred_fallthru
      _
    // Predicated region
    $region90: #{fno_forward.1} parent=1 // pred_check
      _
    $region91: #{fno_forward.1} parent=1 // pred_check_branch
      %6599 = sbr.rel (0) target = $region93
    $region92: #{fno_forward.1} parent=1 // pred_region
      _
    $region93: #{fno_forward.1} parent=1 // pred_fallthru
      _
    %6600 = vsyncpa [#allocation3], 1
    %6601 = vsyncpa [#allocation5], 1
    %6602 = vsyncpa [#allocation8], 1
    %6603 = vsyncpa [#allocation11], 1

</llo_original>
